<compile_context>
chip_gen: v7x
topology: tpu7x:2x2x1
jax: 0.10.0
libtpu: 0.0.40
codegen_flags: <defaults>
</compile_context>

<pallas_src>
import numpy as np
import jax
import jax.numpy as jnp
from jax.experimental import pallas as pl
from jax.experimental.pallas import tpu as pltpu


_LANE = 128   # lane-dense channel padding target
_ROW0 = 3     # interior row offset in the halo scratch (max radius = 3)
_COL0 = 8     # interior column offset (sublane-aligned, >= max radius)


# ----------------------------- fused kernel --------------------------------

def mkpconv_kernel(x_ref,
                   w1_ref, b1_ref,
                   w2_ref, s2_ref, t2_ref,
                   w3_ref, b3_ref,
                   w4_ref, s4_ref, t4_ref,
                   w5_ref, b5_ref,
                   o_ref,
                   pad_ref):
    H, W, C = x_ref.shape              # C already padded to a multiple of 128
    H_scr, W_scr, _ = pad_ref.shape

    # Zero only the halo frame (the interior is fully overwritten before every
    # depthwise conv).  Unconditional every step -> megacore-safe.
    pad_ref[0:_ROW0, :, :] = jnp.zeros((_ROW0, W_scr, C), jnp.float32)
    pad_ref[_ROW0 + H:, :, :] = jnp.zeros((H_scr - _ROW0 - H, W_scr, C),
                                          jnp.float32)
    pad_ref[_ROW0:_ROW0 + H, 0:_COL0, :] = jnp.zeros((H, _COL0, C),
                                                     jnp.float32)
    pad_ref[_ROW0:_ROW0 + H, _COL0 + W:, :] = jnp.zeros(
        (H, W_scr - _COL0 - W, C), jnp.float32)

    def dwconv(k, w_r, b_r):
        """Depthwise k x k 'same' conv on the data in pad_ref's interior.

        The sublane (W) shift is hoisted out of the dy loop: one column-shifted
        slab per dx, dy taps slice it along the cheap leading (row) dim.
        Per-dx partials are tree-reduced to break the serial acc chain.
        """
        r = k // 2
        w = w_r[...]                                    # (k*k, C), loaded once
        partials = []
        for dx in range(k):
            c0 = _COL0 - r + dx
            col = pad_ref[_ROW0 - r:_ROW0 + r + H, c0:c0 + W, :]  # (H+2r, W, C)
            p = col[0:H] * w[dx]
            for dy in range(1, k):
                p = p + col[dy:dy + H] * w[dy * k + dx]
            partials.append(p)
        while len(partials) > 1:                        # tree-reduce over dx
            nxt = [partials[i] + partials[i + 1]
                   for i in range(0, len(partials) - 1, 2)]
            if len(partials) % 2:
                nxt.append(partials[-1])
            partials = nxt
        return partials[0] + b_r[...]                   # bias: (1, 1, C)

    def pw_bn_silu(xx, w_r, s_r, t_r):
        """1x1 conv as a lane-padded CxC MXU matmul (bf16 operands, f32 acc)
        + folded eval-mode BatchNorm + SiLU."""
        y = jnp.dot(xx.reshape(H * W, C).astype(jnp.bfloat16), w_r[...],
                    preferred_element_type=jnp.float32)            # (H*W, C)
        y = y * s_r[...] + t_r[...]                                 # (1, C)
        y = y * jax.nn.sigmoid(y)                                   # SiLU
        return y.reshape(H, W, C)

    # stage 1: depthwise 3x3 on x
    pad_ref[_ROW0:_ROW0 + H, _COL0:_COL0 + W, :] = x_ref[...].astype(jnp.float32)
    x1 = dwconv(3, w1_ref, b1_ref)
    x2 = pw_bn_silu(x1, w2_ref, s2_ref, t2_ref)

    # stage 2: depthwise 5x5 on x2
    pad_ref[_ROW0:_ROW0 + H, _COL0:_COL0 + W, :] = x2
    x3 = dwconv(5, w3_ref, b3_ref)
    x4 = pw_bn_silu(x3, w4_ref, s4_ref, t4_ref)

    # stage 3: depthwise 7x7 on x4, then residual (re-read x_ref here rather
    # than keeping x live across the whole body -> smaller live set).
    pad_ref[_ROW0:_ROW0 + H, _COL0:_COL0 + W, :] = x4
    x5 = dwconv(7, w5_ref, b5_ref)
    o_ref[...] = (x5 + x_ref[...].astype(jnp.float32)).astype(o_ref.dtype)


# ------------------------------- wrapper ------------------------------------

def _pad_last_dim(a, cp):
    c = a.shape[-1]
    if c == cp:
        return a
    cfg = [(0, 0)] * (a.ndim - 1) + [(0, cp - c)]
    return jnp.pad(a, cfg)


def mkpconv_nhwc(x_nhwc, params):
    """Run the fused MKPConv kernel on an NHWC tensor. Grid iterates over batch."""
    N, H, W, C = x_nhwc.shape
    # Keep W a multiple of 8 so the (H,W,C)->(H*W,C) reshape before the MXU
    # matmuls is a layout no-op (no hidden relayout copies).
    assert W % 8 == 0, "W must be a multiple of 8 (sublane alignment)"
    Cp = pl.cdiv(C, _LANE) * _LANE

    (w1, b1, w2, s2, t2, w3, b3, w4, s4, t4, w5, b5) = params
    xp = _pad_last_dim(x_nhwc, Cp)

    def dw_w(w, k):   # (k,k,C) -> (k*k, Cp): kernel indexes w[dy*k + dx]
        return _pad_last_dim(w, Cp).reshape(k * k, Cp)

    padded = (
        dw_w(w1, 3), _pad_last_dim(b1, Cp),
        jnp.pad(w2, ((0, Cp - C), (0, Cp - C))).astype(jnp.bfloat16),
        _pad_last_dim(s2, Cp), _pad_last_dim(t2, Cp),
        dw_w(w3, 5), _pad_last_dim(b3, Cp),
        jnp.pad(w4, ((0, Cp - C), (0, Cp - C))).astype(jnp.bfloat16),
        _pad_last_dim(s4, Cp), _pad_last_dim(t4, Cp),
        dw_w(w5, 7), _pad_last_dim(b5, Cp),
    )

    # Halo scratch: interior at (_ROW0, _COL0); width padded to a multiple of 8
    # sublanes with >= 3 zero-halo columns on each side.
    H_scr = H + 2 * _ROW0
    W_scr = _COL0 + pl.cdiv(W + 3, 8) * 8

    def full_spec(a):
        nd = a.ndim
        return pl.BlockSpec(a.shape, lambda n, _nd=nd: (0,) * _nd)

    in_specs = [pl.BlockSpec((pl.Squeezed(), H, W, Cp), lambda n: (n, 0, 0, 0))]
    in_specs += [full_spec(p) for p in padded]
    out_spec = pl.BlockSpec((pl.Squeezed(), H, W, Cp), lambda n: (n, 0, 0, 0))

    flops = N * (2 * H * W * Cp * (9 + 25 + 49)          # depthwise taps
                 + 2 * (2 * H * W * Cp * Cp)             # two 1x1 matmuls
                 + 10 * H * W * Cp)                      # BN/SiLU/residual
    transcendentals = N * 2 * H * W * Cp                 # two sigmoids
    bytes_accessed = (4 * 2 * N * H * W * Cp
                      + sum(int(p.size) * p.dtype.itemsize for p in padded))

    out_padded = pl.pallas_call(
        mkpconv_kernel,
        out_shape=jax.ShapeDtypeStruct((N, H, W, Cp), x_nhwc.dtype),
        grid=(N,),
        in_specs=in_specs,
        out_specs=out_spec,
        scratch_shapes=[pltpu.VMEM((H_scr, W_scr, Cp), jnp.float32)],
        compiler_params=pltpu.CompilerParams(
            dimension_semantics=("parallel",),
            # v5e/v6e have 128 MiB physical VMEM; a 64 MiB scoped cap keeps the
            # whole-image block + halo scratch comfortable at larger shapes.
            vmem_limit_bytes=64 * 1024 * 1024),
        cost_estimate=pl.CostEstimate(flops=int(flops),
                                      transcendentals=int(transcendentals),
                                      bytes_accessed=int(bytes_accessed)),
    )(xp, *padded)

    return out_padded[..., :C]


def mkpconv_nchw(x_nchw, params):
    x_nhwc = jnp.transpose(x_nchw, (0, 2, 3, 1))
    out_nhwc = mkpconv_nhwc(x_nhwc, params)
    return jnp.transpose(out_nhwc, (0, 3, 1, 2))


# --------------------------- deterministic params ---------------------------

def make_params(c):
    key = jax.random.PRNGKey(42)
    ks = jax.random.split(key, 16)

    def bn_fold(kg, kb, km, kv):
        gamma = 1.0 + 0.1 * jax.random.normal(kg, (c,), jnp.float32)
        beta = 0.1 * jax.random.normal(kb, (c,), jnp.float32)
        mean = 0.1 * jax.random.normal(km, (c,), jnp.float32)
        var = 0.5 + jnp.abs(jax.random.normal(kv, (c,), jnp.float32))
        scale = gamma * jax.lax.rsqrt(var + 1e-5)
        shift = beta - mean * scale
        return scale.reshape(1, c), shift.reshape(1, c)

    w1 = 0.20 * jax.random.normal(ks[0], (3, 3, c), jnp.float32)      # dw 3x3
    b1 = 0.10 * jax.random.normal(ks[1], (1, 1, c), jnp.float32)
    w2 = jax.random.normal(ks[2], (c, c), jnp.float32) / jnp.sqrt(c)  # 1x1
    s2, t2 = bn_fold(ks[3], ks[4], ks[5], ks[6])
    w3 = 0.10 * jax.random.normal(ks[7], (5, 5, c), jnp.float32)      # dw 5x5
    b3 = 0.10 * jax.random.normal(ks[8], (1, 1, c), jnp.float32)
    w4 = jax.random.normal(ks[9], (c, c), jnp.float32) / jnp.sqrt(c)
    s4, t4 = bn_fold(ks[10], ks[11], ks[12], ks[13])
    w5 = 0.05 * jax.random.normal(ks[14], (7, 7, c), jnp.float32)     # dw 7x7
    b5 = 0.10 * jax.random.normal(ks[15], (1, 1, c), jnp.float32)
    return (w1, b1, w2, s2, t2, w3, b3, w4, s4, t4, w5, b5)


# ------------------------------ pure-JAX reference ---------------------------

def mkpconv_ref_nhwc(x, params):
    (w1, b1, w2, s2, t2, w3, b3, w4, s4, t4, w5, b5) = params
    C = x.shape[-1]
    dn = ("NHWC", "HWIO", "NHWC")

    def dw(xx, w, b, k):
        r = k // 2
        y = jax.lax.conv_general_dilated(
            xx, w[:, :, None, :], (1, 1), ((r, r), (r, r)),
            dimension_numbers=dn, feature_group_count=C)
        return y + b.reshape(1, 1, 1, C)

    def pw(xx, w, s, t):
        y = jax.lax.conv_general_dilated(
            xx, w[None, None, :, :], (1, 1), ((0, 0), (0, 0)),
            dimension_numbers=dn)
        y = y * s.reshape(1, 1, 1, C) + t.reshape(1, 1, 1, C)
        return y * jax.nn.sigmoid(y)

    x1 = dw(x, w1, b1, 3)
    x2 = pw(x1, w2, s2, t2)
    x3 = dw(x2, w3, b3, 5)
    x4 = pw(x3, w4, s4, t4)
    x5 = dw(x4, w5, b5, 7)
    return x5 + x


# ----------------------------------- main ------------------------------------

if __name__ == "__main__":
    N, C, H, W = 2, 8, 16, 16                 # NCHW, as the PyTorch module expects
    key = jax.random.PRNGKey(0)
    x_nchw = jax.random.normal(key, (N, C, H, W), jnp.float32)
    params = make_params(C)

    out_nchw = mkpconv_nchw(x_nchw, params)
    jax.block_until_ready(out_nchw)

    # Correctness check against a pure-f32 JAX reference of the same
    # (eval-mode) math.  The 2e-2 tolerance is set by the bf16 MXU operands of
    # the two 1x1 convs; the f32 depthwise path alone matches at ~1e-5.
    x_nhwc = jnp.transpose(x_nchw, (0, 2, 3, 1))
    ref_nchw = jnp.transpose(mkpconv_ref_nhwc(x_nhwc, params), (0, 3, 1, 2))
    assert out_nchw.shape == (N, C, H, W)
    np.testing.assert_allclose(np.asarray(out_nchw), np.asarray(ref_nchw),
                               rtol=2e-2, atol=2e-2)
    print("KERNEL_OK")
</pallas_src>

<mosaic_0001>
module attributes {stable_mosaic.version = 11 : i64} {
  func.func @mkpconv_kernel(%arg0: i32, %arg1: memref<1x16x16x128xf32, #tpu.memory_space<vmem>>, %arg2: memref<9x128xf32, #tpu.memory_space<vmem>>, %arg3: memref<1x1x128xf32, #tpu.memory_space<vmem>>, %arg4: memref<128x128xbf16, #tpu.memory_space<vmem>>, %arg5: memref<1x128xf32, #tpu.memory_space<vmem>>, %arg6: memref<1x128xf32, #tpu.memory_space<vmem>>, %arg7: memref<25x128xf32, #tpu.memory_space<vmem>>, %arg8: memref<1x1x128xf32, #tpu.memory_space<vmem>>, %arg9: memref<128x128xbf16, #tpu.memory_space<vmem>>, %arg10: memref<1x128xf32, #tpu.memory_space<vmem>>, %arg11: memref<1x128xf32, #tpu.memory_space<vmem>>, %arg12: memref<49x128xf32, #tpu.memory_space<vmem>>, %arg13: memref<1x1x128xf32, #tpu.memory_space<vmem>>, %arg14: memref<1x16x16x128xf32, #tpu.memory_space<vmem>>, %arg15: memref<22x32x128xf32, #tpu.memory_space<vmem>>) attributes {dimension_semantics = [#tpu.dimension_semantics<parallel>], iteration_bounds = array<i64: 2>, scalar_prefetch = 0 : i64, scratch_operands = 1 : i64, tpu.core_type = #tpu.core_type<tc>, window_params = [{transform_indices = @transform_0, window_bounds = array<i64: 1, 16, 16, 128>}, {pipeline_mode = #tpu.pipeline_mode<synchronous>, transform_indices = @transform_1, window_bounds = array<i64: 9, 128>}, {pipeline_mode = #tpu.pipeline_mode<synchronous>, transform_indices = @transform_2, window_bounds = array<i64: 1, 1, 128>}, {pipeline_mode = #tpu.pipeline_mode<synchronous>, transform_indices = @transform_3, window_bounds = array<i64: 128, 128>}, {pipeline_mode = #tpu.pipeline_mode<synchronous>, transform_indices = @transform_4, window_bounds = array<i64: 1, 128>}, {pipeline_mode = #tpu.pipeline_mode<synchronous>, transform_indices = @transform_5, window_bounds = array<i64: 1, 128>}, {pipeline_mode = #tpu.pipeline_mode<synchronous>, transform_indices = @transform_6, window_bounds = array<i64: 25, 128>}, {pipeline_mode = #tpu.pipeline_mode<synchronous>, transform_indices = @transform_7, window_bounds = array<i64: 1, 1, 128>}, {pipeline_mode = #tpu.pipeline_mode<synchronous>, transform_indices = @transform_8, window_bounds = array<i64: 128, 128>}, {pipeline_mode = #tpu.pipeline_mode<synchronous>, transform_indices = @transform_9, window_bounds = array<i64: 1, 128>}, {pipeline_mode = #tpu.pipeline_mode<synchronous>, transform_indices = @transform_10, window_bounds = array<i64: 1, 128>}, {pipeline_mode = #tpu.pipeline_mode<synchronous>, transform_indices = @transform_11, window_bounds = array<i64: 49, 128>}, {pipeline_mode = #tpu.pipeline_mode<synchronous>, transform_indices = @transform_12, window_bounds = array<i64: 1, 1, 128>}, {transform_indices = @transform_13, window_bounds = array<i64: 1, 16, 16, 128>}]} {
    %cst = arith.constant 0.000000e+00 : f32
    %0 = vector.broadcast %cst : f32 to vector<3x32x128xf32>
    %c0 = arith.constant 0 : index
    %c0_0 = arith.constant 0 : index
    %c0_1 = arith.constant 0 : index
    %1 = vector.load %arg15[%c0, %c0_0, %c0_1] : memref<22x32x128xf32, #tpu.memory_space<vmem>>, vector<3x32x128xf32>
    tpu.vector_store %arg15[%c0, %c0_0, %c0_1], %0 {strides = array<i32>} : memref<22x32x128xf32, #tpu.memory_space<vmem>>, vector<3x32x128xf32>,
    %cst_2 = arith.constant 0.000000e+00 : f32
    %2 = vector.broadcast %cst_2 : f32 to vector<3x32x128xf32>
    %c19 = arith.constant 19 : index
    %c0_3 = arith.constant 0 : index
    %c0_4 = arith.constant 0 : index
    %3 = vector.load %arg15[%c19, %c0_3, %c0_4] : memref<22x32x128xf32, #tpu.memory_space<vmem>>, vector<3x32x128xf32>
    tpu.vector_store %arg15[%c19, %c0_3, %c0_4], %2 {strides = array<i32>} : memref<22x32x128xf32, #tpu.memory_space<vmem>>, vector<3x32x128xf32>,
    %cst_5 = arith.constant 0.000000e+00 : f32
    %4 = vector.broadcast %cst_5 : f32 to vector<16x8x128xf32>
    %c3 = arith.constant 3 : index
    %c0_6 = arith.constant 0 : index
    %c0_7 = arith.constant 0 : index
    %5 = vector.load %arg15[%c3, %c0_6, %c0_7] : memref<22x32x128xf32, #tpu.memory_space<vmem>>, vector<16x8x128xf32>
    tpu.vector_store %arg15[%c3, %c0_6, %c0_7], %4 {strides = array<i32>} : memref<22x32x128xf32, #tpu.memory_space<vmem>>, vector<16x8x128xf32>,
    %cst_8 = arith.constant 0.000000e+00 : f32
    %6 = vector.broadcast %cst_8 : f32 to vector<16x8x128xf32>
    %c3_9 = arith.constant 3 : index
    %c24 = arith.constant 24 : index
    %c0_10 = arith.constant 0 : index
    %7 = vector.load %arg15[%c3_9, %c24, %c0_10] : memref<22x32x128xf32, #tpu.memory_space<vmem>>, vector<16x8x128xf32>
    tpu.vector_store %arg15[%c3_9, %c24, %c0_10], %6 {strides = array<i32>} : memref<22x32x128xf32, #tpu.memory_space<vmem>>, vector<16x8x128xf32>,
    %c0_11 = arith.constant 0 : index
    %c0_12 = arith.constant 0 : index
    %c0_13 = arith.constant 0 : index
    %c0_14 = arith.constant 0 : index
    %8 = vector.load %arg1[%c0_11, %c0_12, %c0_13, %c0_14] : memref<1x16x16x128xf32, #tpu.memory_space<vmem>>, vector<1x16x16x128xf32>
    %9 = vector.shape_cast %8 : vector<1x16x16x128xf32> to vector<16x16x128xf32>
    %c3_15 = arith.constant 3 : index
    %c8 = arith.constant 8 : index
    %c0_16 = arith.constant 0 : index
    %10 = vector.load %arg15[%c3_15, %c8, %c0_16] : memref<22x32x128xf32, #tpu.memory_space<vmem>>, vector<16x16x128xf32>
    tpu.vector_store %arg15[%c3_15, %c8, %c0_16], %9 {strides = array<i32>} : memref<22x32x128xf32, #tpu.memory_space<vmem>>, vector<16x16x128xf32>,
    %c0_17 = arith.constant 0 : index
    %c0_18 = arith.constant 0 : index
    %11 = vector.load %arg2[%c0_17, %c0_18] : memref<9x128xf32, #tpu.memory_space<vmem>>, vector<9x128xf32>
    %c2 = arith.constant 2 : index
    %c7 = arith.constant 7 : index
    %c0_19 = arith.constant 0 : index
    %12 = vector.load %arg15[%c2, %c7, %c0_19] : memref<22x32x128xf32, #tpu.memory_space<vmem>>, vector<18x16x128xf32>
    %13 = vector.extract_strided_slice %12 {offsets = [0, 0, 0], sizes = [16, 16, 128], strides = [1, 1, 1]} : vector<18x16x128xf32> to vector<16x16x128xf32>
    %14 = vector.extract_strided_slice %11 {offsets = [0, 0], sizes = [1, 128], strides = [1, 1]} : vector<9x128xf32> to vector<1x128xf32>
    %15 = vector.shape_cast %14 : vector<1x128xf32> to vector<128xf32>
    %16 = vector.shape_cast %15 : vector<128xf32> to vector<1x1x128xf32>
    %17 = vector.broadcast %16 : vector<1x1x128xf32> to vector<16x16x128xf32>
    %18 = arith.mulf %13, %17 : vector<16x16x128xf32>
    %19 = vector.extract_strided_slice %12 {offsets = [1, 0, 0], sizes = [16, 16, 128], strides = [1, 1, 1]} : vector<18x16x128xf32> to vector<16x16x128xf32>
    %20 = vector.extract_strided_slice %11 {offsets = [3, 0], sizes = [1, 128], strides = [1, 1]} : vector<9x128xf32> to vector<1x128xf32>
    %21 = vector.shape_cast %20 : vector<1x128xf32> to vector<128xf32>
    %22 = vector.shape_cast %21 : vector<128xf32> to vector<1x1x128xf32>
    %23 = vector.broadcast %22 : vector<1x1x128xf32> to vector<16x16x128xf32>
    %24 = arith.mulf %19, %23 : vector<16x16x128xf32>
    %25 = arith.addf %18, %24 : vector<16x16x128xf32>
    %26 = vector.extract_strided_slice %12 {offsets = [2, 0, 0], sizes = [16, 16, 128], strides = [1, 1, 1]} : vector<18x16x128xf32> to vector<16x16x128xf32>
    %27 = vector.extract_strided_slice %11 {offsets = [6, 0], sizes = [1, 128], strides = [1, 1]} : vector<9x128xf32> to vector<1x128xf32>
    %28 = vector.shape_cast %27 : vector<1x128xf32> to vector<128xf32>
    %29 = vector.shape_cast %28 : vector<128xf32> to vector<1x1x128xf32>
    %30 = vector.broadcast %29 : vector<1x1x128xf32> to vector<16x16x128xf32>
    %31 = arith.mulf %26, %30 : vector<16x16x128xf32>
    %32 = arith.addf %25, %31 : vector<16x16x128xf32>
    %c2_20 = arith.constant 2 : index
    %c8_21 = arith.constant 8 : index
    %c0_22 = arith.constant 0 : index
    %33 = vector.load %arg15[%c2_20, %c8_21, %c0_22] : memref<22x32x128xf32, #tpu.memory_space<vmem>>, vector<18x16x128xf32>
    %34 = vector.extract_strided_slice %33 {offsets = [0, 0, 0], sizes = [16, 16, 128], strides = [1, 1, 1]} : vector<18x16x128xf32> to vector<16x16x128xf32>
    %35 = vector.extract_strided_slice %11 {offsets = [1, 0], sizes = [1, 128], strides = [1, 1]} : vector<9x128xf32> to vector<1x128xf32>
    %36 = vector.shape_cast %35 : vector<1x128xf32> to vector<128xf32>
    %37 = vector.shape_cast %36 : vector<128xf32> to vector<1x1x128xf32>
    %38 = vector.broadcast %37 : vector<1x1x128xf32> to vector<16x16x128xf32>
    %39 = arith.mulf %34, %38 : vector<16x16x128xf32>
    %40 = vector.extract_strided_slice %33 {offsets = [1, 0, 0], sizes = [16, 16, 128], strides = [1, 1, 1]} : vector<18x16x128xf32> to vector<16x16x128xf32>
    %41 = vector.extract_strided_slice %11 {offsets = [4, 0], sizes = [1, 128], strides = [1, 1]} : vector<9x128xf32> to vector<1x128xf32>
    %42 = vector.shape_cast %41 : vector<1x128xf32> to vector<128xf32>
    %43 = vector.shape_cast %42 : vector<128xf32> to vector<1x1x128xf32>
    %44 = vector.broadcast %43 : vector<1x1x128xf32> to vector<16x16x128xf32>
    %45 = arith.mulf %40, %44 : vector<16x16x128xf32>
    %46 = arith.addf %39, %45 : vector<16x16x128xf32>
    %47 = vector.extract_strided_slice %33 {offsets = [2, 0, 0], sizes = [16, 16, 128], strides = [1, 1, 1]} : vector<18x16x128xf32> to vector<16x16x128xf32>
    %48 = vector.extract_strided_slice %11 {offsets = [7, 0], sizes = [1, 128], strides = [1, 1]} : vector<9x128xf32> to vector<1x128xf32>
    %49 = vector.shape_cast %48 : vector<1x128xf32> to vector<128xf32>
    %50 = vector.shape_cast %49 : vector<128xf32> to vector<1x1x128xf32>
    %51 = vector.broadcast %50 : vector<1x1x128xf32> to vector<16x16x128xf32>
    %52 = arith.mulf %47, %51 : vector<16x16x128xf32>
    %53 = arith.addf %46, %52 : vector<16x16x128xf32>
    %c2_23 = arith.constant 2 : index
    %c9 = arith.constant 9 : index
    %c0_24 = arith.constant 0 : index
    %54 = vector.load %arg15[%c2_23, %c9, %c0_24] : memref<22x32x128xf32, #tpu.memory_space<vmem>>, vector<18x16x128xf32>
    %55 = vector.extract_strided_slice %54 {offsets = [0, 0, 0], sizes = [16, 16, 128], strides = [1, 1, 1]} : vector<18x16x128xf32> to vector<16x16x128xf32>
    %56 = vector.extract_strided_slice %11 {offsets = [2, 0], sizes = [1, 128], strides = [1, 1]} : vector<9x128xf32> to vector<1x128xf32>
    %57 = vector.shape_cast %56 : vector<1x128xf32> to vector<128xf32>
    %58 = vector.shape_cast %57 : vector<128xf32> to vector<1x1x128xf32>
    %59 = vector.broadcast %58 : vector<1x1x128xf32> to vector<16x16x128xf32>
    %60 = arith.mulf %55, %59 : vector<16x16x128xf32>
    %61 = vector.extract_strided_slice %54 {offsets = [1, 0, 0], sizes = [16, 16, 128], strides = [1, 1, 1]} : vector<18x16x128xf32> to vector<16x16x128xf32>
    %62 = vector.extract_strided_slice %11 {offsets = [5, 0], sizes = [1, 128], strides = [1, 1]} : vector<9x128xf32> to vector<1x128xf32>
    %63 = vector.shape_cast %62 : vector<1x128xf32> to vector<128xf32>
    %64 = vector.shape_cast %63 : vector<128xf32> to vector<1x1x128xf32>
    %65 = vector.broadcast %64 : vector<1x1x128xf32> to vector<16x16x128xf32>
    %66 = arith.mulf %61, %65 : vector<16x16x128xf32>
    %67 = arith.addf %60, %66 : vector<16x16x128xf32>
    %68 = vector.extract_strided_slice %54 {offsets = [2, 0, 0], sizes = [16, 16, 128], strides = [1, 1, 1]} : vector<18x16x128xf32> to vector<16x16x128xf32>
    %69 = vector.extract_strided_slice %11 {offsets = [8, 0], sizes = [1, 128], strides = [1, 1]} : vector<9x128xf32> to vector<1x128xf32>
    %70 = vector.shape_cast %69 : vector<1x128xf32> to vector<128xf32>
    %71 = vector.shape_cast %70 : vector<128xf32> to vector<1x1x128xf32>
    %72 = vector.broadcast %71 : vector<1x1x128xf32> to vector<16x16x128xf32>
    %73 = arith.mulf %68, %72 : vector<16x16x128xf32>
    %74 = arith.addf %67, %73 : vector<16x16x128xf32>
    %75 = arith.addf %32, %53 : vector<16x16x128xf32>
    %76 = arith.addf %75, %74 : vector<16x16x128xf32>
    %c0_25 = arith.constant 0 : index
    %c0_26 = arith.constant 0 : index
    %c0_27 = arith.constant 0 : index
    %77 = vector.load %arg3[%c0_25, %c0_26, %c0_27] : memref<1x1x128xf32, #tpu.memory_space<vmem>>, vector<1x1x128xf32>
    %78 = vector.broadcast %77 : vector<1x1x128xf32> to vector<16x16x128xf32>
    %79 = arith.addf %76, %78 : vector<16x16x128xf32>
    %80 = vector.shape_cast %79 : vector<16x16x128xf32> to vector<256x128xf32>
    %81 = arith.truncf %80 : vector<256x128xf32> to vector<256x128xbf16>
    %c0_28 = arith.constant 0 : index
    %c0_29 = arith.constant 0 : index
    %82 = vector.load %arg4[%c0_28, %c0_29] : memref<128x128xbf16, #tpu.memory_space<vmem>>, vector<128x128xbf16>
    %cst_30 = arith.constant dense<0.000000e+00> : vector<256x128xf32>
    %83 = tpu.matmul %81, %82, %cst_30 {dimension_numbers = #tpu.dot_dimension_numbers<[1], [0], [0], [1], [0, 0, 1, 1], [], []>} : vector<256x128xbf16>, vector<128x128xbf16>, vector<256x128xf32> -> vector<256x128xf32>
    %c0_31 = arith.constant 0 : index
    %c0_32 = arith.constant 0 : index
    %84 = vector.load %arg5[%c0_31, %c0_32] : memref<1x128xf32, #tpu.memory_space<vmem>>, vector<1x128xf32>
    %85 = vector.broadcast %84 : vector<1x128xf32> to vector<256x128xf32>
    %86 = arith.mulf %83, %85 : vector<256x128xf32>
    %c0_33 = arith.constant 0 : index
    %c0_34 = arith.constant 0 : index
    %87 = vector.load %arg6[%c0_33, %c0_34] : memref<1x128xf32, #tpu.memory_space<vmem>>, vector<1x128xf32>
    %88 = vector.broadcast %87 : vector<1x128xf32> to vector<256x128xf32>
    %89 = arith.addf %86, %88 : vector<256x128xf32>
    %90 = arith.negf %89 : vector<256x128xf32>
    %91 = math.exp %90 : vector<256x128xf32>
    %cst_35 = arith.constant 1.000000e+00 : f32
    %92 = vector.broadcast %cst_35 : f32 to vector<256x128xf32>
    %93 = arith.addf %92, %91 : vector<256x128xf32>
    %94 = arith.divf %92, %93 : vector<256x128xf32>
    %95 = arith.mulf %89, %94 : vector<256x128xf32>
    %96 = vector.shape_cast %95 : vector<256x128xf32> to vector<16x16x128xf32>
    %c3_36 = arith.constant 3 : index
    %c8_37 = arith.constant 8 : index
    %c0_38 = arith.constant 0 : index
    %97 = vector.load %arg15[%c3_36, %c8_37, %c0_38] : memref<22x32x128xf32, #tpu.memory_space<vmem>>, vector<16x16x128xf32>
    tpu.vector_store %arg15[%c3_36, %c8_37, %c0_38], %96 {strides = array<i32>} : memref<22x32x128xf32, #tpu.memory_space<vmem>>, vector<16x16x128xf32>,
    %c0_39 = arith.constant 0 : index
    %c0_40 = arith.constant 0 : index
    %98 = vector.load %arg7[%c0_39, %c0_40] : memref<25x128xf32, #tpu.memory_space<vmem>>, vector<25x128xf32>
    %c1 = arith.constant 1 : index
    %c6 = arith.constant 6 : index
    %c0_41 = arith.constant 0 : index
    %99 = vector.load %arg15[%c1, %c6, %c0_41] : memref<22x32x128xf32, #tpu.memory_space<vmem>>, vector<20x16x128xf32>
    %100 = vector.extract_strided_slice %99 {offsets = [0, 0, 0], sizes = [16, 16, 128], strides = [1, 1, 1]} : vector<20x16x128xf32> to vector<16x16x128xf32>
    %101 = vector.extract_strided_slice %98 {offsets = [0, 0], sizes = [1, 128], strides = [1, 1]} : vector<25x128xf32> to vector<1x128xf32>
    %102 = vector.shape_cast %101 : vector<1x128xf32> to vector<128xf32>
    %103 = vector.shape_cast %102 : vector<128xf32> to vector<1x1x128xf32>
    %104 = vector.broadcast %103 : vector<1x1x128xf32> to vector<16x16x128xf32>
    %105 = arith.mulf %100, %104 : vector<16x16x128xf32>
    %106 = vector.extract_strided_slice %99 {offsets = [1, 0, 0], sizes = [16, 16, 128], strides = [1, 1, 1]} : vector<20x16x128xf32> to vector<16x16x128xf32>
    %107 = vector.extract_strided_slice %98 {offsets = [5, 0], sizes = [1, 128], strides = [1, 1]} : vector<25x128xf32> to vector<1x128xf32>
    %108 = vector.shape_cast %107 : vector<1x128xf32> to vector<128xf32>
    %109 = vector.shape_cast %108 : vector<128xf32> to vector<1x1x128xf32>
    %110 = vector.broadcast %109 : vector<1x1x128xf32> to vector<16x16x128xf32>
    %111 = arith.mulf %106, %110 : vector<16x16x128xf32>
    %112 = arith.addf %105, %111 : vector<16x16x128xf32>
    %113 = vector.extract_strided_slice %99 {offsets = [2, 0, 0], sizes = [16, 16, 128], strides = [1, 1, 1]} : vector<20x16x128xf32> to vector<16x16x128xf32>
    %114 = vector.extract_strided_slice %98 {offsets = [10, 0], sizes = [1, 128], strides = [1, 1]} : vector<25x128xf32> to vector<1x128xf32>
    %115 = vector.shape_cast %114 : vector<1x128xf32> to vector<128xf32>
    %116 = vector.shape_cast %115 : vector<128xf32> to vector<1x1x128xf32>
    %117 = vector.broadcast %116 : vector<1x1x128xf32> to vector<16x16x128xf32>
    %118 = arith.mulf %113, %117 : vector<16x16x128xf32>
    %119 = arith.addf %112, %118 : vector<16x16x128xf32>
    %120 = vector.extract_strided_slice %99 {offsets = [3, 0, 0], sizes = [16, 16, 128], strides = [1, 1, 1]} : vector<20x16x128xf32> to vector<16x16x128xf32>
    %121 = vector.extract_strided_slice %98 {offsets = [15, 0], sizes = [1, 128], strides = [1, 1]} : vector<25x128xf32> to vector<1x128xf32>
    %122 = vector.shape_cast %121 : vector<1x128xf32> to vector<128xf32>
    %123 = vector.shape_cast %122 : vector<128xf32> to vector<1x1x128xf32>
    %124 = vector.broadcast %123 : vector<1x1x128xf32> to vector<16x16x128xf32>
    %125 = arith.mulf %120, %124 : vector<16x16x128xf32>
    %126 = arith.addf %119, %125 : vector<16x16x128xf32>
    %127 = vector.extract_strided_slice %99 {offsets = [4, 0, 0], sizes = [16, 16, 128], strides = [1, 1, 1]} : vector<20x16x128xf32> to vector<16x16x128xf32>
    %128 = vector.extract_strided_slice %98 {offsets = [20, 0], sizes = [1, 128], strides = [1, 1]} : vector<25x128xf32> to vector<1x128xf32>
    %129 = vector.shape_cast %128 : vector<1x128xf32> to vector<128xf32>
    %130 = vector.shape_cast %129 : vector<128xf32> to vector<1x1x128xf32>
    %131 = vector.broadcast %130 : vector<1x1x128xf32> to vector<16x16x128xf32>
    %132 = arith.mulf %127, %131 : vector<16x16x128xf32>
    %133 = arith.addf %126, %132 : vector<16x16x128xf32>
    %c1_42 = arith.constant 1 : index
    %c7_43 = arith.constant 7 : index
    %c0_44 = arith.constant 0 : index
    %134 = vector.load %arg15[%c1_42, %c7_43, %c0_44] : memref<22x32x128xf32, #tpu.memory_space<vmem>>, vector<20x16x128xf32>
    %135 = vector.extract_strided_slice %134 {offsets = [0, 0, 0], sizes = [16, 16, 128], strides = [1, 1, 1]} : vector<20x16x128xf32> to vector<16x16x128xf32>
    %136 = vector.extract_strided_slice %98 {offsets = [1, 0], sizes = [1, 128], strides = [1, 1]} : vector<25x128xf32> to vector<1x128xf32>
    %137 = vector.shape_cast %136 : vector<1x128xf32> to vector<128xf32>
    %138 = vector.shape_cast %137 : vector<128xf32> to vector<1x1x128xf32>
    %139 = vector.broadcast %138 : vector<1x1x128xf32> to vector<16x16x128xf32>
    %140 = arith.mulf %135, %139 : vector<16x16x128xf32>
    %141 = vector.extract_strided_slice %134 {offsets = [1, 0, 0], sizes = [16, 16, 128], strides = [1, 1, 1]} : vector<20x16x128xf32> to vector<16x16x128xf32>
    %142 = vector.extract_strided_slice %98 {offsets = [6, 0], sizes = [1, 128], strides = [1, 1]} : vector<25x128xf32> to vector<1x128xf32>
    %143 = vector.shape_cast %142 : vector<1x128xf32> to vector<128xf32>
    %144 = vector.shape_cast %143 : vector<128xf32> to vector<1x1x128xf32>
    %145 = vector.broadcast %144 : vector<1x1x128xf32> to vector<16x16x128xf32>
    %146 = arith.mulf %141, %145 : vector<16x16x128xf32>
    %147 = arith.addf %140, %146 : vector<16x16x128xf32>
    %148 = vector.extract_strided_slice %134 {offsets = [2, 0, 0], sizes = [16, 16, 128], strides = [1, 1, 1]} : vector<20x16x128xf32> to vector<16x16x128xf32>
    %149 = vector.extract_strided_slice %98 {offsets = [11, 0], sizes = [1, 128], strides = [1, 1]} : vector<25x128xf32> to vector<1x128xf32>
    %150 = vector.shape_cast %149 : vector<1x128xf32> to vector<128xf32>
    %151 = vector.shape_cast %150 : vector<128xf32> to vector<1x1x128xf32>
    %152 = vector.broadcast %151 : vector<1x1x128xf32> to vector<16x16x128xf32>
    %153 = arith.mulf %148, %152 : vector<16x16x128xf32>
    %154 = arith.addf %147, %153 : vector<16x16x128xf32>
    %155 = vector.extract_strided_slice %134 {offsets = [3, 0, 0], sizes = [16, 16, 128], strides = [1, 1, 1]} : vector<20x16x128xf32> to vector<16x16x128xf32>
    %156 = vector.extract_strided_slice %98 {offsets = [16, 0], sizes = [1, 128], strides = [1, 1]} : vector<25x128xf32> to vector<1x128xf32>
    %157 = vector.shape_cast %156 : vector<1x128xf32> to vector<128xf32>
    %158 = vector.shape_cast %157 : vector<128xf32> to vector<1x1x128xf32>
    %159 = vector.broadcast %158 : vector<1x1x128xf32> to vector<16x16x128xf32>
    %160 = arith.mulf %155, %159 : vector<16x16x128xf32>
    %161 = arith.addf %154, %160 : vector<16x16x128xf32>
    %162 = vector.extract_strided_slice %134 {offsets = [4, 0, 0], sizes = [16, 16, 128], strides = [1, 1, 1]} : vector<20x16x128xf32> to vector<16x16x128xf32>
    %163 = vector.extract_strided_slice %98 {offsets = [21, 0], sizes = [1, 128], strides = [1, 1]} : vector<25x128xf32> to vector<1x128xf32>
    %164 = vector.shape_cast %163 : vector<1x128xf32> to vector<128xf32>
    %165 = vector.shape_cast %164 : vector<128xf32> to vector<1x1x128xf32>
    %166 = vector.broadcast %165 : vector<1x1x128xf32> to vector<16x16x128xf32>
    %167 = arith.mulf %162, %166 : vector<16x16x128xf32>
    %168 = arith.addf %161, %167 : vector<16x16x128xf32>
    %c1_45 = arith.constant 1 : index
    %c8_46 = arith.constant 8 : index
    %c0_47 = arith.constant 0 : index
    %169 = vector.load %arg15[%c1_45, %c8_46, %c0_47] : memref<22x32x128xf32, #tpu.memory_space<vmem>>, vector<20x16x128xf32>
    %170 = vector.extract_strided_slice %169 {offsets = [0, 0, 0], sizes = [16, 16, 128], strides = [1, 1, 1]} : vector<20x16x128xf32> to vector<16x16x128xf32>
    %171 = vector.extract_strided_slice %98 {offsets = [2, 0], sizes = [1, 128], strides = [1, 1]} : vector<25x128xf32> to vector<1x128xf32>
    %172 = vector.shape_cast %171 : vector<1x128xf32> to vector<128xf32>
    %173 = vector.shape_cast %172 : vector<128xf32> to vector<1x1x128xf32>
    %174 = vector.broadcast %173 : vector<1x1x128xf32> to vector<16x16x128xf32>
    %175 = arith.mulf %170, %174 : vector<16x16x128xf32>
    %176 = vector.extract_strided_slice %169 {offsets = [1, 0, 0], sizes = [16, 16, 128], strides = [1, 1, 1]} : vector<20x16x128xf32> to vector<16x16x128xf32>
    %177 = vector.extract_strided_slice %98 {offsets = [7, 0], sizes = [1, 128], strides = [1, 1]} : vector<25x128xf32> to vector<1x128xf32>
    %178 = vector.shape_cast %177 : vector<1x128xf32> to vector<128xf32>
    %179 = vector.shape_cast %178 : vector<128xf32> to vector<1x1x128xf32>
    %180 = vector.broadcast %179 : vector<1x1x128xf32> to vector<16x16x128xf32>
    %181 = arith.mulf %176, %180 : vector<16x16x128xf32>
    %182 = arith.addf %175, %181 : vector<16x16x128xf32>
    %183 = vector.extract_strided_slice %169 {offsets = [2, 0, 0], sizes = [16, 16, 128], strides = [1, 1, 1]} : vector<20x16x128xf32> to vector<16x16x128xf32>
    %184 = vector.extract_strided_slice %98 {offsets = [12, 0], sizes = [1, 128], strides = [1, 1]} : vector<25x128xf32> to vector<1x128xf32>
    %185 = vector.shape_cast %184 : vector<1x128xf32> to vector<128xf32>
    %186 = vector.shape_cast %185 : vector<128xf32> to vector<1x1x128xf32>
    %187 = vector.broadcast %186 : vector<1x1x128xf32> to vector<16x16x128xf32>
    %188 = arith.mulf %183, %187 : vector<16x16x128xf32>
    %189 = arith.addf %182, %188 : vector<16x16x128xf32>
    %190 = vector.extract_strided_slice %169 {offsets = [3, 0, 0], sizes = [16, 16, 128], strides = [1, 1, 1]} : vector<20x16x128xf32> to vector<16x16x128xf32>
    %191 = vector.extract_strided_slice %98 {offsets = [17, 0], sizes = [1, 128], strides = [1, 1]} : vector<25x128xf32> to vector<1x128xf32>
    %192 = vector.shape_cast %191 : vector<1x128xf32> to vector<128xf32>
    %193 = vector.shape_cast %192 : vector<128xf32> to vector<1x1x128xf32>
    %194 = vector.broadcast %193 : vector<1x1x128xf32> to vector<16x16x128xf32>
    %195 = arith.mulf %190, %194 : vector<16x16x128xf32>
    %196 = arith.addf %189, %195 : vector<16x16x128xf32>
    %197 = vector.extract_strided_slice %169 {offsets = [4, 0, 0], sizes = [16, 16, 128], strides = [1, 1, 1]} : vector<20x16x128xf32> to vector<16x16x128xf32>
    %198 = vector.extract_strided_slice %98 {offsets = [22, 0], sizes = [1, 128], strides = [1, 1]} : vector<25x128xf32> to vector<1x128xf32>
    %199 = vector.shape_cast %198 : vector<1x128xf32> to vector<128xf32>
    %200 = vector.shape_cast %199 : vector<128xf32> to vector<1x1x128xf32>
    %201 = vector.broadcast %200 : vector<1x1x128xf32> to vector<16x16x128xf32>
    %202 = arith.mulf %197, %201 : vector<16x16x128xf32>
    %203 = arith.addf %196, %202 : vector<16x16x128xf32>
    %c1_48 = arith.constant 1 : index
    %c9_49 = arith.constant 9 : index
    %c0_50 = arith.constant 0 : index
    %204 = vector.load %arg15[%c1_48, %c9_49, %c0_50] : memref<22x32x128xf32, #tpu.memory_space<vmem>>, vector<20x16x128xf32>
    %205 = vector.extract_strided_slice %204 {offsets = [0, 0, 0], sizes = [16, 16, 128], strides = [1, 1, 1]} : vector<20x16x128xf32> to vector<16x16x128xf32>
    %206 = vector.extract_strided_slice %98 {offsets = [3, 0], sizes = [1, 128], strides = [1, 1]} : vector<25x128xf32> to vector<1x128xf32>
    %207 = vector.shape_cast %206 : vector<1x128xf32> to vector<128xf32>
    %208 = vector.shape_cast %207 : vector<128xf32> to vector<1x1x128xf32>
    %209 = vector.broadcast %208 : vector<1x1x128xf32> to vector<16x16x128xf32>
    %210 = arith.mulf %205, %209 : vector<16x16x128xf32>
    %211 = vector.extract_strided_slice %204 {offsets = [1, 0, 0], sizes = [16, 16, 128], strides = [1, 1, 1]} : vector<20x16x128xf32> to vector<16x16x128xf32>
    %212 = vector.extract_strided_slice %98 {offsets = [8, 0], sizes = [1, 128], strides = [1, 1]} : vector<25x128xf32> to vector<1x128xf32>
    %213 = vector.shape_cast %212 : vector<1x128xf32> to vector<128xf32>
    %214 = vector.shape_cast %213 : vector<128xf32> to vector<1x1x128xf32>
    %215 = vector.broadcast %214 : vector<1x1x128xf32> to vector<16x16x128xf32>
    %216 = arith.mulf %211, %215 : vector<16x16x128xf32>
    %217 = arith.addf %210, %216 : vector<16x16x128xf32>
    %218 = vector.extract_strided_slice %204 {offsets = [2, 0, 0], sizes = [16, 16, 128], strides = [1, 1, 1]} : vector<20x16x128xf32> to vector<16x16x128xf32>
    %219 = vector.extract_strided_slice %98 {offsets = [13, 0], sizes = [1, 128], strides = [1, 1]} : vector<25x128xf32> to vector<1x128xf32>
    %220 = vector.shape_cast %219 : vector<1x128xf32> to vector<128xf32>
    %221 = vector.shape_cast %220 : vector<128xf32> to vector<1x1x128xf32>
    %222 = vector.broadcast %221 : vector<1x1x128xf32> to vector<16x16x128xf32>
    %223 = arith.mulf %218, %222 : vector<16x16x128xf32>
    %224 = arith.addf %217, %223 : vector<16x16x128xf32>
    %225 = vector.extract_strided_slice %204 {offsets = [3, 0, 0], sizes = [16, 16, 128], strides = [1, 1, 1]} : vector<20x16x128xf32> to vector<16x16x128xf32>
    %226 = vector.extract_strided_slice %98 {offsets = [18, 0], sizes = [1, 128], strides = [1, 1]} : vector<25x128xf32> to vector<1x128xf32>
    %227 = vector.shape_cast %226 : vector<1x128xf32> to vector<128xf32>
    %228 = vector.shape_cast %227 : vector<128xf32> to vector<1x1x128xf32>
    %229 = vector.broadcast %228 : vector<1x1x128xf32> to vector<16x16x128xf32>
    %230 = arith.mulf %225, %229 : vector<16x16x128xf32>
    %231 = arith.addf %224, %230 : vector<16x16x128xf32>
    %232 = vector.extract_strided_slice %204 {offsets = [4, 0, 0], sizes = [16, 16, 128], strides = [1, 1, 1]} : vector<20x16x128xf32> to vector<16x16x128xf32>
    %233 = vector.extract_strided_slice %98 {offsets = [23, 0], sizes = [1, 128], strides = [1, 1]} : vector<25x128xf32> to vector<1x128xf32>
    %234 = vector.shape_cast %233 : vector<1x128xf32> to vector<128xf32>
    %235 = vector.shape_cast %234 : vector<128xf32> to vector<1x1x128xf32>
    %236 = vector.broadcast %235 : vector<1x1x128xf32> to vector<16x16x128xf32>
    %237 = arith.mulf %232, %236 : vector<16x16x128xf32>
    %238 = arith.addf %231, %237 : vector<16x16x128xf32>
    %c1_51 = arith.constant 1 : index
    %c10 = arith.constant 10 : index
    %c0_52 = arith.constant 0 : index
    %239 = vector.load %arg15[%c1_51, %c10, %c0_52] : memref<22x32x128xf32, #tpu.memory_space<vmem>>, vector<20x16x128xf32>
    %240 = vector.extract_strided_slice %239 {offsets = [0, 0, 0], sizes = [16, 16, 128], strides = [1, 1, 1]} : vector<20x16x128xf32> to vector<16x16x128xf32>
    %241 = vector.extract_strided_slice %98 {offsets = [4, 0], sizes = [1, 128], strides = [1, 1]} : vector<25x128xf32> to vector<1x128xf32>
    %242 = vector.shape_cast %241 : vector<1x128xf32> to vector<128xf32>
    %243 = vector.shape_cast %242 : vector<128xf32> to vector<1x1x128xf32>
    %244 = vector.broadcast %243 : vector<1x1x128xf32> to vector<16x16x128xf32>
    %245 = arith.mulf %240, %244 : vector<16x16x128xf32>
    %246 = vector.extract_strided_slice %239 {offsets = [1, 0, 0], sizes = [16, 16, 128], strides = [1, 1, 1]} : vector<20x16x128xf32> to vector<16x16x128xf32>
    %247 = vector.extract_strided_slice %98 {offsets = [9, 0], sizes = [1, 128], strides = [1, 1]} : vector<25x128xf32> to vector<1x128xf32>
    %248 = vector.shape_cast %247 : vector<1x128xf32> to vector<128xf32>
    %249 = vector.shape_cast %248 : vector<128xf32> to vector<1x1x128xf32>
    %250 = vector.broadcast %249 : vector<1x1x128xf32> to vector<16x16x128xf32>
    %251 = arith.mulf %246, %250 : vector<16x16x128xf32>
    %252 = arith.addf %245, %251 : vector<16x16x128xf32>
    %253 = vector.extract_strided_slice %239 {offsets = [2, 0, 0], sizes = [16, 16, 128], strides = [1, 1, 1]} : vector<20x16x128xf32> to vector<16x16x128xf32>
    %254 = vector.extract_strided_slice %98 {offsets = [14, 0], sizes = [1, 128], strides = [1, 1]} : vector<25x128xf32> to vector<1x128xf32>
    %255 = vector.shape_cast %254 : vector<1x128xf32> to vector<128xf32>
    %256 = vector.shape_cast %255 : vector<128xf32> to vector<1x1x128xf32>
    %257 = vector.broadcast %256 : vector<1x1x128xf32> to vector<16x16x128xf32>
    %258 = arith.mulf %253, %257 : vector<16x16x128xf32>
    %259 = arith.addf %252, %258 : vector<16x16x128xf32>
    %260 = vector.extract_strided_slice %239 {offsets = [3, 0, 0], sizes = [16, 16, 128], strides = [1, 1, 1]} : vector<20x16x128xf32> to vector<16x16x128xf32>
    %261 = vector.extract_strided_slice %98 {offsets = [19, 0], sizes = [1, 128], strides = [1, 1]} : vector<25x128xf32> to vector<1x128xf32>
    %262 = vector.shape_cast %261 : vector<1x128xf32> to vector<128xf32>
    %263 = vector.shape_cast %262 : vector<128xf32> to vector<1x1x128xf32>
    %264 = vector.broadcast %263 : vector<1x1x128xf32> to vector<16x16x128xf32>
    %265 = arith.mulf %260, %264 : vector<16x16x128xf32>
    %266 = arith.addf %259, %265 : vector<16x16x128xf32>
    %267 = vector.extract_strided_slice %239 {offsets = [4, 0, 0], sizes = [16, 16, 128], strides = [1, 1, 1]} : vector<20x16x128xf32> to vector<16x16x128xf32>
    %268 = vector.extract_strided_slice %98 {offsets = [24, 0], sizes = [1, 128], strides = [1, 1]} : vector<25x128xf32> to vector<1x128xf32>
    %269 = vector.shape_cast %268 : vector<1x128xf32> to vector<128xf32>
    %270 = vector.shape_cast %269 : vector<128xf32> to vector<1x1x128xf32>
    %271 = vector.broadcast %270 : vector<1x1x128xf32> to vector<16x16x128xf32>
    %272 = arith.mulf %267, %271 : vector<16x16x128xf32>
    %273 = arith.addf %266, %272 : vector<16x16x128xf32>
    %274 = arith.addf %133, %168 : vector<16x16x128xf32>
    %275 = arith.addf %203, %238 : vector<16x16x128xf32>
    %276 = arith.addf %274, %275 : vector<16x16x128xf32>
    %277 = arith.addf %276, %273 : vector<16x16x128xf32>
    %c0_53 = arith.constant 0 : index
    %c0_54 = arith.constant 0 : index
    %c0_55 = arith.constant 0 : index
    %278 = vector.load %arg8[%c0_53, %c0_54, %c0_55] : memref<1x1x128xf32, #tpu.memory_space<vmem>>, vector<1x1x128xf32>
    %279 = vector.broadcast %278 : vector<1x1x128xf32> to vector<16x16x128xf32>
    %280 = arith.addf %277, %279 : vector<16x16x128xf32>
    %281 = vector.shape_cast %280 : vector<16x16x128xf32> to vector<256x128xf32>
    %282 = arith.truncf %281 : vector<256x128xf32> to vector<256x128xbf16>
    %c0_56 = arith.constant 0 : index
    %c0_57 = arith.constant 0 : index
    %283 = vector.load %arg9[%c0_56, %c0_57] : memref<128x128xbf16, #tpu.memory_space<vmem>>, vector<128x128xbf16>
    %cst_58 = arith.constant dense<0.000000e+00> : vector<256x128xf32>
    %284 = tpu.matmul %282, %283, %cst_58 {dimension_numbers = #tpu.dot_dimension_numbers<[1], [0], [0], [1], [0, 0, 1, 1], [], []>} : vector<256x128xbf16>, vector<128x128xbf16>, vector<256x128xf32> -> vector<256x128xf32>
    %c0_59 = arith.constant 0 : index
    %c0_60 = arith.constant 0 : index
    %285 = vector.load %arg10[%c0_59, %c0_60] : memref<1x128xf32, #tpu.memory_space<vmem>>, vector<1x128xf32>
    %286 = vector.broadcast %285 : vector<1x128xf32> to vector<256x128xf32>
    %287 = arith.mulf %284, %286 : vector<256x128xf32>
    %c0_61 = arith.constant 0 : index
    %c0_62 = arith.constant 0 : index
    %288 = vector.load %arg11[%c0_61, %c0_62] : memref<1x128xf32, #tpu.memory_space<vmem>>, vector<1x128xf32>
    %289 = vector.broadcast %288 : vector<1x128xf32> to vector<256x128xf32>
    %290 = arith.addf %287, %289 : vector<256x128xf32>
    %291 = arith.negf %290 : vector<256x128xf32>
    %292 = math.exp %291 : vector<256x128xf32>
    %cst_63 = arith.constant 1.000000e+00 : f32
    %293 = vector.broadcast %cst_63 : f32 to vector<256x128xf32>
    %294 = arith.addf %293, %292 : vector<256x128xf32>
    %295 = arith.divf %293, %294 : vector<256x128xf32>
    %296 = arith.mulf %290, %295 : vector<256x128xf32>
    %297 = vector.shape_cast %296 : vector<256x128xf32> to vector<16x16x128xf32>
    %c3_64 = arith.constant 3 : index
    %c8_65 = arith.constant 8 : index
    %c0_66 = arith.constant 0 : index
    %298 = vector.load %arg15[%c3_64, %c8_65, %c0_66] : memref<22x32x128xf32, #tpu.memory_space<vmem>>, vector<16x16x128xf32>
    tpu.vector_store %arg15[%c3_64, %c8_65, %c0_66], %297 {strides = array<i32>} : memref<22x32x128xf32, #tpu.memory_space<vmem>>, vector<16x16x128xf32>,
    %c0_67 = arith.constant 0 : index
    %c0_68 = arith.constant 0 : index
    %299 = vector.load %arg12[%c0_67, %c0_68] : memref<49x128xf32, #tpu.memory_space<vmem>>, vector<49x128xf32>
    %c0_69 = arith.constant 0 : index
    %c5 = arith.constant 5 : index
    %c0_70 = arith.constant 0 : index
    %300 = vector.load %arg15[%c0_69, %c5, %c0_70] : memref<22x32x128xf32, #tpu.memory_space<vmem>>, vector<22x16x128xf32>
    %301 = vector.extract_strided_slice %300 {offsets = [0, 0, 0], sizes = [16, 16, 128], strides = [1, 1, 1]} : vector<22x16x128xf32> to vector<16x16x128xf32>
    %302 = vector.extract_strided_slice %299 {offsets = [0, 0], sizes = [1, 128], strides = [1, 1]} : vector<49x128xf32> to vector<1x128xf32>
    %303 = vector.shape_cast %302 : vector<1x128xf32> to vector<128xf32>
    %304 = vector.shape_cast %303 : vector<128xf32> to vector<1x1x128xf32>
    %305 = vector.broadcast %304 : vector<1x1x128xf32> to vector<16x16x128xf32>
    %306 = arith.mulf %301, %305 : vector<16x16x128xf32>
    %307 = vector.extract_strided_slice %300 {offsets = [1, 0, 0], sizes = [16, 16, 128], strides = [1, 1, 1]} : vector<22x16x128xf32> to vector<16x16x128xf32>
    %308 = vector.extract_strided_slice %299 {offsets = [7, 0], sizes = [1, 128], strides = [1, 1]} : vector<49x128xf32> to vector<1x128xf32>
    %309 = vector.shape_cast %308 : vector<1x128xf32> to vector<128xf32>
    %310 = vector.shape_cast %309 : vector<128xf32> to vector<1x1x128xf32>
    %311 = vector.broadcast %310 : vector<1x1x128xf32> to vector<16x16x128xf32>
    %312 = arith.mulf %307, %311 : vector<16x16x128xf32>
    %313 = arith.addf %306, %312 : vector<16x16x128xf32>
    %314 = vector.extract_strided_slice %300 {offsets = [2, 0, 0], sizes = [16, 16, 128], strides = [1, 1, 1]} : vector<22x16x128xf32> to vector<16x16x128xf32>
    %315 = vector.extract_strided_slice %299 {offsets = [14, 0], sizes = [1, 128], strides = [1, 1]} : vector<49x128xf32> to vector<1x128xf32>
    %316 = vector.shape_cast %315 : vector<1x128xf32> to vector<128xf32>
    %317 = vector.shape_cast %316 : vector<128xf32> to vector<1x1x128xf32>
    %318 = vector.broadcast %317 : vector<1x1x128xf32> to vector<16x16x128xf32>
    %319 = arith.mulf %314, %318 : vector<16x16x128xf32>
    %320 = arith.addf %313, %319 : vector<16x16x128xf32>
    %321 = vector.extract_strided_slice %300 {offsets = [3, 0, 0], sizes = [16, 16, 128], strides = [1, 1, 1]} : vector<22x16x128xf32> to vector<16x16x128xf32>
    %322 = vector.extract_strided_slice %299 {offsets = [21, 0], sizes = [1, 128], strides = [1, 1]} : vector<49x128xf32> to vector<1x128xf32>
    %323 = vector.shape_cast %322 : vector<1x128xf32> to vector<128xf32>
    %324 = vector.shape_cast %323 : vector<128xf32> to vector<1x1x128xf32>
    %325 = vector.broadcast %324 : vector<1x1x128xf32> to vector<16x16x128xf32>
    %326 = arith.mulf %321, %325 : vector<16x16x128xf32>
    %327 = arith.addf %320, %326 : vector<16x16x128xf32>
    %328 = vector.extract_strided_slice %300 {offsets = [4, 0, 0], sizes = [16, 16, 128], strides = [1, 1, 1]} : vector<22x16x128xf32> to vector<16x16x128xf32>
    %329 = vector.extract_strided_slice %299 {offsets = [28, 0], sizes = [1, 128], strides = [1, 1]} : vector<49x128xf32> to vector<1x128xf32>
    %330 = vector.shape_cast %329 : vector<1x128xf32> to vector<128xf32>
    %331 = vector.shape_cast %330 : vector<128xf32> to vector<1x1x128xf32>
    %332 = vector.broadcast %331 : vector<1x1x128xf32> to vector<16x16x128xf32>
    %333 = arith.mulf %328, %332 : vector<16x16x128xf32>
    %334 = arith.addf %327, %333 : vector<16x16x128xf32>
    %335 = vector.extract_strided_slice %300 {offsets = [5, 0, 0], sizes = [16, 16, 128], strides = [1, 1, 1]} : vector<22x16x128xf32> to vector<16x16x128xf32>
    %336 = vector.extract_strided_slice %299 {offsets = [35, 0], sizes = [1, 128], strides = [1, 1]} : vector<49x128xf32> to vector<1x128xf32>
    %337 = vector.shape_cast %336 : vector<1x128xf32> to vector<128xf32>
    %338 = vector.shape_cast %337 : vector<128xf32> to vector<1x1x128xf32>
    %339 = vector.broadcast %338 : vector<1x1x128xf32> to vector<16x16x128xf32>
    %340 = arith.mulf %335, %339 : vector<16x16x128xf32>
    %341 = arith.addf %334, %340 : vector<16x16x128xf32>
    %342 = vector.extract_strided_slice %300 {offsets = [6, 0, 0], sizes = [16, 16, 128], strides = [1, 1, 1]} : vector<22x16x128xf32> to vector<16x16x128xf32>
    %343 = vector.extract_strided_slice %299 {offsets = [42, 0], sizes = [1, 128], strides = [1, 1]} : vector<49x128xf32> to vector<1x128xf32>
    %344 = vector.shape_cast %343 : vector<1x128xf32> to vector<128xf32>
    %345 = vector.shape_cast %344 : vector<128xf32> to vector<1x1x128xf32>
    %346 = vector.broadcast %345 : vector<1x1x128xf32> to vector<16x16x128xf32>
    %347 = arith.mulf %342, %346 : vector<16x16x128xf32>
    %348 = arith.addf %341, %347 : vector<16x16x128xf32>
    %c0_71 = arith.constant 0 : index
    %c6_72 = arith.constant 6 : index
    %c0_73 = arith.constant 0 : index
    %349 = vector.load %arg15[%c0_71, %c6_72, %c0_73] : memref<22x32x128xf32, #tpu.memory_space<vmem>>, vector<22x16x128xf32>
    %350 = vector.extract_strided_slice %349 {offsets = [0, 0, 0], sizes = [16, 16, 128], strides = [1, 1, 1]} : vector<22x16x128xf32> to vector<16x16x128xf32>
    %351 = vector.extract_strided_slice %299 {offsets = [1, 0], sizes = [1, 128], strides = [1, 1]} : vector<49x128xf32> to vector<1x128xf32>
    %352 = vector.shape_cast %351 : vector<1x128xf32> to vector<128xf32>
    %353 = vector.shape_cast %352 : vector<128xf32> to vector<1x1x128xf32>
    %354 = vector.broadcast %353 : vector<1x1x128xf32> to vector<16x16x128xf32>
    %355 = arith.mulf %350, %354 : vector<16x16x128xf32>
    %356 = vector.extract_strided_slice %349 {offsets = [1, 0, 0], sizes = [16, 16, 128], strides = [1, 1, 1]} : vector<22x16x128xf32> to vector<16x16x128xf32>
    %357 = vector.extract_strided_slice %299 {offsets = [8, 0], sizes = [1, 128], strides = [1, 1]} : vector<49x128xf32> to vector<1x128xf32>
    %358 = vector.shape_cast %357 : vector<1x128xf32> to vector<128xf32>
    %359 = vector.shape_cast %358 : vector<128xf32> to vector<1x1x128xf32>
    %360 = vector.broadcast %359 : vector<1x1x128xf32> to vector<16x16x128xf32>
    %361 = arith.mulf %356, %360 : vector<16x16x128xf32>
    %362 = arith.addf %355, %361 : vector<16x16x128xf32>
    %363 = vector.extract_strided_slice %349 {offsets = [2, 0, 0], sizes = [16, 16, 128], strides = [1, 1, 1]} : vector<22x16x128xf32> to vector<16x16x128xf32>
    %364 = vector.extract_strided_slice %299 {offsets = [15, 0], sizes = [1, 128], strides = [1, 1]} : vector<49x128xf32> to vector<1x128xf32>
    %365 = vector.shape_cast %364 : vector<1x128xf32> to vector<128xf32>
    %366 = vector.shape_cast %365 : vector<128xf32> to vector<1x1x128xf32>
    %367 = vector.broadcast %366 : vector<1x1x128xf32> to vector<16x16x128xf32>
    %368 = arith.mulf %363, %367 : vector<16x16x128xf32>
    %369 = arith.addf %362, %368 : vector<16x16x128xf32>
    %370 = vector.extract_strided_slice %349 {offsets = [3, 0, 0], sizes = [16, 16, 128], strides = [1, 1, 1]} : vector<22x16x128xf32> to vector<16x16x128xf32>
    %371 = vector.extract_strided_slice %299 {offsets = [22, 0], sizes = [1, 128], strides = [1, 1]} : vector<49x128xf32> to vector<1x128xf32>
    %372 = vector.shape_cast %371 : vector<1x128xf32> to vector<128xf32>
    %373 = vector.shape_cast %372 : vector<128xf32> to vector<1x1x128xf32>
    %374 = vector.broadcast %373 : vector<1x1x128xf32> to vector<16x16x128xf32>
    %375 = arith.mulf %370, %374 : vector<16x16x128xf32>
    %376 = arith.addf %369, %375 : vector<16x16x128xf32>
    %377 = vector.extract_strided_slice %349 {offsets = [4, 0, 0], sizes = [16, 16, 128], strides = [1, 1, 1]} : vector<22x16x128xf32> to vector<16x16x128xf32>
    %378 = vector.extract_strided_slice %299 {offsets = [29, 0], sizes = [1, 128], strides = [1, 1]} : vector<49x128xf32> to vector<1x128xf32>
    %379 = vector.shape_cast %378 : vector<1x128xf32> to vector<128xf32>
    %380 = vector.shape_cast %379 : vector<128xf32> to vector<1x1x128xf32>
    %381 = vector.broadcast %380 : vector<1x1x128xf32> to vector<16x16x128xf32>
    %382 = arith.mulf %377, %381 : vector<16x16x128xf32>
    %383 = arith.addf %376, %382 : vector<16x16x128xf32>
    %384 = vector.extract_strided_slice %349 {offsets = [5, 0, 0], sizes = [16, 16, 128], strides = [1, 1, 1]} : vector<22x16x128xf32> to vector<16x16x128xf32>
    %385 = vector.extract_strided_slice %299 {offsets = [36, 0], sizes = [1, 128], strides = [1, 1]} : vector<49x128xf32> to vector<1x128xf32>
    %386 = vector.shape_cast %385 : vector<1x128xf32> to vector<128xf32>
    %387 = vector.shape_cast %386 : vector<128xf32> to vector<1x1x128xf32>
    %388 = vector.broadcast %387 : vector<1x1x128xf32> to vector<16x16x128xf32>
    %389 = arith.mulf %384, %388 : vector<16x16x128xf32>
    %390 = arith.addf %383, %389 : vector<16x16x128xf32>
    %391 = vector.extract_strided_slice %349 {offsets = [6, 0, 0], sizes = [16, 16, 128], strides = [1, 1, 1]} : vector<22x16x128xf32> to vector<16x16x128xf32>
    %392 = vector.extract_strided_slice %299 {offsets = [43, 0], sizes = [1, 128], strides = [1, 1]} : vector<49x128xf32> to vector<1x128xf32>
    %393 = vector.shape_cast %392 : vector<1x128xf32> to vector<128xf32>
    %394 = vector.shape_cast %393 : vector<128xf32> to vector<1x1x128xf32>
    %395 = vector.broadcast %394 : vector<1x1x128xf32> to vector<16x16x128xf32>
    %396 = arith.mulf %391, %395 : vector<16x16x128xf32>
    %397 = arith.addf %390, %396 : vector<16x16x128xf32>
    %c0_74 = arith.constant 0 : index
    %c7_75 = arith.constant 7 : index
    %c0_76 = arith.constant 0 : index
    %398 = vector.load %arg15[%c0_74, %c7_75, %c0_76] : memref<22x32x128xf32, #tpu.memory_space<vmem>>, vector<22x16x128xf32>
    %399 = vector.extract_strided_slice %398 {offsets = [0, 0, 0], sizes = [16, 16, 128], strides = [1, 1, 1]} : vector<22x16x128xf32> to vector<16x16x128xf32>
    %400 = vector.extract_strided_slice %299 {offsets = [2, 0], sizes = [1, 128], strides = [1, 1]} : vector<49x128xf32> to vector<1x128xf32>
    %401 = vector.shape_cast %400 : vector<1x128xf32> to vector<128xf32>
    %402 = vector.shape_cast %401 : vector<128xf32> to vector<1x1x128xf32>
    %403 = vector.broadcast %402 : vector<1x1x128xf32> to vector<16x16x128xf32>
    %404 = arith.mulf %399, %403 : vector<16x16x128xf32>
    %405 = vector.extract_strided_slice %398 {offsets = [1, 0, 0], sizes = [16, 16, 128], strides = [1, 1, 1]} : vector<22x16x128xf32> to vector<16x16x128xf32>
    %406 = vector.extract_strided_slice %299 {offsets = [9, 0], sizes = [1, 128], strides = [1, 1]} : vector<49x128xf32> to vector<1x128xf32>
    %407 = vector.shape_cast %406 : vector<1x128xf32> to vector<128xf32>
    %408 = vector.shape_cast %407 : vector<128xf32> to vector<1x1x128xf32>
    %409 = vector.broadcast %408 : vector<1x1x128xf32> to vector<16x16x128xf32>
    %410 = arith.mulf %405, %409 : vector<16x16x128xf32>
    %411 = arith.addf %404, %410 : vector<16x16x128xf32>
    %412 = vector.extract_strided_slice %398 {offsets = [2, 0, 0], sizes = [16, 16, 128], strides = [1, 1, 1]} : vector<22x16x128xf32> to vector<16x16x128xf32>
    %413 = vector.extract_strided_slice %299 {offsets = [16, 0], sizes = [1, 128], strides = [1, 1]} : vector<49x128xf32> to vector<1x128xf32>
    %414 = vector.shape_cast %413 : vector<1x128xf32> to vector<128xf32>
    %415 = vector.shape_cast %414 : vector<128xf32> to vector<1x1x128xf32>
    %416 = vector.broadcast %415 : vector<1x1x128xf32> to vector<16x16x128xf32>
    %417 = arith.mulf %412, %416 : vector<16x16x128xf32>
    %418 = arith.addf %411, %417 : vector<16x16x128xf32>
    %419 = vector.extract_strided_slice %398 {offsets = [3, 0, 0], sizes = [16, 16, 128], strides = [1, 1, 1]} : vector<22x16x128xf32> to vector<16x16x128xf32>
    %420 = vector.extract_strided_slice %299 {offsets = [23, 0], sizes = [1, 128], strides = [1, 1]} : vector<49x128xf32> to vector<1x128xf32>
    %421 = vector.shape_cast %420 : vector<1x128xf32> to vector<128xf32>
    %422 = vector.shape_cast %421 : vector<128xf32> to vector<1x1x128xf32>
    %423 = vector.broadcast %422 : vector<1x1x128xf32> to vector<16x16x128xf32>
    %424 = arith.mulf %419, %423 : vector<16x16x128xf32>
    %425 = arith.addf %418, %424 : vector<16x16x128xf32>
    %426 = vector.extract_strided_slice %398 {offsets = [4, 0, 0], sizes = [16, 16, 128], strides = [1, 1, 1]} : vector<22x16x128xf32> to vector<16x16x128xf32>
    %427 = vector.extract_strided_slice %299 {offsets = [30, 0], sizes = [1, 128], strides = [1, 1]} : vector<49x128xf32> to vector<1x128xf32>
    %428 = vector.shape_cast %427 : vector<1x128xf32> to vector<128xf32>
    %429 = vector.shape_cast %428 : vector<128xf32> to vector<1x1x128xf32>
    %430 = vector.broadcast %429 : vector<1x1x128xf32> to vector<16x16x128xf32>
    %431 = arith.mulf %426, %430 : vector<16x16x128xf32>
    %432 = arith.addf %425, %431 : vector<16x16x128xf32>
    %433 = vector.extract_strided_slice %398 {offsets = [5, 0, 0], sizes = [16, 16, 128], strides = [1, 1, 1]} : vector<22x16x128xf32> to vector<16x16x128xf32>
    %434 = vector.extract_strided_slice %299 {offsets = [37, 0], sizes = [1, 128], strides = [1, 1]} : vector<49x128xf32> to vector<1x128xf32>
    %435 = vector.shape_cast %434 : vector<1x128xf32> to vector<128xf32>
    %436 = vector.shape_cast %435 : vector<128xf32> to vector<1x1x128xf32>
    %437 = vector.broadcast %436 : vector<1x1x128xf32> to vector<16x16x128xf32>
    %438 = arith.mulf %433, %437 : vector<16x16x128xf32>
    %439 = arith.addf %432, %438 : vector<16x16x128xf32>
    %440 = vector.extract_strided_slice %398 {offsets = [6, 0, 0], sizes = [16, 16, 128], strides = [1, 1, 1]} : vector<22x16x128xf32> to vector<16x16x128xf32>
    %441 = vector.extract_strided_slice %299 {offsets = [44, 0], sizes = [1, 128], strides = [1, 1]} : vector<49x128xf32> to vector<1x128xf32>
    %442 = vector.shape_cast %441 : vector<1x128xf32> to vector<128xf32>
    %443 = vector.shape_cast %442 : vector<128xf32> to vector<1x1x128xf32>
    %444 = vector.broadcast %443 : vector<1x1x128xf32> to vector<16x16x128xf32>
    %445 = arith.mulf %440, %444 : vector<16x16x128xf32>
    %446 = arith.addf %439, %445 : vector<16x16x128xf32>
    %c0_77 = arith.constant 0 : index
    %c8_78 = arith.constant 8 : index
    %c0_79 = arith.constant 0 : index
    %447 = vector.load %arg15[%c0_77, %c8_78, %c0_79] : memref<22x32x128xf32, #tpu.memory_space<vmem>>, vector<22x16x128xf32>
    %448 = vector.extract_strided_slice %447 {offsets = [0, 0, 0], sizes = [16, 16, 128], strides = [1, 1, 1]} : vector<22x16x128xf32> to vector<16x16x128xf32>
    %449 = vector.extract_strided_slice %299 {offsets = [3, 0], sizes = [1, 128], strides = [1, 1]} : vector<49x128xf32> to vector<1x128xf32>
    %450 = vector.shape_cast %449 : vector<1x128xf32> to vector<128xf32>
    %451 = vector.shape_cast %450 : vector<128xf32> to vector<1x1x128xf32>
    %452 = vector.broadcast %451 : vector<1x1x128xf32> to vector<16x16x128xf32>
    %453 = arith.mulf %448, %452 : vector<16x16x128xf32>
    %454 = vector.extract_strided_slice %447 {offsets = [1, 0, 0], sizes = [16, 16, 128], strides = [1, 1, 1]} : vector<22x16x128xf32> to vector<16x16x128xf32>
    %455 = vector.extract_strided_slice %299 {offsets = [10, 0], sizes = [1, 128], strides = [1, 1]} : vector<49x128xf32> to vector<1x128xf32>
    %456 = vector.shape_cast %455 : vector<1x128xf32> to vector<128xf32>
    %457 = vector.shape_cast %456 : vector<128xf32> to vector<1x1x128xf32>
    %458 = vector.broadcast %457 : vector<1x1x128xf32> to vector<16x16x128xf32>
    %459 = arith.mulf %454, %458 : vector<16x16x128xf32>
    %460 = arith.addf %453, %459 : vector<16x16x128xf32>
    %461 = vector.extract_strided_slice %447 {offsets = [2, 0, 0], sizes = [16, 16, 128], strides = [1, 1, 1]} : vector<22x16x128xf32> to vector<16x16x128xf32>
    %462 = vector.extract_strided_slice %299 {offsets = [17, 0], sizes = [1, 128], strides = [1, 1]} : vector<49x128xf32> to vector<1x128xf32>
    %463 = vector.shape_cast %462 : vector<1x128xf32> to vector<128xf32>
    %464 = vector.shape_cast %463 : vector<128xf32> to vector<1x1x128xf32>
    %465 = vector.broadcast %464 : vector<1x1x128xf32> to vector<16x16x128xf32>
    %466 = arith.mulf %461, %465 : vector<16x16x128xf32>
    %467 = arith.addf %460, %466 : vector<16x16x128xf32>
    %468 = vector.extract_strided_slice %447 {offsets = [3, 0, 0], sizes = [16, 16, 128], strides = [1, 1, 1]} : vector<22x16x128xf32> to vector<16x16x128xf32>
    %469 = vector.extract_strided_slice %299 {offsets = [24, 0], sizes = [1, 128], strides = [1, 1]} : vector<49x128xf32> to vector<1x128xf32>
    %470 = vector.shape_cast %469 : vector<1x128xf32> to vector<128xf32>
    %471 = vector.shape_cast %470 : vector<128xf32> to vector<1x1x128xf32>
    %472 = vector.broadcast %471 : vector<1x1x128xf32> to vector<16x16x128xf32>
    %473 = arith.mulf %468, %472 : vector<16x16x128xf32>
    %474 = arith.addf %467, %473 : vector<16x16x128xf32>
    %475 = vector.extract_strided_slice %447 {offsets = [4, 0, 0], sizes = [16, 16, 128], strides = [1, 1, 1]} : vector<22x16x128xf32> to vector<16x16x128xf32>
    %476 = vector.extract_strided_slice %299 {offsets = [31, 0], sizes = [1, 128], strides = [1, 1]} : vector<49x128xf32> to vector<1x128xf32>
    %477 = vector.shape_cast %476 : vector<1x128xf32> to vector<128xf32>
    %478 = vector.shape_cast %477 : vector<128xf32> to vector<1x1x128xf32>
    %479 = vector.broadcast %478 : vector<1x1x128xf32> to vector<16x16x128xf32>
    %480 = arith.mulf %475, %479 : vector<16x16x128xf32>
    %481 = arith.addf %474, %480 : vector<16x16x128xf32>
    %482 = vector.extract_strided_slice %447 {offsets = [5, 0, 0], sizes = [16, 16, 128], strides = [1, 1, 1]} : vector<22x16x128xf32> to vector<16x16x128xf32>
    %483 = vector.extract_strided_slice %299 {offsets = [38, 0], sizes = [1, 128], strides = [1, 1]} : vector<49x128xf32> to vector<1x128xf32>
    %484 = vector.shape_cast %483 : vector<1x128xf32> to vector<128xf32>
    %485 = vector.shape_cast %484 : vector<128xf32> to vector<1x1x128xf32>
    %486 = vector.broadcast %485 : vector<1x1x128xf32> to vector<16x16x128xf32>
    %487 = arith.mulf %482, %486 : vector<16x16x128xf32>
    %488 = arith.addf %481, %487 : vector<16x16x128xf32>
    %489 = vector.extract_strided_slice %447 {offsets = [6, 0, 0], sizes = [16, 16, 128], strides = [1, 1, 1]} : vector<22x16x128xf32> to vector<16x16x128xf32>
    %490 = vector.extract_strided_slice %299 {offsets = [45, 0], sizes = [1, 128], strides = [1, 1]} : vector<49x128xf32> to vector<1x128xf32>
    %491 = vector.shape_cast %490 : vector<1x128xf32> to vector<128xf32>
    %492 = vector.shape_cast %491 : vector<128xf32> to vector<1x1x128xf32>
    %493 = vector.broadcast %492 : vector<1x1x128xf32> to vector<16x16x128xf32>
    %494 = arith.mulf %489, %493 : vector<16x16x128xf32>
    %495 = arith.addf %488, %494 : vector<16x16x128xf32>
    %c0_80 = arith.constant 0 : index
    %c9_81 = arith.constant 9 : index
    %c0_82 = arith.constant 0 : index
    %496 = vector.load %arg15[%c0_80, %c9_81, %c0_82] : memref<22x32x128xf32, #tpu.memory_space<vmem>>, vector<22x16x128xf32>
    %497 = vector.extract_strided_slice %496 {offsets = [0, 0, 0], sizes = [16, 16, 128], strides = [1, 1, 1]} : vector<22x16x128xf32> to vector<16x16x128xf32>
    %498 = vector.extract_strided_slice %299 {offsets = [4, 0], sizes = [1, 128], strides = [1, 1]} : vector<49x128xf32> to vector<1x128xf32>
    %499 = vector.shape_cast %498 : vector<1x128xf32> to vector<128xf32>
    %500 = vector.shape_cast %499 : vector<128xf32> to vector<1x1x128xf32>
    %501 = vector.broadcast %500 : vector<1x1x128xf32> to vector<16x16x128xf32>
    %502 = arith.mulf %497, %501 : vector<16x16x128xf32>
    %503 = vector.extract_strided_slice %496 {offsets = [1, 0, 0], sizes = [16, 16, 128], strides = [1, 1, 1]} : vector<22x16x128xf32> to vector<16x16x128xf32>
    %504 = vector.extract_strided_slice %299 {offsets = [11, 0], sizes = [1, 128], strides = [1, 1]} : vector<49x128xf32> to vector<1x128xf32>
    %505 = vector.shape_cast %504 : vector<1x128xf32> to vector<128xf32>
    %506 = vector.shape_cast %505 : vector<128xf32> to vector<1x1x128xf32>
    %507 = vector.broadcast %506 : vector<1x1x128xf32> to vector<16x16x128xf32>
    %508 = arith.mulf %503, %507 : vector<16x16x128xf32>
    %509 = arith.addf %502, %508 : vector<16x16x128xf32>
    %510 = vector.extract_strided_slice %496 {offsets = [2, 0, 0], sizes = [16, 16, 128], strides = [1, 1, 1]} : vector<22x16x128xf32> to vector<16x16x128xf32>
    %511 = vector.extract_strided_slice %299 {offsets = [18, 0], sizes = [1, 128], strides = [1, 1]} : vector<49x128xf32> to vector<1x128xf32>
    %512 = vector.shape_cast %511 : vector<1x128xf32> to vector<128xf32>
    %513 = vector.shape_cast %512 : vector<128xf32> to vector<1x1x128xf32>
    %514 = vector.broadcast %513 : vector<1x1x128xf32> to vector<16x16x128xf32>
    %515 = arith.mulf %510, %514 : vector<16x16x128xf32>
    %516 = arith.addf %509, %515 : vector<16x16x128xf32>
    %517 = vector.extract_strided_slice %496 {offsets = [3, 0, 0], sizes = [16, 16, 128], strides = [1, 1, 1]} : vector<22x16x128xf32> to vector<16x16x128xf32>
    %518 = vector.extract_strided_slice %299 {offsets = [25, 0], sizes = [1, 128], strides = [1, 1]} : vector<49x128xf32> to vector<1x128xf32>
    %519 = vector.shape_cast %518 : vector<1x128xf32> to vector<128xf32>
    %520 = vector.shape_cast %519 : vector<128xf32> to vector<1x1x128xf32>
    %521 = vector.broadcast %520 : vector<1x1x128xf32> to vector<16x16x128xf32>
    %522 = arith.mulf %517, %521 : vector<16x16x128xf32>
    %523 = arith.addf %516, %522 : vector<16x16x128xf32>
    %524 = vector.extract_strided_slice %496 {offsets = [4, 0, 0], sizes = [16, 16, 128], strides = [1, 1, 1]} : vector<22x16x128xf32> to vector<16x16x128xf32>
    %525 = vector.extract_strided_slice %299 {offsets = [32, 0], sizes = [1, 128], strides = [1, 1]} : vector<49x128xf32> to vector<1x128xf32>
    %526 = vector.shape_cast %525 : vector<1x128xf32> to vector<128xf32>
    %527 = vector.shape_cast %526 : vector<128xf32> to vector<1x1x128xf32>
    %528 = vector.broadcast %527 : vector<1x1x128xf32> to vector<16x16x128xf32>
    %529 = arith.mulf %524, %528 : vector<16x16x128xf32>
    %530 = arith.addf %523, %529 : vector<16x16x128xf32>
    %531 = vector.extract_strided_slice %496 {offsets = [5, 0, 0], sizes = [16, 16, 128], strides = [1, 1, 1]} : vector<22x16x128xf32> to vector<16x16x128xf32>
    %532 = vector.extract_strided_slice %299 {offsets = [39, 0], sizes = [1, 128], strides = [1, 1]} : vector<49x128xf32> to vector<1x128xf32>
    %533 = vector.shape_cast %532 : vector<1x128xf32> to vector<128xf32>
    %534 = vector.shape_cast %533 : vector<128xf32> to vector<1x1x128xf32>
    %535 = vector.broadcast %534 : vector<1x1x128xf32> to vector<16x16x128xf32>
    %536 = arith.mulf %531, %535 : vector<16x16x128xf32>
    %537 = arith.addf %530, %536 : vector<16x16x128xf32>
    %538 = vector.extract_strided_slice %496 {offsets = [6, 0, 0], sizes = [16, 16, 128], strides = [1, 1, 1]} : vector<22x16x128xf32> to vector<16x16x128xf32>
    %539 = vector.extract_strided_slice %299 {offsets = [46, 0], sizes = [1, 128], strides = [1, 1]} : vector<49x128xf32> to vector<1x128xf32>
    %540 = vector.shape_cast %539 : vector<1x128xf32> to vector<128xf32>
    %541 = vector.shape_cast %540 : vector<128xf32> to vector<1x1x128xf32>
    %542 = vector.broadcast %541 : vector<1x1x128xf32> to vector<16x16x128xf32>
    %543 = arith.mulf %538, %542 : vector<16x16x128xf32>
    %544 = arith.addf %537, %543 : vector<16x16x128xf32>
    %c0_83 = arith.constant 0 : index
    %c10_84 = arith.constant 10 : index
    %c0_85 = arith.constant 0 : index
    %545 = vector.load %arg15[%c0_83, %c10_84, %c0_85] : memref<22x32x128xf32, #tpu.memory_space<vmem>>, vector<22x16x128xf32>
    %546 = vector.extract_strided_slice %545 {offsets = [0, 0, 0], sizes = [16, 16, 128], strides = [1, 1, 1]} : vector<22x16x128xf32> to vector<16x16x128xf32>
    %547 = vector.extract_strided_slice %299 {offsets = [5, 0], sizes = [1, 128], strides = [1, 1]} : vector<49x128xf32> to vector<1x128xf32>
    %548 = vector.shape_cast %547 : vector<1x128xf32> to vector<128xf32>
    %549 = vector.shape_cast %548 : vector<128xf32> to vector<1x1x128xf32>
    %550 = vector.broadcast %549 : vector<1x1x128xf32> to vector<16x16x128xf32>
    %551 = arith.mulf %546, %550 : vector<16x16x128xf32>
    %552 = vector.extract_strided_slice %545 {offsets = [1, 0, 0], sizes = [16, 16, 128], strides = [1, 1, 1]} : vector<22x16x128xf32> to vector<16x16x128xf32>
    %553 = vector.extract_strided_slice %299 {offsets = [12, 0], sizes = [1, 128], strides = [1, 1]} : vector<49x128xf32> to vector<1x128xf32>
    %554 = vector.shape_cast %553 : vector<1x128xf32> to vector<128xf32>
    %555 = vector.shape_cast %554 : vector<128xf32> to vector<1x1x128xf32>
    %556 = vector.broadcast %555 : vector<1x1x128xf32> to vector<16x16x128xf32>
    %557 = arith.mulf %552, %556 : vector<16x16x128xf32>
    %558 = arith.addf %551, %557 : vector<16x16x128xf32>
    %559 = vector.extract_strided_slice %545 {offsets = [2, 0, 0], sizes = [16, 16, 128], strides = [1, 1, 1]} : vector<22x16x128xf32> to vector<16x16x128xf32>
    %560 = vector.extract_strided_slice %299 {offsets = [19, 0], sizes = [1, 128], strides = [1, 1]} : vector<49x128xf32> to vector<1x128xf32>
    %561 = vector.shape_cast %560 : vector<1x128xf32> to vector<128xf32>
    %562 = vector.shape_cast %561 : vector<128xf32> to vector<1x1x128xf32>
    %563 = vector.broadcast %562 : vector<1x1x128xf32> to vector<16x16x128xf32>
    %564 = arith.mulf %559, %563 : vector<16x16x128xf32>
    %565 = arith.addf %558, %564 : vector<16x16x128xf32>
    %566 = vector.extract_strided_slice %545 {offsets = [3, 0, 0], sizes = [16, 16, 128], strides = [1, 1, 1]} : vector<22x16x128xf32> to vector<16x16x128xf32>
    %567 = vector.extract_strided_slice %299 {offsets = [26, 0], sizes = [1, 128], strides = [1, 1]} : vector<49x128xf32> to vector<1x128xf32>
    %568 = vector.shape_cast %567 : vector<1x128xf32> to vector<128xf32>
    %569 = vector.shape_cast %568 : vector<128xf32> to vector<1x1x128xf32>
    %570 = vector.broadcast %569 : vector<1x1x128xf32> to vector<16x16x128xf32>
    %571 = arith.mulf %566, %570 : vector<16x16x128xf32>
    %572 = arith.addf %565, %571 : vector<16x16x128xf32>
    %573 = vector.extract_strided_slice %545 {offsets = [4, 0, 0], sizes = [16, 16, 128], strides = [1, 1, 1]} : vector<22x16x128xf32> to vector<16x16x128xf32>
    %574 = vector.extract_strided_slice %299 {offsets = [33, 0], sizes = [1, 128], strides = [1, 1]} : vector<49x128xf32> to vector<1x128xf32>
    %575 = vector.shape_cast %574 : vector<1x128xf32> to vector<128xf32>
    %576 = vector.shape_cast %575 : vector<128xf32> to vector<1x1x128xf32>
    %577 = vector.broadcast %576 : vector<1x1x128xf32> to vector<16x16x128xf32>
    %578 = arith.mulf %573, %577 : vector<16x16x128xf32>
    %579 = arith.addf %572, %578 : vector<16x16x128xf32>
    %580 = vector.extract_strided_slice %545 {offsets = [5, 0, 0], sizes = [16, 16, 128], strides = [1, 1, 1]} : vector<22x16x128xf32> to vector<16x16x128xf32>
    %581 = vector.extract_strided_slice %299 {offsets = [40, 0], sizes = [1, 128], strides = [1, 1]} : vector<49x128xf32> to vector<1x128xf32>
    %582 = vector.shape_cast %581 : vector<1x128xf32> to vector<128xf32>
    %583 = vector.shape_cast %582 : vector<128xf32> to vector<1x1x128xf32>
    %584 = vector.broadcast %583 : vector<1x1x128xf32> to vector<16x16x128xf32>
    %585 = arith.mulf %580, %584 : vector<16x16x128xf32>
    %586 = arith.addf %579, %585 : vector<16x16x128xf32>
    %587 = vector.extract_strided_slice %545 {offsets = [6, 0, 0], sizes = [16, 16, 128], strides = [1, 1, 1]} : vector<22x16x128xf32> to vector<16x16x128xf32>
    %588 = vector.extract_strided_slice %299 {offsets = [47, 0], sizes = [1, 128], strides = [1, 1]} : vector<49x128xf32> to vector<1x128xf32>
    %589 = vector.shape_cast %588 : vector<1x128xf32> to vector<128xf32>
    %590 = vector.shape_cast %589 : vector<128xf32> to vector<1x1x128xf32>
    %591 = vector.broadcast %590 : vector<1x1x128xf32> to vector<16x16x128xf32>
    %592 = arith.mulf %587, %591 : vector<16x16x128xf32>
    %593 = arith.addf %586, %592 : vector<16x16x128xf32>
    %c0_86 = arith.constant 0 : index
    %c11 = arith.constant 11 : index
    %c0_87 = arith.constant 0 : index
    %594 = vector.load %arg15[%c0_86, %c11, %c0_87] : memref<22x32x128xf32, #tpu.memory_space<vmem>>, vector<22x16x128xf32>
    %595 = vector.extract_strided_slice %594 {offsets = [0, 0, 0], sizes = [16, 16, 128], strides = [1, 1, 1]} : vector<22x16x128xf32> to vector<16x16x128xf32>
    %596 = vector.extract_strided_slice %299 {offsets = [6, 0], sizes = [1, 128], strides = [1, 1]} : vector<49x128xf32> to vector<1x128xf32>
    %597 = vector.shape_cast %596 : vector<1x128xf32> to vector<128xf32>
    %598 = vector.shape_cast %597 : vector<128xf32> to vector<1x1x128xf32>
    %599 = vector.broadcast %598 : vector<1x1x128xf32> to vector<16x16x128xf32>
    %600 = arith.mulf %595, %599 : vector<16x16x128xf32>
    %601 = vector.extract_strided_slice %594 {offsets = [1, 0, 0], sizes = [16, 16, 128], strides = [1, 1, 1]} : vector<22x16x128xf32> to vector<16x16x128xf32>
    %602 = vector.extract_strided_slice %299 {offsets = [13, 0], sizes = [1, 128], strides = [1, 1]} : vector<49x128xf32> to vector<1x128xf32>
    %603 = vector.shape_cast %602 : vector<1x128xf32> to vector<128xf32>
    %604 = vector.shape_cast %603 : vector<128xf32> to vector<1x1x128xf32>
    %605 = vector.broadcast %604 : vector<1x1x128xf32> to vector<16x16x128xf32>
    %606 = arith.mulf %601, %605 : vector<16x16x128xf32>
    %607 = arith.addf %600, %606 : vector<16x16x128xf32>
    %608 = vector.extract_strided_slice %594 {offsets = [2, 0, 0], sizes = [16, 16, 128], strides = [1, 1, 1]} : vector<22x16x128xf32> to vector<16x16x128xf32>
    %609 = vector.extract_strided_slice %299 {offsets = [20, 0], sizes = [1, 128], strides = [1, 1]} : vector<49x128xf32> to vector<1x128xf32>
    %610 = vector.shape_cast %609 : vector<1x128xf32> to vector<128xf32>
    %611 = vector.shape_cast %610 : vector<128xf32> to vector<1x1x128xf32>
    %612 = vector.broadcast %611 : vector<1x1x128xf32> to vector<16x16x128xf32>
    %613 = arith.mulf %608, %612 : vector<16x16x128xf32>
    %614 = arith.addf %607, %613 : vector<16x16x128xf32>
    %615 = vector.extract_strided_slice %594 {offsets = [3, 0, 0], sizes = [16, 16, 128], strides = [1, 1, 1]} : vector<22x16x128xf32> to vector<16x16x128xf32>
    %616 = vector.extract_strided_slice %299 {offsets = [27, 0], sizes = [1, 128], strides = [1, 1]} : vector<49x128xf32> to vector<1x128xf32>
    %617 = vector.shape_cast %616 : vector<1x128xf32> to vector<128xf32>
    %618 = vector.shape_cast %617 : vector<128xf32> to vector<1x1x128xf32>
    %619 = vector.broadcast %618 : vector<1x1x128xf32> to vector<16x16x128xf32>
    %620 = arith.mulf %615, %619 : vector<16x16x128xf32>
    %621 = arith.addf %614, %620 : vector<16x16x128xf32>
    %622 = vector.extract_strided_slice %594 {offsets = [4, 0, 0], sizes = [16, 16, 128], strides = [1, 1, 1]} : vector<22x16x128xf32> to vector<16x16x128xf32>
    %623 = vector.extract_strided_slice %299 {offsets = [34, 0], sizes = [1, 128], strides = [1, 1]} : vector<49x128xf32> to vector<1x128xf32>
    %624 = vector.shape_cast %623 : vector<1x128xf32> to vector<128xf32>
    %625 = vector.shape_cast %624 : vector<128xf32> to vector<1x1x128xf32>
    %626 = vector.broadcast %625 : vector<1x1x128xf32> to vector<16x16x128xf32>
    %627 = arith.mulf %622, %626 : vector<16x16x128xf32>
    %628 = arith.addf %621, %627 : vector<16x16x128xf32>
    %629 = vector.extract_strided_slice %594 {offsets = [5, 0, 0], sizes = [16, 16, 128], strides = [1, 1, 1]} : vector<22x16x128xf32> to vector<16x16x128xf32>
    %630 = vector.extract_strided_slice %299 {offsets = [41, 0], sizes = [1, 128], strides = [1, 1]} : vector<49x128xf32> to vector<1x128xf32>
    %631 = vector.shape_cast %630 : vector<1x128xf32> to vector<128xf32>
    %632 = vector.shape_cast %631 : vector<128xf32> to vector<1x1x128xf32>
    %633 = vector.broadcast %632 : vector<1x1x128xf32> to vector<16x16x128xf32>
    %634 = arith.mulf %629, %633 : vector<16x16x128xf32>
    %635 = arith.addf %628, %634 : vector<16x16x128xf32>
    %636 = vector.extract_strided_slice %594 {offsets = [6, 0, 0], sizes = [16, 16, 128], strides = [1, 1, 1]} : vector<22x16x128xf32> to vector<16x16x128xf32>
    %637 = vector.extract_strided_slice %299 {offsets = [48, 0], sizes = [1, 128], strides = [1, 1]} : vector<49x128xf32> to vector<1x128xf32>
    %638 = vector.shape_cast %637 : vector<1x128xf32> to vector<128xf32>
    %639 = vector.shape_cast %638 : vector<128xf32> to vector<1x1x128xf32>
    %640 = vector.broadcast %639 : vector<1x1x128xf32> to vector<16x16x128xf32>
    %641 = arith.mulf %636, %640 : vector<16x16x128xf32>
    %642 = arith.addf %635, %641 : vector<16x16x128xf32>
    %643 = arith.addf %348, %397 : vector<16x16x128xf32>
    %644 = arith.addf %446, %495 : vector<16x16x128xf32>
    %645 = arith.addf %544, %593 : vector<16x16x128xf32>
    %646 = arith.addf %643, %644 : vector<16x16x128xf32>
    %647 = arith.addf %645, %642 : vector<16x16x128xf32>
    %648 = arith.addf %646, %647 : vector<16x16x128xf32>
    %c0_88 = arith.constant 0 : index
    %c0_89 = arith.constant 0 : index
    %c0_90 = arith.constant 0 : index
    %649 = vector.load %arg13[%c0_88, %c0_89, %c0_90] : memref<1x1x128xf32, #tpu.memory_space<vmem>>, vector<1x1x128xf32>
    %650 = vector.broadcast %649 : vector<1x1x128xf32> to vector<16x16x128xf32>
    %651 = arith.addf %648, %650 : vector<16x16x128xf32>
    %c0_91 = arith.constant 0 : index
    %c0_92 = arith.constant 0 : index
    %c0_93 = arith.constant 0 : index
    %c0_94 = arith.constant 0 : index
    %652 = vector.load %arg1[%c0_91, %c0_92, %c0_93, %c0_94] : memref<1x16x16x128xf32, #tpu.memory_space<vmem>>, vector<1x16x16x128xf32>
    %653 = vector.shape_cast %652 : vector<1x16x16x128xf32> to vector<16x16x128xf32>
    %654 = arith.addf %651, %653 : vector<16x16x128xf32>
    %c0_95 = arith.constant 0 : index
    %c0_96 = arith.constant 0 : index
    %c0_97 = arith.constant 0 : index
    %c0_98 = arith.constant 0 : index
    %655 = vector.load %arg14[%c0_95, %c0_96, %c0_97, %c0_98] : memref<1x16x16x128xf32, #tpu.memory_space<vmem>>, vector<1x16x16x128xf32>
    %656 = vector.shape_cast %655 : vector<1x16x16x128xf32> to vector<16x16x128xf32>
    %657 = vector.shape_cast %654 : vector<16x16x128xf32> to vector<1x16x16x128xf32>
    tpu.vector_store %arg14[%c0_95, %c0_96, %c0_97, %c0_98], %657 {strides = array<i32>} : memref<1x16x16x128xf32, #tpu.memory_space<vmem>>, vector<1x16x16x128xf32>,
    return
  }
  func.func @transform_0(%arg0: i32) -> (i32, i32, i32, i32) {
    %c0_i32 = arith.constant 0 : i32
    %c0_i32_0 = arith.constant 0 : i32
    %c0_i32_1 = arith.constant 0 : i32
    %c0_i32_2 = arith.constant 0 : i32
    return %arg0, %c0_i32, %c0_i32_0, %c0_i32_1 : i32, i32, i32, i32
  }
  func.func @transform_1(%arg0: i32) -> (i32, i32) {
    %c0_i32 = arith.constant 0 : i32
    %c0_i32_0 = arith.constant 0 : i32
    %c0_i32_1 = arith.constant 0 : i32
    return %c0_i32, %c0_i32_0 : i32, i32
  }
  func.func @transform_2(%arg0: i32) -> (i32, i32, i32) {
    %c0_i32 = arith.constant 0 : i32
    %c0_i32_0 = arith.constant 0 : i32
    %c0_i32_1 = arith.constant 0 : i32
    %c0_i32_2 = arith.constant 0 : i32
    return %c0_i32, %c0_i32_0, %c0_i32_1 : i32, i32, i32
  }
  func.func @transform_3(%arg0: i32) -> (i32, i32) {
    %c0_i32 = arith.constant 0 : i32
    %c0_i32_0 = arith.constant 0 : i32
    %c0_i32_1 = arith.constant 0 : i32
    return %c0_i32, %c0_i32_0 : i32, i32
  }
  func.func @transform_4(%arg0: i32) -> (i32, i32) {
    %c0_i32 = arith.constant 0 : i32
    %c0_i32_0 = arith.constant 0 : i32
    %c0_i32_1 = arith.constant 0 : i32
    return %c0_i32, %c0_i32_0 : i32, i32
  }
  func.func @transform_5(%arg0: i32) -> (i32, i32) {
    %c0_i32 = arith.constant 0 : i32
    %c0_i32_0 = arith.constant 0 : i32
    %c0_i32_1 = arith.constant 0 : i32
    return %c0_i32, %c0_i32_0 : i32, i32
  }
  func.func @transform_6(%arg0: i32) -> (i32, i32) {
    %c0_i32 = arith.constant 0 : i32
    %c0_i32_0 = arith.constant 0 : i32
    %c0_i32_1 = arith.constant 0 : i32
    return %c0_i32, %c0_i32_0 : i32, i32
  }
  func.func @transform_7(%arg0: i32) -> (i32, i32, i32) {
    %c0_i32 = arith.constant 0 : i32
    %c0_i32_0 = arith.constant 0 : i32
    %c0_i32_1 = arith.constant 0 : i32
    %c0_i32_2 = arith.constant 0 : i32
    return %c0_i32, %c0_i32_0, %c0_i32_1 : i32, i32, i32
  }
  func.func @transform_8(%arg0: i32) -> (i32, i32) {
    %c0_i32 = arith.constant 0 : i32
    %c0_i32_0 = arith.constant 0 : i32
    %c0_i32_1 = arith.constant 0 : i32
    return %c0_i32, %c0_i32_0 : i32, i32
  }
  func.func @transform_9(%arg0: i32) -> (i32, i32) {
    %c0_i32 = arith.constant 0 : i32
    %c0_i32_0 = arith.constant 0 : i32
    %c0_i32_1 = arith.constant 0 : i32
    return %c0_i32, %c0_i32_0 : i32, i32
  }
  func.func @transform_10(%arg0: i32) -> (i32, i32) {
    %c0_i32 = arith.constant 0 : i32
    %c0_i32_0 = arith.constant 0 : i32
    %c0_i32_1 = arith.constant 0 : i32
    return %c0_i32, %c0_i32_0 : i32, i32
  }
  func.func @transform_11(%arg0: i32) -> (i32, i32) {
    %c0_i32 = arith.constant 0 : i32
    %c0_i32_0 = arith.constant 0 : i32
    %c0_i32_1 = arith.constant 0 : i32
    return %c0_i32, %c0_i32_0 : i32, i32
  }
  func.func @transform_12(%arg0: i32) -> (i32, i32, i32) {
    %c0_i32 = arith.constant 0 : i32
    %c0_i32_0 = arith.constant 0 : i32
    %c0_i32_1 = arith.constant 0 : i32
    %c0_i32_2 = arith.constant 0 : i32
    return %c0_i32, %c0_i32_0, %c0_i32_1 : i32, i32, i32
  }
  func.func @transform_13(%arg0: i32) -> (i32, i32, i32, i32) {
    %c0_i32 = arith.constant 0 : i32
    %c0_i32_0 = arith.constant 0 : i32
    %c0_i32_1 = arith.constant 0 : i32
    %c0_i32_2 = arith.constant 0 : i32
    return %arg0, %c0_i32, %c0_i32_0, %c0_i32_1 : i32, i32, i32, i32
  }
}

</mosaic_0001>

<llo_original>
// kernel: tpu_custom_call.1
$region0: #{tpu_custom_call.1}
  #allocation0 [shape = 'u32[]', space=smem, size = 0x4, offset = 0x4, fixed_abs, tag = 'smem constant byte address 0x4 - core index']
  #allocation1 [shape = 'u32[144,128]{1,0:T(1,128)}', space=vmem, size = 0x12000, scoped, tag = 'internal scratch']
  #allocation2 [shape = 'f32[22,32,128]{2,1,0:T(8,128)}', space=vmem, size = 0x58000, scoped, tag = 'scratch operand']
  %s0 = inlined_call_operand.hbm [shape: f32[2,16,16,128], index: 0, kind: input, shape index: {}]
  %s1 = inlined_call_operand.hbm [shape: f32[9,128], index: 1, kind: input, shape index: {}]
  %s2 = inlined_call_operand.hbm [shape: f32[1,1,128], index: 2, kind: input, shape index: {}]
  %s3 = inlined_call_operand.hbm [shape: bf16[128,128], index: 3, kind: input, shape index: {}]
  %s4 = inlined_call_operand.hbm [shape: f32[1,128], index: 4, kind: input, shape index: {}]
  %s5 = inlined_call_operand.hbm [shape: f32[1,128], index: 5, kind: input, shape index: {}]
  %s6 = inlined_call_operand.hbm [shape: f32[25,128], index: 6, kind: input, shape index: {}]
  %s7 = inlined_call_operand.hbm [shape: f32[1,1,128], index: 7, kind: input, shape index: {}]
  %s8 = inlined_call_operand.hbm [shape: bf16[128,128], index: 8, kind: input, shape index: {}]
  %s9 = inlined_call_operand.hbm [shape: f32[1,128], index: 9, kind: input, shape index: {}]
  %s10 = inlined_call_operand.hbm [shape: f32[1,128], index: 10, kind: input, shape index: {}]
  %s11 = inlined_call_operand.hbm [shape: f32[49,128], index: 11, kind: input, shape index: {}]
  %s12 = inlined_call_operand.hbm [shape: f32[1,1,128], index: 12, kind: input, shape index: {}]
  %s13 = inlined_call_operand.hbm [shape: f32[2,16,16,128], index: 13, kind: output, shape index: {}]
  %s14 = sld [smem:[#allocation0]]
  $region137: #{tpu_custom_call.1} parent=0
    _
  %s16 = ssub.s32 1, %s14
  %s17 = scalar_select 0, %s16, %s14
  $region1: #{tpu_custom_call.1} parent=0
    #allocation3 [shape = 'u8[262144]{0}', space=vmem, size = 0x40000, scoped, tag = 'input window, operand 0']
    #allocation4 [shape = 's32[2]{0}', space=sflag, size = 0x8, scoped, tag = 'scoped memory for tpu_custom_call.1']
    #allocation5 [shape = 's32[2]{0}', space=sflag, size = 0x8, scoped, tag = 'scoped memory for tpu_custom_call.1']
    #allocation6 [shape = 'u8[8192]{0}', space=vmem, size = 0x2000, scoped, tag = 'input window, operand 1, single buffered']
    #allocation7 [shape = 's32[1]{0}', space=sflag, size = 0x4, scoped, tag = 'scoped memory for tpu_custom_call.1']
    #allocation8 [shape = 'u8[512]{0}', space=vmem, size = 0x400, scoped, tag = 'input window, operand 2, single buffered']
    #allocation9 [shape = 'u8[32768]{0}', space=vmem, size = 0x8000, scoped, tag = 'input window, operand 3, single buffered']
    #allocation10 [shape = 's32[1]{0}', space=sflag, size = 0x4, scoped, tag = 'scoped memory for tpu_custom_call.1']
    #allocation11 [shape = 'u8[512]{0}', space=vmem, size = 0x400, scoped, tag = 'input window, operand 4, single buffered']
    #allocation12 [shape = 'u8[512]{0}', space=vmem, size = 0x400, scoped, tag = 'input window, operand 5, single buffered']
    #allocation13 [shape = 's32[1]{0}', space=sflag, size = 0x4, scoped, tag = 'scoped memory for tpu_custom_call.1']
    #allocation14 [shape = 'u8[16384]{0}', space=vmem, size = 0x4000, scoped, tag = 'input window, operand 6, single buffered']
    #allocation15 [shape = 'u8[512]{0}', space=vmem, size = 0x400, scoped, tag = 'input window, operand 7, single buffered']
    #allocation16 [shape = 's32[1]{0}', space=sflag, size = 0x4, scoped, tag = 'scoped memory for tpu_custom_call.1']
    #allocation17 [shape = 'u8[32768]{0}', space=vmem, size = 0x8000, scoped, tag = 'input window, operand 8, single buffered']
    #allocation18 [shape = 'u8[512]{0}', space=vmem, size = 0x400, scoped, tag = 'input window, operand 9, single buffered']
    #allocation19 [shape = 's32[1]{0}', space=sflag, size = 0x4, scoped, tag = 'scoped memory for tpu_custom_call.1']
    #allocation20 [shape = 'u8[512]{0}', space=vmem, size = 0x400, scoped, tag = 'input window, operand 10, single buffered']
    #allocation21 [shape = 'u8[28672]{0}', space=vmem, size = 0x7000, scoped, tag = 'input window, operand 11, single buffered']
    #allocation22 [shape = 's32[1]{0}', space=sflag, size = 0x4, scoped, tag = 'scoped memory for tpu_custom_call.1']
    #allocation23 [shape = 'u8[512]{0}', space=vmem, size = 0x400, scoped, tag = 'input window, operand 12, single buffered']
    #allocation24 [shape = 'u8[262144]{0}', space=vmem, size = 0x40000, scoped, tag = 'output window, operand 0']
    %18 = vsyncpa [#allocation4], 0
    %s19 = scalar_lea.sflag [#allocation4], 1
    %20 = vsyncpa %s19, 0
    %21 = vsyncpa [#allocation7], 0
    %22 = vsyncpa [#allocation10], 0
    %23 = vsyncpa [#allocation13], 0
    %24 = vsyncpa [#allocation16], 0
    %25 = vsyncpa [#allocation19], 0
    %26 = vsyncpa [#allocation22], 0
    %27 = vsyncpa [#allocation5], 0
    %s28 = scalar_lea.sflag [#allocation5], 1
    %29 = vsyncpa %s28, 0
    loop: start=0, step=1, limit=4
    $region2: #{tpu_custom_call.1} parent=1 // loop_pre_header
      _
    $region3: #{tpu_custom_call.1} parent=1 // loop_header
      %s31 = sphi 0, %s35
      %p32 = scmp.ge.s32.totalorder %s31, 4
      %s41 = sphi 0, %s43
      %s44 = sphi 0, %s41
      %s45 = sphi 0, %s44
      %s61 = sphi 0, %s45
      %s65 = sphi 0, %s65
      %s67 = sphi 0, %s65
      %s68 = sphi 0, %s67
      %s82 = sphi 0, %s68
      %s86 = sphi 0, %s86
      %s88 = sphi 0, %s86
      %s89 = sphi 0, %s88
      %s103 = sphi 0, %s89
      %s107 = sphi 0, %s107
      %s109 = sphi 0, %s107
      %s110 = sphi 0, %s109
      %s124 = sphi 0, %s110
      %s128 = sphi 0, %s128
      %s130 = sphi 0, %s128
      %s131 = sphi 0, %s130
      %s145 = sphi 0, %s131
      %s149 = sphi 0, %s149
      %s151 = sphi 0, %s149
      %s152 = sphi 0, %s151
      %s166 = sphi 0, %s152
      %s170 = sphi 0, %s170
      %s172 = sphi 0, %s170
      %s173 = sphi 0, %s172
      %s187 = sphi 0, %s173
      %s191 = sphi 0, %s191
      %s193 = sphi 0, %s191
      %s194 = sphi 0, %s193
      %s208 = sphi 0, %s194
      %s212 = sphi 0, %s212
      %s214 = sphi 0, %s212
      %s215 = sphi 0, %s214
      %s229 = sphi 0, %s215
      %s233 = sphi 0, %s233
      %s235 = sphi 0, %s233
      %s236 = sphi 0, %s235
      %s250 = sphi 0, %s236
      %s254 = sphi 0, %s254
      %s256 = sphi 0, %s254
      %s257 = sphi 0, %s256
      %s271 = sphi 0, %s257
      %s275 = sphi 0, %s275
      %s277 = sphi 0, %s275
      %s278 = sphi 0, %s277
      %s292 = sphi 0, %s278
      %s296 = sphi 0, %s296
      %s298 = sphi 0, %s296
      %s299 = sphi 0, %s298
      %s313 = sphi 0, %s299
      %s319 = sphi 0, %s321
      %s322 = sphi 0, %s319
      %s323 = sphi 0, %s322
      %s339 = sphi 0, %s323
    $region4: #{tpu_custom_call.1} parent=1 // loop_header_branch
      %34 = sbr.rel (%p32) target = $region8
    $region5: #{tpu_custom_call.1} parent=1 // loop_body
      %s36 = ssub.s32 %s31, 1
      %s37 = ssub.s32 %s31, 2
      %s38 = sadd.s32 %s31, 1
      %s39 = ssub.s32 %s31, %s38
      %p40 = scmp.eq.s32.totalorder %s39, 0
      %s42 = sadd.s32 %s41, 1
      %s43 = scalar_select %p40, %s41, %s42
      %p46 = pneg %p40
      %p47 = scmp.eq.s32.totalorder %s31, 1
      %p48 = por %p46, %p47
      %p49 = scmp.ne.s32.totalorder %s41, %s44
      %p50 = scmp.eq.s32.totalorder %s31, 0
      %p51 = por %p49, %p50
      %p52 = scmp.ne.s32.totalorder %s41, %s44
      %p53 = scmp.eq.s32.totalorder %s36, 1
      %p54 = por %p52, %p53
      %p55 = scmp.ne.s32.totalorder %s44, %s45
      %p56 = scmp.eq.s32.totalorder %s36, 0
      %p57 = por %p55, %p56
      %p58 = scmp.ne.s32.totalorder %s44, %s45
      %p59 = scmp.eq.s32.totalorder %s37, 1
      %p60 = por %p58, %p59
      %p62 = scmp.ne.s32.totalorder %s45, %s61
      %p63 = scmp.eq.s32.totalorder %s37, 0
      %p64 = por %p62, %p63
      %s66 = sadd.s32 %s65, 1
      %p69 = scmp.eq.s32.totalorder %s31, 1
      %p70 = scmp.ne.s32.totalorder %s65, %s67
      %p71 = scmp.eq.s32.totalorder %s31, 0
      %p72 = por %p70, %p71
      %p73 = scmp.ne.s32.totalorder %s65, %s67
      %p74 = scmp.eq.s32.totalorder %s36, 1
      %p75 = por %p73, %p74
      %p76 = scmp.ne.s32.totalorder %s67, %s68
      %p77 = scmp.eq.s32.totalorder %s36, 0
      %p78 = por %p76, %p77
      %p79 = scmp.ne.s32.totalorder %s67, %s68
      %p80 = scmp.eq.s32.totalorder %s37, 1
      %p81 = por %p79, %p80
      %p83 = scmp.ne.s32.totalorder %s68, %s82
      %p84 = scmp.eq.s32.totalorder %s37, 0
      %p85 = por %p83, %p84
      %s87 = sadd.s32 %s86, 1
      %p90 = scmp.eq.s32.totalorder %s31, 1
      %p91 = scmp.ne.s32.totalorder %s86, %s88
      %p92 = scmp.eq.s32.totalorder %s31, 0
      %p93 = por %p91, %p92
      %p94 = scmp.ne.s32.totalorder %s86, %s88
      %p95 = scmp.eq.s32.totalorder %s36, 1
      %p96 = por %p94, %p95
      %p97 = scmp.ne.s32.totalorder %s88, %s89
      %p98 = scmp.eq.s32.totalorder %s36, 0
      %p99 = por %p97, %p98
      %p100 = scmp.ne.s32.totalorder %s88, %s89
      %p101 = scmp.eq.s32.totalorder %s37, 1
      %p102 = por %p100, %p101
      %p104 = scmp.ne.s32.totalorder %s89, %s103
      %p105 = scmp.eq.s32.totalorder %s37, 0
      %p106 = por %p104, %p105
      %s108 = sadd.s32 %s107, 1
      %p111 = scmp.eq.s32.totalorder %s31, 1
      %p112 = scmp.ne.s32.totalorder %s107, %s109
      %p113 = scmp.eq.s32.totalorder %s31, 0
      %p114 = por %p112, %p113
      %p115 = scmp.ne.s32.totalorder %s107, %s109
      %p116 = scmp.eq.s32.totalorder %s36, 1
      %p117 = por %p115, %p116
      %p118 = scmp.ne.s32.totalorder %s109, %s110
      %p119 = scmp.eq.s32.totalorder %s36, 0
      %p120 = por %p118, %p119
      %p121 = scmp.ne.s32.totalorder %s109, %s110
      %p122 = scmp.eq.s32.totalorder %s37, 1
      %p123 = por %p121, %p122
      %p125 = scmp.ne.s32.totalorder %s110, %s124
      %p126 = scmp.eq.s32.totalorder %s37, 0
      %p127 = por %p125, %p126
      %s129 = sadd.s32 %s128, 1
      %p132 = scmp.eq.s32.totalorder %s31, 1
      %p133 = scmp.ne.s32.totalorder %s128, %s130
      %p134 = scmp.eq.s32.totalorder %s31, 0
      %p135 = por %p133, %p134
      %p136 = scmp.ne.s32.totalorder %s128, %s130
      %p137 = scmp.eq.s32.totalorder %s36, 1
      %p138 = por %p136, %p137
      %p139 = scmp.ne.s32.totalorder %s130, %s131
      %p140 = scmp.eq.s32.totalorder %s36, 0
      %p141 = por %p139, %p140
      %p142 = scmp.ne.s32.totalorder %s130, %s131
      %p143 = scmp.eq.s32.totalorder %s37, 1
      %p144 = por %p142, %p143
      %p146 = scmp.ne.s32.totalorder %s131, %s145
      %p147 = scmp.eq.s32.totalorder %s37, 0
      %p148 = por %p146, %p147
      %s150 = sadd.s32 %s149, 1
      %p153 = scmp.eq.s32.totalorder %s31, 1
      %p154 = scmp.ne.s32.totalorder %s149, %s151
      %p155 = scmp.eq.s32.totalorder %s31, 0
      %p156 = por %p154, %p155
      %p157 = scmp.ne.s32.totalorder %s149, %s151
      %p158 = scmp.eq.s32.totalorder %s36, 1
      %p159 = por %p157, %p158
      %p160 = scmp.ne.s32.totalorder %s151, %s152
      %p161 = scmp.eq.s32.totalorder %s36, 0
      %p162 = por %p160, %p161
      %p163 = scmp.ne.s32.totalorder %s151, %s152
      %p164 = scmp.eq.s32.totalorder %s37, 1
      %p165 = por %p163, %p164
      %p167 = scmp.ne.s32.totalorder %s152, %s166
      %p168 = scmp.eq.s32.totalorder %s37, 0
      %p169 = por %p167, %p168
      %s171 = sadd.s32 %s170, 1
      %p174 = scmp.eq.s32.totalorder %s31, 1
      %p175 = scmp.ne.s32.totalorder %s170, %s172
      %p176 = scmp.eq.s32.totalorder %s31, 0
      %p177 = por %p175, %p176
      %p178 = scmp.ne.s32.totalorder %s170, %s172
      %p179 = scmp.eq.s32.totalorder %s36, 1
      %p180 = por %p178, %p179
      %p181 = scmp.ne.s32.totalorder %s172, %s173
      %p182 = scmp.eq.s32.totalorder %s36, 0
      %p183 = por %p181, %p182
      %p184 = scmp.ne.s32.totalorder %s172, %s173
      %p185 = scmp.eq.s32.totalorder %s37, 1
      %p186 = por %p184, %p185
      %p188 = scmp.ne.s32.totalorder %s173, %s187
      %p189 = scmp.eq.s32.totalorder %s37, 0
      %p190 = por %p188, %p189
      %s192 = sadd.s32 %s191, 1
      %p195 = scmp.eq.s32.totalorder %s31, 1
      %p196 = scmp.ne.s32.totalorder %s191, %s193
      %p197 = scmp.eq.s32.totalorder %s31, 0
      %p198 = por %p196, %p197
      %p199 = scmp.ne.s32.totalorder %s191, %s193
      %p200 = scmp.eq.s32.totalorder %s36, 1
      %p201 = por %p199, %p200
      %p202 = scmp.ne.s32.totalorder %s193, %s194
      %p203 = scmp.eq.s32.totalorder %s36, 0
      %p204 = por %p202, %p203
      %p205 = scmp.ne.s32.totalorder %s193, %s194
      %p206 = scmp.eq.s32.totalorder %s37, 1
      %p207 = por %p205, %p206
      %p209 = scmp.ne.s32.totalorder %s194, %s208
      %p210 = scmp.eq.s32.totalorder %s37, 0
      %p211 = por %p209, %p210
      %s213 = sadd.s32 %s212, 1
      %p216 = scmp.eq.s32.totalorder %s31, 1
      %p217 = scmp.ne.s32.totalorder %s212, %s214
      %p218 = scmp.eq.s32.totalorder %s31, 0
      %p219 = por %p217, %p218
      %p220 = scmp.ne.s32.totalorder %s212, %s214
      %p221 = scmp.eq.s32.totalorder %s36, 1
      %p222 = por %p220, %p221
      %p223 = scmp.ne.s32.totalorder %s214, %s215
      %p224 = scmp.eq.s32.totalorder %s36, 0
      %p225 = por %p223, %p224
      %p226 = scmp.ne.s32.totalorder %s214, %s215
      %p227 = scmp.eq.s32.totalorder %s37, 1
      %p228 = por %p226, %p227
      %p230 = scmp.ne.s32.totalorder %s215, %s229
      %p231 = scmp.eq.s32.totalorder %s37, 0
      %p232 = por %p230, %p231
      %s234 = sadd.s32 %s233, 1
      %p237 = scmp.eq.s32.totalorder %s31, 1
      %p238 = scmp.ne.s32.totalorder %s233, %s235
      %p239 = scmp.eq.s32.totalorder %s31, 0
      %p240 = por %p238, %p239
      %p241 = scmp.ne.s32.totalorder %s233, %s235
      %p242 = scmp.eq.s32.totalorder %s36, 1
      %p243 = por %p241, %p242
      %p244 = scmp.ne.s32.totalorder %s235, %s236
      %p245 = scmp.eq.s32.totalorder %s36, 0
      %p246 = por %p244, %p245
      %p247 = scmp.ne.s32.totalorder %s235, %s236
      %p248 = scmp.eq.s32.totalorder %s37, 1
      %p249 = por %p247, %p248
      %p251 = scmp.ne.s32.totalorder %s236, %s250
      %p252 = scmp.eq.s32.totalorder %s37, 0
      %p253 = por %p251, %p252
      %s255 = sadd.s32 %s254, 1
      %p258 = scmp.eq.s32.totalorder %s31, 1
      %p259 = scmp.ne.s32.totalorder %s254, %s256
      %p260 = scmp.eq.s32.totalorder %s31, 0
      %p261 = por %p259, %p260
      %p262 = scmp.ne.s32.totalorder %s254, %s256
      %p263 = scmp.eq.s32.totalorder %s36, 1
      %p264 = por %p262, %p263
      %p265 = scmp.ne.s32.totalorder %s256, %s257
      %p266 = scmp.eq.s32.totalorder %s36, 0
      %p267 = por %p265, %p266
      %p268 = scmp.ne.s32.totalorder %s256, %s257
      %p269 = scmp.eq.s32.totalorder %s37, 1
      %p270 = por %p268, %p269
      %p272 = scmp.ne.s32.totalorder %s257, %s271
      %p273 = scmp.eq.s32.totalorder %s37, 0
      %p274 = por %p272, %p273
      %s276 = sadd.s32 %s275, 1
      %p279 = scmp.eq.s32.totalorder %s31, 1
      %p280 = scmp.ne.s32.totalorder %s275, %s277
      %p281 = scmp.eq.s32.totalorder %s31, 0
      %p282 = por %p280, %p281
      %p283 = scmp.ne.s32.totalorder %s275, %s277
      %p284 = scmp.eq.s32.totalorder %s36, 1
      %p285 = por %p283, %p284
      %p286 = scmp.ne.s32.totalorder %s277, %s278
      %p287 = scmp.eq.s32.totalorder %s36, 0
      %p288 = por %p286, %p287
      %p289 = scmp.ne.s32.totalorder %s277, %s278
      %p290 = scmp.eq.s32.totalorder %s37, 1
      %p291 = por %p289, %p290
      %p293 = scmp.ne.s32.totalorder %s278, %s292
      %p294 = scmp.eq.s32.totalorder %s37, 0
      %p295 = por %p293, %p294
      %s297 = sadd.s32 %s296, 1
      %p300 = scmp.eq.s32.totalorder %s31, 1
      %p301 = scmp.ne.s32.totalorder %s296, %s298
      %p302 = scmp.eq.s32.totalorder %s31, 0
      %p303 = por %p301, %p302
      %p304 = scmp.ne.s32.totalorder %s296, %s298
      %p305 = scmp.eq.s32.totalorder %s36, 1
      %p306 = por %p304, %p305
      %p307 = scmp.ne.s32.totalorder %s298, %s299
      %p308 = scmp.eq.s32.totalorder %s36, 0
      %p309 = por %p307, %p308
      %p310 = scmp.ne.s32.totalorder %s298, %s299
      %p311 = scmp.eq.s32.totalorder %s37, 1
      %p312 = por %p310, %p311
      %p314 = scmp.ne.s32.totalorder %s299, %s313
      %p315 = scmp.eq.s32.totalorder %s37, 0
      %p316 = por %p314, %p315
      %s317 = ssub.s32 %s31, %s38
      %p318 = scmp.eq.s32.totalorder %s317, 0
      %s320 = sadd.s32 %s319, 1
      %s321 = scalar_select %p318, %s319, %s320
      %p324 = pneg %p318
      %p325 = scmp.eq.s32.totalorder %s31, 1
      %p326 = por %p324, %p325
      %p327 = scmp.ne.s32.totalorder %s319, %s322
      %p328 = scmp.eq.s32.totalorder %s31, 0
      %p329 = por %p327, %p328
      %p330 = scmp.ne.s32.totalorder %s319, %s322
      %p331 = scmp.eq.s32.totalorder %s36, 1
      %p332 = por %p330, %p331
      %p333 = scmp.ne.s32.totalorder %s322, %s323
      %p334 = scmp.eq.s32.totalorder %s36, 0
      %p335 = por %p333, %p334
      %p336 = scmp.ne.s32.totalorder %s322, %s323
      %p337 = scmp.eq.s32.totalorder %s37, 1
      %p338 = por %p336, %p337
      %p340 = scmp.ne.s32.totalorder %s323, %s339
      %p341 = scmp.eq.s32.totalorder %s37, 0
      %p342 = por %p340, %p341
      %p343 = scmp.le.s32.totalorder 1, %s31
      %p344 = scmp.lt.s32.totalorder %s31, 3
      %p345 = pnand %p343, %p344
      %p346 = pneg %p345
      // Predicated region
      $region9: #{tpu_custom_call.1} parent=5 // pred_check
        _
      $region10: #{tpu_custom_call.1} parent=5 // pred_check_branch
        %348 = sbr.rel (%p345) target = $region12
      $region11: #{tpu_custom_call.1} parent=5 // pred_region
        %s349 = ssub.s32 %s31, 1
        // Predicated region
        $region13: #{tpu_custom_call.1} parent=11 // pred_check
          %p350 = pneg %p78
        $region14: #{tpu_custom_call.1} parent=11 // pred_check_branch
          %352 = sbr.rel (%p350) target = $region16
        $region15: #{tpu_custom_call.1} parent=11 // pred_region
          %s354 = ssub.s32 256, 256
          %355 = vsyncadd [#allocation7], %s354
          %s356 = sshll.u32 [#allocation6], 4
          %s357 = int_to_ptr.vmem [resolvable:$true] %s356
          %362 = dma.hbm_to_vmem [thread:$0]  %s1, 256, %s357, [#allocation7], 128, 128, 8
        $region16: #{tpu_custom_call.1} parent=11 // pred_fallthru
          _
        // Predicated region
        $region17: #{tpu_custom_call.1} parent=11 // pred_check
          %p363 = pneg %p99
        $region18: #{tpu_custom_call.1} parent=11 // pred_check_branch
          %365 = sbr.rel (%p363) target = $region20
        $region19: #{tpu_custom_call.1} parent=11 // pred_region
          %s367 = ssub.s32 16, 16
          %368 = vsyncadd [#allocation7], %s367
          %s370 = sshll.u32 [#allocation8], 4
          %s371 = int_to_ptr.vmem [resolvable:$true] %s370
          %373 = dma.hbm_to_vmem [thread:$0]  %s2, 16, %s371, [#allocation7]
        $region20: #{tpu_custom_call.1} parent=11 // pred_fallthru
          _
        // Predicated region
        $region21: #{tpu_custom_call.1} parent=11 // pred_check
          %p374 = pneg %p120
        $region22: #{tpu_custom_call.1} parent=11 // pred_check_branch
          %376 = sbr.rel (%p374) target = $region24
        $region23: #{tpu_custom_call.1} parent=11 // pred_region
          %s378 = ssub.s32 1024, 1024
          %379 = vsyncadd [#allocation10], %s378
          %s380 = sshll.u32 [#allocation9], 4
          %s381 = int_to_ptr.vmem [resolvable:$true] %s380
          %386 = dma.hbm_to_vmem [thread:$0]  %s3, 1024, %s381, [#allocation10], 64, 64, 4
        $region24: #{tpu_custom_call.1} parent=11 // pred_fallthru
          _
        // Predicated region
        $region25: #{tpu_custom_call.1} parent=11 // pred_check
          %p387 = pneg %p141
        $region26: #{tpu_custom_call.1} parent=11 // pred_check_branch
          %389 = sbr.rel (%p387) target = $region28
        $region27: #{tpu_custom_call.1} parent=11 // pred_region
          %s391 = ssub.s32 16, 16
          %392 = vsyncadd [#allocation10], %s391
          %s394 = sshll.u32 [#allocation11], 4
          %s395 = int_to_ptr.vmem [resolvable:$true] %s394
          %397 = dma.hbm_to_vmem [thread:$0]  %s4, 16, %s395, [#allocation10]
        $region28: #{tpu_custom_call.1} parent=11 // pred_fallthru
          _
        // Predicated region
        $region29: #{tpu_custom_call.1} parent=11 // pred_check
          %p398 = pneg %p162
        $region30: #{tpu_custom_call.1} parent=11 // pred_check_branch
          %400 = sbr.rel (%p398) target = $region32
        $region31: #{tpu_custom_call.1} parent=11 // pred_region
          %s402 = ssub.s32 16, 16
          %403 = vsyncadd [#allocation13], %s402
          %s405 = sshll.u32 [#allocation12], 4
          %s406 = int_to_ptr.vmem [resolvable:$true] %s405
          %408 = dma.hbm_to_vmem [thread:$0]  %s5, 16, %s406, [#allocation13]
        $region32: #{tpu_custom_call.1} parent=11 // pred_fallthru
          _
        // Predicated region
        $region33: #{tpu_custom_call.1} parent=11 // pred_check
          %p409 = pneg %p183
        $region34: #{tpu_custom_call.1} parent=11 // pred_check_branch
          %411 = sbr.rel (%p409) target = $region36
        $region35: #{tpu_custom_call.1} parent=11 // pred_region
          %s413 = ssub.s32 512, 512
          %414 = vsyncadd [#allocation13], %s413
          %s415 = sshll.u32 [#allocation14], 4
          %s416 = int_to_ptr.vmem [resolvable:$true] %s415
          %421 = dma.hbm_to_vmem [thread:$0]  %s6, 512, %s416, [#allocation13], 128, 128, 8
        $region36: #{tpu_custom_call.1} parent=11 // pred_fallthru
          _
        // Predicated region
        $region37: #{tpu_custom_call.1} parent=11 // pred_check
          %p422 = pneg %p204
        $region38: #{tpu_custom_call.1} parent=11 // pred_check_branch
          %424 = sbr.rel (%p422) target = $region40
        $region39: #{tpu_custom_call.1} parent=11 // pred_region
          %s426 = ssub.s32 16, 16
          %427 = vsyncadd [#allocation16], %s426
          %s429 = sshll.u32 [#allocation15], 4
          %s430 = int_to_ptr.vmem [resolvable:$true] %s429
          %432 = dma.hbm_to_vmem [thread:$0]  %s7, 16, %s430, [#allocation16]
        $region40: #{tpu_custom_call.1} parent=11 // pred_fallthru
          _
        // Predicated region
        $region41: #{tpu_custom_call.1} parent=11 // pred_check
          %p433 = pneg %p225
        $region42: #{tpu_custom_call.1} parent=11 // pred_check_branch
          %435 = sbr.rel (%p433) target = $region44
        $region43: #{tpu_custom_call.1} parent=11 // pred_region
          %s437 = ssub.s32 1024, 1024
          %438 = vsyncadd [#allocation16], %s437
          %s439 = sshll.u32 [#allocation17], 4
          %s440 = int_to_ptr.vmem [resolvable:$true] %s439
          %445 = dma.hbm_to_vmem [thread:$0]  %s8, 1024, %s440, [#allocation16], 64, 64, 4
        $region44: #{tpu_custom_call.1} parent=11 // pred_fallthru
          _
        // Predicated region
        $region45: #{tpu_custom_call.1} parent=11 // pred_check
          %p446 = pneg %p246
        $region46: #{tpu_custom_call.1} parent=11 // pred_check_branch
          %448 = sbr.rel (%p446) target = $region48
        $region47: #{tpu_custom_call.1} parent=11 // pred_region
          %s450 = ssub.s32 16, 16
          %451 = vsyncadd [#allocation19], %s450
          %s453 = sshll.u32 [#allocation18], 4
          %s454 = int_to_ptr.vmem [resolvable:$true] %s453
          %456 = dma.hbm_to_vmem [thread:$0]  %s9, 16, %s454, [#allocation19]
        $region48: #{tpu_custom_call.1} parent=11 // pred_fallthru
          _
        // Predicated region
        $region49: #{tpu_custom_call.1} parent=11 // pred_check
          %p457 = pneg %p267
        $region50: #{tpu_custom_call.1} parent=11 // pred_check_branch
          %459 = sbr.rel (%p457) target = $region52
        $region51: #{tpu_custom_call.1} parent=11 // pred_region
          %s461 = ssub.s32 16, 16
          %462 = vsyncadd [#allocation19], %s461
          %s464 = sshll.u32 [#allocation20], 4
          %s465 = int_to_ptr.vmem [resolvable:$true] %s464
          %467 = dma.hbm_to_vmem [thread:$0]  %s10, 16, %s465, [#allocation19]
        $region52: #{tpu_custom_call.1} parent=11 // pred_fallthru
          _
        // Predicated region
        $region53: #{tpu_custom_call.1} parent=11 // pred_check
          %p468 = pneg %p288
        $region54: #{tpu_custom_call.1} parent=11 // pred_check_branch
          %470 = sbr.rel (%p468) target = $region56
        $region55: #{tpu_custom_call.1} parent=11 // pred_region
          %s472 = ssub.s32 896, 896
          %473 = vsyncadd [#allocation22], %s472
          %s474 = sshll.u32 [#allocation21], 4
          %s475 = int_to_ptr.vmem [resolvable:$true] %s474
          %480 = dma.hbm_to_vmem [thread:$0]  %s11, 896, %s475, [#allocation22], 128, 128, 8
        $region56: #{tpu_custom_call.1} parent=11 // pred_fallthru
          _
        // Predicated region
        $region57: #{tpu_custom_call.1} parent=11 // pred_check
          %p481 = pneg %p309
        $region58: #{tpu_custom_call.1} parent=11 // pred_check_branch
          %483 = sbr.rel (%p481) target = $region60
        $region59: #{tpu_custom_call.1} parent=11 // pred_region
          %s485 = ssub.s32 16, 16
          %486 = vsyncadd [#allocation22], %s485
          %s488 = sshll.u32 [#allocation23], 4
          %s489 = int_to_ptr.vmem [resolvable:$true] %s488
          %491 = dma.hbm_to_vmem [thread:$0]  %s12, 16, %s489, [#allocation22]
        $region60: #{tpu_custom_call.1} parent=11 // pred_fallthru
          _
      $region12: #{tpu_custom_call.1} parent=5 // pred_fallthru
        _
      %p492 = scmp.lt.s32.totalorder %s31, 2
      // Predicated region
      $region61: #{tpu_custom_call.1} parent=5 // pred_check
        %p493 = pneg %p492
      $region62: #{tpu_custom_call.1} parent=5 // pred_check_branch
        %495 = sbr.rel (%p493) target = $region64
      $region63: #{tpu_custom_call.1} parent=5 // pred_region
        // Predicated region
        $region65: #{tpu_custom_call.1} parent=63 // pred_check
          %p496 = pneg %p51
        $region66: #{tpu_custom_call.1} parent=63 // pred_check_branch
          %498 = sbr.rel (%p496) target = $region68
        $region67: #{tpu_custom_call.1} parent=63 // pred_region
          %s499 = sand.u32 %s41, 1
          %s500 = scalar_lea.sflag [#allocation4], %s499
          %s501 = sand.u32 %s41, 1
          %s502 = smul.addr %s501, 256
          %s503 = scalar_lea.vmem [#allocation3], %s502
          %s505 = ssub.s32 4096, 4096
          %506 = vsyncadd %s500, %s505
          %s507 = smul.addr %s31, 32
          %s508 = smul.addr %s507, 128
          %s509 = scalar_lea.hbm %s0, %s508
          %s510 = sshll.u32 %s503, 4
          %s511 = int_to_ptr.vmem [resolvable:$true] %s510
          %516 = dma.hbm_to_vmem [thread:$0]  %s509, 4096, %s511, %s500, 128, 128, 8
        $region68: #{tpu_custom_call.1} parent=63 // pred_fallthru
          _
      $region64: #{tpu_custom_call.1} parent=5 // pred_fallthru
        _
      %p517 = scmp.le.s32.totalorder 1, %s31
      %p518 = scmp.lt.s32.totalorder %s31, 3
      %p519 = pnand %p517, %p518
      %p520 = pneg %p519
      // Predicated region
      $region69: #{tpu_custom_call.1} parent=5 // pred_check
        _
      $region70: #{tpu_custom_call.1} parent=5 // pred_check_branch
        %522 = sbr.rel (%p519) target = $region72
      $region71: #{tpu_custom_call.1} parent=5 // pred_region
        %s523 = ssub.s32 %s31, 1
        %s524 = sand.u32 %s44, 1
        %s525 = scalar_lea.sflag [#allocation4], %s524
        %s526 = sand.u32 %s44, 1
        %s527 = smul.addr %s526, 256
        %s528 = scalar_lea.vmem [#allocation3], %s527
        // Predicated region
        $region73: #{tpu_custom_call.1} parent=71 // pred_check
          %p529 = pneg %p57
        $region74: #{tpu_custom_call.1} parent=71 // pred_check_branch
          %531 = sbr.rel (%p529) target = $region76
        $region75: #{tpu_custom_call.1} parent=71 // pred_region
          %532 = dma.done %s525, 4096
        $region76: #{tpu_custom_call.1} parent=71 // pred_fallthru
          _
        // Predicated region
        $region77: #{tpu_custom_call.1} parent=71 // pred_check
          %p533 = pneg %p78
        $region78: #{tpu_custom_call.1} parent=71 // pred_check_branch
          %535 = sbr.rel (%p533) target = $region80
        $region79: #{tpu_custom_call.1} parent=71 // pred_region
          %536 = dma.done [#allocation7], 256
        $region80: #{tpu_custom_call.1} parent=71 // pred_fallthru
          _
        // Predicated region
        $region81: #{tpu_custom_call.1} parent=71 // pred_check
          %p537 = pneg %p99
        $region82: #{tpu_custom_call.1} parent=71 // pred_check_branch
          %539 = sbr.rel (%p537) target = $region84
        $region83: #{tpu_custom_call.1} parent=71 // pred_region
          %540 = dma.done [#allocation7], 16
        $region84: #{tpu_custom_call.1} parent=71 // pred_fallthru
          _
        // Predicated region
        $region85: #{tpu_custom_call.1} parent=71 // pred_check
          %p541 = pneg %p120
        $region86: #{tpu_custom_call.1} parent=71 // pred_check_branch
          %543 = sbr.rel (%p541) target = $region88
        $region87: #{tpu_custom_call.1} parent=71 // pred_region
          %544 = dma.done [#allocation10], 1024
        $region88: #{tpu_custom_call.1} parent=71 // pred_fallthru
          _
        // Predicated region
        $region89: #{tpu_custom_call.1} parent=71 // pred_check
          %p545 = pneg %p141
        $region90: #{tpu_custom_call.1} parent=71 // pred_check_branch
          %547 = sbr.rel (%p545) target = $region92
        $region91: #{tpu_custom_call.1} parent=71 // pred_region
          %548 = dma.done [#allocation10], 16
        $region92: #{tpu_custom_call.1} parent=71 // pred_fallthru
          _
        // Predicated region
        $region93: #{tpu_custom_call.1} parent=71 // pred_check
          %p549 = pneg %p162
        $region94: #{tpu_custom_call.1} parent=71 // pred_check_branch
          %551 = sbr.rel (%p549) target = $region96
        $region95: #{tpu_custom_call.1} parent=71 // pred_region
          %552 = dma.done [#allocation13], 16
        $region96: #{tpu_custom_call.1} parent=71 // pred_fallthru
          _
        // Predicated region
        $region97: #{tpu_custom_call.1} parent=71 // pred_check
          %p553 = pneg %p183
        $region98: #{tpu_custom_call.1} parent=71 // pred_check_branch
          %555 = sbr.rel (%p553) target = $region100
        $region99: #{tpu_custom_call.1} parent=71 // pred_region
          %556 = dma.done [#allocation13], 512
        $region100: #{tpu_custom_call.1} parent=71 // pred_fallthru
          _
        // Predicated region
        $region101: #{tpu_custom_call.1} parent=71 // pred_check
          %p557 = pneg %p204
        $region102: #{tpu_custom_call.1} parent=71 // pred_check_branch
          %559 = sbr.rel (%p557) target = $region104
        $region103: #{tpu_custom_call.1} parent=71 // pred_region
          %560 = dma.done [#allocation16], 16
        $region104: #{tpu_custom_call.1} parent=71 // pred_fallthru
          _
        // Predicated region
        $region105: #{tpu_custom_call.1} parent=71 // pred_check
          %p561 = pneg %p225
        $region106: #{tpu_custom_call.1} parent=71 // pred_check_branch
          %563 = sbr.rel (%p561) target = $region108
        $region107: #{tpu_custom_call.1} parent=71 // pred_region
          %564 = dma.done [#allocation16], 1024
        $region108: #{tpu_custom_call.1} parent=71 // pred_fallthru
          _
        // Predicated region
        $region109: #{tpu_custom_call.1} parent=71 // pred_check
          %p565 = pneg %p246
        $region110: #{tpu_custom_call.1} parent=71 // pred_check_branch
          %567 = sbr.rel (%p565) target = $region112
        $region111: #{tpu_custom_call.1} parent=71 // pred_region
          %568 = dma.done [#allocation19], 16
        $region112: #{tpu_custom_call.1} parent=71 // pred_fallthru
          _
        // Predicated region
        $region113: #{tpu_custom_call.1} parent=71 // pred_check
          %p569 = pneg %p267
        $region114: #{tpu_custom_call.1} parent=71 // pred_check_branch
          %571 = sbr.rel (%p569) target = $region116
        $region115: #{tpu_custom_call.1} parent=71 // pred_region
          %572 = dma.done [#allocation19], 16
        $region116: #{tpu_custom_call.1} parent=71 // pred_fallthru
          _
        // Predicated region
        $region117: #{tpu_custom_call.1} parent=71 // pred_check
          %p573 = pneg %p288
        $region118: #{tpu_custom_call.1} parent=71 // pred_check_branch
          %575 = sbr.rel (%p573) target = $region120
        $region119: #{tpu_custom_call.1} parent=71 // pred_region
          %576 = dma.done [#allocation22], 896
        $region120: #{tpu_custom_call.1} parent=71 // pred_fallthru
          _
        // Predicated region
        $region121: #{tpu_custom_call.1} parent=71 // pred_check
          %p577 = pneg %p309
        $region122: #{tpu_custom_call.1} parent=71 // pred_check_branch
          %579 = sbr.rel (%p577) target = $region124
        $region123: #{tpu_custom_call.1} parent=71 // pred_region
          %580 = dma.done [#allocation22], 16
        $region124: #{tpu_custom_call.1} parent=71 // pred_fallthru
          _
        %s581 = sand.u32 %s44, 1
        %s582 = scalar_lea.sflag [#allocation4], %s581
        %s583 = sand.u32 %s44, 1
        %s584 = smul.addr %s583, 256
        %s585 = scalar_lea.vmem [#allocation3], %s584
        %p586 = pneg %p57
        %p587 = pneg %p54
        %p588 = pneg %p78
        %p589 = pneg %p75
        %p590 = pneg %p99
        %p591 = pneg %p96
        %p592 = pneg %p120
        %p593 = pneg %p117
        %p594 = pneg %p141
        %p595 = pneg %p138
        %p596 = pneg %p162
        %p597 = pneg %p159
        %p598 = pneg %p183
        %p599 = pneg %p180
        %p600 = pneg %p204
        %p601 = pneg %p201
        %p602 = pneg %p225
        %p603 = pneg %p222
        %p604 = pneg %p246
        %p605 = pneg %p243
        %p606 = pneg %p267
        %p607 = pneg %p264
        %p608 = pneg %p288
        %p609 = pneg %p285
        %p610 = pneg %p309
        %p611 = pneg %p306
        %p612 = pneg %p335
        %p613 = pneg %p332
        %s614 = sand.u32 %s322, 1
        %s615 = scalar_lea.sflag [#allocation5], %s614
        %s616 = sand.u32 %s322, 1
        %s617 = smul.addr %s616, 256
        %s618 = scalar_lea.vmem [#allocation24], %s617
        %620 = vst [vmem:[#allocation2] sm:$0xff] 0.0
        %621 = vst [vmem:[#allocation2 + $0x8] sm:$0xff] 0.0
        %622 = vst [vmem:[#allocation2 + $0x10] sm:$0xff] 0.0
        %623 = vst [vmem:[#allocation2 + $0x18] sm:$0xff] 0.0
        %624 = vst [vmem:[#allocation2 + $0x20] sm:$0xff] 0.0
        %625 = vst [vmem:[#allocation2 + $0x28] sm:$0xff] 0.0
        %626 = vst [vmem:[#allocation2 + $0x30] sm:$0xff] 0.0
        %627 = vst [vmem:[#allocation2 + $0x38] sm:$0xff] 0.0
        %628 = vst [vmem:[#allocation2 + $0x40] sm:$0xff] 0.0
        %629 = vst [vmem:[#allocation2 + $0x48] sm:$0xff] 0.0
        %630 = vst [vmem:[#allocation2 + $0x50] sm:$0xff] 0.0
        %631 = vst [vmem:[#allocation2 + $0x58] sm:$0xff] 0.0
        %s632 = scalar_lea.vmem [#allocation2], 608
        %633 = vst [vmem:[%s632] sm:$0xff] 0.0
        %634 = vst [vmem:[%s632 + $0x8] sm:$0xff] 0.0
        %635 = vst [vmem:[%s632 + $0x10] sm:$0xff] 0.0
        %636 = vst [vmem:[%s632 + $0x18] sm:$0xff] 0.0
        %637 = vst [vmem:[%s632 + $0x20] sm:$0xff] 0.0
        %638 = vst [vmem:[%s632 + $0x28] sm:$0xff] 0.0
        %639 = vst [vmem:[%s632 + $0x30] sm:$0xff] 0.0
        %640 = vst [vmem:[%s632 + $0x38] sm:$0xff] 0.0
        %641 = vst [vmem:[%s632 + $0x40] sm:$0xff] 0.0
        %642 = vst [vmem:[%s632 + $0x48] sm:$0xff] 0.0
        %643 = vst [vmem:[%s632 + $0x50] sm:$0xff] 0.0
        %644 = vst [vmem:[%s632 + $0x58] sm:$0xff] 0.0
        %s645 = scalar_lea.vmem [#allocation2], 96
        %646 = vst [vmem:[%s645] sm:$0xff] 0.0
        %647 = vst [vmem:[%s645 + $0x20] sm:$0xff] 0.0
        %648 = vst [vmem:[%s645 + $0x40] sm:$0xff] 0.0
        %649 = vst [vmem:[%s645 + $0x60] sm:$0xff] 0.0
        %650 = vst [vmem:[%s645 + $0x80] sm:$0xff] 0.0
        %651 = vst [vmem:[%s645 + $0xa0] sm:$0xff] 0.0
        %652 = vst [vmem:[%s645 + $0xc0] sm:$0xff] 0.0
        %653 = vst [vmem:[%s645 + $0xe0] sm:$0xff] 0.0
        %654 = vst [vmem:[%s645 + $0x100] sm:$0xff] 0.0
        %655 = vst [vmem:[%s645 + $0x120] sm:$0xff] 0.0
        %656 = vst [vmem:[%s645 + $0x140] sm:$0xff] 0.0
        %657 = vst [vmem:[%s645 + $0x160] sm:$0xff] 0.0
        %658 = vst [vmem:[%s645 + $0x180] sm:$0xff] 0.0
        %659 = vst [vmem:[%s645 + $0x1a0] sm:$0xff] 0.0
        %660 = vst [vmem:[%s645 + $0x1c0] sm:$0xff] 0.0
        %661 = vst [vmem:[%s645 + $0x1e0] sm:$0xff] 0.0
        %662 = vst [vmem:[%s645 + $0x18] sm:$0xff] 0.0
        %663 = vst [vmem:[%s645 + $0x38] sm:$0xff] 0.0
        %664 = vst [vmem:[%s645 + $0x58] sm:$0xff] 0.0
        %665 = vst [vmem:[%s645 + $0x78] sm:$0xff] 0.0
        %666 = vst [vmem:[%s645 + $0x98] sm:$0xff] 0.0
        %667 = vst [vmem:[%s645 + $0xb8] sm:$0xff] 0.0
        %668 = vst [vmem:[%s645 + $0xd8] sm:$0xff] 0.0
        %669 = vst [vmem:[%s645 + $0xf8] sm:$0xff] 0.0
        %670 = vst [vmem:[%s645 + $0x118] sm:$0xff] 0.0
        %671 = vst [vmem:[%s645 + $0x138] sm:$0xff] 0.0
        %672 = vst [vmem:[%s645 + $0x158] sm:$0xff] 0.0
        %673 = vst [vmem:[%s645 + $0x178] sm:$0xff] 0.0
        %674 = vst [vmem:[%s645 + $0x198] sm:$0xff] 0.0
        %675 = vst [vmem:[%s645 + $0x1b8] sm:$0xff] 0.0
        %676 = vst [vmem:[%s645 + $0x1d8] sm:$0xff] 0.0
        %677 = vst [vmem:[%s645 + $0x1f8] sm:$0xff] 0.0
        %v678 = vld [vmem:[%s528] sm:$0xff]
        %v679 = vld [vmem:[%s528 + $0x8] sm:$0xff]
        %v680 = vld [vmem:[%s528 + $0x10] sm:$0xff]
        %v681 = vld [vmem:[%s528 + $0x18] sm:$0xff]
        %v682 = vld [vmem:[%s528 + $0x20] sm:$0xff]
        %v683 = vld [vmem:[%s528 + $0x28] sm:$0xff]
        %v684 = vld [vmem:[%s528 + $0x30] sm:$0xff]
        %v685 = vld [vmem:[%s528 + $0x38] sm:$0xff]
        %v686 = vld [vmem:[%s528 + $0x40] sm:$0xff]
        %v687 = vld [vmem:[%s528 + $0x48] sm:$0xff]
        %v688 = vld [vmem:[%s528 + $0x50] sm:$0xff]
        %v689 = vld [vmem:[%s528 + $0x58] sm:$0xff]
        %v690 = vld [vmem:[%s528 + $0x60] sm:$0xff]
        %v691 = vld [vmem:[%s528 + $0x68] sm:$0xff]
        %v692 = vld [vmem:[%s528 + $0x70] sm:$0xff]
        %v693 = vld [vmem:[%s528 + $0x78] sm:$0xff]
        %v694 = vld [vmem:[%s528 + $0x80] sm:$0xff]
        %v695 = vld [vmem:[%s528 + $0x88] sm:$0xff]
        %v696 = vld [vmem:[%s528 + $0x90] sm:$0xff]
        %v697 = vld [vmem:[%s528 + $0x98] sm:$0xff]
        %v698 = vld [vmem:[%s528 + $0xa0] sm:$0xff]
        %v699 = vld [vmem:[%s528 + $0xa8] sm:$0xff]
        %v700 = vld [vmem:[%s528 + $0xb0] sm:$0xff]
        %v701 = vld [vmem:[%s528 + $0xb8] sm:$0xff]
        %v702 = vld [vmem:[%s528 + $0xc0] sm:$0xff]
        %v703 = vld [vmem:[%s528 + $0xc8] sm:$0xff]
        %v704 = vld [vmem:[%s528 + $0xd0] sm:$0xff]
        %v705 = vld [vmem:[%s528 + $0xd8] sm:$0xff]
        %v706 = vld [vmem:[%s528 + $0xe0] sm:$0xff]
        %v707 = vld [vmem:[%s528 + $0xe8] sm:$0xff]
        %v708 = vld [vmem:[%s528 + $0xf0] sm:$0xff]
        %v709 = vld [vmem:[%s528 + $0xf8] sm:$0xff]
        %710 = vst [vmem:[%s645 + $0x8] sm:$0xff] %v678
        %711 = vst [vmem:[%s645 + $0x10] sm:$0xff] %v679
        %712 = vst [vmem:[%s645 + $0x28] sm:$0xff] %v680
        %713 = vst [vmem:[%s645 + $0x30] sm:$0xff] %v681
        %714 = vst [vmem:[%s645 + $0x48] sm:$0xff] %v682
        %715 = vst [vmem:[%s645 + $0x50] sm:$0xff] %v683
        %716 = vst [vmem:[%s645 + $0x68] sm:$0xff] %v684
        %717 = vst [vmem:[%s645 + $0x70] sm:$0xff] %v685
        %718 = vst [vmem:[%s645 + $0x88] sm:$0xff] %v686
        %719 = vst [vmem:[%s645 + $0x90] sm:$0xff] %v687
        %720 = vst [vmem:[%s645 + $0xa8] sm:$0xff] %v688
        %721 = vst [vmem:[%s645 + $0xb0] sm:$0xff] %v689
        %722 = vst [vmem:[%s645 + $0xc8] sm:$0xff] %v690
        %723 = vst [vmem:[%s645 + $0xd0] sm:$0xff] %v691
        %724 = vst [vmem:[%s645 + $0xe8] sm:$0xff] %v692
        %725 = vst [vmem:[%s645 + $0xf0] sm:$0xff] %v693
        %726 = vst [vmem:[%s645 + $0x108] sm:$0xff] %v694
        %727 = vst [vmem:[%s645 + $0x110] sm:$0xff] %v695
        %728 = vst [vmem:[%s645 + $0x128] sm:$0xff] %v696
        %729 = vst [vmem:[%s645 + $0x130] sm:$0xff] %v697
        %730 = vst [vmem:[%s645 + $0x148] sm:$0xff] %v698
        %731 = vst [vmem:[%s645 + $0x150] sm:$0xff] %v699
        %732 = vst [vmem:[%s645 + $0x168] sm:$0xff] %v700
        %733 = vst [vmem:[%s645 + $0x170] sm:$0xff] %v701
        %734 = vst [vmem:[%s645 + $0x188] sm:$0xff] %v702
        %735 = vst [vmem:[%s645 + $0x190] sm:$0xff] %v703
        %736 = vst [vmem:[%s645 + $0x1a8] sm:$0xff] %v704
        %737 = vst [vmem:[%s645 + $0x1b0] sm:$0xff] %v705
        %738 = vst [vmem:[%s645 + $0x1c8] sm:$0xff] %v706
        %739 = vst [vmem:[%s645 + $0x1d0] sm:$0xff] %v707
        %740 = vst [vmem:[%s645 + $0x1e8] sm:$0xff] %v708
        %741 = vst [vmem:[%s645 + $0x1f0] sm:$0xff] %v709
        %v742 = vld [vmem:[#allocation6] sm:$0xff]
        %v743 = vld [vmem:[#allocation6 + $0x8] sm:$0x1]
        %s744 = scalar_lea.vmem [#allocation2], 64
        %v745 = vld [vmem:[%s744 + $0x7] sm:$0xff]
        %v746 = vld [vmem:[%s744 + $0xf] sm:$0xff]
        %v747 = vld [vmem:[%s744 + $0x27] sm:$0xff]
        %v748 = vld [vmem:[%s744 + $0x2f] sm:$0xff]
        %v749 = vld [vmem:[%s744 + $0x47] sm:$0xff]
        %v750 = vld [vmem:[%s744 + $0x4f] sm:$0xff]
        %v751 = vld [vmem:[%s744 + $0x67] sm:$0xff]
        %v752 = vld [vmem:[%s744 + $0x6f] sm:$0xff]
        %v753 = vld [vmem:[%s744 + $0x87] sm:$0xff]
        %v754 = vld [vmem:[%s744 + $0x8f] sm:$0xff]
        %v755 = vld [vmem:[%s744 + $0xa7] sm:$0xff]
        %v756 = vld [vmem:[%s744 + $0xaf] sm:$0xff]
        %v757 = vld [vmem:[%s744 + $0xc7] sm:$0xff]
        %v758 = vld [vmem:[%s744 + $0xcf] sm:$0xff]
        %v759 = vld [vmem:[%s744 + $0xe7] sm:$0xff]
        %v760 = vld [vmem:[%s744 + $0xef] sm:$0xff]
        %v761 = vld [vmem:[%s744 + $0x107] sm:$0xff]
        %v762 = vld [vmem:[%s744 + $0x10f] sm:$0xff]
        %v763 = vld [vmem:[%s744 + $0x127] sm:$0xff]
        %v764 = vld [vmem:[%s744 + $0x12f] sm:$0xff]
        %v765 = vld [vmem:[%s744 + $0x147] sm:$0xff]
        %v766 = vld [vmem:[%s744 + $0x14f] sm:$0xff]
        %v767 = vld [vmem:[%s744 + $0x167] sm:$0xff]
        %v768 = vld [vmem:[%s744 + $0x16f] sm:$0xff]
        %v769 = vld [vmem:[%s744 + $0x187] sm:$0xff]
        %v770 = vld [vmem:[%s744 + $0x18f] sm:$0xff]
        %v771 = vld [vmem:[%s744 + $0x1a7] sm:$0xff]
        %v772 = vld [vmem:[%s744 + $0x1af] sm:$0xff]
        %v773 = vld [vmem:[%s744 + $0x1c7] sm:$0xff]
        %v774 = vld [vmem:[%s744 + $0x1cf] sm:$0xff]
        %v775 = vld [vmem:[%s744 + $0x1e7] sm:$0xff]
        %v776 = vld [vmem:[%s744 + $0x1ef] sm:$0xff]
        %v777 = vld [vmem:[%s744 + $0x207] sm:$0xff]
        %v778 = vld [vmem:[%s744 + $0x20f] sm:$0xff]
        %v779 = vld [vmem:[%s744 + $0x227] sm:$0xff]
        %v780 = vld [vmem:[%s744 + $0x22f] sm:$0xff]
        %v781 = vlaneseq
        %v782 = vshrl.u32 %v781, 7
        %v783 = vsub.s32 0, %v782
        %v784 = vrot.slane %v742, %v783
        %v785 = vmul.f32 %v745, %v784
        %v786 = vmul.f32 %v746, %v784
        %v787 = vmul.f32 %v747, %v784
        %v788 = vmul.f32 %v748, %v784
        %v789 = vmul.f32 %v749, %v784
        %v790 = vmul.f32 %v750, %v784
        %v791 = vmul.f32 %v751, %v784
        %v792 = vmul.f32 %v752, %v784
        %v793 = vmul.f32 %v753, %v784
        %v794 = vmul.f32 %v754, %v784
        %v795 = vmul.f32 %v755, %v784
        %v796 = vmul.f32 %v756, %v784
        %v797 = vmul.f32 %v757, %v784
        %v798 = vmul.f32 %v758, %v784
        %v799 = vmul.f32 %v759, %v784
        %v800 = vmul.f32 %v760, %v784
        %v801 = vmul.f32 %v761, %v784
        %v802 = vmul.f32 %v762, %v784
        %v803 = vmul.f32 %v763, %v784
        %v804 = vmul.f32 %v764, %v784
        %v805 = vmul.f32 %v765, %v784
        %v806 = vmul.f32 %v766, %v784
        %v807 = vmul.f32 %v767, %v784
        %v808 = vmul.f32 %v768, %v784
        %v809 = vmul.f32 %v769, %v784
        %v810 = vmul.f32 %v770, %v784
        %v811 = vmul.f32 %v771, %v784
        %v812 = vmul.f32 %v772, %v784
        %v813 = vmul.f32 %v773, %v784
        %v814 = vmul.f32 %v774, %v784
        %v815 = vmul.f32 %v775, %v784
        %v816 = vmul.f32 %v776, %v784
        %v817 = vlaneseq
        %v818 = vshrl.u32 %v817, 7
        %v819 = vsub.s32 3, %v818
        %v820 = vrot.slane %v742, %v819
        %v821 = vmul.f32 %v747, %v820
        %v822 = vmul.f32 %v748, %v820
        %v823 = vmul.f32 %v749, %v820
        %v824 = vmul.f32 %v750, %v820
        %v825 = vmul.f32 %v751, %v820
        %v826 = vmul.f32 %v752, %v820
        %v827 = vmul.f32 %v753, %v820
        %v828 = vmul.f32 %v754, %v820
        %v829 = vmul.f32 %v755, %v820
        %v830 = vmul.f32 %v756, %v820
        %v831 = vmul.f32 %v757, %v820
        %v832 = vmul.f32 %v758, %v820
        %v833 = vmul.f32 %v759, %v820
        %v834 = vmul.f32 %v760, %v820
        %v835 = vmul.f32 %v761, %v820
        %v836 = vmul.f32 %v762, %v820
        %v837 = vmul.f32 %v763, %v820
        %v838 = vmul.f32 %v764, %v820
        %v839 = vmul.f32 %v765, %v820
        %v840 = vmul.f32 %v766, %v820
        %v841 = vmul.f32 %v767, %v820
        %v842 = vmul.f32 %v768, %v820
        %v843 = vmul.f32 %v769, %v820
        %v844 = vmul.f32 %v770, %v820
        %v845 = vmul.f32 %v771, %v820
        %v846 = vmul.f32 %v772, %v820
        %v847 = vmul.f32 %v773, %v820
        %v848 = vmul.f32 %v774, %v820
        %v849 = vmul.f32 %v775, %v820
        %v850 = vmul.f32 %v776, %v820
        %v851 = vmul.f32 %v777, %v820
        %v852 = vmul.f32 %v778, %v820
        %v853 = vadd.f32 %v785, %v821
        %v854 = vadd.f32 %v786, %v822
        %v855 = vadd.f32 %v787, %v823
        %v856 = vadd.f32 %v788, %v824
        %v857 = vadd.f32 %v789, %v825
        %v858 = vadd.f32 %v790, %v826
        %v859 = vadd.f32 %v791, %v827
        %v860 = vadd.f32 %v792, %v828
        %v861 = vadd.f32 %v793, %v829
        %v862 = vadd.f32 %v794, %v830
        %v863 = vadd.f32 %v795, %v831
        %v864 = vadd.f32 %v796, %v832
        %v865 = vadd.f32 %v797, %v833
        %v866 = vadd.f32 %v798, %v834
        %v867 = vadd.f32 %v799, %v835
        %v868 = vadd.f32 %v800, %v836
        %v869 = vadd.f32 %v801, %v837
        %v870 = vadd.f32 %v802, %v838
        %v871 = vadd.f32 %v803, %v839
        %v872 = vadd.f32 %v804, %v840
        %v873 = vadd.f32 %v805, %v841
        %v874 = vadd.f32 %v806, %v842
        %v875 = vadd.f32 %v807, %v843
        %v876 = vadd.f32 %v808, %v844
        %v877 = vadd.f32 %v809, %v845
        %v878 = vadd.f32 %v810, %v846
        %v879 = vadd.f32 %v811, %v847
        %v880 = vadd.f32 %v812, %v848
        %v881 = vadd.f32 %v813, %v849
        %v882 = vadd.f32 %v814, %v850
        %v883 = vadd.f32 %v815, %v851
        %v884 = vadd.f32 %v816, %v852
        %v885 = vlaneseq
        %v886 = vshrl.u32 %v885, 7
        %v887 = vsub.s32 6, %v886
        %v888 = vrot.slane %v742, %v887
        %v889 = vmul.f32 %v749, %v888
        %v890 = vmul.f32 %v750, %v888
        %v891 = vmul.f32 %v751, %v888
        %v892 = vmul.f32 %v752, %v888
        %v893 = vmul.f32 %v753, %v888
        %v894 = vmul.f32 %v754, %v888
        %v895 = vmul.f32 %v755, %v888
        %v896 = vmul.f32 %v756, %v888
        %v897 = vmul.f32 %v757, %v888
        %v898 = vmul.f32 %v758, %v888
        %v899 = vmul.f32 %v759, %v888
        %v900 = vmul.f32 %v760, %v888
        %v901 = vmul.f32 %v761, %v888
        %v902 = vmul.f32 %v762, %v888
        %v903 = vmul.f32 %v763, %v888
        %v904 = vmul.f32 %v764, %v888
        %v905 = vmul.f32 %v765, %v888
        %v906 = vmul.f32 %v766, %v888
        %v907 = vmul.f32 %v767, %v888
        %v908 = vmul.f32 %v768, %v888
        %v909 = vmul.f32 %v769, %v888
        %v910 = vmul.f32 %v770, %v888
        %v911 = vmul.f32 %v771, %v888
        %v912 = vmul.f32 %v772, %v888
        %v913 = vmul.f32 %v773, %v888
        %v914 = vmul.f32 %v774, %v888
        %v915 = vmul.f32 %v775, %v888
        %v916 = vmul.f32 %v776, %v888
        %v917 = vmul.f32 %v777, %v888
        %v918 = vmul.f32 %v778, %v888
        %v919 = vmul.f32 %v779, %v888
        %v920 = vmul.f32 %v780, %v888
        %v921 = vadd.f32 %v853, %v889
        %v922 = vadd.f32 %v854, %v890
        %v923 = vadd.f32 %v855, %v891
        %v924 = vadd.f32 %v856, %v892
        %v925 = vadd.f32 %v857, %v893
        %v926 = vadd.f32 %v858, %v894
        %v927 = vadd.f32 %v859, %v895
        %v928 = vadd.f32 %v860, %v896
        %v929 = vadd.f32 %v861, %v897
        %v930 = vadd.f32 %v862, %v898
        %v931 = vadd.f32 %v863, %v899
        %v932 = vadd.f32 %v864, %v900
        %v933 = vadd.f32 %v865, %v901
        %v934 = vadd.f32 %v866, %v902
        %v935 = vadd.f32 %v867, %v903
        %v936 = vadd.f32 %v868, %v904
        %v937 = vadd.f32 %v869, %v905
        %v938 = vadd.f32 %v870, %v906
        %v939 = vadd.f32 %v871, %v907
        %v940 = vadd.f32 %v872, %v908
        %v941 = vadd.f32 %v873, %v909
        %v942 = vadd.f32 %v874, %v910
        %v943 = vadd.f32 %v875, %v911
        %v944 = vadd.f32 %v876, %v912
        %v945 = vadd.f32 %v877, %v913
        %v946 = vadd.f32 %v878, %v914
        %v947 = vadd.f32 %v879, %v915
        %v948 = vadd.f32 %v880, %v916
        %v949 = vadd.f32 %v881, %v917
        %v950 = vadd.f32 %v882, %v918
        %v951 = vadd.f32 %v883, %v919
        %v952 = vadd.f32 %v884, %v920
        %v953 = vld [vmem:[%s744 + $0x8] sm:$0xff]
        %v954 = vld [vmem:[%s744 + $0x10] sm:$0xff]
        %v955 = vld [vmem:[%s744 + $0x28] sm:$0xff]
        %v956 = vld [vmem:[%s744 + $0x30] sm:$0xff]
        %v957 = vld [vmem:[%s744 + $0x48] sm:$0xff]
        %v958 = vld [vmem:[%s744 + $0x50] sm:$0xff]
        %v959 = vld [vmem:[%s744 + $0x68] sm:$0xff]
        %v960 = vld [vmem:[%s744 + $0x70] sm:$0xff]
        %v961 = vld [vmem:[%s744 + $0x88] sm:$0xff]
        %v962 = vld [vmem:[%s744 + $0x90] sm:$0xff]
        %v963 = vld [vmem:[%s744 + $0xa8] sm:$0xff]
        %v964 = vld [vmem:[%s744 + $0xb0] sm:$0xff]
        %v965 = vld [vmem:[%s744 + $0xc8] sm:$0xff]
        %v966 = vld [vmem:[%s744 + $0xd0] sm:$0xff]
        %v967 = vld [vmem:[%s744 + $0xe8] sm:$0xff]
        %v968 = vld [vmem:[%s744 + $0xf0] sm:$0xff]
        %v969 = vld [vmem:[%s744 + $0x108] sm:$0xff]
        %v970 = vld [vmem:[%s744 + $0x110] sm:$0xff]
        %v971 = vld [vmem:[%s744 + $0x128] sm:$0xff]
        %v972 = vld [vmem:[%s744 + $0x130] sm:$0xff]
        %v973 = vld [vmem:[%s744 + $0x148] sm:$0xff]
        %v974 = vld [vmem:[%s744 + $0x150] sm:$0xff]
        %v975 = vld [vmem:[%s744 + $0x168] sm:$0xff]
        %v976 = vld [vmem:[%s744 + $0x170] sm:$0xff]
        %v977 = vld [vmem:[%s744 + $0x188] sm:$0xff]
        %v978 = vld [vmem:[%s744 + $0x190] sm:$0xff]
        %v979 = vld [vmem:[%s744 + $0x1a8] sm:$0xff]
        %v980 = vld [vmem:[%s744 + $0x1b0] sm:$0xff]
        %v981 = vld [vmem:[%s744 + $0x1c8] sm:$0xff]
        %v982 = vld [vmem:[%s744 + $0x1d0] sm:$0xff]
        %v983 = vld [vmem:[%s744 + $0x1e8] sm:$0xff]
        %v984 = vld [vmem:[%s744 + $0x1f0] sm:$0xff]
        %v985 = vld [vmem:[%s744 + $0x208] sm:$0xff]
        %v986 = vld [vmem:[%s744 + $0x210] sm:$0xff]
        %v987 = vld [vmem:[%s744 + $0x228] sm:$0xff]
        %v988 = vld [vmem:[%s744 + $0x230] sm:$0xff]
        %v989 = vlaneseq
        %v990 = vshrl.u32 %v989, 7
        %v991 = vsub.s32 1, %v990
        %v992 = vrot.slane %v742, %v991
        %v993 = vmul.f32 %v953, %v992
        %v994 = vmul.f32 %v954, %v992
        %v995 = vmul.f32 %v955, %v992
        %v996 = vmul.f32 %v956, %v992
        %v997 = vmul.f32 %v957, %v992
        %v998 = vmul.f32 %v958, %v992
        %v999 = vmul.f32 %v959, %v992
        %v1000 = vmul.f32 %v960, %v992
        %v1001 = vmul.f32 %v961, %v992
        %v1002 = vmul.f32 %v962, %v992
        %v1003 = vmul.f32 %v963, %v992
        %v1004 = vmul.f32 %v964, %v992
        %v1005 = vmul.f32 %v965, %v992
        %v1006 = vmul.f32 %v966, %v992
        %v1007 = vmul.f32 %v967, %v992
        %v1008 = vmul.f32 %v968, %v992
        %v1009 = vmul.f32 %v969, %v992
        %v1010 = vmul.f32 %v970, %v992
        %v1011 = vmul.f32 %v971, %v992
        %v1012 = vmul.f32 %v972, %v992
        %v1013 = vmul.f32 %v973, %v992
        %v1014 = vmul.f32 %v974, %v992
        %v1015 = vmul.f32 %v975, %v992
        %v1016 = vmul.f32 %v976, %v992
        %v1017 = vmul.f32 %v977, %v992
        %v1018 = vmul.f32 %v978, %v992
        %v1019 = vmul.f32 %v979, %v992
        %v1020 = vmul.f32 %v980, %v992
        %v1021 = vmul.f32 %v981, %v992
        %v1022 = vmul.f32 %v982, %v992
        %v1023 = vmul.f32 %v983, %v992
        %v1024 = vmul.f32 %v984, %v992
        %v1025 = vlaneseq
        %v1026 = vshrl.u32 %v1025, 7
        %v1027 = vsub.s32 4, %v1026
        %v1028 = vrot.slane %v742, %v1027
        %v1029 = vmul.f32 %v955, %v1028
        %v1030 = vmul.f32 %v956, %v1028
        %v1031 = vmul.f32 %v957, %v1028
        %v1032 = vmul.f32 %v958, %v1028
        %v1033 = vmul.f32 %v959, %v1028
        %v1034 = vmul.f32 %v960, %v1028
        %v1035 = vmul.f32 %v961, %v1028
        %v1036 = vmul.f32 %v962, %v1028
        %v1037 = vmul.f32 %v963, %v1028
        %v1038 = vmul.f32 %v964, %v1028
        %v1039 = vmul.f32 %v965, %v1028
        %v1040 = vmul.f32 %v966, %v1028
        %v1041 = vmul.f32 %v967, %v1028
        %v1042 = vmul.f32 %v968, %v1028
        %v1043 = vmul.f32 %v969, %v1028
        %v1044 = vmul.f32 %v970, %v1028
        %v1045 = vmul.f32 %v971, %v1028
        %v1046 = vmul.f32 %v972, %v1028
        %v1047 = vmul.f32 %v973, %v1028
        %v1048 = vmul.f32 %v974, %v1028
        %v1049 = vmul.f32 %v975, %v1028
        %v1050 = vmul.f32 %v976, %v1028
        %v1051 = vmul.f32 %v977, %v1028
        %v1052 = vmul.f32 %v978, %v1028
        %v1053 = vmul.f32 %v979, %v1028
        %v1054 = vmul.f32 %v980, %v1028
        %v1055 = vmul.f32 %v981, %v1028
        %v1056 = vmul.f32 %v982, %v1028
        %v1057 = vmul.f32 %v983, %v1028
        %v1058 = vmul.f32 %v984, %v1028
        %v1059 = vmul.f32 %v985, %v1028
        %v1060 = vmul.f32 %v986, %v1028
        %v1061 = vadd.f32 %v993, %v1029
        %v1062 = vadd.f32 %v994, %v1030
        %v1063 = vadd.f32 %v995, %v1031
        %v1064 = vadd.f32 %v996, %v1032
        %v1065 = vadd.f32 %v997, %v1033
        %v1066 = vadd.f32 %v998, %v1034
        %v1067 = vadd.f32 %v999, %v1035
        %v1068 = vadd.f32 %v1000, %v1036
        %v1069 = vadd.f32 %v1001, %v1037
        %v1070 = vadd.f32 %v1002, %v1038
        %v1071 = vadd.f32 %v1003, %v1039
        %v1072 = vadd.f32 %v1004, %v1040
        %v1073 = vadd.f32 %v1005, %v1041
        %v1074 = vadd.f32 %v1006, %v1042
        %v1075 = vadd.f32 %v1007, %v1043
        %v1076 = vadd.f32 %v1008, %v1044
        %v1077 = vadd.f32 %v1009, %v1045
        %v1078 = vadd.f32 %v1010, %v1046
        %v1079 = vadd.f32 %v1011, %v1047
        %v1080 = vadd.f32 %v1012, %v1048
        %v1081 = vadd.f32 %v1013, %v1049
        %v1082 = vadd.f32 %v1014, %v1050
        %v1083 = vadd.f32 %v1015, %v1051
        %v1084 = vadd.f32 %v1016, %v1052
        %v1085 = vadd.f32 %v1017, %v1053
        %v1086 = vadd.f32 %v1018, %v1054
        %v1087 = vadd.f32 %v1019, %v1055
        %v1088 = vadd.f32 %v1020, %v1056
        %v1089 = vadd.f32 %v1021, %v1057
        %v1090 = vadd.f32 %v1022, %v1058
        %v1091 = vadd.f32 %v1023, %v1059
        %v1092 = vadd.f32 %v1024, %v1060
        %v1093 = vlaneseq
        %v1094 = vshrl.u32 %v1093, 7
        %v1095 = vsub.s32 7, %v1094
        %v1096 = vrot.slane %v742, %v1095
        %v1097 = vmul.f32 %v957, %v1096
        %v1098 = vmul.f32 %v958, %v1096
        %v1099 = vmul.f32 %v959, %v1096
        %v1100 = vmul.f32 %v960, %v1096
        %v1101 = vmul.f32 %v961, %v1096
        %v1102 = vmul.f32 %v962, %v1096
        %v1103 = vmul.f32 %v963, %v1096
        %v1104 = vmul.f32 %v964, %v1096
        %v1105 = vmul.f32 %v965, %v1096
        %v1106 = vmul.f32 %v966, %v1096
        %v1107 = vmul.f32 %v967, %v1096
        %v1108 = vmul.f32 %v968, %v1096
        %v1109 = vmul.f32 %v969, %v1096
        %v1110 = vmul.f32 %v970, %v1096
        %v1111 = vmul.f32 %v971, %v1096
        %v1112 = vmul.f32 %v972, %v1096
        %v1113 = vmul.f32 %v973, %v1096
        %v1114 = vmul.f32 %v974, %v1096
        %v1115 = vmul.f32 %v975, %v1096
        %v1116 = vmul.f32 %v976, %v1096
        %v1117 = vmul.f32 %v977, %v1096
        %v1118 = vmul.f32 %v978, %v1096
        %v1119 = vmul.f32 %v979, %v1096
        %v1120 = vmul.f32 %v980, %v1096
        %v1121 = vmul.f32 %v981, %v1096
        %v1122 = vmul.f32 %v982, %v1096
        %v1123 = vmul.f32 %v983, %v1096
        %v1124 = vmul.f32 %v984, %v1096
        %v1125 = vmul.f32 %v985, %v1096
        %v1126 = vmul.f32 %v986, %v1096
        %v1127 = vmul.f32 %v987, %v1096
        %v1128 = vmul.f32 %v988, %v1096
        %v1129 = vadd.f32 %v1061, %v1097
        %v1130 = vadd.f32 %v1062, %v1098
        %v1131 = vadd.f32 %v1063, %v1099
        %v1132 = vadd.f32 %v1064, %v1100
        %v1133 = vadd.f32 %v1065, %v1101
        %v1134 = vadd.f32 %v1066, %v1102
        %v1135 = vadd.f32 %v1067, %v1103
        %v1136 = vadd.f32 %v1068, %v1104
        %v1137 = vadd.f32 %v1069, %v1105
        %v1138 = vadd.f32 %v1070, %v1106
        %v1139 = vadd.f32 %v1071, %v1107
        %v1140 = vadd.f32 %v1072, %v1108
        %v1141 = vadd.f32 %v1073, %v1109
        %v1142 = vadd.f32 %v1074, %v1110
        %v1143 = vadd.f32 %v1075, %v1111
        %v1144 = vadd.f32 %v1076, %v1112
        %v1145 = vadd.f32 %v1077, %v1113
        %v1146 = vadd.f32 %v1078, %v1114
        %v1147 = vadd.f32 %v1079, %v1115
        %v1148 = vadd.f32 %v1080, %v1116
        %v1149 = vadd.f32 %v1081, %v1117
        %v1150 = vadd.f32 %v1082, %v1118
        %v1151 = vadd.f32 %v1083, %v1119
        %v1152 = vadd.f32 %v1084, %v1120
        %v1153 = vadd.f32 %v1085, %v1121
        %v1154 = vadd.f32 %v1086, %v1122
        %v1155 = vadd.f32 %v1087, %v1123
        %v1156 = vadd.f32 %v1088, %v1124
        %v1157 = vadd.f32 %v1089, %v1125
        %v1158 = vadd.f32 %v1090, %v1126
        %v1159 = vadd.f32 %v1091, %v1127
        %v1160 = vadd.f32 %v1092, %v1128
        %v1161 = vld [vmem:[%s744 + $0x9] sm:$0xff]
        %v1162 = vld [vmem:[%s744 + $0x11] sm:$0xff]
        %v1163 = vld [vmem:[%s744 + $0x29] sm:$0xff]
        %v1164 = vld [vmem:[%s744 + $0x31] sm:$0xff]
        %v1165 = vld [vmem:[%s744 + $0x49] sm:$0xff]
        %v1166 = vld [vmem:[%s744 + $0x51] sm:$0xff]
        %v1167 = vld [vmem:[%s744 + $0x69] sm:$0xff]
        %v1168 = vld [vmem:[%s744 + $0x71] sm:$0xff]
        %v1169 = vld [vmem:[%s744 + $0x89] sm:$0xff]
        %v1170 = vld [vmem:[%s744 + $0x91] sm:$0xff]
        %v1171 = vld [vmem:[%s744 + $0xa9] sm:$0xff]
        %v1172 = vld [vmem:[%s744 + $0xb1] sm:$0xff]
        %v1173 = vld [vmem:[%s744 + $0xc9] sm:$0xff]
        %v1174 = vld [vmem:[%s744 + $0xd1] sm:$0xff]
        %v1175 = vld [vmem:[%s744 + $0xe9] sm:$0xff]
        %v1176 = vld [vmem:[%s744 + $0xf1] sm:$0xff]
        %v1177 = vld [vmem:[%s744 + $0x109] sm:$0xff]
        %v1178 = vld [vmem:[%s744 + $0x111] sm:$0xff]
        %v1179 = vld [vmem:[%s744 + $0x129] sm:$0xff]
        %v1180 = vld [vmem:[%s744 + $0x131] sm:$0xff]
        %v1181 = vld [vmem:[%s744 + $0x149] sm:$0xff]
        %v1182 = vld [vmem:[%s744 + $0x151] sm:$0xff]
        %v1183 = vld [vmem:[%s744 + $0x169] sm:$0xff]
        %v1184 = vld [vmem:[%s744 + $0x171] sm:$0xff]
        %v1185 = vld [vmem:[%s744 + $0x189] sm:$0xff]
        %v1186 = vld [vmem:[%s744 + $0x191] sm:$0xff]
        %v1187 = vld [vmem:[%s744 + $0x1a9] sm:$0xff]
        %v1188 = vld [vmem:[%s744 + $0x1b1] sm:$0xff]
        %v1189 = vld [vmem:[%s744 + $0x1c9] sm:$0xff]
        %v1190 = vld [vmem:[%s744 + $0x1d1] sm:$0xff]
        %v1191 = vld [vmem:[%s744 + $0x1e9] sm:$0xff]
        %v1192 = vld [vmem:[%s744 + $0x1f1] sm:$0xff]
        %v1193 = vld [vmem:[%s744 + $0x209] sm:$0xff]
        %v1194 = vld [vmem:[%s744 + $0x211] sm:$0xff]
        %v1195 = vld [vmem:[%s744 + $0x229] sm:$0xff]
        %v1196 = vld [vmem:[%s744 + $0x231] sm:$0xff]
        %v1197 = vlaneseq
        %v1198 = vshrl.u32 %v1197, 7
        %v1199 = vsub.s32 2, %v1198
        %v1200 = vrot.slane %v742, %v1199
        %v1201 = vmul.f32 %v1161, %v1200
        %v1202 = vmul.f32 %v1162, %v1200
        %v1203 = vmul.f32 %v1163, %v1200
        %v1204 = vmul.f32 %v1164, %v1200
        %v1205 = vmul.f32 %v1165, %v1200
        %v1206 = vmul.f32 %v1166, %v1200
        %v1207 = vmul.f32 %v1167, %v1200
        %v1208 = vmul.f32 %v1168, %v1200
        %v1209 = vmul.f32 %v1169, %v1200
        %v1210 = vmul.f32 %v1170, %v1200
        %v1211 = vmul.f32 %v1171, %v1200
        %v1212 = vmul.f32 %v1172, %v1200
        %v1213 = vmul.f32 %v1173, %v1200
        %v1214 = vmul.f32 %v1174, %v1200
        %v1215 = vmul.f32 %v1175, %v1200
        %v1216 = vmul.f32 %v1176, %v1200
        %v1217 = vmul.f32 %v1177, %v1200
        %v1218 = vmul.f32 %v1178, %v1200
        %v1219 = vmul.f32 %v1179, %v1200
        %v1220 = vmul.f32 %v1180, %v1200
        %v1221 = vmul.f32 %v1181, %v1200
        %v1222 = vmul.f32 %v1182, %v1200
        %v1223 = vmul.f32 %v1183, %v1200
        %v1224 = vmul.f32 %v1184, %v1200
        %v1225 = vmul.f32 %v1185, %v1200
        %v1226 = vmul.f32 %v1186, %v1200
        %v1227 = vmul.f32 %v1187, %v1200
        %v1228 = vmul.f32 %v1188, %v1200
        %v1229 = vmul.f32 %v1189, %v1200
        %v1230 = vmul.f32 %v1190, %v1200
        %v1231 = vmul.f32 %v1191, %v1200
        %v1232 = vmul.f32 %v1192, %v1200
        %v1233 = vlaneseq
        %v1234 = vshrl.u32 %v1233, 7
        %v1235 = vsub.s32 5, %v1234
        %v1236 = vrot.slane %v742, %v1235
        %v1237 = vmul.f32 %v1163, %v1236
        %v1238 = vmul.f32 %v1164, %v1236
        %v1239 = vmul.f32 %v1165, %v1236
        %v1240 = vmul.f32 %v1166, %v1236
        %v1241 = vmul.f32 %v1167, %v1236
        %v1242 = vmul.f32 %v1168, %v1236
        %v1243 = vmul.f32 %v1169, %v1236
        %v1244 = vmul.f32 %v1170, %v1236
        %v1245 = vmul.f32 %v1171, %v1236
        %v1246 = vmul.f32 %v1172, %v1236
        %v1247 = vmul.f32 %v1173, %v1236
        %v1248 = vmul.f32 %v1174, %v1236
        %v1249 = vmul.f32 %v1175, %v1236
        %v1250 = vmul.f32 %v1176, %v1236
        %v1251 = vmul.f32 %v1177, %v1236
        %v1252 = vmul.f32 %v1178, %v1236
        %v1253 = vmul.f32 %v1179, %v1236
        %v1254 = vmul.f32 %v1180, %v1236
        %v1255 = vmul.f32 %v1181, %v1236
        %v1256 = vmul.f32 %v1182, %v1236
        %v1257 = vmul.f32 %v1183, %v1236
        %v1258 = vmul.f32 %v1184, %v1236
        %v1259 = vmul.f32 %v1185, %v1236
        %v1260 = vmul.f32 %v1186, %v1236
        %v1261 = vmul.f32 %v1187, %v1236
        %v1262 = vmul.f32 %v1188, %v1236
        %v1263 = vmul.f32 %v1189, %v1236
        %v1264 = vmul.f32 %v1190, %v1236
        %v1265 = vmul.f32 %v1191, %v1236
        %v1266 = vmul.f32 %v1192, %v1236
        %v1267 = vmul.f32 %v1193, %v1236
        %v1268 = vmul.f32 %v1194, %v1236
        %v1269 = vadd.f32 %v1201, %v1237
        %v1270 = vadd.f32 %v1202, %v1238
        %v1271 = vadd.f32 %v1203, %v1239
        %v1272 = vadd.f32 %v1204, %v1240
        %v1273 = vadd.f32 %v1205, %v1241
        %v1274 = vadd.f32 %v1206, %v1242
        %v1275 = vadd.f32 %v1207, %v1243
        %v1276 = vadd.f32 %v1208, %v1244
        %v1277 = vadd.f32 %v1209, %v1245
        %v1278 = vadd.f32 %v1210, %v1246
        %v1279 = vadd.f32 %v1211, %v1247
        %v1280 = vadd.f32 %v1212, %v1248
        %v1281 = vadd.f32 %v1213, %v1249
        %v1282 = vadd.f32 %v1214, %v1250
        %v1283 = vadd.f32 %v1215, %v1251
        %v1284 = vadd.f32 %v1216, %v1252
        %v1285 = vadd.f32 %v1217, %v1253
        %v1286 = vadd.f32 %v1218, %v1254
        %v1287 = vadd.f32 %v1219, %v1255
        %v1288 = vadd.f32 %v1220, %v1256
        %v1289 = vadd.f32 %v1221, %v1257
        %v1290 = vadd.f32 %v1222, %v1258
        %v1291 = vadd.f32 %v1223, %v1259
        %v1292 = vadd.f32 %v1224, %v1260
        %v1293 = vadd.f32 %v1225, %v1261
        %v1294 = vadd.f32 %v1226, %v1262
        %v1295 = vadd.f32 %v1227, %v1263
        %v1296 = vadd.f32 %v1228, %v1264
        %v1297 = vadd.f32 %v1229, %v1265
        %v1298 = vadd.f32 %v1230, %v1266
        %v1299 = vadd.f32 %v1231, %v1267
        %v1300 = vadd.f32 %v1232, %v1268
        %v1301 = vlaneseq
        %v1302 = vshrl.u32 %v1301, 7
        %v1303 = vsub.s32 0, %v1302
        %v1304 = vrot.slane %v743, %v1303
        %v1305 = vmul.f32 %v1165, %v1304
        %v1306 = vmul.f32 %v1166, %v1304
        %v1307 = vmul.f32 %v1167, %v1304
        %v1308 = vmul.f32 %v1168, %v1304
        %v1309 = vmul.f32 %v1169, %v1304
        %v1310 = vmul.f32 %v1170, %v1304
        %v1311 = vmul.f32 %v1171, %v1304
        %v1312 = vmul.f32 %v1172, %v1304
        %v1313 = vmul.f32 %v1173, %v1304
        %v1314 = vmul.f32 %v1174, %v1304
        %v1315 = vmul.f32 %v1175, %v1304
        %v1316 = vmul.f32 %v1176, %v1304
        %v1317 = vmul.f32 %v1177, %v1304
        %v1318 = vmul.f32 %v1178, %v1304
        %v1319 = vmul.f32 %v1179, %v1304
        %v1320 = vmul.f32 %v1180, %v1304
        %v1321 = vmul.f32 %v1181, %v1304
        %v1322 = vmul.f32 %v1182, %v1304
        %v1323 = vmul.f32 %v1183, %v1304
        %v1324 = vmul.f32 %v1184, %v1304
        %v1325 = vmul.f32 %v1185, %v1304
        %v1326 = vmul.f32 %v1186, %v1304
        %v1327 = vmul.f32 %v1187, %v1304
        %v1328 = vmul.f32 %v1188, %v1304
        %v1329 = vmul.f32 %v1189, %v1304
        %v1330 = vmul.f32 %v1190, %v1304
        %v1331 = vmul.f32 %v1191, %v1304
        %v1332 = vmul.f32 %v1192, %v1304
        %v1333 = vmul.f32 %v1193, %v1304
        %v1334 = vmul.f32 %v1194, %v1304
        %v1335 = vmul.f32 %v1195, %v1304
        %v1336 = vmul.f32 %v1196, %v1304
        %v1337 = vadd.f32 %v1269, %v1305
        %v1338 = vadd.f32 %v1270, %v1306
        %v1339 = vadd.f32 %v1271, %v1307
        %v1340 = vadd.f32 %v1272, %v1308
        %v1341 = vadd.f32 %v1273, %v1309
        %v1342 = vadd.f32 %v1274, %v1310
        %v1343 = vadd.f32 %v1275, %v1311
        %v1344 = vadd.f32 %v1276, %v1312
        %v1345 = vadd.f32 %v1277, %v1313
        %v1346 = vadd.f32 %v1278, %v1314
        %v1347 = vadd.f32 %v1279, %v1315
        %v1348 = vadd.f32 %v1280, %v1316
        %v1349 = vadd.f32 %v1281, %v1317
        %v1350 = vadd.f32 %v1282, %v1318
        %v1351 = vadd.f32 %v1283, %v1319
        %v1352 = vadd.f32 %v1284, %v1320
        %v1353 = vadd.f32 %v1285, %v1321
        %v1354 = vadd.f32 %v1286, %v1322
        %v1355 = vadd.f32 %v1287, %v1323
        %v1356 = vadd.f32 %v1288, %v1324
        %v1357 = vadd.f32 %v1289, %v1325
        %v1358 = vadd.f32 %v1290, %v1326
        %v1359 = vadd.f32 %v1291, %v1327
        %v1360 = vadd.f32 %v1292, %v1328
        %v1361 = vadd.f32 %v1293, %v1329
        %v1362 = vadd.f32 %v1294, %v1330
        %v1363 = vadd.f32 %v1295, %v1331
        %v1364 = vadd.f32 %v1296, %v1332
        %v1365 = vadd.f32 %v1297, %v1333
        %v1366 = vadd.f32 %v1298, %v1334
        %v1367 = vadd.f32 %v1299, %v1335
        %v1368 = vadd.f32 %v1300, %v1336
        %v1369 = vadd.f32 %v921, %v1129
        %v1370 = vadd.f32 %v922, %v1130
        %v1371 = vadd.f32 %v923, %v1131
        %v1372 = vadd.f32 %v924, %v1132
        %v1373 = vadd.f32 %v925, %v1133
        %v1374 = vadd.f32 %v926, %v1134
        %v1375 = vadd.f32 %v927, %v1135
        %v1376 = vadd.f32 %v928, %v1136
        %v1377 = vadd.f32 %v929, %v1137
        %v1378 = vadd.f32 %v930, %v1138
        %v1379 = vadd.f32 %v931, %v1139
        %v1380 = vadd.f32 %v932, %v1140
        %v1381 = vadd.f32 %v933, %v1141
        %v1382 = vadd.f32 %v934, %v1142
        %v1383 = vadd.f32 %v935, %v1143
        %v1384 = vadd.f32 %v936, %v1144
        %v1385 = vadd.f32 %v937, %v1145
        %v1386 = vadd.f32 %v938, %v1146
        %v1387 = vadd.f32 %v939, %v1147
        %v1388 = vadd.f32 %v940, %v1148
        %v1389 = vadd.f32 %v941, %v1149
        %v1390 = vadd.f32 %v942, %v1150
        %v1391 = vadd.f32 %v943, %v1151
        %v1392 = vadd.f32 %v944, %v1152
        %v1393 = vadd.f32 %v945, %v1153
        %v1394 = vadd.f32 %v946, %v1154
        %v1395 = vadd.f32 %v947, %v1155
        %v1396 = vadd.f32 %v948, %v1156
        %v1397 = vadd.f32 %v949, %v1157
        %v1398 = vadd.f32 %v950, %v1158
        %v1399 = vadd.f32 %v951, %v1159
        %v1400 = vadd.f32 %v952, %v1160
        %v1401 = vadd.f32 %v1369, %v1337
        %v1402 = vadd.f32 %v1370, %v1338
        %v1403 = vadd.f32 %v1371, %v1339
        %v1404 = vadd.f32 %v1372, %v1340
        %v1405 = vadd.f32 %v1373, %v1341
        %v1406 = vadd.f32 %v1374, %v1342
        %v1407 = vadd.f32 %v1375, %v1343
        %v1408 = vadd.f32 %v1376, %v1344
        %v1409 = vadd.f32 %v1377, %v1345
        %v1410 = vadd.f32 %v1378, %v1346
        %v1411 = vadd.f32 %v1379, %v1347
        %v1412 = vadd.f32 %v1380, %v1348
        %v1413 = vadd.f32 %v1381, %v1349
        %v1414 = vadd.f32 %v1382, %v1350
        %v1415 = vadd.f32 %v1383, %v1351
        %v1416 = vadd.f32 %v1384, %v1352
        %v1417 = vadd.f32 %v1385, %v1353
        %v1418 = vadd.f32 %v1386, %v1354
        %v1419 = vadd.f32 %v1387, %v1355
        %v1420 = vadd.f32 %v1388, %v1356
        %v1421 = vadd.f32 %v1389, %v1357
        %v1422 = vadd.f32 %v1390, %v1358
        %v1423 = vadd.f32 %v1391, %v1359
        %v1424 = vadd.f32 %v1392, %v1360
        %v1425 = vadd.f32 %v1393, %v1361
        %v1426 = vadd.f32 %v1394, %v1362
        %v1427 = vadd.f32 %v1395, %v1363
        %v1428 = vadd.f32 %v1396, %v1364
        %v1429 = vadd.f32 %v1397, %v1365
        %v1430 = vadd.f32 %v1398, %v1366
        %v1431 = vadd.f32 %v1399, %v1367
        %v1432 = vadd.f32 %v1400, %v1368
        %v1433 = vld [vmem:[#allocation8] sm:$0x1]
        %v1435 = vlaneseq
        %v1436 = vshrl.u32 %v1435, 7
        %v1437 = vsub.s32 0, %v1436
        %v1438 = vrot.slane %v1433, %v1437
        %v1440 = vadd.f32 %v1401, %v1438
        %v1441 = vadd.f32 %v1402, %v1438
        %v1442 = vadd.f32 %v1403, %v1438
        %v1443 = vadd.f32 %v1404, %v1438
        %v1444 = vadd.f32 %v1405, %v1438
        %v1445 = vadd.f32 %v1406, %v1438
        %v1446 = vadd.f32 %v1407, %v1438
        %v1447 = vadd.f32 %v1408, %v1438
        %v1448 = vadd.f32 %v1409, %v1438
        %v1449 = vadd.f32 %v1410, %v1438
        %v1450 = vadd.f32 %v1411, %v1438
        %v1451 = vadd.f32 %v1412, %v1438
        %v1452 = vadd.f32 %v1413, %v1438
        %v1453 = vadd.f32 %v1414, %v1438
        %v1454 = vadd.f32 %v1415, %v1438
        %v1455 = vadd.f32 %v1416, %v1438
        %v1456 = vadd.f32 %v1417, %v1438
        %v1457 = vadd.f32 %v1418, %v1438
        %v1458 = vadd.f32 %v1419, %v1438
        %v1459 = vadd.f32 %v1420, %v1438
        %v1460 = vadd.f32 %v1421, %v1438
        %v1461 = vadd.f32 %v1422, %v1438
        %v1462 = vadd.f32 %v1423, %v1438
        %v1463 = vadd.f32 %v1424, %v1438
        %v1464 = vadd.f32 %v1425, %v1438
        %v1465 = vadd.f32 %v1426, %v1438
        %v1466 = vadd.f32 %v1427, %v1438
        %v1467 = vadd.f32 %v1428, %v1438
        %v1468 = vadd.f32 %v1429, %v1438
        %v1469 = vadd.f32 %v1430, %v1438
        %v1470 = vadd.f32 %v1431, %v1438
        %v1471 = vadd.f32 %v1432, %v1438
        %v1472 = vpack.c.bf16 %v1441, %v1440
        %v1473 = vpack.c.bf16 %v1443, %v1442
        %v1474 = vpack.c.bf16 %v1445, %v1444
        %v1475 = vpack.c.bf16 %v1447, %v1446
        %v1476 = vpack.c.bf16 %v1449, %v1448
        %v1477 = vpack.c.bf16 %v1451, %v1450
        %v1478 = vpack.c.bf16 %v1453, %v1452
        %v1479 = vpack.c.bf16 %v1455, %v1454
        %v1480 = vpack.c.bf16 %v1457, %v1456
        %v1481 = vpack.c.bf16 %v1459, %v1458
        %v1482 = vpack.c.bf16 %v1461, %v1460
        %v1483 = vpack.c.bf16 %v1463, %v1462
        %v1484 = vpack.c.bf16 %v1465, %v1464
        %v1485 = vpack.c.bf16 %v1467, %v1466
        %v1486 = vpack.c.bf16 %v1469, %v1468
        %v1487 = vpack.c.bf16 %v1471, %v1470
        %v1488 = vld [vmem:[#allocation9] sm:$0xf]
        %v1489 = vld [vmem:[#allocation9 + $0x4] sm:$0xf]
        %v1490 = vld [vmem:[#allocation9 + $0x8] sm:$0xf]
        %v1491 = vld [vmem:[#allocation9 + $0xc] sm:$0xf]
        %v1492 = vld [vmem:[#allocation9 + $0x10] sm:$0xf]
        %v1493 = vld [vmem:[#allocation9 + $0x14] sm:$0xf]
        %v1494 = vld [vmem:[#allocation9 + $0x18] sm:$0xf]
        %v1495 = vld [vmem:[#allocation9 + $0x1c] sm:$0xf]
        %v1496 = vld [vmem:[#allocation9 + $0x20] sm:$0xf]
        %v1497 = vld [vmem:[#allocation9 + $0x24] sm:$0xf]
        %v1498 = vld [vmem:[#allocation9 + $0x28] sm:$0xf]
        %v1499 = vld [vmem:[#allocation9 + $0x2c] sm:$0xf]
        %v1500 = vld [vmem:[#allocation9 + $0x30] sm:$0xf]
        %v1501 = vld [vmem:[#allocation9 + $0x34] sm:$0xf]
        %v1502 = vld [vmem:[#allocation9 + $0x38] sm:$0xf]
        %v1503 = vld [vmem:[#allocation9 + $0x3c] sm:$0xf]
        %v1520 = vunpack.c.l.b16 %v1488
        %v1521 = vunpack.c.l.b16 %v1489
        %v1522 = vunpack.c.l.b16 %v1490
        %v1523 = vunpack.c.l.b16 %v1491
        %v1524 = vunpack.c.l.b16 %v1492
        %v1525 = vunpack.c.l.b16 %v1493
        %v1526 = vunpack.c.l.b16 %v1494
        %v1527 = vunpack.c.l.b16 %v1495
        %v1528 = vunpack.c.l.b16 %v1496
        %v1529 = vunpack.c.l.b16 %v1497
        %v1530 = vunpack.c.l.b16 %v1498
        %v1531 = vunpack.c.l.b16 %v1499
        %v1532 = vunpack.c.l.b16 %v1500
        %v1533 = vunpack.c.l.b16 %v1501
        %v1534 = vunpack.c.l.b16 %v1502
        %v1535 = vunpack.c.l.b16 %v1503
        %v1536 = vpack.c.b16 %v1521, %v1520
        %v1537 = vpack.c.b16 %v1523, %v1522
        %v1538 = vpack.c.b16 %v1525, %v1524
        %v1539 = vpack.c.b16 %v1527, %v1526
        %v1540 = vpack.c.b16 %v1529, %v1528
        %v1541 = vpack.c.b16 %v1531, %v1530
        %v1542 = vpack.c.b16 %v1533, %v1532
        %v1543 = vpack.c.b16 %v1535, %v1534
        %1552 = vmatprep.subr.bf16.mxu0 0
        %1553 = vmatpush1.bf16.msra.mxu0 %v1536
        %1554 = vmatprep.subr.bf16.mxu0 0
        %1555 = vmatpush1.bf16.msra.mxu0 %v1537
        %1556 = vmatprep.subr.bf16.mxu0 0
        %1557 = vmatpush1.bf16.msra.mxu0 %v1538
        %1558 = vmatprep.subr.bf16.mxu0 0
        %1559 = vmatpush1.bf16.msra.mxu0 %v1539
        %1560 = vmatprep.subr.bf16.mxu0 0
        %1561 = vmatpush1.bf16.msra.mxu0 %v1540
        %1562 = vmatprep.subr.bf16.mxu0 0
        %1563 = vmatpush1.bf16.msra.mxu0 %v1541
        %1564 = vmatprep.subr.bf16.mxu0 0
        %1565 = vmatpush1.bf16.msra.mxu0 %v1542
        %1566 = vmatprep.subr.bf16.mxu0 0
        %1567 = vmatpush1.bf16.msra.mxu0 %v1543
        %1568 = vmatprep.subr.bf16.mxu0 0
        %1569 = vmatpush1.bf16.msra.mxu0 0
        %1570 = vmatprep.subr.bf16.mxu0 0
        %1571 = vmatpush1.bf16.msra.mxu0 0
        %1572 = vmatprep.subr.bf16.mxu0 0
        %1573 = vmatpush1.bf16.msra.mxu0 0
        %1574 = vmatprep.subr.bf16.mxu0 0
        %1575 = vmatpush1.bf16.msra.mxu0 0
        %1576 = vmatprep.subr.bf16.mxu0 0
        %1577 = vmatpush1.bf16.msra.mxu0 0
        %1578 = vmatprep.subr.bf16.mxu0 0
        %1579 = vmatpush1.bf16.msra.mxu0 0
        %1580 = vmatprep.subr.bf16.mxu0 0
        %1581 = vmatpush1.bf16.msra.mxu0 0
        %1582 = vmatprep.subr.bf16.mxu0 0
        %1583 = vmatpush1.bf16.msra.mxu0 0
        %1584 = vmatprep.mubr.bf16.mxu0 0
        %1585 = vmatmul.mubr.bf16.gmra.mrb[0].mxu0 %v1472
        %v1586 = vpop.f32.mrb[0].mxu0
        %v1587 = vadd.f32 0.0, %v1586
        %v1588 = vpop.f32.mrb[0].mxu0
        %v1589 = vpop.f32.mrb[0].mxu0
        %v1590 = vadd.f32 0.0, %v1589
        %v1591 = vpop.f32.mrb[0].mxu0
        %1592 = vmatprep.mubr.bf16.mxu0 0
        %1593 = vmatmul.mubr.bf16.gmra.mrb[0].mxu0 %v1473
        %v1594 = vpop.f32.mrb[0].mxu0
        %v1595 = vadd.f32 0.0, %v1594
        %v1596 = vpop.f32.mrb[0].mxu0
        %v1597 = vpop.f32.mrb[0].mxu0
        %v1598 = vadd.f32 0.0, %v1597
        %v1599 = vpop.f32.mrb[0].mxu0
        %1600 = vmatprep.mubr.bf16.mxu0 0
        %1601 = vmatmul.mubr.bf16.gmra.mrb[0].mxu0 %v1474
        %v1602 = vpop.f32.mrb[0].mxu0
        %v1603 = vadd.f32 0.0, %v1602
        %v1604 = vpop.f32.mrb[0].mxu0
        %v1605 = vpop.f32.mrb[0].mxu0
        %v1606 = vadd.f32 0.0, %v1605
        %v1607 = vpop.f32.mrb[0].mxu0
        %1608 = vmatprep.mubr.bf16.mxu0 0
        %1609 = vmatmul.mubr.bf16.gmra.mrb[0].mxu0 %v1475
        %v1610 = vpop.f32.mrb[0].mxu0
        %v1611 = vadd.f32 0.0, %v1610
        %v1612 = vpop.f32.mrb[0].mxu0
        %v1613 = vpop.f32.mrb[0].mxu0
        %v1614 = vadd.f32 0.0, %v1613
        %v1615 = vpop.f32.mrb[0].mxu0
        %1616 = vmatprep.mubr.bf16.mxu0 0
        %1617 = vmatmul.mubr.bf16.gmra.mrb[0].mxu0 %v1476
        %v1618 = vpop.f32.mrb[0].mxu0
        %v1619 = vadd.f32 0.0, %v1618
        %v1620 = vpop.f32.mrb[0].mxu0
        %v1621 = vpop.f32.mrb[0].mxu0
        %v1622 = vadd.f32 0.0, %v1621
        %v1623 = vpop.f32.mrb[0].mxu0
        %1624 = vmatprep.mubr.bf16.mxu0 0
        %1625 = vmatmul.mubr.bf16.gmra.mrb[0].mxu0 %v1477
        %v1626 = vpop.f32.mrb[0].mxu0
        %v1627 = vadd.f32 0.0, %v1626
        %v1628 = vpop.f32.mrb[0].mxu0
        %v1629 = vpop.f32.mrb[0].mxu0
        %v1630 = vadd.f32 0.0, %v1629
        %v1631 = vpop.f32.mrb[0].mxu0
        %1632 = vmatprep.mubr.bf16.mxu0 0
        %1633 = vmatmul.mubr.bf16.gmra.mrb[0].mxu0 %v1478
        %v1634 = vpop.f32.mrb[0].mxu0
        %v1635 = vadd.f32 0.0, %v1634
        %v1636 = vpop.f32.mrb[0].mxu0
        %v1637 = vpop.f32.mrb[0].mxu0
        %v1638 = vadd.f32 0.0, %v1637
        %v1639 = vpop.f32.mrb[0].mxu0
        %1640 = vmatprep.mubr.bf16.mxu0 0
        %1641 = vmatmul.mubr.bf16.gmra.mrb[0].mxu0 %v1479
        %v1642 = vpop.f32.mrb[0].mxu0
        %v1643 = vadd.f32 0.0, %v1642
        %v1644 = vpop.f32.mrb[0].mxu0
        %v1645 = vpop.f32.mrb[0].mxu0
        %v1646 = vadd.f32 0.0, %v1645
        %v1647 = vpop.f32.mrb[0].mxu0
        %1648 = vmatprep.mubr.bf16.mxu0 0
        %1649 = vmatmul.mubr.bf16.gmra.mrb[0].mxu0 %v1480
        %v1650 = vpop.f32.mrb[0].mxu0
        %v1651 = vadd.f32 0.0, %v1650
        %v1652 = vpop.f32.mrb[0].mxu0
        %v1653 = vpop.f32.mrb[0].mxu0
        %v1654 = vadd.f32 0.0, %v1653
        %v1655 = vpop.f32.mrb[0].mxu0
        %1656 = vmatprep.mubr.bf16.mxu0 0
        %1657 = vmatmul.mubr.bf16.gmra.mrb[0].mxu0 %v1481
        %v1658 = vpop.f32.mrb[0].mxu0
        %v1659 = vadd.f32 0.0, %v1658
        %v1660 = vpop.f32.mrb[0].mxu0
        %v1661 = vpop.f32.mrb[0].mxu0
        %v1662 = vadd.f32 0.0, %v1661
        %v1663 = vpop.f32.mrb[0].mxu0
        %1664 = vmatprep.mubr.bf16.mxu0 0
        %1665 = vmatmul.mubr.bf16.gmra.mrb[0].mxu0 %v1482
        %v1666 = vpop.f32.mrb[0].mxu0
        %v1667 = vadd.f32 0.0, %v1666
        %v1668 = vpop.f32.mrb[0].mxu0
        %v1669 = vpop.f32.mrb[0].mxu0
        %v1670 = vadd.f32 0.0, %v1669
        %v1671 = vpop.f32.mrb[0].mxu0
        %1672 = vmatprep.mubr.bf16.mxu0 0
        %1673 = vmatmul.mubr.bf16.gmra.mrb[0].mxu0 %v1483
        %v1674 = vpop.f32.mrb[0].mxu0
        %v1675 = vadd.f32 0.0, %v1674
        %v1676 = vpop.f32.mrb[0].mxu0
        %v1677 = vpop.f32.mrb[0].mxu0
        %v1678 = vadd.f32 0.0, %v1677
        %v1679 = vpop.f32.mrb[0].mxu0
        %1680 = vmatprep.mubr.bf16.mxu0 0
        %1681 = vmatmul.mubr.bf16.gmra.mrb[0].mxu0 %v1484
        %v1682 = vpop.f32.mrb[0].mxu0
        %v1683 = vadd.f32 0.0, %v1682
        %v1684 = vpop.f32.mrb[0].mxu0
        %v1685 = vpop.f32.mrb[0].mxu0
        %v1686 = vadd.f32 0.0, %v1685
        %v1687 = vpop.f32.mrb[0].mxu0
        %1688 = vmatprep.mubr.bf16.mxu0 0
        %1689 = vmatmul.mubr.bf16.gmra.mrb[0].mxu0 %v1485
        %v1690 = vpop.f32.mrb[0].mxu0
        %v1691 = vadd.f32 0.0, %v1690
        %v1692 = vpop.f32.mrb[0].mxu0
        %v1693 = vpop.f32.mrb[0].mxu0
        %v1694 = vadd.f32 0.0, %v1693
        %v1695 = vpop.f32.mrb[0].mxu0
        %1696 = vmatprep.mubr.bf16.mxu0 0
        %1697 = vmatmul.mubr.bf16.gmra.mrb[0].mxu0 %v1486
        %v1698 = vpop.f32.mrb[0].mxu0
        %v1699 = vadd.f32 0.0, %v1698
        %v1700 = vpop.f32.mrb[0].mxu0
        %v1701 = vpop.f32.mrb[0].mxu0
        %v1702 = vadd.f32 0.0, %v1701
        %v1703 = vpop.f32.mrb[0].mxu0
        %1704 = vmatprep.mubr.bf16.mxu0 0
        %1705 = vmatmul.mubr.bf16.gmra.mrb[0].mxu0 %v1487
        %v1706 = vpop.f32.mrb[0].mxu0
        %v1707 = vadd.f32 0.0, %v1706
        %v1708 = vpop.f32.mrb[0].mxu0
        %v1709 = vpop.f32.mrb[0].mxu0
        %v1710 = vadd.f32 0.0, %v1709
        %v1711 = vpop.f32.mrb[0].mxu0
        %1712 = vdwg.mxu0
        %v1713 = vld [vmem:[#allocation11] sm:$0x1]
        %v1715 = vlaneseq
        %v1716 = vshrl.u32 %v1715, 7
        %v1717 = vsub.s32 0, %v1716
        %v1718 = vrot.slane %v1713, %v1717
        %v1720 = vmul.f32 %v1587, %v1718
        %v1721 = vmul.f32 %v1590, %v1718
        %v1722 = vmul.f32 %v1595, %v1718
        %v1723 = vmul.f32 %v1598, %v1718
        %v1724 = vmul.f32 %v1603, %v1718
        %v1725 = vmul.f32 %v1606, %v1718
        %v1726 = vmul.f32 %v1611, %v1718
        %v1727 = vmul.f32 %v1614, %v1718
        %v1728 = vmul.f32 %v1619, %v1718
        %v1729 = vmul.f32 %v1622, %v1718
        %v1730 = vmul.f32 %v1627, %v1718
        %v1731 = vmul.f32 %v1630, %v1718
        %v1732 = vmul.f32 %v1635, %v1718
        %v1733 = vmul.f32 %v1638, %v1718
        %v1734 = vmul.f32 %v1643, %v1718
        %v1735 = vmul.f32 %v1646, %v1718
        %v1736 = vmul.f32 %v1651, %v1718
        %v1737 = vmul.f32 %v1654, %v1718
        %v1738 = vmul.f32 %v1659, %v1718
        %v1739 = vmul.f32 %v1662, %v1718
        %v1740 = vmul.f32 %v1667, %v1718
        %v1741 = vmul.f32 %v1670, %v1718
        %v1742 = vmul.f32 %v1675, %v1718
        %v1743 = vmul.f32 %v1678, %v1718
        %v1744 = vmul.f32 %v1683, %v1718
        %v1745 = vmul.f32 %v1686, %v1718
        %v1746 = vmul.f32 %v1691, %v1718
        %v1747 = vmul.f32 %v1694, %v1718
        %v1748 = vmul.f32 %v1699, %v1718
        %v1749 = vmul.f32 %v1702, %v1718
        %v1750 = vmul.f32 %v1707, %v1718
        %v1751 = vmul.f32 %v1710, %v1718
        %v1752 = vld [vmem:[#allocation12] sm:$0x1]
        %v1754 = vlaneseq
        %v1755 = vshrl.u32 %v1754, 7
        %v1756 = vsub.s32 0, %v1755
        %v1757 = vrot.slane %v1752, %v1756
        %v1759 = vadd.f32 %v1720, %v1757
        %v1760 = vadd.f32 %v1721, %v1757
        %v1761 = vadd.f32 %v1722, %v1757
        %v1762 = vadd.f32 %v1723, %v1757
        %v1763 = vadd.f32 %v1724, %v1757
        %v1764 = vadd.f32 %v1725, %v1757
        %v1765 = vadd.f32 %v1726, %v1757
        %v1766 = vadd.f32 %v1727, %v1757
        %v1767 = vadd.f32 %v1728, %v1757
        %v1768 = vadd.f32 %v1729, %v1757
        %v1769 = vadd.f32 %v1730, %v1757
        %v1770 = vadd.f32 %v1731, %v1757
        %v1771 = vadd.f32 %v1732, %v1757
        %v1772 = vadd.f32 %v1733, %v1757
        %v1773 = vadd.f32 %v1734, %v1757
        %v1774 = vadd.f32 %v1735, %v1757
        %v1775 = vadd.f32 %v1736, %v1757
        %v1776 = vadd.f32 %v1737, %v1757
        %v1777 = vadd.f32 %v1738, %v1757
        %v1778 = vadd.f32 %v1739, %v1757
        %v1779 = vadd.f32 %v1740, %v1757
        %v1780 = vadd.f32 %v1741, %v1757
        %v1781 = vadd.f32 %v1742, %v1757
        %v1782 = vadd.f32 %v1743, %v1757
        %v1783 = vadd.f32 %v1744, %v1757
        %v1784 = vadd.f32 %v1745, %v1757
        %v1785 = vadd.f32 %v1746, %v1757
        %v1786 = vadd.f32 %v1747, %v1757
        %v1787 = vadd.f32 %v1748, %v1757
        %v1788 = vadd.f32 %v1749, %v1757
        %v1789 = vadd.f32 %v1750, %v1757
        %v1790 = vadd.f32 %v1751, %v1757
        %v1791 = vxor.u32 %v1759, 2147483648
        %v1792 = vxor.u32 %v1760, 2147483648
        %v1793 = vxor.u32 %v1761, 2147483648
        %v1794 = vxor.u32 %v1762, 2147483648
        %v1795 = vxor.u32 %v1763, 2147483648
        %v1796 = vxor.u32 %v1764, 2147483648
        %v1797 = vxor.u32 %v1765, 2147483648
        %v1798 = vxor.u32 %v1766, 2147483648
        %v1799 = vxor.u32 %v1767, 2147483648
        %v1800 = vxor.u32 %v1768, 2147483648
        %v1801 = vxor.u32 %v1769, 2147483648
        %v1802 = vxor.u32 %v1770, 2147483648
        %v1803 = vxor.u32 %v1771, 2147483648
        %v1804 = vxor.u32 %v1772, 2147483648
        %v1805 = vxor.u32 %v1773, 2147483648
        %v1806 = vxor.u32 %v1774, 2147483648
        %v1807 = vxor.u32 %v1775, 2147483648
        %v1808 = vxor.u32 %v1776, 2147483648
        %v1809 = vxor.u32 %v1777, 2147483648
        %v1810 = vxor.u32 %v1778, 2147483648
        %v1811 = vxor.u32 %v1779, 2147483648
        %v1812 = vxor.u32 %v1780, 2147483648
        %v1813 = vxor.u32 %v1781, 2147483648
        %v1814 = vxor.u32 %v1782, 2147483648
        %v1815 = vxor.u32 %v1783, 2147483648
        %v1816 = vxor.u32 %v1784, 2147483648
        %v1817 = vxor.u32 %v1785, 2147483648
        %v1818 = vxor.u32 %v1786, 2147483648
        %v1819 = vxor.u32 %v1787, 2147483648
        %v1820 = vxor.u32 %v1788, 2147483648
        %v1821 = vxor.u32 %v1789, 2147483648
        %v1822 = vxor.u32 %v1790, 2147483648
        %v1823 = vmul.f32 %v1791, 1.442695
        %v1824 = vpow.pop %v1823
        %v1825 = vmul.f32 %v1792, 1.442695
        %v1826 = vpow.pop %v1825
        %v1827 = vmul.f32 %v1793, 1.442695
        %v1828 = vpow.pop %v1827
        %v1829 = vmul.f32 %v1794, 1.442695
        %v1830 = vpow.pop %v1829
        %v1831 = vmul.f32 %v1795, 1.442695
        %v1832 = vpow.pop %v1831
        %v1833 = vmul.f32 %v1796, 1.442695
        %v1834 = vpow.pop %v1833
        %v1835 = vmul.f32 %v1797, 1.442695
        %v1836 = vpow.pop %v1835
        %v1837 = vmul.f32 %v1798, 1.442695
        %v1838 = vpow.pop %v1837
        %v1839 = vmul.f32 %v1799, 1.442695
        %v1840 = vpow.pop %v1839
        %v1841 = vmul.f32 %v1800, 1.442695
        %v1842 = vpow.pop %v1841
        %v1843 = vmul.f32 %v1801, 1.442695
        %v1844 = vpow.pop %v1843
        %v1845 = vmul.f32 %v1802, 1.442695
        %v1846 = vpow.pop %v1845
        %v1847 = vmul.f32 %v1803, 1.442695
        %v1848 = vpow.pop %v1847
        %v1849 = vmul.f32 %v1804, 1.442695
        %v1850 = vpow.pop %v1849
        %v1851 = vmul.f32 %v1805, 1.442695
        %v1852 = vpow.pop %v1851
        %v1853 = vmul.f32 %v1806, 1.442695
        %v1854 = vpow.pop %v1853
        %v1855 = vmul.f32 %v1807, 1.442695
        %v1856 = vpow.pop %v1855
        %v1857 = vmul.f32 %v1808, 1.442695
        %v1858 = vpow.pop %v1857
        %v1859 = vmul.f32 %v1809, 1.442695
        %v1860 = vpow.pop %v1859
        %v1861 = vmul.f32 %v1810, 1.442695
        %v1862 = vpow.pop %v1861
        %v1863 = vmul.f32 %v1811, 1.442695
        %v1864 = vpow.pop %v1863
        %v1865 = vmul.f32 %v1812, 1.442695
        %v1866 = vpow.pop %v1865
        %v1867 = vmul.f32 %v1813, 1.442695
        %v1868 = vpow.pop %v1867
        %v1869 = vmul.f32 %v1814, 1.442695
        %v1870 = vpow.pop %v1869
        %v1871 = vmul.f32 %v1815, 1.442695
        %v1872 = vpow.pop %v1871
        %v1873 = vmul.f32 %v1816, 1.442695
        %v1874 = vpow.pop %v1873
        %v1875 = vmul.f32 %v1817, 1.442695
        %v1876 = vpow.pop %v1875
        %v1877 = vmul.f32 %v1818, 1.442695
        %v1878 = vpow.pop %v1877
        %v1879 = vmul.f32 %v1819, 1.442695
        %v1880 = vpow.pop %v1879
        %v1881 = vmul.f32 %v1820, 1.442695
        %v1882 = vpow.pop %v1881
        %v1883 = vmul.f32 %v1821, 1.442695
        %v1884 = vpow.pop %v1883
        %v1885 = vmul.f32 %v1822, 1.442695
        %v1886 = vpow.pop %v1885
        %v1887 = vadd.f32 %v1824, 1.0
        %v1888 = vadd.f32 %v1826, 1.0
        %v1889 = vadd.f32 %v1828, 1.0
        %v1890 = vadd.f32 %v1830, 1.0
        %v1891 = vadd.f32 %v1832, 1.0
        %v1892 = vadd.f32 %v1834, 1.0
        %v1893 = vadd.f32 %v1836, 1.0
        %v1894 = vadd.f32 %v1838, 1.0
        %v1895 = vadd.f32 %v1840, 1.0
        %v1896 = vadd.f32 %v1842, 1.0
        %v1897 = vadd.f32 %v1844, 1.0
        %v1898 = vadd.f32 %v1846, 1.0
        %v1899 = vadd.f32 %v1848, 1.0
        %v1900 = vadd.f32 %v1850, 1.0
        %v1901 = vadd.f32 %v1852, 1.0
        %v1902 = vadd.f32 %v1854, 1.0
        %v1903 = vadd.f32 %v1856, 1.0
        %v1904 = vadd.f32 %v1858, 1.0
        %v1905 = vadd.f32 %v1860, 1.0
        %v1906 = vadd.f32 %v1862, 1.0
        %v1907 = vadd.f32 %v1864, 1.0
        %v1908 = vadd.f32 %v1866, 1.0
        %v1909 = vadd.f32 %v1868, 1.0
        %v1910 = vadd.f32 %v1870, 1.0
        %v1911 = vadd.f32 %v1872, 1.0
        %v1912 = vadd.f32 %v1874, 1.0
        %v1913 = vadd.f32 %v1876, 1.0
        %v1914 = vadd.f32 %v1878, 1.0
        %v1915 = vadd.f32 %v1880, 1.0
        %v1916 = vadd.f32 %v1882, 1.0
        %v1917 = vadd.f32 %v1884, 1.0
        %v1918 = vadd.f32 %v1886, 1.0
        %v1919 = vrcp.pop %v1887
        %v1920 = vmul.f32 1.0, %v1919
        %v1921 = vrcp.pop %v1888
        %v1922 = vmul.f32 1.0, %v1921
        %v1923 = vrcp.pop %v1889
        %v1924 = vmul.f32 1.0, %v1923
        %v1925 = vrcp.pop %v1890
        %v1926 = vmul.f32 1.0, %v1925
        %v1927 = vrcp.pop %v1891
        %v1928 = vmul.f32 1.0, %v1927
        %v1929 = vrcp.pop %v1892
        %v1930 = vmul.f32 1.0, %v1929
        %v1931 = vrcp.pop %v1893
        %v1932 = vmul.f32 1.0, %v1931
        %v1933 = vrcp.pop %v1894
        %v1934 = vmul.f32 1.0, %v1933
        %v1935 = vrcp.pop %v1895
        %v1936 = vmul.f32 1.0, %v1935
        %v1937 = vrcp.pop %v1896
        %v1938 = vmul.f32 1.0, %v1937
        %v1939 = vrcp.pop %v1897
        %v1940 = vmul.f32 1.0, %v1939
        %v1941 = vrcp.pop %v1898
        %v1942 = vmul.f32 1.0, %v1941
        %v1943 = vrcp.pop %v1899
        %v1944 = vmul.f32 1.0, %v1943
        %v1945 = vrcp.pop %v1900
        %v1946 = vmul.f32 1.0, %v1945
        %v1947 = vrcp.pop %v1901
        %v1948 = vmul.f32 1.0, %v1947
        %v1949 = vrcp.pop %v1902
        %v1950 = vmul.f32 1.0, %v1949
        %v1951 = vrcp.pop %v1903
        %v1952 = vmul.f32 1.0, %v1951
        %v1953 = vrcp.pop %v1904
        %v1954 = vmul.f32 1.0, %v1953
        %v1955 = vrcp.pop %v1905
        %v1956 = vmul.f32 1.0, %v1955
        %v1957 = vrcp.pop %v1906
        %v1958 = vmul.f32 1.0, %v1957
        %v1959 = vrcp.pop %v1907
        %v1960 = vmul.f32 1.0, %v1959
        %v1961 = vrcp.pop %v1908
        %v1962 = vmul.f32 1.0, %v1961
        %v1963 = vrcp.pop %v1909
        %v1964 = vmul.f32 1.0, %v1963
        %v1965 = vrcp.pop %v1910
        %v1966 = vmul.f32 1.0, %v1965
        %v1967 = vrcp.pop %v1911
        %v1968 = vmul.f32 1.0, %v1967
        %v1969 = vrcp.pop %v1912
        %v1970 = vmul.f32 1.0, %v1969
        %v1971 = vrcp.pop %v1913
        %v1972 = vmul.f32 1.0, %v1971
        %v1973 = vrcp.pop %v1914
        %v1974 = vmul.f32 1.0, %v1973
        %v1975 = vrcp.pop %v1915
        %v1976 = vmul.f32 1.0, %v1975
        %v1977 = vrcp.pop %v1916
        %v1978 = vmul.f32 1.0, %v1977
        %v1979 = vrcp.pop %v1917
        %v1980 = vmul.f32 1.0, %v1979
        %v1981 = vrcp.pop %v1918
        %v1982 = vmul.f32 1.0, %v1981
        %v1983 = vmul.f32 %v1759, %v1920
        %v1984 = vmul.f32 %v1760, %v1922
        %v1985 = vmul.f32 %v1761, %v1924
        %v1986 = vmul.f32 %v1762, %v1926
        %v1987 = vmul.f32 %v1763, %v1928
        %v1988 = vmul.f32 %v1764, %v1930
        %v1989 = vmul.f32 %v1765, %v1932
        %v1990 = vmul.f32 %v1766, %v1934
        %v1991 = vmul.f32 %v1767, %v1936
        %v1992 = vmul.f32 %v1768, %v1938
        %v1993 = vmul.f32 %v1769, %v1940
        %v1994 = vmul.f32 %v1770, %v1942
        %v1995 = vmul.f32 %v1771, %v1944
        %v1996 = vmul.f32 %v1772, %v1946
        %v1997 = vmul.f32 %v1773, %v1948
        %v1998 = vmul.f32 %v1774, %v1950
        %v1999 = vmul.f32 %v1775, %v1952
        %v2000 = vmul.f32 %v1776, %v1954
        %v2001 = vmul.f32 %v1777, %v1956
        %v2002 = vmul.f32 %v1778, %v1958
        %v2003 = vmul.f32 %v1779, %v1960
        %v2004 = vmul.f32 %v1780, %v1962
        %v2005 = vmul.f32 %v1781, %v1964
        %v2006 = vmul.f32 %v1782, %v1966
        %v2007 = vmul.f32 %v1783, %v1968
        %v2008 = vmul.f32 %v1784, %v1970
        %v2009 = vmul.f32 %v1785, %v1972
        %v2010 = vmul.f32 %v1786, %v1974
        %v2011 = vmul.f32 %v1787, %v1976
        %v2012 = vmul.f32 %v1788, %v1978
        %v2013 = vmul.f32 %v1789, %v1980
        %v2014 = vmul.f32 %v1790, %v1982
        %2015 = vst [vmem:[%s645 + $0x8] sm:$0xff] %v1983
        %2016 = vst [vmem:[%s645 + $0x10] sm:$0xff] %v1984
        %2017 = vst [vmem:[%s645 + $0x28] sm:$0xff] %v1985
        %2018 = vst [vmem:[%s645 + $0x30] sm:$0xff] %v1986
        %2019 = vst [vmem:[%s645 + $0x48] sm:$0xff] %v1987
        %2020 = vst [vmem:[%s645 + $0x50] sm:$0xff] %v1988
        %2021 = vst [vmem:[%s645 + $0x68] sm:$0xff] %v1989
        %2022 = vst [vmem:[%s645 + $0x70] sm:$0xff] %v1990
        %2023 = vst [vmem:[%s645 + $0x88] sm:$0xff] %v1991
        %2024 = vst [vmem:[%s645 + $0x90] sm:$0xff] %v1992
        %2025 = vst [vmem:[%s645 + $0xa8] sm:$0xff] %v1993
        %2026 = vst [vmem:[%s645 + $0xb0] sm:$0xff] %v1994
        %2027 = vst [vmem:[%s645 + $0xc8] sm:$0xff] %v1995
        %2028 = vst [vmem:[%s645 + $0xd0] sm:$0xff] %v1996
        %2029 = vst [vmem:[%s645 + $0xe8] sm:$0xff] %v1997
        %2030 = vst [vmem:[%s645 + $0xf0] sm:$0xff] %v1998
        %2031 = vst [vmem:[%s645 + $0x108] sm:$0xff] %v1999
        %2032 = vst [vmem:[%s645 + $0x110] sm:$0xff] %v2000
        %2033 = vst [vmem:[%s645 + $0x128] sm:$0xff] %v2001
        %2034 = vst [vmem:[%s645 + $0x130] sm:$0xff] %v2002
        %2035 = vst [vmem:[%s645 + $0x148] sm:$0xff] %v2003
        %2036 = vst [vmem:[%s645 + $0x150] sm:$0xff] %v2004
        %2037 = vst [vmem:[%s645 + $0x168] sm:$0xff] %v2005
        %2038 = vst [vmem:[%s645 + $0x170] sm:$0xff] %v2006
        %2039 = vst [vmem:[%s645 + $0x188] sm:$0xff] %v2007
        %2040 = vst [vmem:[%s645 + $0x190] sm:$0xff] %v2008
        %2041 = vst [vmem:[%s645 + $0x1a8] sm:$0xff] %v2009
        %2042 = vst [vmem:[%s645 + $0x1b0] sm:$0xff] %v2010
        %2043 = vst [vmem:[%s645 + $0x1c8] sm:$0xff] %v2011
        %2044 = vst [vmem:[%s645 + $0x1d0] sm:$0xff] %v2012
        %2045 = vst [vmem:[%s645 + $0x1e8] sm:$0xff] %v2013
        %2046 = vst [vmem:[%s645 + $0x1f0] sm:$0xff] %v2014
        %v2047 = vld [vmem:[#allocation14] sm:$0xff]
        %v2048 = vld [vmem:[#allocation14 + $0x8] sm:$0xff]
        %v2049 = vld [vmem:[#allocation14 + $0x10] sm:$0xff]
        %v2050 = vld [vmem:[#allocation14 + $0x18] sm:$0x1]
        %s2051 = scalar_lea.vmem [#allocation2], 32
        %v2052 = vld [vmem:[%s2051 + $0x6] sm:$0xff]
        %v2053 = vld [vmem:[%s2051 + $0xe] sm:$0xff]
        %v2054 = vld [vmem:[%s2051 + $0x26] sm:$0xff]
        %v2055 = vld [vmem:[%s2051 + $0x2e] sm:$0xff]
        %v2056 = vld [vmem:[%s2051 + $0x46] sm:$0xff]
        %v2057 = vld [vmem:[%s2051 + $0x4e] sm:$0xff]
        %v2058 = vld [vmem:[%s2051 + $0x66] sm:$0xff]
        %v2059 = vld [vmem:[%s2051 + $0x6e] sm:$0xff]
        %v2060 = vld [vmem:[%s2051 + $0x86] sm:$0xff]
        %v2061 = vld [vmem:[%s2051 + $0x8e] sm:$0xff]
        %v2062 = vld [vmem:[%s2051 + $0xa6] sm:$0xff]
        %v2063 = vld [vmem:[%s2051 + $0xae] sm:$0xff]
        %v2064 = vld [vmem:[%s2051 + $0xc6] sm:$0xff]
        %v2065 = vld [vmem:[%s2051 + $0xce] sm:$0xff]
        %v2066 = vld [vmem:[%s2051 + $0xe6] sm:$0xff]
        %v2067 = vld [vmem:[%s2051 + $0xee] sm:$0xff]
        %v2068 = vld [vmem:[%s2051 + $0x106] sm:$0xff]
        %v2069 = vld [vmem:[%s2051 + $0x10e] sm:$0xff]
        %v2070 = vld [vmem:[%s2051 + $0x126] sm:$0xff]
        %v2071 = vld [vmem:[%s2051 + $0x12e] sm:$0xff]
        %v2072 = vld [vmem:[%s2051 + $0x146] sm:$0xff]
        %v2073 = vld [vmem:[%s2051 + $0x14e] sm:$0xff]
        %v2074 = vld [vmem:[%s2051 + $0x166] sm:$0xff]
        %v2075 = vld [vmem:[%s2051 + $0x16e] sm:$0xff]
        %v2076 = vld [vmem:[%s2051 + $0x186] sm:$0xff]
        %v2077 = vld [vmem:[%s2051 + $0x18e] sm:$0xff]
        %v2078 = vld [vmem:[%s2051 + $0x1a6] sm:$0xff]
        %v2079 = vld [vmem:[%s2051 + $0x1ae] sm:$0xff]
        %v2080 = vld [vmem:[%s2051 + $0x1c6] sm:$0xff]
        %v2081 = vld [vmem:[%s2051 + $0x1ce] sm:$0xff]
        %v2082 = vld [vmem:[%s2051 + $0x1e6] sm:$0xff]
        %v2083 = vld [vmem:[%s2051 + $0x1ee] sm:$0xff]
        %v2084 = vld [vmem:[%s2051 + $0x206] sm:$0xff]
        %v2085 = vld [vmem:[%s2051 + $0x20e] sm:$0xff]
        %v2086 = vld [vmem:[%s2051 + $0x226] sm:$0xff]
        %v2087 = vld [vmem:[%s2051 + $0x22e] sm:$0xff]
        %v2088 = vld [vmem:[%s2051 + $0x246] sm:$0xff]
        %v2089 = vld [vmem:[%s2051 + $0x24e] sm:$0xff]
        %v2090 = vld [vmem:[%s2051 + $0x266] sm:$0xff]
        %v2091 = vld [vmem:[%s2051 + $0x26e] sm:$0xff]
        %v2092 = vlaneseq
        %v2093 = vshrl.u32 %v2092, 7
        %v2094 = vsub.s32 0, %v2093
        %v2095 = vrot.slane %v2047, %v2094
        %v2096 = vmul.f32 %v2052, %v2095
        %v2097 = vmul.f32 %v2053, %v2095
        %v2098 = vmul.f32 %v2054, %v2095
        %v2099 = vmul.f32 %v2055, %v2095
        %v2100 = vmul.f32 %v2056, %v2095
        %v2101 = vmul.f32 %v2057, %v2095
        %v2102 = vmul.f32 %v2058, %v2095
        %v2103 = vmul.f32 %v2059, %v2095
        %v2104 = vmul.f32 %v2060, %v2095
        %v2105 = vmul.f32 %v2061, %v2095
        %v2106 = vmul.f32 %v2062, %v2095
        %v2107 = vmul.f32 %v2063, %v2095
        %v2108 = vmul.f32 %v2064, %v2095
        %v2109 = vmul.f32 %v2065, %v2095
        %v2110 = vmul.f32 %v2066, %v2095
        %v2111 = vmul.f32 %v2067, %v2095
        %v2112 = vmul.f32 %v2068, %v2095
        %v2113 = vmul.f32 %v2069, %v2095
        %v2114 = vmul.f32 %v2070, %v2095
        %v2115 = vmul.f32 %v2071, %v2095
        %v2116 = vmul.f32 %v2072, %v2095
        %v2117 = vmul.f32 %v2073, %v2095
        %v2118 = vmul.f32 %v2074, %v2095
        %v2119 = vmul.f32 %v2075, %v2095
        %v2120 = vmul.f32 %v2076, %v2095
        %v2121 = vmul.f32 %v2077, %v2095
        %v2122 = vmul.f32 %v2078, %v2095
        %v2123 = vmul.f32 %v2079, %v2095
        %v2124 = vmul.f32 %v2080, %v2095
        %v2125 = vmul.f32 %v2081, %v2095
        %v2126 = vmul.f32 %v2082, %v2095
        %v2127 = vmul.f32 %v2083, %v2095
        %v2128 = vlaneseq
        %v2129 = vshrl.u32 %v2128, 7
        %v2130 = vsub.s32 5, %v2129
        %v2131 = vrot.slane %v2047, %v2130
        %v2132 = vmul.f32 %v2054, %v2131
        %v2133 = vmul.f32 %v2055, %v2131
        %v2134 = vmul.f32 %v2056, %v2131
        %v2135 = vmul.f32 %v2057, %v2131
        %v2136 = vmul.f32 %v2058, %v2131
        %v2137 = vmul.f32 %v2059, %v2131
        %v2138 = vmul.f32 %v2060, %v2131
        %v2139 = vmul.f32 %v2061, %v2131
        %v2140 = vmul.f32 %v2062, %v2131
        %v2141 = vmul.f32 %v2063, %v2131
        %v2142 = vmul.f32 %v2064, %v2131
        %v2143 = vmul.f32 %v2065, %v2131
        %v2144 = vmul.f32 %v2066, %v2131
        %v2145 = vmul.f32 %v2067, %v2131
        %v2146 = vmul.f32 %v2068, %v2131
        %v2147 = vmul.f32 %v2069, %v2131
        %v2148 = vmul.f32 %v2070, %v2131
        %v2149 = vmul.f32 %v2071, %v2131
        %v2150 = vmul.f32 %v2072, %v2131
        %v2151 = vmul.f32 %v2073, %v2131
        %v2152 = vmul.f32 %v2074, %v2131
        %v2153 = vmul.f32 %v2075, %v2131
        %v2154 = vmul.f32 %v2076, %v2131
        %v2155 = vmul.f32 %v2077, %v2131
        %v2156 = vmul.f32 %v2078, %v2131
        %v2157 = vmul.f32 %v2079, %v2131
        %v2158 = vmul.f32 %v2080, %v2131
        %v2159 = vmul.f32 %v2081, %v2131
        %v2160 = vmul.f32 %v2082, %v2131
        %v2161 = vmul.f32 %v2083, %v2131
        %v2162 = vmul.f32 %v2084, %v2131
        %v2163 = vmul.f32 %v2085, %v2131
        %v2164 = vadd.f32 %v2096, %v2132
        %v2165 = vadd.f32 %v2097, %v2133
        %v2166 = vadd.f32 %v2098, %v2134
        %v2167 = vadd.f32 %v2099, %v2135
        %v2168 = vadd.f32 %v2100, %v2136
        %v2169 = vadd.f32 %v2101, %v2137
        %v2170 = vadd.f32 %v2102, %v2138
        %v2171 = vadd.f32 %v2103, %v2139
        %v2172 = vadd.f32 %v2104, %v2140
        %v2173 = vadd.f32 %v2105, %v2141
        %v2174 = vadd.f32 %v2106, %v2142
        %v2175 = vadd.f32 %v2107, %v2143
        %v2176 = vadd.f32 %v2108, %v2144
        %v2177 = vadd.f32 %v2109, %v2145
        %v2178 = vadd.f32 %v2110, %v2146
        %v2179 = vadd.f32 %v2111, %v2147
        %v2180 = vadd.f32 %v2112, %v2148
        %v2181 = vadd.f32 %v2113, %v2149
        %v2182 = vadd.f32 %v2114, %v2150
        %v2183 = vadd.f32 %v2115, %v2151
        %v2184 = vadd.f32 %v2116, %v2152
        %v2185 = vadd.f32 %v2117, %v2153
        %v2186 = vadd.f32 %v2118, %v2154
        %v2187 = vadd.f32 %v2119, %v2155
        %v2188 = vadd.f32 %v2120, %v2156
        %v2189 = vadd.f32 %v2121, %v2157
        %v2190 = vadd.f32 %v2122, %v2158
        %v2191 = vadd.f32 %v2123, %v2159
        %v2192 = vadd.f32 %v2124, %v2160
        %v2193 = vadd.f32 %v2125, %v2161
        %v2194 = vadd.f32 %v2126, %v2162
        %v2195 = vadd.f32 %v2127, %v2163
        %v2196 = vlaneseq
        %v2197 = vshrl.u32 %v2196, 7
        %v2198 = vsub.s32 2, %v2197
        %v2199 = vrot.slane %v2048, %v2198
        %v2200 = vmul.f32 %v2056, %v2199
        %v2201 = vmul.f32 %v2057, %v2199
        %v2202 = vmul.f32 %v2058, %v2199
        %v2203 = vmul.f32 %v2059, %v2199
        %v2204 = vmul.f32 %v2060, %v2199
        %v2205 = vmul.f32 %v2061, %v2199
        %v2206 = vmul.f32 %v2062, %v2199
        %v2207 = vmul.f32 %v2063, %v2199
        %v2208 = vmul.f32 %v2064, %v2199
        %v2209 = vmul.f32 %v2065, %v2199
        %v2210 = vmul.f32 %v2066, %v2199
        %v2211 = vmul.f32 %v2067, %v2199
        %v2212 = vmul.f32 %v2068, %v2199
        %v2213 = vmul.f32 %v2069, %v2199
        %v2214 = vmul.f32 %v2070, %v2199
        %v2215 = vmul.f32 %v2071, %v2199
        %v2216 = vmul.f32 %v2072, %v2199
        %v2217 = vmul.f32 %v2073, %v2199
        %v2218 = vmul.f32 %v2074, %v2199
        %v2219 = vmul.f32 %v2075, %v2199
        %v2220 = vmul.f32 %v2076, %v2199
        %v2221 = vmul.f32 %v2077, %v2199
        %v2222 = vmul.f32 %v2078, %v2199
        %v2223 = vmul.f32 %v2079, %v2199
        %v2224 = vmul.f32 %v2080, %v2199
        %v2225 = vmul.f32 %v2081, %v2199
        %v2226 = vmul.f32 %v2082, %v2199
        %v2227 = vmul.f32 %v2083, %v2199
        %v2228 = vmul.f32 %v2084, %v2199
        %v2229 = vmul.f32 %v2085, %v2199
        %v2230 = vmul.f32 %v2086, %v2199
        %v2231 = vmul.f32 %v2087, %v2199
        %v2232 = vadd.f32 %v2164, %v2200
        %v2233 = vadd.f32 %v2165, %v2201
        %v2234 = vadd.f32 %v2166, %v2202
        %v2235 = vadd.f32 %v2167, %v2203
        %v2236 = vadd.f32 %v2168, %v2204
        %v2237 = vadd.f32 %v2169, %v2205
        %v2238 = vadd.f32 %v2170, %v2206
        %v2239 = vadd.f32 %v2171, %v2207
        %v2240 = vadd.f32 %v2172, %v2208
        %v2241 = vadd.f32 %v2173, %v2209
        %v2242 = vadd.f32 %v2174, %v2210
        %v2243 = vadd.f32 %v2175, %v2211
        %v2244 = vadd.f32 %v2176, %v2212
        %v2245 = vadd.f32 %v2177, %v2213
        %v2246 = vadd.f32 %v2178, %v2214
        %v2247 = vadd.f32 %v2179, %v2215
        %v2248 = vadd.f32 %v2180, %v2216
        %v2249 = vadd.f32 %v2181, %v2217
        %v2250 = vadd.f32 %v2182, %v2218
        %v2251 = vadd.f32 %v2183, %v2219
        %v2252 = vadd.f32 %v2184, %v2220
        %v2253 = vadd.f32 %v2185, %v2221
        %v2254 = vadd.f32 %v2186, %v2222
        %v2255 = vadd.f32 %v2187, %v2223
        %v2256 = vadd.f32 %v2188, %v2224
        %v2257 = vadd.f32 %v2189, %v2225
        %v2258 = vadd.f32 %v2190, %v2226
        %v2259 = vadd.f32 %v2191, %v2227
        %v2260 = vadd.f32 %v2192, %v2228
        %v2261 = vadd.f32 %v2193, %v2229
        %v2262 = vadd.f32 %v2194, %v2230
        %v2263 = vadd.f32 %v2195, %v2231
        %v2264 = vlaneseq
        %v2265 = vshrl.u32 %v2264, 7
        %v2266 = vsub.s32 7, %v2265
        %v2267 = vrot.slane %v2048, %v2266
        %v2268 = vmul.f32 %v2058, %v2267
        %v2269 = vmul.f32 %v2059, %v2267
        %v2270 = vmul.f32 %v2060, %v2267
        %v2271 = vmul.f32 %v2061, %v2267
        %v2272 = vmul.f32 %v2062, %v2267
        %v2273 = vmul.f32 %v2063, %v2267
        %v2274 = vmul.f32 %v2064, %v2267
        %v2275 = vmul.f32 %v2065, %v2267
        %v2276 = vmul.f32 %v2066, %v2267
        %v2277 = vmul.f32 %v2067, %v2267
        %v2278 = vmul.f32 %v2068, %v2267
        %v2279 = vmul.f32 %v2069, %v2267
        %v2280 = vmul.f32 %v2070, %v2267
        %v2281 = vmul.f32 %v2071, %v2267
        %v2282 = vmul.f32 %v2072, %v2267
        %v2283 = vmul.f32 %v2073, %v2267
        %v2284 = vmul.f32 %v2074, %v2267
        %v2285 = vmul.f32 %v2075, %v2267
        %v2286 = vmul.f32 %v2076, %v2267
        %v2287 = vmul.f32 %v2077, %v2267
        %v2288 = vmul.f32 %v2078, %v2267
        %v2289 = vmul.f32 %v2079, %v2267
        %v2290 = vmul.f32 %v2080, %v2267
        %v2291 = vmul.f32 %v2081, %v2267
        %v2292 = vmul.f32 %v2082, %v2267
        %v2293 = vmul.f32 %v2083, %v2267
        %v2294 = vmul.f32 %v2084, %v2267
        %v2295 = vmul.f32 %v2085, %v2267
        %v2296 = vmul.f32 %v2086, %v2267
        %v2297 = vmul.f32 %v2087, %v2267
        %v2298 = vmul.f32 %v2088, %v2267
        %v2299 = vmul.f32 %v2089, %v2267
        %v2300 = vadd.f32 %v2232, %v2268
        %v2301 = vadd.f32 %v2233, %v2269
        %v2302 = vadd.f32 %v2234, %v2270
        %v2303 = vadd.f32 %v2235, %v2271
        %v2304 = vadd.f32 %v2236, %v2272
        %v2305 = vadd.f32 %v2237, %v2273
        %v2306 = vadd.f32 %v2238, %v2274
        %v2307 = vadd.f32 %v2239, %v2275
        %v2308 = vadd.f32 %v2240, %v2276
        %v2309 = vadd.f32 %v2241, %v2277
        %v2310 = vadd.f32 %v2242, %v2278
        %v2311 = vadd.f32 %v2243, %v2279
        %v2312 = vadd.f32 %v2244, %v2280
        %v2313 = vadd.f32 %v2245, %v2281
        %v2314 = vadd.f32 %v2246, %v2282
        %v2315 = vadd.f32 %v2247, %v2283
        %v2316 = vadd.f32 %v2248, %v2284
        %v2317 = vadd.f32 %v2249, %v2285
        %v2318 = vadd.f32 %v2250, %v2286
        %v2319 = vadd.f32 %v2251, %v2287
        %v2320 = vadd.f32 %v2252, %v2288
        %v2321 = vadd.f32 %v2253, %v2289
        %v2322 = vadd.f32 %v2254, %v2290
        %v2323 = vadd.f32 %v2255, %v2291
        %v2324 = vadd.f32 %v2256, %v2292
        %v2325 = vadd.f32 %v2257, %v2293
        %v2326 = vadd.f32 %v2258, %v2294
        %v2327 = vadd.f32 %v2259, %v2295
        %v2328 = vadd.f32 %v2260, %v2296
        %v2329 = vadd.f32 %v2261, %v2297
        %v2330 = vadd.f32 %v2262, %v2298
        %v2331 = vadd.f32 %v2263, %v2299
        %v2332 = vlaneseq
        %v2333 = vshrl.u32 %v2332, 7
        %v2334 = vsub.s32 4, %v2333
        %v2335 = vrot.slane %v2049, %v2334
        %v2336 = vmul.f32 %v2060, %v2335
        %v2337 = vmul.f32 %v2061, %v2335
        %v2338 = vmul.f32 %v2062, %v2335
        %v2339 = vmul.f32 %v2063, %v2335
        %v2340 = vmul.f32 %v2064, %v2335
        %v2341 = vmul.f32 %v2065, %v2335
        %v2342 = vmul.f32 %v2066, %v2335
        %v2343 = vmul.f32 %v2067, %v2335
        %v2344 = vmul.f32 %v2068, %v2335
        %v2345 = vmul.f32 %v2069, %v2335
        %v2346 = vmul.f32 %v2070, %v2335
        %v2347 = vmul.f32 %v2071, %v2335
        %v2348 = vmul.f32 %v2072, %v2335
        %v2349 = vmul.f32 %v2073, %v2335
        %v2350 = vmul.f32 %v2074, %v2335
        %v2351 = vmul.f32 %v2075, %v2335
        %v2352 = vmul.f32 %v2076, %v2335
        %v2353 = vmul.f32 %v2077, %v2335
        %v2354 = vmul.f32 %v2078, %v2335
        %v2355 = vmul.f32 %v2079, %v2335
        %v2356 = vmul.f32 %v2080, %v2335
        %v2357 = vmul.f32 %v2081, %v2335
        %v2358 = vmul.f32 %v2082, %v2335
        %v2359 = vmul.f32 %v2083, %v2335
        %v2360 = vmul.f32 %v2084, %v2335
        %v2361 = vmul.f32 %v2085, %v2335
        %v2362 = vmul.f32 %v2086, %v2335
        %v2363 = vmul.f32 %v2087, %v2335
        %v2364 = vmul.f32 %v2088, %v2335
        %v2365 = vmul.f32 %v2089, %v2335
        %v2366 = vmul.f32 %v2090, %v2335
        %v2367 = vmul.f32 %v2091, %v2335
        %v2368 = vadd.f32 %v2300, %v2336
        %v2369 = vadd.f32 %v2301, %v2337
        %v2370 = vadd.f32 %v2302, %v2338
        %v2371 = vadd.f32 %v2303, %v2339
        %v2372 = vadd.f32 %v2304, %v2340
        %v2373 = vadd.f32 %v2305, %v2341
        %v2374 = vadd.f32 %v2306, %v2342
        %v2375 = vadd.f32 %v2307, %v2343
        %v2376 = vadd.f32 %v2308, %v2344
        %v2377 = vadd.f32 %v2309, %v2345
        %v2378 = vadd.f32 %v2310, %v2346
        %v2379 = vadd.f32 %v2311, %v2347
        %v2380 = vadd.f32 %v2312, %v2348
        %v2381 = vadd.f32 %v2313, %v2349
        %v2382 = vadd.f32 %v2314, %v2350
        %v2383 = vadd.f32 %v2315, %v2351
        %v2384 = vadd.f32 %v2316, %v2352
        %v2385 = vadd.f32 %v2317, %v2353
        %v2386 = vadd.f32 %v2318, %v2354
        %v2387 = vadd.f32 %v2319, %v2355
        %v2388 = vadd.f32 %v2320, %v2356
        %v2389 = vadd.f32 %v2321, %v2357
        %v2390 = vadd.f32 %v2322, %v2358
        %v2391 = vadd.f32 %v2323, %v2359
        %v2392 = vadd.f32 %v2324, %v2360
        %v2393 = vadd.f32 %v2325, %v2361
        %v2394 = vadd.f32 %v2326, %v2362
        %v2395 = vadd.f32 %v2327, %v2363
        %v2396 = vadd.f32 %v2328, %v2364
        %v2397 = vadd.f32 %v2329, %v2365
        %v2398 = vadd.f32 %v2330, %v2366
        %v2399 = vadd.f32 %v2331, %v2367
        %v2400 = vld [vmem:[%s2051 + $0x7] sm:$0xff]
        %v2401 = vld [vmem:[%s2051 + $0xf] sm:$0xff]
        %v2402 = vld [vmem:[%s2051 + $0x27] sm:$0xff]
        %v2403 = vld [vmem:[%s2051 + $0x2f] sm:$0xff]
        %v2404 = vld [vmem:[%s2051 + $0x47] sm:$0xff]
        %v2405 = vld [vmem:[%s2051 + $0x4f] sm:$0xff]
        %v2406 = vld [vmem:[%s2051 + $0x67] sm:$0xff]
        %v2407 = vld [vmem:[%s2051 + $0x6f] sm:$0xff]
        %v2408 = vld [vmem:[%s2051 + $0x87] sm:$0xff]
        %v2409 = vld [vmem:[%s2051 + $0x8f] sm:$0xff]
        %v2410 = vld [vmem:[%s2051 + $0xa7] sm:$0xff]
        %v2411 = vld [vmem:[%s2051 + $0xaf] sm:$0xff]
        %v2412 = vld [vmem:[%s2051 + $0xc7] sm:$0xff]
        %v2413 = vld [vmem:[%s2051 + $0xcf] sm:$0xff]
        %v2414 = vld [vmem:[%s2051 + $0xe7] sm:$0xff]
        %v2415 = vld [vmem:[%s2051 + $0xef] sm:$0xff]
        %v2416 = vld [vmem:[%s2051 + $0x107] sm:$0xff]
        %v2417 = vld [vmem:[%s2051 + $0x10f] sm:$0xff]
        %v2418 = vld [vmem:[%s2051 + $0x127] sm:$0xff]
        %v2419 = vld [vmem:[%s2051 + $0x12f] sm:$0xff]
        %v2420 = vld [vmem:[%s2051 + $0x147] sm:$0xff]
        %v2421 = vld [vmem:[%s2051 + $0x14f] sm:$0xff]
        %v2422 = vld [vmem:[%s2051 + $0x167] sm:$0xff]
        %v2423 = vld [vmem:[%s2051 + $0x16f] sm:$0xff]
        %v2424 = vld [vmem:[%s2051 + $0x187] sm:$0xff]
        %v2425 = vld [vmem:[%s2051 + $0x18f] sm:$0xff]
        %v2426 = vld [vmem:[%s2051 + $0x1a7] sm:$0xff]
        %v2427 = vld [vmem:[%s2051 + $0x1af] sm:$0xff]
        %v2428 = vld [vmem:[%s2051 + $0x1c7] sm:$0xff]
        %v2429 = vld [vmem:[%s2051 + $0x1cf] sm:$0xff]
        %v2430 = vld [vmem:[%s2051 + $0x1e7] sm:$0xff]
        %v2431 = vld [vmem:[%s2051 + $0x1ef] sm:$0xff]
        %v2432 = vld [vmem:[%s2051 + $0x207] sm:$0xff]
        %v2433 = vld [vmem:[%s2051 + $0x20f] sm:$0xff]
        %v2434 = vld [vmem:[%s2051 + $0x227] sm:$0xff]
        %v2435 = vld [vmem:[%s2051 + $0x22f] sm:$0xff]
        %v2436 = vld [vmem:[%s2051 + $0x247] sm:$0xff]
        %v2437 = vld [vmem:[%s2051 + $0x24f] sm:$0xff]
        %v2438 = vld [vmem:[%s2051 + $0x267] sm:$0xff]
        %v2439 = vld [vmem:[%s2051 + $0x26f] sm:$0xff]
        %v2440 = vlaneseq
        %v2441 = vshrl.u32 %v2440, 7
        %v2442 = vsub.s32 1, %v2441
        %v2443 = vrot.slane %v2047, %v2442
        %v2444 = vmul.f32 %v2400, %v2443
        %v2445 = vmul.f32 %v2401, %v2443
        %v2446 = vmul.f32 %v2402, %v2443
        %v2447 = vmul.f32 %v2403, %v2443
        %v2448 = vmul.f32 %v2404, %v2443
        %v2449 = vmul.f32 %v2405, %v2443
        %v2450 = vmul.f32 %v2406, %v2443
        %v2451 = vmul.f32 %v2407, %v2443
        %v2452 = vmul.f32 %v2408, %v2443
        %v2453 = vmul.f32 %v2409, %v2443
        %v2454 = vmul.f32 %v2410, %v2443
        %v2455 = vmul.f32 %v2411, %v2443
        %v2456 = vmul.f32 %v2412, %v2443
        %v2457 = vmul.f32 %v2413, %v2443
        %v2458 = vmul.f32 %v2414, %v2443
        %v2459 = vmul.f32 %v2415, %v2443
        %v2460 = vmul.f32 %v2416, %v2443
        %v2461 = vmul.f32 %v2417, %v2443
        %v2462 = vmul.f32 %v2418, %v2443
        %v2463 = vmul.f32 %v2419, %v2443
        %v2464 = vmul.f32 %v2420, %v2443
        %v2465 = vmul.f32 %v2421, %v2443
        %v2466 = vmul.f32 %v2422, %v2443
        %v2467 = vmul.f32 %v2423, %v2443
        %v2468 = vmul.f32 %v2424, %v2443
        %v2469 = vmul.f32 %v2425, %v2443
        %v2470 = vmul.f32 %v2426, %v2443
        %v2471 = vmul.f32 %v2427, %v2443
        %v2472 = vmul.f32 %v2428, %v2443
        %v2473 = vmul.f32 %v2429, %v2443
        %v2474 = vmul.f32 %v2430, %v2443
        %v2475 = vmul.f32 %v2431, %v2443
        %v2476 = vlaneseq
        %v2477 = vshrl.u32 %v2476, 7
        %v2478 = vsub.s32 6, %v2477
        %v2479 = vrot.slane %v2047, %v2478
        %v2480 = vmul.f32 %v2402, %v2479
        %v2481 = vmul.f32 %v2403, %v2479
        %v2482 = vmul.f32 %v2404, %v2479
        %v2483 = vmul.f32 %v2405, %v2479
        %v2484 = vmul.f32 %v2406, %v2479
        %v2485 = vmul.f32 %v2407, %v2479
        %v2486 = vmul.f32 %v2408, %v2479
        %v2487 = vmul.f32 %v2409, %v2479
        %v2488 = vmul.f32 %v2410, %v2479
        %v2489 = vmul.f32 %v2411, %v2479
        %v2490 = vmul.f32 %v2412, %v2479
        %v2491 = vmul.f32 %v2413, %v2479
        %v2492 = vmul.f32 %v2414, %v2479
        %v2493 = vmul.f32 %v2415, %v2479
        %v2494 = vmul.f32 %v2416, %v2479
        %v2495 = vmul.f32 %v2417, %v2479
        %v2496 = vmul.f32 %v2418, %v2479
        %v2497 = vmul.f32 %v2419, %v2479
        %v2498 = vmul.f32 %v2420, %v2479
        %v2499 = vmul.f32 %v2421, %v2479
        %v2500 = vmul.f32 %v2422, %v2479
        %v2501 = vmul.f32 %v2423, %v2479
        %v2502 = vmul.f32 %v2424, %v2479
        %v2503 = vmul.f32 %v2425, %v2479
        %v2504 = vmul.f32 %v2426, %v2479
        %v2505 = vmul.f32 %v2427, %v2479
        %v2506 = vmul.f32 %v2428, %v2479
        %v2507 = vmul.f32 %v2429, %v2479
        %v2508 = vmul.f32 %v2430, %v2479
        %v2509 = vmul.f32 %v2431, %v2479
        %v2510 = vmul.f32 %v2432, %v2479
        %v2511 = vmul.f32 %v2433, %v2479
        %v2512 = vadd.f32 %v2444, %v2480
        %v2513 = vadd.f32 %v2445, %v2481
        %v2514 = vadd.f32 %v2446, %v2482
        %v2515 = vadd.f32 %v2447, %v2483
        %v2516 = vadd.f32 %v2448, %v2484
        %v2517 = vadd.f32 %v2449, %v2485
        %v2518 = vadd.f32 %v2450, %v2486
        %v2519 = vadd.f32 %v2451, %v2487
        %v2520 = vadd.f32 %v2452, %v2488
        %v2521 = vadd.f32 %v2453, %v2489
        %v2522 = vadd.f32 %v2454, %v2490
        %v2523 = vadd.f32 %v2455, %v2491
        %v2524 = vadd.f32 %v2456, %v2492
        %v2525 = vadd.f32 %v2457, %v2493
        %v2526 = vadd.f32 %v2458, %v2494
        %v2527 = vadd.f32 %v2459, %v2495
        %v2528 = vadd.f32 %v2460, %v2496
        %v2529 = vadd.f32 %v2461, %v2497
        %v2530 = vadd.f32 %v2462, %v2498
        %v2531 = vadd.f32 %v2463, %v2499
        %v2532 = vadd.f32 %v2464, %v2500
        %v2533 = vadd.f32 %v2465, %v2501
        %v2534 = vadd.f32 %v2466, %v2502
        %v2535 = vadd.f32 %v2467, %v2503
        %v2536 = vadd.f32 %v2468, %v2504
        %v2537 = vadd.f32 %v2469, %v2505
        %v2538 = vadd.f32 %v2470, %v2506
        %v2539 = vadd.f32 %v2471, %v2507
        %v2540 = vadd.f32 %v2472, %v2508
        %v2541 = vadd.f32 %v2473, %v2509
        %v2542 = vadd.f32 %v2474, %v2510
        %v2543 = vadd.f32 %v2475, %v2511
        %v2544 = vlaneseq
        %v2545 = vshrl.u32 %v2544, 7
        %v2546 = vsub.s32 3, %v2545
        %v2547 = vrot.slane %v2048, %v2546
        %v2548 = vmul.f32 %v2404, %v2547
        %v2549 = vmul.f32 %v2405, %v2547
        %v2550 = vmul.f32 %v2406, %v2547
        %v2551 = vmul.f32 %v2407, %v2547
        %v2552 = vmul.f32 %v2408, %v2547
        %v2553 = vmul.f32 %v2409, %v2547
        %v2554 = vmul.f32 %v2410, %v2547
        %v2555 = vmul.f32 %v2411, %v2547
        %v2556 = vmul.f32 %v2412, %v2547
        %v2557 = vmul.f32 %v2413, %v2547
        %v2558 = vmul.f32 %v2414, %v2547
        %v2559 = vmul.f32 %v2415, %v2547
        %v2560 = vmul.f32 %v2416, %v2547
        %v2561 = vmul.f32 %v2417, %v2547
        %v2562 = vmul.f32 %v2418, %v2547
        %v2563 = vmul.f32 %v2419, %v2547
        %v2564 = vmul.f32 %v2420, %v2547
        %v2565 = vmul.f32 %v2421, %v2547
        %v2566 = vmul.f32 %v2422, %v2547
        %v2567 = vmul.f32 %v2423, %v2547
        %v2568 = vmul.f32 %v2424, %v2547
        %v2569 = vmul.f32 %v2425, %v2547
        %v2570 = vmul.f32 %v2426, %v2547
        %v2571 = vmul.f32 %v2427, %v2547
        %v2572 = vmul.f32 %v2428, %v2547
        %v2573 = vmul.f32 %v2429, %v2547
        %v2574 = vmul.f32 %v2430, %v2547
        %v2575 = vmul.f32 %v2431, %v2547
        %v2576 = vmul.f32 %v2432, %v2547
        %v2577 = vmul.f32 %v2433, %v2547
        %v2578 = vmul.f32 %v2434, %v2547
        %v2579 = vmul.f32 %v2435, %v2547
        %v2580 = vadd.f32 %v2512, %v2548
        %v2581 = vadd.f32 %v2513, %v2549
        %v2582 = vadd.f32 %v2514, %v2550
        %v2583 = vadd.f32 %v2515, %v2551
        %v2584 = vadd.f32 %v2516, %v2552
        %v2585 = vadd.f32 %v2517, %v2553
        %v2586 = vadd.f32 %v2518, %v2554
        %v2587 = vadd.f32 %v2519, %v2555
        %v2588 = vadd.f32 %v2520, %v2556
        %v2589 = vadd.f32 %v2521, %v2557
        %v2590 = vadd.f32 %v2522, %v2558
        %v2591 = vadd.f32 %v2523, %v2559
        %v2592 = vadd.f32 %v2524, %v2560
        %v2593 = vadd.f32 %v2525, %v2561
        %v2594 = vadd.f32 %v2526, %v2562
        %v2595 = vadd.f32 %v2527, %v2563
        %v2596 = vadd.f32 %v2528, %v2564
        %v2597 = vadd.f32 %v2529, %v2565
        %v2598 = vadd.f32 %v2530, %v2566
        %v2599 = vadd.f32 %v2531, %v2567
        %v2600 = vadd.f32 %v2532, %v2568
        %v2601 = vadd.f32 %v2533, %v2569
        %v2602 = vadd.f32 %v2534, %v2570
        %v2603 = vadd.f32 %v2535, %v2571
        %v2604 = vadd.f32 %v2536, %v2572
        %v2605 = vadd.f32 %v2537, %v2573
        %v2606 = vadd.f32 %v2538, %v2574
        %v2607 = vadd.f32 %v2539, %v2575
        %v2608 = vadd.f32 %v2540, %v2576
        %v2609 = vadd.f32 %v2541, %v2577
        %v2610 = vadd.f32 %v2542, %v2578
        %v2611 = vadd.f32 %v2543, %v2579
        %v2612 = vlaneseq
        %v2613 = vshrl.u32 %v2612, 7
        %v2614 = vsub.s32 0, %v2613
        %v2615 = vrot.slane %v2049, %v2614
        %v2616 = vmul.f32 %v2406, %v2615
        %v2617 = vmul.f32 %v2407, %v2615
        %v2618 = vmul.f32 %v2408, %v2615
        %v2619 = vmul.f32 %v2409, %v2615
        %v2620 = vmul.f32 %v2410, %v2615
        %v2621 = vmul.f32 %v2411, %v2615
        %v2622 = vmul.f32 %v2412, %v2615
        %v2623 = vmul.f32 %v2413, %v2615
        %v2624 = vmul.f32 %v2414, %v2615
        %v2625 = vmul.f32 %v2415, %v2615
        %v2626 = vmul.f32 %v2416, %v2615
        %v2627 = vmul.f32 %v2417, %v2615
        %v2628 = vmul.f32 %v2418, %v2615
        %v2629 = vmul.f32 %v2419, %v2615
        %v2630 = vmul.f32 %v2420, %v2615
        %v2631 = vmul.f32 %v2421, %v2615
        %v2632 = vmul.f32 %v2422, %v2615
        %v2633 = vmul.f32 %v2423, %v2615
        %v2634 = vmul.f32 %v2424, %v2615
        %v2635 = vmul.f32 %v2425, %v2615
        %v2636 = vmul.f32 %v2426, %v2615
        %v2637 = vmul.f32 %v2427, %v2615
        %v2638 = vmul.f32 %v2428, %v2615
        %v2639 = vmul.f32 %v2429, %v2615
        %v2640 = vmul.f32 %v2430, %v2615
        %v2641 = vmul.f32 %v2431, %v2615
        %v2642 = vmul.f32 %v2432, %v2615
        %v2643 = vmul.f32 %v2433, %v2615
        %v2644 = vmul.f32 %v2434, %v2615
        %v2645 = vmul.f32 %v2435, %v2615
        %v2646 = vmul.f32 %v2436, %v2615
        %v2647 = vmul.f32 %v2437, %v2615
        %v2648 = vadd.f32 %v2580, %v2616
        %v2649 = vadd.f32 %v2581, %v2617
        %v2650 = vadd.f32 %v2582, %v2618
        %v2651 = vadd.f32 %v2583, %v2619
        %v2652 = vadd.f32 %v2584, %v2620
        %v2653 = vadd.f32 %v2585, %v2621
        %v2654 = vadd.f32 %v2586, %v2622
        %v2655 = vadd.f32 %v2587, %v2623
        %v2656 = vadd.f32 %v2588, %v2624
        %v2657 = vadd.f32 %v2589, %v2625
        %v2658 = vadd.f32 %v2590, %v2626
        %v2659 = vadd.f32 %v2591, %v2627
        %v2660 = vadd.f32 %v2592, %v2628
        %v2661 = vadd.f32 %v2593, %v2629
        %v2662 = vadd.f32 %v2594, %v2630
        %v2663 = vadd.f32 %v2595, %v2631
        %v2664 = vadd.f32 %v2596, %v2632
        %v2665 = vadd.f32 %v2597, %v2633
        %v2666 = vadd.f32 %v2598, %v2634
        %v2667 = vadd.f32 %v2599, %v2635
        %v2668 = vadd.f32 %v2600, %v2636
        %v2669 = vadd.f32 %v2601, %v2637
        %v2670 = vadd.f32 %v2602, %v2638
        %v2671 = vadd.f32 %v2603, %v2639
        %v2672 = vadd.f32 %v2604, %v2640
        %v2673 = vadd.f32 %v2605, %v2641
        %v2674 = vadd.f32 %v2606, %v2642
        %v2675 = vadd.f32 %v2607, %v2643
        %v2676 = vadd.f32 %v2608, %v2644
        %v2677 = vadd.f32 %v2609, %v2645
        %v2678 = vadd.f32 %v2610, %v2646
        %v2679 = vadd.f32 %v2611, %v2647
        %v2680 = vlaneseq
        %v2681 = vshrl.u32 %v2680, 7
        %v2682 = vsub.s32 5, %v2681
        %v2683 = vrot.slane %v2049, %v2682
        %v2684 = vmul.f32 %v2408, %v2683
        %v2685 = vmul.f32 %v2409, %v2683
        %v2686 = vmul.f32 %v2410, %v2683
        %v2687 = vmul.f32 %v2411, %v2683
        %v2688 = vmul.f32 %v2412, %v2683
        %v2689 = vmul.f32 %v2413, %v2683
        %v2690 = vmul.f32 %v2414, %v2683
        %v2691 = vmul.f32 %v2415, %v2683
        %v2692 = vmul.f32 %v2416, %v2683
        %v2693 = vmul.f32 %v2417, %v2683
        %v2694 = vmul.f32 %v2418, %v2683
        %v2695 = vmul.f32 %v2419, %v2683
        %v2696 = vmul.f32 %v2420, %v2683
        %v2697 = vmul.f32 %v2421, %v2683
        %v2698 = vmul.f32 %v2422, %v2683
        %v2699 = vmul.f32 %v2423, %v2683
        %v2700 = vmul.f32 %v2424, %v2683
        %v2701 = vmul.f32 %v2425, %v2683
        %v2702 = vmul.f32 %v2426, %v2683
        %v2703 = vmul.f32 %v2427, %v2683
        %v2704 = vmul.f32 %v2428, %v2683
        %v2705 = vmul.f32 %v2429, %v2683
        %v2706 = vmul.f32 %v2430, %v2683
        %v2707 = vmul.f32 %v2431, %v2683
        %v2708 = vmul.f32 %v2432, %v2683
        %v2709 = vmul.f32 %v2433, %v2683
        %v2710 = vmul.f32 %v2434, %v2683
        %v2711 = vmul.f32 %v2435, %v2683
        %v2712 = vmul.f32 %v2436, %v2683
        %v2713 = vmul.f32 %v2437, %v2683
        %v2714 = vmul.f32 %v2438, %v2683
        %v2715 = vmul.f32 %v2439, %v2683
        %v2716 = vadd.f32 %v2648, %v2684
        %v2717 = vadd.f32 %v2649, %v2685
        %v2718 = vadd.f32 %v2650, %v2686
        %v2719 = vadd.f32 %v2651, %v2687
        %v2720 = vadd.f32 %v2652, %v2688
        %v2721 = vadd.f32 %v2653, %v2689
        %v2722 = vadd.f32 %v2654, %v2690
        %v2723 = vadd.f32 %v2655, %v2691
        %v2724 = vadd.f32 %v2656, %v2692
        %v2725 = vadd.f32 %v2657, %v2693
        %v2726 = vadd.f32 %v2658, %v2694
        %v2727 = vadd.f32 %v2659, %v2695
        %v2728 = vadd.f32 %v2660, %v2696
        %v2729 = vadd.f32 %v2661, %v2697
        %v2730 = vadd.f32 %v2662, %v2698
        %v2731 = vadd.f32 %v2663, %v2699
        %v2732 = vadd.f32 %v2664, %v2700
        %v2733 = vadd.f32 %v2665, %v2701
        %v2734 = vadd.f32 %v2666, %v2702
        %v2735 = vadd.f32 %v2667, %v2703
        %v2736 = vadd.f32 %v2668, %v2704
        %v2737 = vadd.f32 %v2669, %v2705
        %v2738 = vadd.f32 %v2670, %v2706
        %v2739 = vadd.f32 %v2671, %v2707
        %v2740 = vadd.f32 %v2672, %v2708
        %v2741 = vadd.f32 %v2673, %v2709
        %v2742 = vadd.f32 %v2674, %v2710
        %v2743 = vadd.f32 %v2675, %v2711
        %v2744 = vadd.f32 %v2676, %v2712
        %v2745 = vadd.f32 %v2677, %v2713
        %v2746 = vadd.f32 %v2678, %v2714
        %v2747 = vadd.f32 %v2679, %v2715
        %v2748 = vld [vmem:[%s2051 + $0x8] sm:$0xff]
        %v2749 = vld [vmem:[%s2051 + $0x10] sm:$0xff]
        %v2750 = vld [vmem:[%s2051 + $0x28] sm:$0xff]
        %v2751 = vld [vmem:[%s2051 + $0x30] sm:$0xff]
        %v2752 = vld [vmem:[%s2051 + $0x48] sm:$0xff]
        %v2753 = vld [vmem:[%s2051 + $0x50] sm:$0xff]
        %v2754 = vld [vmem:[%s2051 + $0x68] sm:$0xff]
        %v2755 = vld [vmem:[%s2051 + $0x70] sm:$0xff]
        %v2756 = vld [vmem:[%s2051 + $0x88] sm:$0xff]
        %v2757 = vld [vmem:[%s2051 + $0x90] sm:$0xff]
        %v2758 = vld [vmem:[%s2051 + $0xa8] sm:$0xff]
        %v2759 = vld [vmem:[%s2051 + $0xb0] sm:$0xff]
        %v2760 = vld [vmem:[%s2051 + $0xc8] sm:$0xff]
        %v2761 = vld [vmem:[%s2051 + $0xd0] sm:$0xff]
        %v2762 = vld [vmem:[%s2051 + $0xe8] sm:$0xff]
        %v2763 = vld [vmem:[%s2051 + $0xf0] sm:$0xff]
        %v2764 = vld [vmem:[%s2051 + $0x108] sm:$0xff]
        %v2765 = vld [vmem:[%s2051 + $0x110] sm:$0xff]
        %v2766 = vld [vmem:[%s2051 + $0x128] sm:$0xff]
        %v2767 = vld [vmem:[%s2051 + $0x130] sm:$0xff]
        %v2768 = vld [vmem:[%s2051 + $0x148] sm:$0xff]
        %v2769 = vld [vmem:[%s2051 + $0x150] sm:$0xff]
        %v2770 = vld [vmem:[%s2051 + $0x168] sm:$0xff]
        %v2771 = vld [vmem:[%s2051 + $0x170] sm:$0xff]
        %v2772 = vld [vmem:[%s2051 + $0x188] sm:$0xff]
        %v2773 = vld [vmem:[%s2051 + $0x190] sm:$0xff]
        %v2774 = vld [vmem:[%s2051 + $0x1a8] sm:$0xff]
        %v2775 = vld [vmem:[%s2051 + $0x1b0] sm:$0xff]
        %v2776 = vld [vmem:[%s2051 + $0x1c8] sm:$0xff]
        %v2777 = vld [vmem:[%s2051 + $0x1d0] sm:$0xff]
        %v2778 = vld [vmem:[%s2051 + $0x1e8] sm:$0xff]
        %v2779 = vld [vmem:[%s2051 + $0x1f0] sm:$0xff]
        %v2780 = vld [vmem:[%s2051 + $0x208] sm:$0xff]
        %v2781 = vld [vmem:[%s2051 + $0x210] sm:$0xff]
        %v2782 = vld [vmem:[%s2051 + $0x228] sm:$0xff]
        %v2783 = vld [vmem:[%s2051 + $0x230] sm:$0xff]
        %v2784 = vld [vmem:[%s2051 + $0x248] sm:$0xff]
        %v2785 = vld [vmem:[%s2051 + $0x250] sm:$0xff]
        %v2786 = vld [vmem:[%s2051 + $0x268] sm:$0xff]
        %v2787 = vld [vmem:[%s2051 + $0x270] sm:$0xff]
        %v2788 = vlaneseq
        %v2789 = vshrl.u32 %v2788, 7
        %v2790 = vsub.s32 2, %v2789
        %v2791 = vrot.slane %v2047, %v2790
        %v2792 = vmul.f32 %v2748, %v2791
        %v2793 = vmul.f32 %v2749, %v2791
        %v2794 = vmul.f32 %v2750, %v2791
        %v2795 = vmul.f32 %v2751, %v2791
        %v2796 = vmul.f32 %v2752, %v2791
        %v2797 = vmul.f32 %v2753, %v2791
        %v2798 = vmul.f32 %v2754, %v2791
        %v2799 = vmul.f32 %v2755, %v2791
        %v2800 = vmul.f32 %v2756, %v2791
        %v2801 = vmul.f32 %v2757, %v2791
        %v2802 = vmul.f32 %v2758, %v2791
        %v2803 = vmul.f32 %v2759, %v2791
        %v2804 = vmul.f32 %v2760, %v2791
        %v2805 = vmul.f32 %v2761, %v2791
        %v2806 = vmul.f32 %v2762, %v2791
        %v2807 = vmul.f32 %v2763, %v2791
        %v2808 = vmul.f32 %v2764, %v2791
        %v2809 = vmul.f32 %v2765, %v2791
        %v2810 = vmul.f32 %v2766, %v2791
        %v2811 = vmul.f32 %v2767, %v2791
        %v2812 = vmul.f32 %v2768, %v2791
        %v2813 = vmul.f32 %v2769, %v2791
        %v2814 = vmul.f32 %v2770, %v2791
        %v2815 = vmul.f32 %v2771, %v2791
        %v2816 = vmul.f32 %v2772, %v2791
        %v2817 = vmul.f32 %v2773, %v2791
        %v2818 = vmul.f32 %v2774, %v2791
        %v2819 = vmul.f32 %v2775, %v2791
        %v2820 = vmul.f32 %v2776, %v2791
        %v2821 = vmul.f32 %v2777, %v2791
        %v2822 = vmul.f32 %v2778, %v2791
        %v2823 = vmul.f32 %v2779, %v2791
        %v2824 = vlaneseq
        %v2825 = vshrl.u32 %v2824, 7
        %v2826 = vsub.s32 7, %v2825
        %v2827 = vrot.slane %v2047, %v2826
        %v2828 = vmul.f32 %v2750, %v2827
        %v2829 = vmul.f32 %v2751, %v2827
        %v2830 = vmul.f32 %v2752, %v2827
        %v2831 = vmul.f32 %v2753, %v2827
        %v2832 = vmul.f32 %v2754, %v2827
        %v2833 = vmul.f32 %v2755, %v2827
        %v2834 = vmul.f32 %v2756, %v2827
        %v2835 = vmul.f32 %v2757, %v2827
        %v2836 = vmul.f32 %v2758, %v2827
        %v2837 = vmul.f32 %v2759, %v2827
        %v2838 = vmul.f32 %v2760, %v2827
        %v2839 = vmul.f32 %v2761, %v2827
        %v2840 = vmul.f32 %v2762, %v2827
        %v2841 = vmul.f32 %v2763, %v2827
        %v2842 = vmul.f32 %v2764, %v2827
        %v2843 = vmul.f32 %v2765, %v2827
        %v2844 = vmul.f32 %v2766, %v2827
        %v2845 = vmul.f32 %v2767, %v2827
        %v2846 = vmul.f32 %v2768, %v2827
        %v2847 = vmul.f32 %v2769, %v2827
        %v2848 = vmul.f32 %v2770, %v2827
        %v2849 = vmul.f32 %v2771, %v2827
        %v2850 = vmul.f32 %v2772, %v2827
        %v2851 = vmul.f32 %v2773, %v2827
        %v2852 = vmul.f32 %v2774, %v2827
        %v2853 = vmul.f32 %v2775, %v2827
        %v2854 = vmul.f32 %v2776, %v2827
        %v2855 = vmul.f32 %v2777, %v2827
        %v2856 = vmul.f32 %v2778, %v2827
        %v2857 = vmul.f32 %v2779, %v2827
        %v2858 = vmul.f32 %v2780, %v2827
        %v2859 = vmul.f32 %v2781, %v2827
        %v2860 = vadd.f32 %v2792, %v2828
        %v2861 = vadd.f32 %v2793, %v2829
        %v2862 = vadd.f32 %v2794, %v2830
        %v2863 = vadd.f32 %v2795, %v2831
        %v2864 = vadd.f32 %v2796, %v2832
        %v2865 = vadd.f32 %v2797, %v2833
        %v2866 = vadd.f32 %v2798, %v2834
        %v2867 = vadd.f32 %v2799, %v2835
        %v2868 = vadd.f32 %v2800, %v2836
        %v2869 = vadd.f32 %v2801, %v2837
        %v2870 = vadd.f32 %v2802, %v2838
        %v2871 = vadd.f32 %v2803, %v2839
        %v2872 = vadd.f32 %v2804, %v2840
        %v2873 = vadd.f32 %v2805, %v2841
        %v2874 = vadd.f32 %v2806, %v2842
        %v2875 = vadd.f32 %v2807, %v2843
        %v2876 = vadd.f32 %v2808, %v2844
        %v2877 = vadd.f32 %v2809, %v2845
        %v2878 = vadd.f32 %v2810, %v2846
        %v2879 = vadd.f32 %v2811, %v2847
        %v2880 = vadd.f32 %v2812, %v2848
        %v2881 = vadd.f32 %v2813, %v2849
        %v2882 = vadd.f32 %v2814, %v2850
        %v2883 = vadd.f32 %v2815, %v2851
        %v2884 = vadd.f32 %v2816, %v2852
        %v2885 = vadd.f32 %v2817, %v2853
        %v2886 = vadd.f32 %v2818, %v2854
        %v2887 = vadd.f32 %v2819, %v2855
        %v2888 = vadd.f32 %v2820, %v2856
        %v2889 = vadd.f32 %v2821, %v2857
        %v2890 = vadd.f32 %v2822, %v2858
        %v2891 = vadd.f32 %v2823, %v2859
        %v2892 = vlaneseq
        %v2893 = vshrl.u32 %v2892, 7
        %v2894 = vsub.s32 4, %v2893
        %v2895 = vrot.slane %v2048, %v2894
        %v2896 = vmul.f32 %v2752, %v2895
        %v2897 = vmul.f32 %v2753, %v2895
        %v2898 = vmul.f32 %v2754, %v2895
        %v2899 = vmul.f32 %v2755, %v2895
        %v2900 = vmul.f32 %v2756, %v2895
        %v2901 = vmul.f32 %v2757, %v2895
        %v2902 = vmul.f32 %v2758, %v2895
        %v2903 = vmul.f32 %v2759, %v2895
        %v2904 = vmul.f32 %v2760, %v2895
        %v2905 = vmul.f32 %v2761, %v2895
        %v2906 = vmul.f32 %v2762, %v2895
        %v2907 = vmul.f32 %v2763, %v2895
        %v2908 = vmul.f32 %v2764, %v2895
        %v2909 = vmul.f32 %v2765, %v2895
        %v2910 = vmul.f32 %v2766, %v2895
        %v2911 = vmul.f32 %v2767, %v2895
        %v2912 = vmul.f32 %v2768, %v2895
        %v2913 = vmul.f32 %v2769, %v2895
        %v2914 = vmul.f32 %v2770, %v2895
        %v2915 = vmul.f32 %v2771, %v2895
        %v2916 = vmul.f32 %v2772, %v2895
        %v2917 = vmul.f32 %v2773, %v2895
        %v2918 = vmul.f32 %v2774, %v2895
        %v2919 = vmul.f32 %v2775, %v2895
        %v2920 = vmul.f32 %v2776, %v2895
        %v2921 = vmul.f32 %v2777, %v2895
        %v2922 = vmul.f32 %v2778, %v2895
        %v2923 = vmul.f32 %v2779, %v2895
        %v2924 = vmul.f32 %v2780, %v2895
        %v2925 = vmul.f32 %v2781, %v2895
        %v2926 = vmul.f32 %v2782, %v2895
        %v2927 = vmul.f32 %v2783, %v2895
        %v2928 = vadd.f32 %v2860, %v2896
        %v2929 = vadd.f32 %v2861, %v2897
        %v2930 = vadd.f32 %v2862, %v2898
        %v2931 = vadd.f32 %v2863, %v2899
        %v2932 = vadd.f32 %v2864, %v2900
        %v2933 = vadd.f32 %v2865, %v2901
        %v2934 = vadd.f32 %v2866, %v2902
        %v2935 = vadd.f32 %v2867, %v2903
        %v2936 = vadd.f32 %v2868, %v2904
        %v2937 = vadd.f32 %v2869, %v2905
        %v2938 = vadd.f32 %v2870, %v2906
        %v2939 = vadd.f32 %v2871, %v2907
        %v2940 = vadd.f32 %v2872, %v2908
        %v2941 = vadd.f32 %v2873, %v2909
        %v2942 = vadd.f32 %v2874, %v2910
        %v2943 = vadd.f32 %v2875, %v2911
        %v2944 = vadd.f32 %v2876, %v2912
        %v2945 = vadd.f32 %v2877, %v2913
        %v2946 = vadd.f32 %v2878, %v2914
        %v2947 = vadd.f32 %v2879, %v2915
        %v2948 = vadd.f32 %v2880, %v2916
        %v2949 = vadd.f32 %v2881, %v2917
        %v2950 = vadd.f32 %v2882, %v2918
        %v2951 = vadd.f32 %v2883, %v2919
        %v2952 = vadd.f32 %v2884, %v2920
        %v2953 = vadd.f32 %v2885, %v2921
        %v2954 = vadd.f32 %v2886, %v2922
        %v2955 = vadd.f32 %v2887, %v2923
        %v2956 = vadd.f32 %v2888, %v2924
        %v2957 = vadd.f32 %v2889, %v2925
        %v2958 = vadd.f32 %v2890, %v2926
        %v2959 = vadd.f32 %v2891, %v2927
        %v2960 = vlaneseq
        %v2961 = vshrl.u32 %v2960, 7
        %v2962 = vsub.s32 1, %v2961
        %v2963 = vrot.slane %v2049, %v2962
        %v2964 = vmul.f32 %v2754, %v2963
        %v2965 = vmul.f32 %v2755, %v2963
        %v2966 = vmul.f32 %v2756, %v2963
        %v2967 = vmul.f32 %v2757, %v2963
        %v2968 = vmul.f32 %v2758, %v2963
        %v2969 = vmul.f32 %v2759, %v2963
        %v2970 = vmul.f32 %v2760, %v2963
        %v2971 = vmul.f32 %v2761, %v2963
        %v2972 = vmul.f32 %v2762, %v2963
        %v2973 = vmul.f32 %v2763, %v2963
        %v2974 = vmul.f32 %v2764, %v2963
        %v2975 = vmul.f32 %v2765, %v2963
        %v2976 = vmul.f32 %v2766, %v2963
        %v2977 = vmul.f32 %v2767, %v2963
        %v2978 = vmul.f32 %v2768, %v2963
        %v2979 = vmul.f32 %v2769, %v2963
        %v2980 = vmul.f32 %v2770, %v2963
        %v2981 = vmul.f32 %v2771, %v2963
        %v2982 = vmul.f32 %v2772, %v2963
        %v2983 = vmul.f32 %v2773, %v2963
        %v2984 = vmul.f32 %v2774, %v2963
        %v2985 = vmul.f32 %v2775, %v2963
        %v2986 = vmul.f32 %v2776, %v2963
        %v2987 = vmul.f32 %v2777, %v2963
        %v2988 = vmul.f32 %v2778, %v2963
        %v2989 = vmul.f32 %v2779, %v2963
        %v2990 = vmul.f32 %v2780, %v2963
        %v2991 = vmul.f32 %v2781, %v2963
        %v2992 = vmul.f32 %v2782, %v2963
        %v2993 = vmul.f32 %v2783, %v2963
        %v2994 = vmul.f32 %v2784, %v2963
        %v2995 = vmul.f32 %v2785, %v2963
        %v2996 = vadd.f32 %v2928, %v2964
        %v2997 = vadd.f32 %v2929, %v2965
        %v2998 = vadd.f32 %v2930, %v2966
        %v2999 = vadd.f32 %v2931, %v2967
        %v3000 = vadd.f32 %v2932, %v2968
        %v3001 = vadd.f32 %v2933, %v2969
        %v3002 = vadd.f32 %v2934, %v2970
        %v3003 = vadd.f32 %v2935, %v2971
        %v3004 = vadd.f32 %v2936, %v2972
        %v3005 = vadd.f32 %v2937, %v2973
        %v3006 = vadd.f32 %v2938, %v2974
        %v3007 = vadd.f32 %v2939, %v2975
        %v3008 = vadd.f32 %v2940, %v2976
        %v3009 = vadd.f32 %v2941, %v2977
        %v3010 = vadd.f32 %v2942, %v2978
        %v3011 = vadd.f32 %v2943, %v2979
        %v3012 = vadd.f32 %v2944, %v2980
        %v3013 = vadd.f32 %v2945, %v2981
        %v3014 = vadd.f32 %v2946, %v2982
        %v3015 = vadd.f32 %v2947, %v2983
        %v3016 = vadd.f32 %v2948, %v2984
        %v3017 = vadd.f32 %v2949, %v2985
        %v3018 = vadd.f32 %v2950, %v2986
        %v3019 = vadd.f32 %v2951, %v2987
        %v3020 = vadd.f32 %v2952, %v2988
        %v3021 = vadd.f32 %v2953, %v2989
        %v3022 = vadd.f32 %v2954, %v2990
        %v3023 = vadd.f32 %v2955, %v2991
        %v3024 = vadd.f32 %v2956, %v2992
        %v3025 = vadd.f32 %v2957, %v2993
        %v3026 = vadd.f32 %v2958, %v2994
        %v3027 = vadd.f32 %v2959, %v2995
        %v3028 = vlaneseq
        %v3029 = vshrl.u32 %v3028, 7
        %v3030 = vsub.s32 6, %v3029
        %v3031 = vrot.slane %v2049, %v3030
        %v3032 = vmul.f32 %v2756, %v3031
        %v3033 = vmul.f32 %v2757, %v3031
        %v3034 = vmul.f32 %v2758, %v3031
        %v3035 = vmul.f32 %v2759, %v3031
        %v3036 = vmul.f32 %v2760, %v3031
        %v3037 = vmul.f32 %v2761, %v3031
        %v3038 = vmul.f32 %v2762, %v3031
        %v3039 = vmul.f32 %v2763, %v3031
        %v3040 = vmul.f32 %v2764, %v3031
        %v3041 = vmul.f32 %v2765, %v3031
        %v3042 = vmul.f32 %v2766, %v3031
        %v3043 = vmul.f32 %v2767, %v3031
        %v3044 = vmul.f32 %v2768, %v3031
        %v3045 = vmul.f32 %v2769, %v3031
        %v3046 = vmul.f32 %v2770, %v3031
        %v3047 = vmul.f32 %v2771, %v3031
        %v3048 = vmul.f32 %v2772, %v3031
        %v3049 = vmul.f32 %v2773, %v3031
        %v3050 = vmul.f32 %v2774, %v3031
        %v3051 = vmul.f32 %v2775, %v3031
        %v3052 = vmul.f32 %v2776, %v3031
        %v3053 = vmul.f32 %v2777, %v3031
        %v3054 = vmul.f32 %v2778, %v3031
        %v3055 = vmul.f32 %v2779, %v3031
        %v3056 = vmul.f32 %v2780, %v3031
        %v3057 = vmul.f32 %v2781, %v3031
        %v3058 = vmul.f32 %v2782, %v3031
        %v3059 = vmul.f32 %v2783, %v3031
        %v3060 = vmul.f32 %v2784, %v3031
        %v3061 = vmul.f32 %v2785, %v3031
        %v3062 = vmul.f32 %v2786, %v3031
        %v3063 = vmul.f32 %v2787, %v3031
        %v3064 = vadd.f32 %v2996, %v3032
        %v3065 = vadd.f32 %v2997, %v3033
        %v3066 = vadd.f32 %v2998, %v3034
        %v3067 = vadd.f32 %v2999, %v3035
        %v3068 = vadd.f32 %v3000, %v3036
        %v3069 = vadd.f32 %v3001, %v3037
        %v3070 = vadd.f32 %v3002, %v3038
        %v3071 = vadd.f32 %v3003, %v3039
        %v3072 = vadd.f32 %v3004, %v3040
        %v3073 = vadd.f32 %v3005, %v3041
        %v3074 = vadd.f32 %v3006, %v3042
        %v3075 = vadd.f32 %v3007, %v3043
        %v3076 = vadd.f32 %v3008, %v3044
        %v3077 = vadd.f32 %v3009, %v3045
        %v3078 = vadd.f32 %v3010, %v3046
        %v3079 = vadd.f32 %v3011, %v3047
        %v3080 = vadd.f32 %v3012, %v3048
        %v3081 = vadd.f32 %v3013, %v3049
        %v3082 = vadd.f32 %v3014, %v3050
        %v3083 = vadd.f32 %v3015, %v3051
        %v3084 = vadd.f32 %v3016, %v3052
        %v3085 = vadd.f32 %v3017, %v3053
        %v3086 = vadd.f32 %v3018, %v3054
        %v3087 = vadd.f32 %v3019, %v3055
        %v3088 = vadd.f32 %v3020, %v3056
        %v3089 = vadd.f32 %v3021, %v3057
        %v3090 = vadd.f32 %v3022, %v3058
        %v3091 = vadd.f32 %v3023, %v3059
        %v3092 = vadd.f32 %v3024, %v3060
        %v3093 = vadd.f32 %v3025, %v3061
        %v3094 = vadd.f32 %v3026, %v3062
        %v3095 = vadd.f32 %v3027, %v3063
        %v3096 = vld [vmem:[%s2051 + $0x9] sm:$0xff]
        %v3097 = vld [vmem:[%s2051 + $0x11] sm:$0xff]
        %v3098 = vld [vmem:[%s2051 + $0x29] sm:$0xff]
        %v3099 = vld [vmem:[%s2051 + $0x31] sm:$0xff]
        %v3100 = vld [vmem:[%s2051 + $0x49] sm:$0xff]
        %v3101 = vld [vmem:[%s2051 + $0x51] sm:$0xff]
        %v3102 = vld [vmem:[%s2051 + $0x69] sm:$0xff]
        %v3103 = vld [vmem:[%s2051 + $0x71] sm:$0xff]
        %v3104 = vld [vmem:[%s2051 + $0x89] sm:$0xff]
        %v3105 = vld [vmem:[%s2051 + $0x91] sm:$0xff]
        %v3106 = vld [vmem:[%s2051 + $0xa9] sm:$0xff]
        %v3107 = vld [vmem:[%s2051 + $0xb1] sm:$0xff]
        %v3108 = vld [vmem:[%s2051 + $0xc9] sm:$0xff]
        %v3109 = vld [vmem:[%s2051 + $0xd1] sm:$0xff]
        %v3110 = vld [vmem:[%s2051 + $0xe9] sm:$0xff]
        %v3111 = vld [vmem:[%s2051 + $0xf1] sm:$0xff]
        %v3112 = vld [vmem:[%s2051 + $0x109] sm:$0xff]
        %v3113 = vld [vmem:[%s2051 + $0x111] sm:$0xff]
        %v3114 = vld [vmem:[%s2051 + $0x129] sm:$0xff]
        %v3115 = vld [vmem:[%s2051 + $0x131] sm:$0xff]
        %v3116 = vld [vmem:[%s2051 + $0x149] sm:$0xff]
        %v3117 = vld [vmem:[%s2051 + $0x151] sm:$0xff]
        %v3118 = vld [vmem:[%s2051 + $0x169] sm:$0xff]
        %v3119 = vld [vmem:[%s2051 + $0x171] sm:$0xff]
        %v3120 = vld [vmem:[%s2051 + $0x189] sm:$0xff]
        %v3121 = vld [vmem:[%s2051 + $0x191] sm:$0xff]
        %v3122 = vld [vmem:[%s2051 + $0x1a9] sm:$0xff]
        %v3123 = vld [vmem:[%s2051 + $0x1b1] sm:$0xff]
        %v3124 = vld [vmem:[%s2051 + $0x1c9] sm:$0xff]
        %v3125 = vld [vmem:[%s2051 + $0x1d1] sm:$0xff]
        %v3126 = vld [vmem:[%s2051 + $0x1e9] sm:$0xff]
        %v3127 = vld [vmem:[%s2051 + $0x1f1] sm:$0xff]
        %v3128 = vld [vmem:[%s2051 + $0x209] sm:$0xff]
        %v3129 = vld [vmem:[%s2051 + $0x211] sm:$0xff]
        %v3130 = vld [vmem:[%s2051 + $0x229] sm:$0xff]
        %v3131 = vld [vmem:[%s2051 + $0x231] sm:$0xff]
        %v3132 = vld [vmem:[%s2051 + $0x249] sm:$0xff]
        %v3133 = vld [vmem:[%s2051 + $0x251] sm:$0xff]
        %v3134 = vld [vmem:[%s2051 + $0x269] sm:$0xff]
        %v3135 = vld [vmem:[%s2051 + $0x271] sm:$0xff]
        %v3136 = vlaneseq
        %v3137 = vshrl.u32 %v3136, 7
        %v3138 = vsub.s32 3, %v3137
        %v3139 = vrot.slane %v2047, %v3138
        %v3140 = vmul.f32 %v3096, %v3139
        %v3141 = vmul.f32 %v3097, %v3139
        %v3142 = vmul.f32 %v3098, %v3139
        %v3143 = vmul.f32 %v3099, %v3139
        %v3144 = vmul.f32 %v3100, %v3139
        %v3145 = vmul.f32 %v3101, %v3139
        %v3146 = vmul.f32 %v3102, %v3139
        %v3147 = vmul.f32 %v3103, %v3139
        %v3148 = vmul.f32 %v3104, %v3139
        %v3149 = vmul.f32 %v3105, %v3139
        %v3150 = vmul.f32 %v3106, %v3139
        %v3151 = vmul.f32 %v3107, %v3139
        %v3152 = vmul.f32 %v3108, %v3139
        %v3153 = vmul.f32 %v3109, %v3139
        %v3154 = vmul.f32 %v3110, %v3139
        %v3155 = vmul.f32 %v3111, %v3139
        %v3156 = vmul.f32 %v3112, %v3139
        %v3157 = vmul.f32 %v3113, %v3139
        %v3158 = vmul.f32 %v3114, %v3139
        %v3159 = vmul.f32 %v3115, %v3139
        %v3160 = vmul.f32 %v3116, %v3139
        %v3161 = vmul.f32 %v3117, %v3139
        %v3162 = vmul.f32 %v3118, %v3139
        %v3163 = vmul.f32 %v3119, %v3139
        %v3164 = vmul.f32 %v3120, %v3139
        %v3165 = vmul.f32 %v3121, %v3139
        %v3166 = vmul.f32 %v3122, %v3139
        %v3167 = vmul.f32 %v3123, %v3139
        %v3168 = vmul.f32 %v3124, %v3139
        %v3169 = vmul.f32 %v3125, %v3139
        %v3170 = vmul.f32 %v3126, %v3139
        %v3171 = vmul.f32 %v3127, %v3139
        %v3172 = vlaneseq
        %v3173 = vshrl.u32 %v3172, 7
        %v3174 = vsub.s32 0, %v3173
        %v3175 = vrot.slane %v2048, %v3174
        %v3176 = vmul.f32 %v3098, %v3175
        %v3177 = vmul.f32 %v3099, %v3175
        %v3178 = vmul.f32 %v3100, %v3175
        %v3179 = vmul.f32 %v3101, %v3175
        %v3180 = vmul.f32 %v3102, %v3175
        %v3181 = vmul.f32 %v3103, %v3175
        %v3182 = vmul.f32 %v3104, %v3175
        %v3183 = vmul.f32 %v3105, %v3175
        %v3184 = vmul.f32 %v3106, %v3175
        %v3185 = vmul.f32 %v3107, %v3175
        %v3186 = vmul.f32 %v3108, %v3175
        %v3187 = vmul.f32 %v3109, %v3175
        %v3188 = vmul.f32 %v3110, %v3175
        %v3189 = vmul.f32 %v3111, %v3175
        %v3190 = vmul.f32 %v3112, %v3175
        %v3191 = vmul.f32 %v3113, %v3175
        %v3192 = vmul.f32 %v3114, %v3175
        %v3193 = vmul.f32 %v3115, %v3175
        %v3194 = vmul.f32 %v3116, %v3175
        %v3195 = vmul.f32 %v3117, %v3175
        %v3196 = vmul.f32 %v3118, %v3175
        %v3197 = vmul.f32 %v3119, %v3175
        %v3198 = vmul.f32 %v3120, %v3175
        %v3199 = vmul.f32 %v3121, %v3175
        %v3200 = vmul.f32 %v3122, %v3175
        %v3201 = vmul.f32 %v3123, %v3175
        %v3202 = vmul.f32 %v3124, %v3175
        %v3203 = vmul.f32 %v3125, %v3175
        %v3204 = vmul.f32 %v3126, %v3175
        %v3205 = vmul.f32 %v3127, %v3175
        %v3206 = vmul.f32 %v3128, %v3175
        %v3207 = vmul.f32 %v3129, %v3175
        %v3208 = vadd.f32 %v3140, %v3176
        %v3209 = vadd.f32 %v3141, %v3177
        %v3210 = vadd.f32 %v3142, %v3178
        %v3211 = vadd.f32 %v3143, %v3179
        %v3212 = vadd.f32 %v3144, %v3180
        %v3213 = vadd.f32 %v3145, %v3181
        %v3214 = vadd.f32 %v3146, %v3182
        %v3215 = vadd.f32 %v3147, %v3183
        %v3216 = vadd.f32 %v3148, %v3184
        %v3217 = vadd.f32 %v3149, %v3185
        %v3218 = vadd.f32 %v3150, %v3186
        %v3219 = vadd.f32 %v3151, %v3187
        %v3220 = vadd.f32 %v3152, %v3188
        %v3221 = vadd.f32 %v3153, %v3189
        %v3222 = vadd.f32 %v3154, %v3190
        %v3223 = vadd.f32 %v3155, %v3191
        %v3224 = vadd.f32 %v3156, %v3192
        %v3225 = vadd.f32 %v3157, %v3193
        %v3226 = vadd.f32 %v3158, %v3194
        %v3227 = vadd.f32 %v3159, %v3195
        %v3228 = vadd.f32 %v3160, %v3196
        %v3229 = vadd.f32 %v3161, %v3197
        %v3230 = vadd.f32 %v3162, %v3198
        %v3231 = vadd.f32 %v3163, %v3199
        %v3232 = vadd.f32 %v3164, %v3200
        %v3233 = vadd.f32 %v3165, %v3201
        %v3234 = vadd.f32 %v3166, %v3202
        %v3235 = vadd.f32 %v3167, %v3203
        %v3236 = vadd.f32 %v3168, %v3204
        %v3237 = vadd.f32 %v3169, %v3205
        %v3238 = vadd.f32 %v3170, %v3206
        %v3239 = vadd.f32 %v3171, %v3207
        %v3240 = vlaneseq
        %v3241 = vshrl.u32 %v3240, 7
        %v3242 = vsub.s32 5, %v3241
        %v3243 = vrot.slane %v2048, %v3242
        %v3244 = vmul.f32 %v3100, %v3243
        %v3245 = vmul.f32 %v3101, %v3243
        %v3246 = vmul.f32 %v3102, %v3243
        %v3247 = vmul.f32 %v3103, %v3243
        %v3248 = vmul.f32 %v3104, %v3243
        %v3249 = vmul.f32 %v3105, %v3243
        %v3250 = vmul.f32 %v3106, %v3243
        %v3251 = vmul.f32 %v3107, %v3243
        %v3252 = vmul.f32 %v3108, %v3243
        %v3253 = vmul.f32 %v3109, %v3243
        %v3254 = vmul.f32 %v3110, %v3243
        %v3255 = vmul.f32 %v3111, %v3243
        %v3256 = vmul.f32 %v3112, %v3243
        %v3257 = vmul.f32 %v3113, %v3243
        %v3258 = vmul.f32 %v3114, %v3243
        %v3259 = vmul.f32 %v3115, %v3243
        %v3260 = vmul.f32 %v3116, %v3243
        %v3261 = vmul.f32 %v3117, %v3243
        %v3262 = vmul.f32 %v3118, %v3243
        %v3263 = vmul.f32 %v3119, %v3243
        %v3264 = vmul.f32 %v3120, %v3243
        %v3265 = vmul.f32 %v3121, %v3243
        %v3266 = vmul.f32 %v3122, %v3243
        %v3267 = vmul.f32 %v3123, %v3243
        %v3268 = vmul.f32 %v3124, %v3243
        %v3269 = vmul.f32 %v3125, %v3243
        %v3270 = vmul.f32 %v3126, %v3243
        %v3271 = vmul.f32 %v3127, %v3243
        %v3272 = vmul.f32 %v3128, %v3243
        %v3273 = vmul.f32 %v3129, %v3243
        %v3274 = vmul.f32 %v3130, %v3243
        %v3275 = vmul.f32 %v3131, %v3243
        %v3276 = vadd.f32 %v3208, %v3244
        %v3277 = vadd.f32 %v3209, %v3245
        %v3278 = vadd.f32 %v3210, %v3246
        %v3279 = vadd.f32 %v3211, %v3247
        %v3280 = vadd.f32 %v3212, %v3248
        %v3281 = vadd.f32 %v3213, %v3249
        %v3282 = vadd.f32 %v3214, %v3250
        %v3283 = vadd.f32 %v3215, %v3251
        %v3284 = vadd.f32 %v3216, %v3252
        %v3285 = vadd.f32 %v3217, %v3253
        %v3286 = vadd.f32 %v3218, %v3254
        %v3287 = vadd.f32 %v3219, %v3255
        %v3288 = vadd.f32 %v3220, %v3256
        %v3289 = vadd.f32 %v3221, %v3257
        %v3290 = vadd.f32 %v3222, %v3258
        %v3291 = vadd.f32 %v3223, %v3259
        %v3292 = vadd.f32 %v3224, %v3260
        %v3293 = vadd.f32 %v3225, %v3261
        %v3294 = vadd.f32 %v3226, %v3262
        %v3295 = vadd.f32 %v3227, %v3263
        %v3296 = vadd.f32 %v3228, %v3264
        %v3297 = vadd.f32 %v3229, %v3265
        %v3298 = vadd.f32 %v3230, %v3266
        %v3299 = vadd.f32 %v3231, %v3267
        %v3300 = vadd.f32 %v3232, %v3268
        %v3301 = vadd.f32 %v3233, %v3269
        %v3302 = vadd.f32 %v3234, %v3270
        %v3303 = vadd.f32 %v3235, %v3271
        %v3304 = vadd.f32 %v3236, %v3272
        %v3305 = vadd.f32 %v3237, %v3273
        %v3306 = vadd.f32 %v3238, %v3274
        %v3307 = vadd.f32 %v3239, %v3275
        %v3308 = vlaneseq
        %v3309 = vshrl.u32 %v3308, 7
        %v3310 = vsub.s32 2, %v3309
        %v3311 = vrot.slane %v2049, %v3310
        %v3312 = vmul.f32 %v3102, %v3311
        %v3313 = vmul.f32 %v3103, %v3311
        %v3314 = vmul.f32 %v3104, %v3311
        %v3315 = vmul.f32 %v3105, %v3311
        %v3316 = vmul.f32 %v3106, %v3311
        %v3317 = vmul.f32 %v3107, %v3311
        %v3318 = vmul.f32 %v3108, %v3311
        %v3319 = vmul.f32 %v3109, %v3311
        %v3320 = vmul.f32 %v3110, %v3311
        %v3321 = vmul.f32 %v3111, %v3311
        %v3322 = vmul.f32 %v3112, %v3311
        %v3323 = vmul.f32 %v3113, %v3311
        %v3324 = vmul.f32 %v3114, %v3311
        %v3325 = vmul.f32 %v3115, %v3311
        %v3326 = vmul.f32 %v3116, %v3311
        %v3327 = vmul.f32 %v3117, %v3311
        %v3328 = vmul.f32 %v3118, %v3311
        %v3329 = vmul.f32 %v3119, %v3311
        %v3330 = vmul.f32 %v3120, %v3311
        %v3331 = vmul.f32 %v3121, %v3311
        %v3332 = vmul.f32 %v3122, %v3311
        %v3333 = vmul.f32 %v3123, %v3311
        %v3334 = vmul.f32 %v3124, %v3311
        %v3335 = vmul.f32 %v3125, %v3311
        %v3336 = vmul.f32 %v3126, %v3311
        %v3337 = vmul.f32 %v3127, %v3311
        %v3338 = vmul.f32 %v3128, %v3311
        %v3339 = vmul.f32 %v3129, %v3311
        %v3340 = vmul.f32 %v3130, %v3311
        %v3341 = vmul.f32 %v3131, %v3311
        %v3342 = vmul.f32 %v3132, %v3311
        %v3343 = vmul.f32 %v3133, %v3311
        %v3344 = vadd.f32 %v3276, %v3312
        %v3345 = vadd.f32 %v3277, %v3313
        %v3346 = vadd.f32 %v3278, %v3314
        %v3347 = vadd.f32 %v3279, %v3315
        %v3348 = vadd.f32 %v3280, %v3316
        %v3349 = vadd.f32 %v3281, %v3317
        %v3350 = vadd.f32 %v3282, %v3318
        %v3351 = vadd.f32 %v3283, %v3319
        %v3352 = vadd.f32 %v3284, %v3320
        %v3353 = vadd.f32 %v3285, %v3321
        %v3354 = vadd.f32 %v3286, %v3322
        %v3355 = vadd.f32 %v3287, %v3323
        %v3356 = vadd.f32 %v3288, %v3324
        %v3357 = vadd.f32 %v3289, %v3325
        %v3358 = vadd.f32 %v3290, %v3326
        %v3359 = vadd.f32 %v3291, %v3327
        %v3360 = vadd.f32 %v3292, %v3328
        %v3361 = vadd.f32 %v3293, %v3329
        %v3362 = vadd.f32 %v3294, %v3330
        %v3363 = vadd.f32 %v3295, %v3331
        %v3364 = vadd.f32 %v3296, %v3332
        %v3365 = vadd.f32 %v3297, %v3333
        %v3366 = vadd.f32 %v3298, %v3334
        %v3367 = vadd.f32 %v3299, %v3335
        %v3368 = vadd.f32 %v3300, %v3336
        %v3369 = vadd.f32 %v3301, %v3337
        %v3370 = vadd.f32 %v3302, %v3338
        %v3371 = vadd.f32 %v3303, %v3339
        %v3372 = vadd.f32 %v3304, %v3340
        %v3373 = vadd.f32 %v3305, %v3341
        %v3374 = vadd.f32 %v3306, %v3342
        %v3375 = vadd.f32 %v3307, %v3343
        %v3376 = vlaneseq
        %v3377 = vshrl.u32 %v3376, 7
        %v3378 = vsub.s32 7, %v3377
        %v3379 = vrot.slane %v2049, %v3378
        %v3380 = vmul.f32 %v3104, %v3379
        %v3381 = vmul.f32 %v3105, %v3379
        %v3382 = vmul.f32 %v3106, %v3379
        %v3383 = vmul.f32 %v3107, %v3379
        %v3384 = vmul.f32 %v3108, %v3379
        %v3385 = vmul.f32 %v3109, %v3379
        %v3386 = vmul.f32 %v3110, %v3379
        %v3387 = vmul.f32 %v3111, %v3379
        %v3388 = vmul.f32 %v3112, %v3379
        %v3389 = vmul.f32 %v3113, %v3379
        %v3390 = vmul.f32 %v3114, %v3379
        %v3391 = vmul.f32 %v3115, %v3379
        %v3392 = vmul.f32 %v3116, %v3379
        %v3393 = vmul.f32 %v3117, %v3379
        %v3394 = vmul.f32 %v3118, %v3379
        %v3395 = vmul.f32 %v3119, %v3379
        %v3396 = vmul.f32 %v3120, %v3379
        %v3397 = vmul.f32 %v3121, %v3379
        %v3398 = vmul.f32 %v3122, %v3379
        %v3399 = vmul.f32 %v3123, %v3379
        %v3400 = vmul.f32 %v3124, %v3379
        %v3401 = vmul.f32 %v3125, %v3379
        %v3402 = vmul.f32 %v3126, %v3379
        %v3403 = vmul.f32 %v3127, %v3379
        %v3404 = vmul.f32 %v3128, %v3379
        %v3405 = vmul.f32 %v3129, %v3379
        %v3406 = vmul.f32 %v3130, %v3379
        %v3407 = vmul.f32 %v3131, %v3379
        %v3408 = vmul.f32 %v3132, %v3379
        %v3409 = vmul.f32 %v3133, %v3379
        %v3410 = vmul.f32 %v3134, %v3379
        %v3411 = vmul.f32 %v3135, %v3379
        %v3412 = vadd.f32 %v3344, %v3380
        %v3413 = vadd.f32 %v3345, %v3381
        %v3414 = vadd.f32 %v3346, %v3382
        %v3415 = vadd.f32 %v3347, %v3383
        %v3416 = vadd.f32 %v3348, %v3384
        %v3417 = vadd.f32 %v3349, %v3385
        %v3418 = vadd.f32 %v3350, %v3386
        %v3419 = vadd.f32 %v3351, %v3387
        %v3420 = vadd.f32 %v3352, %v3388
        %v3421 = vadd.f32 %v3353, %v3389
        %v3422 = vadd.f32 %v3354, %v3390
        %v3423 = vadd.f32 %v3355, %v3391
        %v3424 = vadd.f32 %v3356, %v3392
        %v3425 = vadd.f32 %v3357, %v3393
        %v3426 = vadd.f32 %v3358, %v3394
        %v3427 = vadd.f32 %v3359, %v3395
        %v3428 = vadd.f32 %v3360, %v3396
        %v3429 = vadd.f32 %v3361, %v3397
        %v3430 = vadd.f32 %v3362, %v3398
        %v3431 = vadd.f32 %v3363, %v3399
        %v3432 = vadd.f32 %v3364, %v3400
        %v3433 = vadd.f32 %v3365, %v3401
        %v3434 = vadd.f32 %v3366, %v3402
        %v3435 = vadd.f32 %v3367, %v3403
        %v3436 = vadd.f32 %v3368, %v3404
        %v3437 = vadd.f32 %v3369, %v3405
        %v3438 = vadd.f32 %v3370, %v3406
        %v3439 = vadd.f32 %v3371, %v3407
        %v3440 = vadd.f32 %v3372, %v3408
        %v3441 = vadd.f32 %v3373, %v3409
        %v3442 = vadd.f32 %v3374, %v3410
        %v3443 = vadd.f32 %v3375, %v3411
        %v3444 = vld [vmem:[%s2051 + $0xa] sm:$0xff]
        %v3445 = vld [vmem:[%s2051 + $0x12] sm:$0xff]
        %v3446 = vld [vmem:[%s2051 + $0x2a] sm:$0xff]
        %v3447 = vld [vmem:[%s2051 + $0x32] sm:$0xff]
        %v3448 = vld [vmem:[%s2051 + $0x4a] sm:$0xff]
        %v3449 = vld [vmem:[%s2051 + $0x52] sm:$0xff]
        %v3450 = vld [vmem:[%s2051 + $0x6a] sm:$0xff]
        %v3451 = vld [vmem:[%s2051 + $0x72] sm:$0xff]
        %v3452 = vld [vmem:[%s2051 + $0x8a] sm:$0xff]
        %v3453 = vld [vmem:[%s2051 + $0x92] sm:$0xff]
        %v3454 = vld [vmem:[%s2051 + $0xaa] sm:$0xff]
        %v3455 = vld [vmem:[%s2051 + $0xb2] sm:$0xff]
        %v3456 = vld [vmem:[%s2051 + $0xca] sm:$0xff]
        %v3457 = vld [vmem:[%s2051 + $0xd2] sm:$0xff]
        %v3458 = vld [vmem:[%s2051 + $0xea] sm:$0xff]
        %v3459 = vld [vmem:[%s2051 + $0xf2] sm:$0xff]
        %v3460 = vld [vmem:[%s2051 + $0x10a] sm:$0xff]
        %v3461 = vld [vmem:[%s2051 + $0x112] sm:$0xff]
        %v3462 = vld [vmem:[%s2051 + $0x12a] sm:$0xff]
        %v3463 = vld [vmem:[%s2051 + $0x132] sm:$0xff]
        %v3464 = vld [vmem:[%s2051 + $0x14a] sm:$0xff]
        %v3465 = vld [vmem:[%s2051 + $0x152] sm:$0xff]
        %v3466 = vld [vmem:[%s2051 + $0x16a] sm:$0xff]
        %v3467 = vld [vmem:[%s2051 + $0x172] sm:$0xff]
        %v3468 = vld [vmem:[%s2051 + $0x18a] sm:$0xff]
        %v3469 = vld [vmem:[%s2051 + $0x192] sm:$0xff]
        %v3470 = vld [vmem:[%s2051 + $0x1aa] sm:$0xff]
        %v3471 = vld [vmem:[%s2051 + $0x1b2] sm:$0xff]
        %v3472 = vld [vmem:[%s2051 + $0x1ca] sm:$0xff]
        %v3473 = vld [vmem:[%s2051 + $0x1d2] sm:$0xff]
        %v3474 = vld [vmem:[%s2051 + $0x1ea] sm:$0xff]
        %v3475 = vld [vmem:[%s2051 + $0x1f2] sm:$0xff]
        %v3476 = vld [vmem:[%s2051 + $0x20a] sm:$0xff]
        %v3477 = vld [vmem:[%s2051 + $0x212] sm:$0xff]
        %v3478 = vld [vmem:[%s2051 + $0x22a] sm:$0xff]
        %v3479 = vld [vmem:[%s2051 + $0x232] sm:$0xff]
        %v3480 = vld [vmem:[%s2051 + $0x24a] sm:$0xff]
        %v3481 = vld [vmem:[%s2051 + $0x252] sm:$0xff]
        %v3482 = vld [vmem:[%s2051 + $0x26a] sm:$0xff]
        %v3483 = vld [vmem:[%s2051 + $0x272] sm:$0xff]
        %v3484 = vlaneseq
        %v3485 = vshrl.u32 %v3484, 7
        %v3486 = vsub.s32 4, %v3485
        %v3487 = vrot.slane %v2047, %v3486
        %v3488 = vmul.f32 %v3444, %v3487
        %v3489 = vmul.f32 %v3445, %v3487
        %v3490 = vmul.f32 %v3446, %v3487
        %v3491 = vmul.f32 %v3447, %v3487
        %v3492 = vmul.f32 %v3448, %v3487
        %v3493 = vmul.f32 %v3449, %v3487
        %v3494 = vmul.f32 %v3450, %v3487
        %v3495 = vmul.f32 %v3451, %v3487
        %v3496 = vmul.f32 %v3452, %v3487
        %v3497 = vmul.f32 %v3453, %v3487
        %v3498 = vmul.f32 %v3454, %v3487
        %v3499 = vmul.f32 %v3455, %v3487
        %v3500 = vmul.f32 %v3456, %v3487
        %v3501 = vmul.f32 %v3457, %v3487
        %v3502 = vmul.f32 %v3458, %v3487
        %v3503 = vmul.f32 %v3459, %v3487
        %v3504 = vmul.f32 %v3460, %v3487
        %v3505 = vmul.f32 %v3461, %v3487
        %v3506 = vmul.f32 %v3462, %v3487
        %v3507 = vmul.f32 %v3463, %v3487
        %v3508 = vmul.f32 %v3464, %v3487
        %v3509 = vmul.f32 %v3465, %v3487
        %v3510 = vmul.f32 %v3466, %v3487
        %v3511 = vmul.f32 %v3467, %v3487
        %v3512 = vmul.f32 %v3468, %v3487
        %v3513 = vmul.f32 %v3469, %v3487
        %v3514 = vmul.f32 %v3470, %v3487
        %v3515 = vmul.f32 %v3471, %v3487
        %v3516 = vmul.f32 %v3472, %v3487
        %v3517 = vmul.f32 %v3473, %v3487
        %v3518 = vmul.f32 %v3474, %v3487
        %v3519 = vmul.f32 %v3475, %v3487
        %v3520 = vlaneseq
        %v3521 = vshrl.u32 %v3520, 7
        %v3522 = vsub.s32 1, %v3521
        %v3523 = vrot.slane %v2048, %v3522
        %v3524 = vmul.f32 %v3446, %v3523
        %v3525 = vmul.f32 %v3447, %v3523
        %v3526 = vmul.f32 %v3448, %v3523
        %v3527 = vmul.f32 %v3449, %v3523
        %v3528 = vmul.f32 %v3450, %v3523
        %v3529 = vmul.f32 %v3451, %v3523
        %v3530 = vmul.f32 %v3452, %v3523
        %v3531 = vmul.f32 %v3453, %v3523
        %v3532 = vmul.f32 %v3454, %v3523
        %v3533 = vmul.f32 %v3455, %v3523
        %v3534 = vmul.f32 %v3456, %v3523
        %v3535 = vmul.f32 %v3457, %v3523
        %v3536 = vmul.f32 %v3458, %v3523
        %v3537 = vmul.f32 %v3459, %v3523
        %v3538 = vmul.f32 %v3460, %v3523
        %v3539 = vmul.f32 %v3461, %v3523
        %v3540 = vmul.f32 %v3462, %v3523
        %v3541 = vmul.f32 %v3463, %v3523
        %v3542 = vmul.f32 %v3464, %v3523
        %v3543 = vmul.f32 %v3465, %v3523
        %v3544 = vmul.f32 %v3466, %v3523
        %v3545 = vmul.f32 %v3467, %v3523
        %v3546 = vmul.f32 %v3468, %v3523
        %v3547 = vmul.f32 %v3469, %v3523
        %v3548 = vmul.f32 %v3470, %v3523
        %v3549 = vmul.f32 %v3471, %v3523
        %v3550 = vmul.f32 %v3472, %v3523
        %v3551 = vmul.f32 %v3473, %v3523
        %v3552 = vmul.f32 %v3474, %v3523
        %v3553 = vmul.f32 %v3475, %v3523
        %v3554 = vmul.f32 %v3476, %v3523
        %v3555 = vmul.f32 %v3477, %v3523
        %v3556 = vadd.f32 %v3488, %v3524
        %v3557 = vadd.f32 %v3489, %v3525
        %v3558 = vadd.f32 %v3490, %v3526
        %v3559 = vadd.f32 %v3491, %v3527
        %v3560 = vadd.f32 %v3492, %v3528
        %v3561 = vadd.f32 %v3493, %v3529
        %v3562 = vadd.f32 %v3494, %v3530
        %v3563 = vadd.f32 %v3495, %v3531
        %v3564 = vadd.f32 %v3496, %v3532
        %v3565 = vadd.f32 %v3497, %v3533
        %v3566 = vadd.f32 %v3498, %v3534
        %v3567 = vadd.f32 %v3499, %v3535
        %v3568 = vadd.f32 %v3500, %v3536
        %v3569 = vadd.f32 %v3501, %v3537
        %v3570 = vadd.f32 %v3502, %v3538
        %v3571 = vadd.f32 %v3503, %v3539
        %v3572 = vadd.f32 %v3504, %v3540
        %v3573 = vadd.f32 %v3505, %v3541
        %v3574 = vadd.f32 %v3506, %v3542
        %v3575 = vadd.f32 %v3507, %v3543
        %v3576 = vadd.f32 %v3508, %v3544
        %v3577 = vadd.f32 %v3509, %v3545
        %v3578 = vadd.f32 %v3510, %v3546
        %v3579 = vadd.f32 %v3511, %v3547
        %v3580 = vadd.f32 %v3512, %v3548
        %v3581 = vadd.f32 %v3513, %v3549
        %v3582 = vadd.f32 %v3514, %v3550
        %v3583 = vadd.f32 %v3515, %v3551
        %v3584 = vadd.f32 %v3516, %v3552
        %v3585 = vadd.f32 %v3517, %v3553
        %v3586 = vadd.f32 %v3518, %v3554
        %v3587 = vadd.f32 %v3519, %v3555
        %v3588 = vlaneseq
        %v3589 = vshrl.u32 %v3588, 7
        %v3590 = vsub.s32 6, %v3589
        %v3591 = vrot.slane %v2048, %v3590
        %v3592 = vmul.f32 %v3448, %v3591
        %v3593 = vmul.f32 %v3449, %v3591
        %v3594 = vmul.f32 %v3450, %v3591
        %v3595 = vmul.f32 %v3451, %v3591
        %v3596 = vmul.f32 %v3452, %v3591
        %v3597 = vmul.f32 %v3453, %v3591
        %v3598 = vmul.f32 %v3454, %v3591
        %v3599 = vmul.f32 %v3455, %v3591
        %v3600 = vmul.f32 %v3456, %v3591
        %v3601 = vmul.f32 %v3457, %v3591
        %v3602 = vmul.f32 %v3458, %v3591
        %v3603 = vmul.f32 %v3459, %v3591
        %v3604 = vmul.f32 %v3460, %v3591
        %v3605 = vmul.f32 %v3461, %v3591
        %v3606 = vmul.f32 %v3462, %v3591
        %v3607 = vmul.f32 %v3463, %v3591
        %v3608 = vmul.f32 %v3464, %v3591
        %v3609 = vmul.f32 %v3465, %v3591
        %v3610 = vmul.f32 %v3466, %v3591
        %v3611 = vmul.f32 %v3467, %v3591
        %v3612 = vmul.f32 %v3468, %v3591
        %v3613 = vmul.f32 %v3469, %v3591
        %v3614 = vmul.f32 %v3470, %v3591
        %v3615 = vmul.f32 %v3471, %v3591
        %v3616 = vmul.f32 %v3472, %v3591
        %v3617 = vmul.f32 %v3473, %v3591
        %v3618 = vmul.f32 %v3474, %v3591
        %v3619 = vmul.f32 %v3475, %v3591
        %v3620 = vmul.f32 %v3476, %v3591
        %v3621 = vmul.f32 %v3477, %v3591
        %v3622 = vmul.f32 %v3478, %v3591
        %v3623 = vmul.f32 %v3479, %v3591
        %v3624 = vadd.f32 %v3556, %v3592
        %v3625 = vadd.f32 %v3557, %v3593
        %v3626 = vadd.f32 %v3558, %v3594
        %v3627 = vadd.f32 %v3559, %v3595
        %v3628 = vadd.f32 %v3560, %v3596
        %v3629 = vadd.f32 %v3561, %v3597
        %v3630 = vadd.f32 %v3562, %v3598
        %v3631 = vadd.f32 %v3563, %v3599
        %v3632 = vadd.f32 %v3564, %v3600
        %v3633 = vadd.f32 %v3565, %v3601
        %v3634 = vadd.f32 %v3566, %v3602
        %v3635 = vadd.f32 %v3567, %v3603
        %v3636 = vadd.f32 %v3568, %v3604
        %v3637 = vadd.f32 %v3569, %v3605
        %v3638 = vadd.f32 %v3570, %v3606
        %v3639 = vadd.f32 %v3571, %v3607
        %v3640 = vadd.f32 %v3572, %v3608
        %v3641 = vadd.f32 %v3573, %v3609
        %v3642 = vadd.f32 %v3574, %v3610
        %v3643 = vadd.f32 %v3575, %v3611
        %v3644 = vadd.f32 %v3576, %v3612
        %v3645 = vadd.f32 %v3577, %v3613
        %v3646 = vadd.f32 %v3578, %v3614
        %v3647 = vadd.f32 %v3579, %v3615
        %v3648 = vadd.f32 %v3580, %v3616
        %v3649 = vadd.f32 %v3581, %v3617
        %v3650 = vadd.f32 %v3582, %v3618
        %v3651 = vadd.f32 %v3583, %v3619
        %v3652 = vadd.f32 %v3584, %v3620
        %v3653 = vadd.f32 %v3585, %v3621
        %v3654 = vadd.f32 %v3586, %v3622
        %v3655 = vadd.f32 %v3587, %v3623
        %v3656 = vlaneseq
        %v3657 = vshrl.u32 %v3656, 7
        %v3658 = vsub.s32 3, %v3657
        %v3659 = vrot.slane %v2049, %v3658
        %v3660 = vmul.f32 %v3450, %v3659
        %v3661 = vmul.f32 %v3451, %v3659
        %v3662 = vmul.f32 %v3452, %v3659
        %v3663 = vmul.f32 %v3453, %v3659
        %v3664 = vmul.f32 %v3454, %v3659
        %v3665 = vmul.f32 %v3455, %v3659
        %v3666 = vmul.f32 %v3456, %v3659
        %v3667 = vmul.f32 %v3457, %v3659
        %v3668 = vmul.f32 %v3458, %v3659
        %v3669 = vmul.f32 %v3459, %v3659
        %v3670 = vmul.f32 %v3460, %v3659
        %v3671 = vmul.f32 %v3461, %v3659
        %v3672 = vmul.f32 %v3462, %v3659
        %v3673 = vmul.f32 %v3463, %v3659
        %v3674 = vmul.f32 %v3464, %v3659
        %v3675 = vmul.f32 %v3465, %v3659
        %v3676 = vmul.f32 %v3466, %v3659
        %v3677 = vmul.f32 %v3467, %v3659
        %v3678 = vmul.f32 %v3468, %v3659
        %v3679 = vmul.f32 %v3469, %v3659
        %v3680 = vmul.f32 %v3470, %v3659
        %v3681 = vmul.f32 %v3471, %v3659
        %v3682 = vmul.f32 %v3472, %v3659
        %v3683 = vmul.f32 %v3473, %v3659
        %v3684 = vmul.f32 %v3474, %v3659
        %v3685 = vmul.f32 %v3475, %v3659
        %v3686 = vmul.f32 %v3476, %v3659
        %v3687 = vmul.f32 %v3477, %v3659
        %v3688 = vmul.f32 %v3478, %v3659
        %v3689 = vmul.f32 %v3479, %v3659
        %v3690 = vmul.f32 %v3480, %v3659
        %v3691 = vmul.f32 %v3481, %v3659
        %v3692 = vadd.f32 %v3624, %v3660
        %v3693 = vadd.f32 %v3625, %v3661
        %v3694 = vadd.f32 %v3626, %v3662
        %v3695 = vadd.f32 %v3627, %v3663
        %v3696 = vadd.f32 %v3628, %v3664
        %v3697 = vadd.f32 %v3629, %v3665
        %v3698 = vadd.f32 %v3630, %v3666
        %v3699 = vadd.f32 %v3631, %v3667
        %v3700 = vadd.f32 %v3632, %v3668
        %v3701 = vadd.f32 %v3633, %v3669
        %v3702 = vadd.f32 %v3634, %v3670
        %v3703 = vadd.f32 %v3635, %v3671
        %v3704 = vadd.f32 %v3636, %v3672
        %v3705 = vadd.f32 %v3637, %v3673
        %v3706 = vadd.f32 %v3638, %v3674
        %v3707 = vadd.f32 %v3639, %v3675
        %v3708 = vadd.f32 %v3640, %v3676
        %v3709 = vadd.f32 %v3641, %v3677
        %v3710 = vadd.f32 %v3642, %v3678
        %v3711 = vadd.f32 %v3643, %v3679
        %v3712 = vadd.f32 %v3644, %v3680
        %v3713 = vadd.f32 %v3645, %v3681
        %v3714 = vadd.f32 %v3646, %v3682
        %v3715 = vadd.f32 %v3647, %v3683
        %v3716 = vadd.f32 %v3648, %v3684
        %v3717 = vadd.f32 %v3649, %v3685
        %v3718 = vadd.f32 %v3650, %v3686
        %v3719 = vadd.f32 %v3651, %v3687
        %v3720 = vadd.f32 %v3652, %v3688
        %v3721 = vadd.f32 %v3653, %v3689
        %v3722 = vadd.f32 %v3654, %v3690
        %v3723 = vadd.f32 %v3655, %v3691
        %v3724 = vlaneseq
        %v3725 = vshrl.u32 %v3724, 7
        %v3726 = vsub.s32 0, %v3725
        %v3727 = vrot.slane %v2050, %v3726
        %v3728 = vmul.f32 %v3452, %v3727
        %v3729 = vmul.f32 %v3453, %v3727
        %v3730 = vmul.f32 %v3454, %v3727
        %v3731 = vmul.f32 %v3455, %v3727
        %v3732 = vmul.f32 %v3456, %v3727
        %v3733 = vmul.f32 %v3457, %v3727
        %v3734 = vmul.f32 %v3458, %v3727
        %v3735 = vmul.f32 %v3459, %v3727
        %v3736 = vmul.f32 %v3460, %v3727
        %v3737 = vmul.f32 %v3461, %v3727
        %v3738 = vmul.f32 %v3462, %v3727
        %v3739 = vmul.f32 %v3463, %v3727
        %v3740 = vmul.f32 %v3464, %v3727
        %v3741 = vmul.f32 %v3465, %v3727
        %v3742 = vmul.f32 %v3466, %v3727
        %v3743 = vmul.f32 %v3467, %v3727
        %v3744 = vmul.f32 %v3468, %v3727
        %v3745 = vmul.f32 %v3469, %v3727
        %v3746 = vmul.f32 %v3470, %v3727
        %v3747 = vmul.f32 %v3471, %v3727
        %v3748 = vmul.f32 %v3472, %v3727
        %v3749 = vmul.f32 %v3473, %v3727
        %v3750 = vmul.f32 %v3474, %v3727
        %v3751 = vmul.f32 %v3475, %v3727
        %v3752 = vmul.f32 %v3476, %v3727
        %v3753 = vmul.f32 %v3477, %v3727
        %v3754 = vmul.f32 %v3478, %v3727
        %v3755 = vmul.f32 %v3479, %v3727
        %v3756 = vmul.f32 %v3480, %v3727
        %v3757 = vmul.f32 %v3481, %v3727
        %v3758 = vmul.f32 %v3482, %v3727
        %v3759 = vmul.f32 %v3483, %v3727
        %v3760 = vadd.f32 %v3692, %v3728
        %v3761 = vadd.f32 %v3693, %v3729
        %v3762 = vadd.f32 %v3694, %v3730
        %v3763 = vadd.f32 %v3695, %v3731
        %v3764 = vadd.f32 %v3696, %v3732
        %v3765 = vadd.f32 %v3697, %v3733
        %v3766 = vadd.f32 %v3698, %v3734
        %v3767 = vadd.f32 %v3699, %v3735
        %v3768 = vadd.f32 %v3700, %v3736
        %v3769 = vadd.f32 %v3701, %v3737
        %v3770 = vadd.f32 %v3702, %v3738
        %v3771 = vadd.f32 %v3703, %v3739
        %v3772 = vadd.f32 %v3704, %v3740
        %v3773 = vadd.f32 %v3705, %v3741
        %v3774 = vadd.f32 %v3706, %v3742
        %v3775 = vadd.f32 %v3707, %v3743
        %v3776 = vadd.f32 %v3708, %v3744
        %v3777 = vadd.f32 %v3709, %v3745
        %v3778 = vadd.f32 %v3710, %v3746
        %v3779 = vadd.f32 %v3711, %v3747
        %v3780 = vadd.f32 %v3712, %v3748
        %v3781 = vadd.f32 %v3713, %v3749
        %v3782 = vadd.f32 %v3714, %v3750
        %v3783 = vadd.f32 %v3715, %v3751
        %v3784 = vadd.f32 %v3716, %v3752
        %v3785 = vadd.f32 %v3717, %v3753
        %v3786 = vadd.f32 %v3718, %v3754
        %v3787 = vadd.f32 %v3719, %v3755
        %v3788 = vadd.f32 %v3720, %v3756
        %v3789 = vadd.f32 %v3721, %v3757
        %v3790 = vadd.f32 %v3722, %v3758
        %v3791 = vadd.f32 %v3723, %v3759
        %v3792 = vadd.f32 %v2368, %v2716
        %v3793 = vadd.f32 %v2369, %v2717
        %v3794 = vadd.f32 %v2370, %v2718
        %v3795 = vadd.f32 %v2371, %v2719
        %v3796 = vadd.f32 %v2372, %v2720
        %v3797 = vadd.f32 %v2373, %v2721
        %v3798 = vadd.f32 %v2374, %v2722
        %v3799 = vadd.f32 %v2375, %v2723
        %v3800 = vadd.f32 %v2376, %v2724
        %v3801 = vadd.f32 %v2377, %v2725
        %v3802 = vadd.f32 %v2378, %v2726
        %v3803 = vadd.f32 %v2379, %v2727
        %v3804 = vadd.f32 %v2380, %v2728
        %v3805 = vadd.f32 %v2381, %v2729
        %v3806 = vadd.f32 %v2382, %v2730
        %v3807 = vadd.f32 %v2383, %v2731
        %v3808 = vadd.f32 %v2384, %v2732
        %v3809 = vadd.f32 %v2385, %v2733
        %v3810 = vadd.f32 %v2386, %v2734
        %v3811 = vadd.f32 %v2387, %v2735
        %v3812 = vadd.f32 %v2388, %v2736
        %v3813 = vadd.f32 %v2389, %v2737
        %v3814 = vadd.f32 %v2390, %v2738
        %v3815 = vadd.f32 %v2391, %v2739
        %v3816 = vadd.f32 %v2392, %v2740
        %v3817 = vadd.f32 %v2393, %v2741
        %v3818 = vadd.f32 %v2394, %v2742
        %v3819 = vadd.f32 %v2395, %v2743
        %v3820 = vadd.f32 %v2396, %v2744
        %v3821 = vadd.f32 %v2397, %v2745
        %v3822 = vadd.f32 %v2398, %v2746
        %v3823 = vadd.f32 %v2399, %v2747
        %v3824 = vadd.f32 %v3064, %v3412
        %v3825 = vadd.f32 %v3065, %v3413
        %v3826 = vadd.f32 %v3066, %v3414
        %v3827 = vadd.f32 %v3067, %v3415
        %v3828 = vadd.f32 %v3068, %v3416
        %v3829 = vadd.f32 %v3069, %v3417
        %v3830 = vadd.f32 %v3070, %v3418
        %v3831 = vadd.f32 %v3071, %v3419
        %v3832 = vadd.f32 %v3072, %v3420
        %v3833 = vadd.f32 %v3073, %v3421
        %v3834 = vadd.f32 %v3074, %v3422
        %v3835 = vadd.f32 %v3075, %v3423
        %v3836 = vadd.f32 %v3076, %v3424
        %v3837 = vadd.f32 %v3077, %v3425
        %v3838 = vadd.f32 %v3078, %v3426
        %v3839 = vadd.f32 %v3079, %v3427
        %v3840 = vadd.f32 %v3080, %v3428
        %v3841 = vadd.f32 %v3081, %v3429
        %v3842 = vadd.f32 %v3082, %v3430
        %v3843 = vadd.f32 %v3083, %v3431
        %v3844 = vadd.f32 %v3084, %v3432
        %v3845 = vadd.f32 %v3085, %v3433
        %v3846 = vadd.f32 %v3086, %v3434
        %v3847 = vadd.f32 %v3087, %v3435
        %v3848 = vadd.f32 %v3088, %v3436
        %v3849 = vadd.f32 %v3089, %v3437
        %v3850 = vadd.f32 %v3090, %v3438
        %v3851 = vadd.f32 %v3091, %v3439
        %v3852 = vadd.f32 %v3092, %v3440
        %v3853 = vadd.f32 %v3093, %v3441
        %v3854 = vadd.f32 %v3094, %v3442
        %v3855 = vadd.f32 %v3095, %v3443
        %v3856 = vadd.f32 %v3792, %v3824
        %v3857 = vadd.f32 %v3793, %v3825
        %v3858 = vadd.f32 %v3794, %v3826
        %v3859 = vadd.f32 %v3795, %v3827
        %v3860 = vadd.f32 %v3796, %v3828
        %v3861 = vadd.f32 %v3797, %v3829
        %v3862 = vadd.f32 %v3798, %v3830
        %v3863 = vadd.f32 %v3799, %v3831
        %v3864 = vadd.f32 %v3800, %v3832
        %v3865 = vadd.f32 %v3801, %v3833
        %v3866 = vadd.f32 %v3802, %v3834
        %v3867 = vadd.f32 %v3803, %v3835
        %v3868 = vadd.f32 %v3804, %v3836
        %v3869 = vadd.f32 %v3805, %v3837
        %v3870 = vadd.f32 %v3806, %v3838
        %v3871 = vadd.f32 %v3807, %v3839
        %v3872 = vadd.f32 %v3808, %v3840
        %v3873 = vadd.f32 %v3809, %v3841
        %v3874 = vadd.f32 %v3810, %v3842
        %v3875 = vadd.f32 %v3811, %v3843
        %v3876 = vadd.f32 %v3812, %v3844
        %v3877 = vadd.f32 %v3813, %v3845
        %v3878 = vadd.f32 %v3814, %v3846
        %v3879 = vadd.f32 %v3815, %v3847
        %v3880 = vadd.f32 %v3816, %v3848
        %v3881 = vadd.f32 %v3817, %v3849
        %v3882 = vadd.f32 %v3818, %v3850
        %v3883 = vadd.f32 %v3819, %v3851
        %v3884 = vadd.f32 %v3820, %v3852
        %v3885 = vadd.f32 %v3821, %v3853
        %v3886 = vadd.f32 %v3822, %v3854
        %v3887 = vadd.f32 %v3823, %v3855
        %v3888 = vadd.f32 %v3856, %v3760
        %v3889 = vadd.f32 %v3857, %v3761
        %v3890 = vadd.f32 %v3858, %v3762
        %v3891 = vadd.f32 %v3859, %v3763
        %v3892 = vadd.f32 %v3860, %v3764
        %v3893 = vadd.f32 %v3861, %v3765
        %v3894 = vadd.f32 %v3862, %v3766
        %v3895 = vadd.f32 %v3863, %v3767
        %v3896 = vadd.f32 %v3864, %v3768
        %v3897 = vadd.f32 %v3865, %v3769
        %v3898 = vadd.f32 %v3866, %v3770
        %v3899 = vadd.f32 %v3867, %v3771
        %v3900 = vadd.f32 %v3868, %v3772
        %v3901 = vadd.f32 %v3869, %v3773
        %v3902 = vadd.f32 %v3870, %v3774
        %v3903 = vadd.f32 %v3871, %v3775
        %v3904 = vadd.f32 %v3872, %v3776
        %v3905 = vadd.f32 %v3873, %v3777
        %v3906 = vadd.f32 %v3874, %v3778
        %v3907 = vadd.f32 %v3875, %v3779
        %v3908 = vadd.f32 %v3876, %v3780
        %v3909 = vadd.f32 %v3877, %v3781
        %v3910 = vadd.f32 %v3878, %v3782
        %v3911 = vadd.f32 %v3879, %v3783
        %v3912 = vadd.f32 %v3880, %v3784
        %v3913 = vadd.f32 %v3881, %v3785
        %v3914 = vadd.f32 %v3882, %v3786
        %v3915 = vadd.f32 %v3883, %v3787
        %v3916 = vadd.f32 %v3884, %v3788
        %v3917 = vadd.f32 %v3885, %v3789
        %v3918 = vadd.f32 %v3886, %v3790
        %v3919 = vadd.f32 %v3887, %v3791
        %v3920 = vld [vmem:[#allocation15] sm:$0x1]
        %v3922 = vlaneseq
        %v3923 = vshrl.u32 %v3922, 7
        %v3924 = vsub.s32 0, %v3923
        %v3925 = vrot.slane %v3920, %v3924
        %v3927 = vadd.f32 %v3888, %v3925
        %v3928 = vadd.f32 %v3889, %v3925
        %v3929 = vadd.f32 %v3890, %v3925
        %v3930 = vadd.f32 %v3891, %v3925
        %v3931 = vadd.f32 %v3892, %v3925
        %v3932 = vadd.f32 %v3893, %v3925
        %v3933 = vadd.f32 %v3894, %v3925
        %v3934 = vadd.f32 %v3895, %v3925
        %v3935 = vadd.f32 %v3896, %v3925
        %v3936 = vadd.f32 %v3897, %v3925
        %v3937 = vadd.f32 %v3898, %v3925
        %v3938 = vadd.f32 %v3899, %v3925
        %v3939 = vadd.f32 %v3900, %v3925
        %v3940 = vadd.f32 %v3901, %v3925
        %v3941 = vadd.f32 %v3902, %v3925
        %v3942 = vadd.f32 %v3903, %v3925
        %v3943 = vadd.f32 %v3904, %v3925
        %v3944 = vadd.f32 %v3905, %v3925
        %v3945 = vadd.f32 %v3906, %v3925
        %v3946 = vadd.f32 %v3907, %v3925
        %v3947 = vadd.f32 %v3908, %v3925
        %v3948 = vadd.f32 %v3909, %v3925
        %v3949 = vadd.f32 %v3910, %v3925
        %v3950 = vadd.f32 %v3911, %v3925
        %v3951 = vadd.f32 %v3912, %v3925
        %v3952 = vadd.f32 %v3913, %v3925
        %v3953 = vadd.f32 %v3914, %v3925
        %v3954 = vadd.f32 %v3915, %v3925
        %v3955 = vadd.f32 %v3916, %v3925
        %v3956 = vadd.f32 %v3917, %v3925
        %v3957 = vadd.f32 %v3918, %v3925
        %v3958 = vadd.f32 %v3919, %v3925
        %v3959 = vpack.c.bf16 %v3928, %v3927
        %v3960 = vpack.c.bf16 %v3930, %v3929
        %v3961 = vpack.c.bf16 %v3932, %v3931
        %v3962 = vpack.c.bf16 %v3934, %v3933
        %v3963 = vpack.c.bf16 %v3936, %v3935
        %v3964 = vpack.c.bf16 %v3938, %v3937
        %v3965 = vpack.c.bf16 %v3940, %v3939
        %v3966 = vpack.c.bf16 %v3942, %v3941
        %v3967 = vpack.c.bf16 %v3944, %v3943
        %v3968 = vpack.c.bf16 %v3946, %v3945
        %v3969 = vpack.c.bf16 %v3948, %v3947
        %v3970 = vpack.c.bf16 %v3950, %v3949
        %v3971 = vpack.c.bf16 %v3952, %v3951
        %v3972 = vpack.c.bf16 %v3954, %v3953
        %v3973 = vpack.c.bf16 %v3956, %v3955
        %v3974 = vpack.c.bf16 %v3958, %v3957
        %v3975 = vld [vmem:[#allocation17] sm:$0xf]
        %v3976 = vld [vmem:[#allocation17 + $0x4] sm:$0xf]
        %v3977 = vld [vmem:[#allocation17 + $0x8] sm:$0xf]
        %v3978 = vld [vmem:[#allocation17 + $0xc] sm:$0xf]
        %v3979 = vld [vmem:[#allocation17 + $0x10] sm:$0xf]
        %v3980 = vld [vmem:[#allocation17 + $0x14] sm:$0xf]
        %v3981 = vld [vmem:[#allocation17 + $0x18] sm:$0xf]
        %v3982 = vld [vmem:[#allocation17 + $0x1c] sm:$0xf]
        %v3983 = vld [vmem:[#allocation17 + $0x20] sm:$0xf]
        %v3984 = vld [vmem:[#allocation17 + $0x24] sm:$0xf]
        %v3985 = vld [vmem:[#allocation17 + $0x28] sm:$0xf]
        %v3986 = vld [vmem:[#allocation17 + $0x2c] sm:$0xf]
        %v3987 = vld [vmem:[#allocation17 + $0x30] sm:$0xf]
        %v3988 = vld [vmem:[#allocation17 + $0x34] sm:$0xf]
        %v3989 = vld [vmem:[#allocation17 + $0x38] sm:$0xf]
        %v3990 = vld [vmem:[#allocation17 + $0x3c] sm:$0xf]
        %v4007 = vunpack.c.l.b16 %v3975
        %v4008 = vunpack.c.l.b16 %v3976
        %v4009 = vunpack.c.l.b16 %v3977
        %v4010 = vunpack.c.l.b16 %v3978
        %v4011 = vunpack.c.l.b16 %v3979
        %v4012 = vunpack.c.l.b16 %v3980
        %v4013 = vunpack.c.l.b16 %v3981
        %v4014 = vunpack.c.l.b16 %v3982
        %v4015 = vunpack.c.l.b16 %v3983
        %v4016 = vunpack.c.l.b16 %v3984
        %v4017 = vunpack.c.l.b16 %v3985
        %v4018 = vunpack.c.l.b16 %v3986
        %v4019 = vunpack.c.l.b16 %v3987
        %v4020 = vunpack.c.l.b16 %v3988
        %v4021 = vunpack.c.l.b16 %v3989
        %v4022 = vunpack.c.l.b16 %v3990
        %v4023 = vpack.c.b16 %v4008, %v4007
        %v4024 = vpack.c.b16 %v4010, %v4009
        %v4025 = vpack.c.b16 %v4012, %v4011
        %v4026 = vpack.c.b16 %v4014, %v4013
        %v4027 = vpack.c.b16 %v4016, %v4015
        %v4028 = vpack.c.b16 %v4018, %v4017
        %v4029 = vpack.c.b16 %v4020, %v4019
        %v4030 = vpack.c.b16 %v4022, %v4021
        %4039 = vmatprep.subr.bf16.mxu0 0
        %4040 = vmatpush1.bf16.msra.mxu0 %v4023
        %4041 = vmatprep.subr.bf16.mxu0 0
        %4042 = vmatpush1.bf16.msra.mxu0 %v4024
        %4043 = vmatprep.subr.bf16.mxu0 0
        %4044 = vmatpush1.bf16.msra.mxu0 %v4025
        %4045 = vmatprep.subr.bf16.mxu0 0
        %4046 = vmatpush1.bf16.msra.mxu0 %v4026
        %4047 = vmatprep.subr.bf16.mxu0 0
        %4048 = vmatpush1.bf16.msra.mxu0 %v4027
        %4049 = vmatprep.subr.bf16.mxu0 0
        %4050 = vmatpush1.bf16.msra.mxu0 %v4028
        %4051 = vmatprep.subr.bf16.mxu0 0
        %4052 = vmatpush1.bf16.msra.mxu0 %v4029
        %4053 = vmatprep.subr.bf16.mxu0 0
        %4054 = vmatpush1.bf16.msra.mxu0 %v4030
        %4055 = vmatprep.subr.bf16.mxu0 0
        %4056 = vmatpush1.bf16.msra.mxu0 0
        %4057 = vmatprep.subr.bf16.mxu0 0
        %4058 = vmatpush1.bf16.msra.mxu0 0
        %4059 = vmatprep.subr.bf16.mxu0 0
        %4060 = vmatpush1.bf16.msra.mxu0 0
        %4061 = vmatprep.subr.bf16.mxu0 0
        %4062 = vmatpush1.bf16.msra.mxu0 0
        %4063 = vmatprep.subr.bf16.mxu0 0
        %4064 = vmatpush1.bf16.msra.mxu0 0
        %4065 = vmatprep.subr.bf16.mxu0 0
        %4066 = vmatpush1.bf16.msra.mxu0 0
        %4067 = vmatprep.subr.bf16.mxu0 0
        %4068 = vmatpush1.bf16.msra.mxu0 0
        %4069 = vmatprep.subr.bf16.mxu0 0
        %4070 = vmatpush1.bf16.msra.mxu0 0
        %4071 = vmatprep.mubr.bf16.mxu0 0
        %4072 = vmatmul.mubr.bf16.gmra.mrb[0].mxu0 %v3959
        %v4073 = vpop.f32.mrb[0].mxu0
        %v4074 = vadd.f32 0.0, %v4073
        %v4075 = vpop.f32.mrb[0].mxu0
        %v4076 = vpop.f32.mrb[0].mxu0
        %v4077 = vadd.f32 0.0, %v4076
        %v4078 = vpop.f32.mrb[0].mxu0
        %4079 = vmatprep.mubr.bf16.mxu0 0
        %4080 = vmatmul.mubr.bf16.gmra.mrb[0].mxu0 %v3960
        %v4081 = vpop.f32.mrb[0].mxu0
        %v4082 = vadd.f32 0.0, %v4081
        %v4083 = vpop.f32.mrb[0].mxu0
        %v4084 = vpop.f32.mrb[0].mxu0
        %v4085 = vadd.f32 0.0, %v4084
        %v4086 = vpop.f32.mrb[0].mxu0
        %4087 = vmatprep.mubr.bf16.mxu0 0
        %4088 = vmatmul.mubr.bf16.gmra.mrb[0].mxu0 %v3961
        %v4089 = vpop.f32.mrb[0].mxu0
        %v4090 = vadd.f32 0.0, %v4089
        %v4091 = vpop.f32.mrb[0].mxu0
        %v4092 = vpop.f32.mrb[0].mxu0
        %v4093 = vadd.f32 0.0, %v4092
        %v4094 = vpop.f32.mrb[0].mxu0
        %4095 = vmatprep.mubr.bf16.mxu0 0
        %4096 = vmatmul.mubr.bf16.gmra.mrb[0].mxu0 %v3962
        %v4097 = vpop.f32.mrb[0].mxu0
        %v4098 = vadd.f32 0.0, %v4097
        %v4099 = vpop.f32.mrb[0].mxu0
        %v4100 = vpop.f32.mrb[0].mxu0
        %v4101 = vadd.f32 0.0, %v4100
        %v4102 = vpop.f32.mrb[0].mxu0
        %4103 = vmatprep.mubr.bf16.mxu0 0
        %4104 = vmatmul.mubr.bf16.gmra.mrb[0].mxu0 %v3963
        %v4105 = vpop.f32.mrb[0].mxu0
        %v4106 = vadd.f32 0.0, %v4105
        %v4107 = vpop.f32.mrb[0].mxu0
        %v4108 = vpop.f32.mrb[0].mxu0
        %v4109 = vadd.f32 0.0, %v4108
        %v4110 = vpop.f32.mrb[0].mxu0
        %4111 = vmatprep.mubr.bf16.mxu0 0
        %4112 = vmatmul.mubr.bf16.gmra.mrb[0].mxu0 %v3964
        %v4113 = vpop.f32.mrb[0].mxu0
        %v4114 = vadd.f32 0.0, %v4113
        %v4115 = vpop.f32.mrb[0].mxu0
        %v4116 = vpop.f32.mrb[0].mxu0
        %v4117 = vadd.f32 0.0, %v4116
        %v4118 = vpop.f32.mrb[0].mxu0
        %4119 = vmatprep.mubr.bf16.mxu0 0
        %4120 = vmatmul.mubr.bf16.gmra.mrb[0].mxu0 %v3965
        %v4121 = vpop.f32.mrb[0].mxu0
        %v4122 = vadd.f32 0.0, %v4121
        %v4123 = vpop.f32.mrb[0].mxu0
        %v4124 = vpop.f32.mrb[0].mxu0
        %v4125 = vadd.f32 0.0, %v4124
        %v4126 = vpop.f32.mrb[0].mxu0
        %4127 = vmatprep.mubr.bf16.mxu0 0
        %4128 = vmatmul.mubr.bf16.gmra.mrb[0].mxu0 %v3966
        %v4129 = vpop.f32.mrb[0].mxu0
        %v4130 = vadd.f32 0.0, %v4129
        %v4131 = vpop.f32.mrb[0].mxu0
        %v4132 = vpop.f32.mrb[0].mxu0
        %v4133 = vadd.f32 0.0, %v4132
        %v4134 = vpop.f32.mrb[0].mxu0
        %4135 = vmatprep.mubr.bf16.mxu0 0
        %4136 = vmatmul.mubr.bf16.gmra.mrb[0].mxu0 %v3967
        %v4137 = vpop.f32.mrb[0].mxu0
        %v4138 = vadd.f32 0.0, %v4137
        %v4139 = vpop.f32.mrb[0].mxu0
        %v4140 = vpop.f32.mrb[0].mxu0
        %v4141 = vadd.f32 0.0, %v4140
        %v4142 = vpop.f32.mrb[0].mxu0
        %4143 = vmatprep.mubr.bf16.mxu0 0
        %4144 = vmatmul.mubr.bf16.gmra.mrb[0].mxu0 %v3968
        %v4145 = vpop.f32.mrb[0].mxu0
        %v4146 = vadd.f32 0.0, %v4145
        %v4147 = vpop.f32.mrb[0].mxu0
        %v4148 = vpop.f32.mrb[0].mxu0
        %v4149 = vadd.f32 0.0, %v4148
        %v4150 = vpop.f32.mrb[0].mxu0
        %4151 = vmatprep.mubr.bf16.mxu0 0
        %4152 = vmatmul.mubr.bf16.gmra.mrb[0].mxu0 %v3969
        %v4153 = vpop.f32.mrb[0].mxu0
        %v4154 = vadd.f32 0.0, %v4153
        %v4155 = vpop.f32.mrb[0].mxu0
        %v4156 = vpop.f32.mrb[0].mxu0
        %v4157 = vadd.f32 0.0, %v4156
        %v4158 = vpop.f32.mrb[0].mxu0
        %4159 = vmatprep.mubr.bf16.mxu0 0
        %4160 = vmatmul.mubr.bf16.gmra.mrb[0].mxu0 %v3970
        %v4161 = vpop.f32.mrb[0].mxu0
        %v4162 = vadd.f32 0.0, %v4161
        %v4163 = vpop.f32.mrb[0].mxu0
        %v4164 = vpop.f32.mrb[0].mxu0
        %v4165 = vadd.f32 0.0, %v4164
        %v4166 = vpop.f32.mrb[0].mxu0
        %4167 = vmatprep.mubr.bf16.mxu0 0
        %4168 = vmatmul.mubr.bf16.gmra.mrb[0].mxu0 %v3971
        %v4169 = vpop.f32.mrb[0].mxu0
        %v4170 = vadd.f32 0.0, %v4169
        %v4171 = vpop.f32.mrb[0].mxu0
        %v4172 = vpop.f32.mrb[0].mxu0
        %v4173 = vadd.f32 0.0, %v4172
        %v4174 = vpop.f32.mrb[0].mxu0
        %4175 = vmatprep.mubr.bf16.mxu0 0
        %4176 = vmatmul.mubr.bf16.gmra.mrb[0].mxu0 %v3972
        %v4177 = vpop.f32.mrb[0].mxu0
        %v4178 = vadd.f32 0.0, %v4177
        %v4179 = vpop.f32.mrb[0].mxu0
        %v4180 = vpop.f32.mrb[0].mxu0
        %v4181 = vadd.f32 0.0, %v4180
        %v4182 = vpop.f32.mrb[0].mxu0
        %4183 = vmatprep.mubr.bf16.mxu0 0
        %4184 = vmatmul.mubr.bf16.gmra.mrb[0].mxu0 %v3973
        %v4185 = vpop.f32.mrb[0].mxu0
        %v4186 = vadd.f32 0.0, %v4185
        %v4187 = vpop.f32.mrb[0].mxu0
        %v4188 = vpop.f32.mrb[0].mxu0
        %v4189 = vadd.f32 0.0, %v4188
        %v4190 = vpop.f32.mrb[0].mxu0
        %4191 = vmatprep.mubr.bf16.mxu0 0
        %4192 = vmatmul.mubr.bf16.gmra.mrb[0].mxu0 %v3974
        %v4193 = vpop.f32.mrb[0].mxu0
        %v4194 = vadd.f32 0.0, %v4193
        %v4195 = vpop.f32.mrb[0].mxu0
        %v4196 = vpop.f32.mrb[0].mxu0
        %v4197 = vadd.f32 0.0, %v4196
        %v4198 = vpop.f32.mrb[0].mxu0
        %4199 = vdwg.mxu0
        %v4200 = vld [vmem:[#allocation18] sm:$0x1]
        %v4202 = vlaneseq
        %v4203 = vshrl.u32 %v4202, 7
        %v4204 = vsub.s32 0, %v4203
        %v4205 = vrot.slane %v4200, %v4204
        %v4207 = vmul.f32 %v4074, %v4205
        %v4208 = vmul.f32 %v4077, %v4205
        %v4209 = vmul.f32 %v4082, %v4205
        %v4210 = vmul.f32 %v4085, %v4205
        %v4211 = vmul.f32 %v4090, %v4205
        %v4212 = vmul.f32 %v4093, %v4205
        %v4213 = vmul.f32 %v4098, %v4205
        %v4214 = vmul.f32 %v4101, %v4205
        %v4215 = vmul.f32 %v4106, %v4205
        %v4216 = vmul.f32 %v4109, %v4205
        %v4217 = vmul.f32 %v4114, %v4205
        %v4218 = vmul.f32 %v4117, %v4205
        %v4219 = vmul.f32 %v4122, %v4205
        %v4220 = vmul.f32 %v4125, %v4205
        %v4221 = vmul.f32 %v4130, %v4205
        %v4222 = vmul.f32 %v4133, %v4205
        %v4223 = vmul.f32 %v4138, %v4205
        %v4224 = vmul.f32 %v4141, %v4205
        %v4225 = vmul.f32 %v4146, %v4205
        %v4226 = vmul.f32 %v4149, %v4205
        %v4227 = vmul.f32 %v4154, %v4205
        %v4228 = vmul.f32 %v4157, %v4205
        %v4229 = vmul.f32 %v4162, %v4205
        %v4230 = vmul.f32 %v4165, %v4205
        %v4231 = vmul.f32 %v4170, %v4205
        %v4232 = vmul.f32 %v4173, %v4205
        %v4233 = vmul.f32 %v4178, %v4205
        %v4234 = vmul.f32 %v4181, %v4205
        %v4235 = vmul.f32 %v4186, %v4205
        %v4236 = vmul.f32 %v4189, %v4205
        %v4237 = vmul.f32 %v4194, %v4205
        %v4238 = vmul.f32 %v4197, %v4205
        %v4239 = vld [vmem:[#allocation20] sm:$0x1]
        %v4241 = vlaneseq
        %v4242 = vshrl.u32 %v4241, 7
        %v4243 = vsub.s32 0, %v4242
        %v4244 = vrot.slane %v4239, %v4243
        %v4246 = vadd.f32 %v4207, %v4244
        %v4247 = vadd.f32 %v4208, %v4244
        %v4248 = vadd.f32 %v4209, %v4244
        %v4249 = vadd.f32 %v4210, %v4244
        %v4250 = vadd.f32 %v4211, %v4244
        %v4251 = vadd.f32 %v4212, %v4244
        %v4252 = vadd.f32 %v4213, %v4244
        %v4253 = vadd.f32 %v4214, %v4244
        %v4254 = vadd.f32 %v4215, %v4244
        %v4255 = vadd.f32 %v4216, %v4244
        %v4256 = vadd.f32 %v4217, %v4244
        %v4257 = vadd.f32 %v4218, %v4244
        %v4258 = vadd.f32 %v4219, %v4244
        %v4259 = vadd.f32 %v4220, %v4244
        %v4260 = vadd.f32 %v4221, %v4244
        %v4261 = vadd.f32 %v4222, %v4244
        %v4262 = vadd.f32 %v4223, %v4244
        %v4263 = vadd.f32 %v4224, %v4244
        %v4264 = vadd.f32 %v4225, %v4244
        %v4265 = vadd.f32 %v4226, %v4244
        %v4266 = vadd.f32 %v4227, %v4244
        %v4267 = vadd.f32 %v4228, %v4244
        %v4268 = vadd.f32 %v4229, %v4244
        %v4269 = vadd.f32 %v4230, %v4244
        %v4270 = vadd.f32 %v4231, %v4244
        %v4271 = vadd.f32 %v4232, %v4244
        %v4272 = vadd.f32 %v4233, %v4244
        %v4273 = vadd.f32 %v4234, %v4244
        %v4274 = vadd.f32 %v4235, %v4244
        %v4275 = vadd.f32 %v4236, %v4244
        %v4276 = vadd.f32 %v4237, %v4244
        %v4277 = vadd.f32 %v4238, %v4244
        %v4278 = vxor.u32 %v4246, 2147483648
        %v4279 = vxor.u32 %v4247, 2147483648
        %v4280 = vxor.u32 %v4248, 2147483648
        %v4281 = vxor.u32 %v4249, 2147483648
        %v4282 = vxor.u32 %v4250, 2147483648
        %v4283 = vxor.u32 %v4251, 2147483648
        %v4284 = vxor.u32 %v4252, 2147483648
        %v4285 = vxor.u32 %v4253, 2147483648
        %v4286 = vxor.u32 %v4254, 2147483648
        %v4287 = vxor.u32 %v4255, 2147483648
        %v4288 = vxor.u32 %v4256, 2147483648
        %v4289 = vxor.u32 %v4257, 2147483648
        %v4290 = vxor.u32 %v4258, 2147483648
        %v4291 = vxor.u32 %v4259, 2147483648
        %v4292 = vxor.u32 %v4260, 2147483648
        %v4293 = vxor.u32 %v4261, 2147483648
        %v4294 = vxor.u32 %v4262, 2147483648
        %v4295 = vxor.u32 %v4263, 2147483648
        %v4296 = vxor.u32 %v4264, 2147483648
        %v4297 = vxor.u32 %v4265, 2147483648
        %v4298 = vxor.u32 %v4266, 2147483648
        %v4299 = vxor.u32 %v4267, 2147483648
        %v4300 = vxor.u32 %v4268, 2147483648
        %v4301 = vxor.u32 %v4269, 2147483648
        %v4302 = vxor.u32 %v4270, 2147483648
        %v4303 = vxor.u32 %v4271, 2147483648
        %v4304 = vxor.u32 %v4272, 2147483648
        %v4305 = vxor.u32 %v4273, 2147483648
        %v4306 = vxor.u32 %v4274, 2147483648
        %v4307 = vxor.u32 %v4275, 2147483648
        %v4308 = vxor.u32 %v4276, 2147483648
        %v4309 = vxor.u32 %v4277, 2147483648
        %v4310 = vmul.f32 %v4278, 1.442695
        %v4311 = vpow.pop %v4310
        %v4312 = vmul.f32 %v4279, 1.442695
        %v4313 = vpow.pop %v4312
        %v4314 = vmul.f32 %v4280, 1.442695
        %v4315 = vpow.pop %v4314
        %v4316 = vmul.f32 %v4281, 1.442695
        %v4317 = vpow.pop %v4316
        %v4318 = vmul.f32 %v4282, 1.442695
        %v4319 = vpow.pop %v4318
        %v4320 = vmul.f32 %v4283, 1.442695
        %v4321 = vpow.pop %v4320
        %v4322 = vmul.f32 %v4284, 1.442695
        %v4323 = vpow.pop %v4322
        %v4324 = vmul.f32 %v4285, 1.442695
        %v4325 = vpow.pop %v4324
        %v4326 = vmul.f32 %v4286, 1.442695
        %v4327 = vpow.pop %v4326
        %v4328 = vmul.f32 %v4287, 1.442695
        %v4329 = vpow.pop %v4328
        %v4330 = vmul.f32 %v4288, 1.442695
        %v4331 = vpow.pop %v4330
        %v4332 = vmul.f32 %v4289, 1.442695
        %v4333 = vpow.pop %v4332
        %v4334 = vmul.f32 %v4290, 1.442695
        %v4335 = vpow.pop %v4334
        %v4336 = vmul.f32 %v4291, 1.442695
        %v4337 = vpow.pop %v4336
        %v4338 = vmul.f32 %v4292, 1.442695
        %v4339 = vpow.pop %v4338
        %v4340 = vmul.f32 %v4293, 1.442695
        %v4341 = vpow.pop %v4340
        %v4342 = vmul.f32 %v4294, 1.442695
        %v4343 = vpow.pop %v4342
        %v4344 = vmul.f32 %v4295, 1.442695
        %v4345 = vpow.pop %v4344
        %v4346 = vmul.f32 %v4296, 1.442695
        %v4347 = vpow.pop %v4346
        %v4348 = vmul.f32 %v4297, 1.442695
        %v4349 = vpow.pop %v4348
        %v4350 = vmul.f32 %v4298, 1.442695
        %v4351 = vpow.pop %v4350
        %v4352 = vmul.f32 %v4299, 1.442695
        %v4353 = vpow.pop %v4352
        %v4354 = vmul.f32 %v4300, 1.442695
        %v4355 = vpow.pop %v4354
        %v4356 = vmul.f32 %v4301, 1.442695
        %v4357 = vpow.pop %v4356
        %v4358 = vmul.f32 %v4302, 1.442695
        %v4359 = vpow.pop %v4358
        %v4360 = vmul.f32 %v4303, 1.442695
        %v4361 = vpow.pop %v4360
        %v4362 = vmul.f32 %v4304, 1.442695
        %v4363 = vpow.pop %v4362
        %v4364 = vmul.f32 %v4305, 1.442695
        %v4365 = vpow.pop %v4364
        %v4366 = vmul.f32 %v4306, 1.442695
        %v4367 = vpow.pop %v4366
        %v4368 = vmul.f32 %v4307, 1.442695
        %v4369 = vpow.pop %v4368
        %v4370 = vmul.f32 %v4308, 1.442695
        %v4371 = vpow.pop %v4370
        %v4372 = vmul.f32 %v4309, 1.442695
        %v4373 = vpow.pop %v4372
        %v4374 = vadd.f32 %v4311, 1.0
        %v4375 = vadd.f32 %v4313, 1.0
        %v4376 = vadd.f32 %v4315, 1.0
        %v4377 = vadd.f32 %v4317, 1.0
        %v4378 = vadd.f32 %v4319, 1.0
        %v4379 = vadd.f32 %v4321, 1.0
        %v4380 = vadd.f32 %v4323, 1.0
        %v4381 = vadd.f32 %v4325, 1.0
        %v4382 = vadd.f32 %v4327, 1.0
        %v4383 = vadd.f32 %v4329, 1.0
        %v4384 = vadd.f32 %v4331, 1.0
        %v4385 = vadd.f32 %v4333, 1.0
        %v4386 = vadd.f32 %v4335, 1.0
        %v4387 = vadd.f32 %v4337, 1.0
        %v4388 = vadd.f32 %v4339, 1.0
        %v4389 = vadd.f32 %v4341, 1.0
        %v4390 = vadd.f32 %v4343, 1.0
        %v4391 = vadd.f32 %v4345, 1.0
        %v4392 = vadd.f32 %v4347, 1.0
        %v4393 = vadd.f32 %v4349, 1.0
        %v4394 = vadd.f32 %v4351, 1.0
        %v4395 = vadd.f32 %v4353, 1.0
        %v4396 = vadd.f32 %v4355, 1.0
        %v4397 = vadd.f32 %v4357, 1.0
        %v4398 = vadd.f32 %v4359, 1.0
        %v4399 = vadd.f32 %v4361, 1.0
        %v4400 = vadd.f32 %v4363, 1.0
        %v4401 = vadd.f32 %v4365, 1.0
        %v4402 = vadd.f32 %v4367, 1.0
        %v4403 = vadd.f32 %v4369, 1.0
        %v4404 = vadd.f32 %v4371, 1.0
        %v4405 = vadd.f32 %v4373, 1.0
        %v4406 = vrcp.pop %v4374
        %v4407 = vmul.f32 1.0, %v4406
        %v4408 = vrcp.pop %v4375
        %v4409 = vmul.f32 1.0, %v4408
        %v4410 = vrcp.pop %v4376
        %v4411 = vmul.f32 1.0, %v4410
        %v4412 = vrcp.pop %v4377
        %v4413 = vmul.f32 1.0, %v4412
        %v4414 = vrcp.pop %v4378
        %v4415 = vmul.f32 1.0, %v4414
        %v4416 = vrcp.pop %v4379
        %v4417 = vmul.f32 1.0, %v4416
        %v4418 = vrcp.pop %v4380
        %v4419 = vmul.f32 1.0, %v4418
        %v4420 = vrcp.pop %v4381
        %v4421 = vmul.f32 1.0, %v4420
        %v4422 = vrcp.pop %v4382
        %v4423 = vmul.f32 1.0, %v4422
        %v4424 = vrcp.pop %v4383
        %v4425 = vmul.f32 1.0, %v4424
        %v4426 = vrcp.pop %v4384
        %v4427 = vmul.f32 1.0, %v4426
        %v4428 = vrcp.pop %v4385
        %v4429 = vmul.f32 1.0, %v4428
        %v4430 = vrcp.pop %v4386
        %v4431 = vmul.f32 1.0, %v4430
        %v4432 = vrcp.pop %v4387
        %v4433 = vmul.f32 1.0, %v4432
        %v4434 = vrcp.pop %v4388
        %v4435 = vmul.f32 1.0, %v4434
        %v4436 = vrcp.pop %v4389
        %v4437 = vmul.f32 1.0, %v4436
        %v4438 = vrcp.pop %v4390
        %v4439 = vmul.f32 1.0, %v4438
        %v4440 = vrcp.pop %v4391
        %v4441 = vmul.f32 1.0, %v4440
        %v4442 = vrcp.pop %v4392
        %v4443 = vmul.f32 1.0, %v4442
        %v4444 = vrcp.pop %v4393
        %v4445 = vmul.f32 1.0, %v4444
        %v4446 = vrcp.pop %v4394
        %v4447 = vmul.f32 1.0, %v4446
        %v4448 = vrcp.pop %v4395
        %v4449 = vmul.f32 1.0, %v4448
        %v4450 = vrcp.pop %v4396
        %v4451 = vmul.f32 1.0, %v4450
        %v4452 = vrcp.pop %v4397
        %v4453 = vmul.f32 1.0, %v4452
        %v4454 = vrcp.pop %v4398
        %v4455 = vmul.f32 1.0, %v4454
        %v4456 = vrcp.pop %v4399
        %v4457 = vmul.f32 1.0, %v4456
        %v4458 = vrcp.pop %v4400
        %v4459 = vmul.f32 1.0, %v4458
        %v4460 = vrcp.pop %v4401
        %v4461 = vmul.f32 1.0, %v4460
        %v4462 = vrcp.pop %v4402
        %v4463 = vmul.f32 1.0, %v4462
        %v4464 = vrcp.pop %v4403
        %v4465 = vmul.f32 1.0, %v4464
        %v4466 = vrcp.pop %v4404
        %v4467 = vmul.f32 1.0, %v4466
        %v4468 = vrcp.pop %v4405
        %v4469 = vmul.f32 1.0, %v4468
        %v4470 = vmul.f32 %v4246, %v4407
        %v4471 = vmul.f32 %v4247, %v4409
        %v4472 = vmul.f32 %v4248, %v4411
        %v4473 = vmul.f32 %v4249, %v4413
        %v4474 = vmul.f32 %v4250, %v4415
        %v4475 = vmul.f32 %v4251, %v4417
        %v4476 = vmul.f32 %v4252, %v4419
        %v4477 = vmul.f32 %v4253, %v4421
        %v4478 = vmul.f32 %v4254, %v4423
        %v4479 = vmul.f32 %v4255, %v4425
        %v4480 = vmul.f32 %v4256, %v4427
        %v4481 = vmul.f32 %v4257, %v4429
        %v4482 = vmul.f32 %v4258, %v4431
        %v4483 = vmul.f32 %v4259, %v4433
        %v4484 = vmul.f32 %v4260, %v4435
        %v4485 = vmul.f32 %v4261, %v4437
        %v4486 = vmul.f32 %v4262, %v4439
        %v4487 = vmul.f32 %v4263, %v4441
        %v4488 = vmul.f32 %v4264, %v4443
        %v4489 = vmul.f32 %v4265, %v4445
        %v4490 = vmul.f32 %v4266, %v4447
        %v4491 = vmul.f32 %v4267, %v4449
        %v4492 = vmul.f32 %v4268, %v4451
        %v4493 = vmul.f32 %v4269, %v4453
        %v4494 = vmul.f32 %v4270, %v4455
        %v4495 = vmul.f32 %v4271, %v4457
        %v4496 = vmul.f32 %v4272, %v4459
        %v4497 = vmul.f32 %v4273, %v4461
        %v4498 = vmul.f32 %v4274, %v4463
        %v4499 = vmul.f32 %v4275, %v4465
        %v4500 = vmul.f32 %v4276, %v4467
        %v4501 = vmul.f32 %v4277, %v4469
        %4502 = vst [vmem:[%s645 + $0x8] sm:$0xff] %v4470
        %4503 = vst [vmem:[%s645 + $0x10] sm:$0xff] %v4471
        %4504 = vst [vmem:[%s645 + $0x28] sm:$0xff] %v4472
        %4505 = vst [vmem:[%s645 + $0x30] sm:$0xff] %v4473
        %4506 = vst [vmem:[%s645 + $0x48] sm:$0xff] %v4474
        %4507 = vst [vmem:[%s645 + $0x50] sm:$0xff] %v4475
        %4508 = vst [vmem:[%s645 + $0x68] sm:$0xff] %v4476
        %4509 = vst [vmem:[%s645 + $0x70] sm:$0xff] %v4477
        %4510 = vst [vmem:[%s645 + $0x88] sm:$0xff] %v4478
        %4511 = vst [vmem:[%s645 + $0x90] sm:$0xff] %v4479
        %4512 = vst [vmem:[%s645 + $0xa8] sm:$0xff] %v4480
        %4513 = vst [vmem:[%s645 + $0xb0] sm:$0xff] %v4481
        %4514 = vst [vmem:[%s645 + $0xc8] sm:$0xff] %v4482
        %4515 = vst [vmem:[%s645 + $0xd0] sm:$0xff] %v4483
        %4516 = vst [vmem:[%s645 + $0xe8] sm:$0xff] %v4484
        %4517 = vst [vmem:[%s645 + $0xf0] sm:$0xff] %v4485
        %4518 = vst [vmem:[%s645 + $0x108] sm:$0xff] %v4486
        %4519 = vst [vmem:[%s645 + $0x110] sm:$0xff] %v4487
        %4520 = vst [vmem:[%s645 + $0x128] sm:$0xff] %v4488
        %4521 = vst [vmem:[%s645 + $0x130] sm:$0xff] %v4489
        %4522 = vst [vmem:[%s645 + $0x148] sm:$0xff] %v4490
        %4523 = vst [vmem:[%s645 + $0x150] sm:$0xff] %v4491
        %4524 = vst [vmem:[%s645 + $0x168] sm:$0xff] %v4492
        %4525 = vst [vmem:[%s645 + $0x170] sm:$0xff] %v4493
        %4526 = vst [vmem:[%s645 + $0x188] sm:$0xff] %v4494
        %4527 = vst [vmem:[%s645 + $0x190] sm:$0xff] %v4495
        %4528 = vst [vmem:[%s645 + $0x1a8] sm:$0xff] %v4496
        %4529 = vst [vmem:[%s645 + $0x1b0] sm:$0xff] %v4497
        %4530 = vst [vmem:[%s645 + $0x1c8] sm:$0xff] %v4498
        %4531 = vst [vmem:[%s645 + $0x1d0] sm:$0xff] %v4499
        %4532 = vst [vmem:[%s645 + $0x1e8] sm:$0xff] %v4500
        %4533 = vst [vmem:[%s645 + $0x1f0] sm:$0xff] %v4501
        %v4534 = vld [vmem:[#allocation21] sm:$0xff]
        %v4535 = vld [vmem:[#allocation21 + $0x8] sm:$0xff]
        %v4536 = vld [vmem:[#allocation21 + $0x10] sm:$0xff]
        %v4537 = vld [vmem:[#allocation21 + $0x18] sm:$0xff]
        %v4538 = vld [vmem:[#allocation21 + $0x20] sm:$0xff]
        %v4539 = vld [vmem:[#allocation21 + $0x28] sm:$0xff]
        %v4540 = vld [vmem:[#allocation21 + $0x30] sm:$0x1]
        %v4541 = vld [vmem:[#allocation2 + $0x5] sm:$0xff]
        %v4542 = vld [vmem:[#allocation2 + $0xd] sm:$0xff]
        %v4543 = vld [vmem:[#allocation2 + $0x25] sm:$0xff]
        %v4544 = vld [vmem:[#allocation2 + $0x2d] sm:$0xff]
        %v4545 = vld [vmem:[#allocation2 + $0x45] sm:$0xff]
        %v4546 = vld [vmem:[#allocation2 + $0x4d] sm:$0xff]
        %v4547 = vld [vmem:[#allocation2 + $0x65] sm:$0xff]
        %v4548 = vld [vmem:[#allocation2 + $0x6d] sm:$0xff]
        %v4549 = vld [vmem:[#allocation2 + $0x85] sm:$0xff]
        %v4550 = vld [vmem:[#allocation2 + $0x8d] sm:$0xff]
        %v4551 = vld [vmem:[#allocation2 + $0xa5] sm:$0xff]
        %v4552 = vld [vmem:[#allocation2 + $0xad] sm:$0xff]
        %v4553 = vld [vmem:[#allocation2 + $0xc5] sm:$0xff]
        %v4554 = vld [vmem:[#allocation2 + $0xcd] sm:$0xff]
        %v4555 = vld [vmem:[#allocation2 + $0xe5] sm:$0xff]
        %v4556 = vld [vmem:[#allocation2 + $0xed] sm:$0xff]
        %v4557 = vld [vmem:[#allocation2 + $0x105] sm:$0xff]
        %v4558 = vld [vmem:[#allocation2 + $0x10d] sm:$0xff]
        %v4559 = vld [vmem:[#allocation2 + $0x125] sm:$0xff]
        %v4560 = vld [vmem:[#allocation2 + $0x12d] sm:$0xff]
        %v4561 = vld [vmem:[#allocation2 + $0x145] sm:$0xff]
        %v4562 = vld [vmem:[#allocation2 + $0x14d] sm:$0xff]
        %v4563 = vld [vmem:[#allocation2 + $0x165] sm:$0xff]
        %v4564 = vld [vmem:[#allocation2 + $0x16d] sm:$0xff]
        %v4565 = vld [vmem:[#allocation2 + $0x185] sm:$0xff]
        %v4566 = vld [vmem:[#allocation2 + $0x18d] sm:$0xff]
        %v4567 = vld [vmem:[#allocation2 + $0x1a5] sm:$0xff]
        %v4568 = vld [vmem:[#allocation2 + $0x1ad] sm:$0xff]
        %v4569 = vld [vmem:[#allocation2 + $0x1c5] sm:$0xff]
        %v4570 = vld [vmem:[#allocation2 + $0x1cd] sm:$0xff]
        %v4571 = vld [vmem:[#allocation2 + $0x1e5] sm:$0xff]
        %v4572 = vld [vmem:[#allocation2 + $0x1ed] sm:$0xff]
        %v4573 = vld [vmem:[#allocation2 + $0x205] sm:$0xff]
        %v4574 = vld [vmem:[#allocation2 + $0x20d] sm:$0xff]
        %v4575 = vld [vmem:[#allocation2 + $0x225] sm:$0xff]
        %v4576 = vld [vmem:[#allocation2 + $0x22d] sm:$0xff]
        %v4577 = vld [vmem:[#allocation2 + $0x245] sm:$0xff]
        %v4578 = vld [vmem:[#allocation2 + $0x24d] sm:$0xff]
        %v4579 = vld [vmem:[#allocation2 + $0x265] sm:$0xff]
        %v4580 = vld [vmem:[#allocation2 + $0x26d] sm:$0xff]
        %v4581 = vld [vmem:[#allocation2 + $0x285] sm:$0xff]
        %v4582 = vld [vmem:[#allocation2 + $0x28d] sm:$0xff]
        %v4583 = vld [vmem:[#allocation2 + $0x2a5] sm:$0xff]
        %v4584 = vld [vmem:[#allocation2 + $0x2ad] sm:$0xff]
        %v4585 = vlaneseq
        %v4586 = vshrl.u32 %v4585, 7
        %v4587 = vsub.s32 0, %v4586
        %v4588 = vrot.slane %v4534, %v4587
        %v4589 = vmul.f32 %v4541, %v4588
        %v4590 = vmul.f32 %v4542, %v4588
        %v4591 = vmul.f32 %v4543, %v4588
        %v4592 = vmul.f32 %v4544, %v4588
        %v4593 = vmul.f32 %v4545, %v4588
        %v4594 = vmul.f32 %v4546, %v4588
        %v4595 = vmul.f32 %v4547, %v4588
        %v4596 = vmul.f32 %v4548, %v4588
        %v4597 = vmul.f32 %v4549, %v4588
        %v4598 = vmul.f32 %v4550, %v4588
        %v4599 = vmul.f32 %v4551, %v4588
        %v4600 = vmul.f32 %v4552, %v4588
        %v4601 = vmul.f32 %v4553, %v4588
        %v4602 = vmul.f32 %v4554, %v4588
        %v4603 = vmul.f32 %v4555, %v4588
        %v4604 = vmul.f32 %v4556, %v4588
        %v4605 = vmul.f32 %v4557, %v4588
        %v4606 = vmul.f32 %v4558, %v4588
        %v4607 = vmul.f32 %v4559, %v4588
        %v4608 = vmul.f32 %v4560, %v4588
        %v4609 = vmul.f32 %v4561, %v4588
        %v4610 = vmul.f32 %v4562, %v4588
        %v4611 = vmul.f32 %v4563, %v4588
        %v4612 = vmul.f32 %v4564, %v4588
        %v4613 = vmul.f32 %v4565, %v4588
        %v4614 = vmul.f32 %v4566, %v4588
        %v4615 = vmul.f32 %v4567, %v4588
        %v4616 = vmul.f32 %v4568, %v4588
        %v4617 = vmul.f32 %v4569, %v4588
        %v4618 = vmul.f32 %v4570, %v4588
        %v4619 = vmul.f32 %v4571, %v4588
        %v4620 = vmul.f32 %v4572, %v4588
        %v4621 = vlaneseq
        %v4622 = vshrl.u32 %v4621, 7
        %v4623 = vsub.s32 7, %v4622
        %v4624 = vrot.slane %v4534, %v4623
        %v4625 = vmul.f32 %v4543, %v4624
        %v4626 = vmul.f32 %v4544, %v4624
        %v4627 = vmul.f32 %v4545, %v4624
        %v4628 = vmul.f32 %v4546, %v4624
        %v4629 = vmul.f32 %v4547, %v4624
        %v4630 = vmul.f32 %v4548, %v4624
        %v4631 = vmul.f32 %v4549, %v4624
        %v4632 = vmul.f32 %v4550, %v4624
        %v4633 = vmul.f32 %v4551, %v4624
        %v4634 = vmul.f32 %v4552, %v4624
        %v4635 = vmul.f32 %v4553, %v4624
        %v4636 = vmul.f32 %v4554, %v4624
        %v4637 = vmul.f32 %v4555, %v4624
        %v4638 = vmul.f32 %v4556, %v4624
        %v4639 = vmul.f32 %v4557, %v4624
        %v4640 = vmul.f32 %v4558, %v4624
        %v4641 = vmul.f32 %v4559, %v4624
        %v4642 = vmul.f32 %v4560, %v4624
        %v4643 = vmul.f32 %v4561, %v4624
        %v4644 = vmul.f32 %v4562, %v4624
        %v4645 = vmul.f32 %v4563, %v4624
        %v4646 = vmul.f32 %v4564, %v4624
        %v4647 = vmul.f32 %v4565, %v4624
        %v4648 = vmul.f32 %v4566, %v4624
        %v4649 = vmul.f32 %v4567, %v4624
        %v4650 = vmul.f32 %v4568, %v4624
        %v4651 = vmul.f32 %v4569, %v4624
        %v4652 = vmul.f32 %v4570, %v4624
        %v4653 = vmul.f32 %v4571, %v4624
        %v4654 = vmul.f32 %v4572, %v4624
        %v4655 = vmul.f32 %v4573, %v4624
        %v4656 = vmul.f32 %v4574, %v4624
        %v4657 = vadd.f32 %v4589, %v4625
        %v4658 = vadd.f32 %v4590, %v4626
        %v4659 = vadd.f32 %v4591, %v4627
        %v4660 = vadd.f32 %v4592, %v4628
        %v4661 = vadd.f32 %v4593, %v4629
        %v4662 = vadd.f32 %v4594, %v4630
        %v4663 = vadd.f32 %v4595, %v4631
        %v4664 = vadd.f32 %v4596, %v4632
        %v4665 = vadd.f32 %v4597, %v4633
        %v4666 = vadd.f32 %v4598, %v4634
        %v4667 = vadd.f32 %v4599, %v4635
        %v4668 = vadd.f32 %v4600, %v4636
        %v4669 = vadd.f32 %v4601, %v4637
        %v4670 = vadd.f32 %v4602, %v4638
        %v4671 = vadd.f32 %v4603, %v4639
        %v4672 = vadd.f32 %v4604, %v4640
        %v4673 = vadd.f32 %v4605, %v4641
        %v4674 = vadd.f32 %v4606, %v4642
        %v4675 = vadd.f32 %v4607, %v4643
        %v4676 = vadd.f32 %v4608, %v4644
        %v4677 = vadd.f32 %v4609, %v4645
        %v4678 = vadd.f32 %v4610, %v4646
        %v4679 = vadd.f32 %v4611, %v4647
        %v4680 = vadd.f32 %v4612, %v4648
        %v4681 = vadd.f32 %v4613, %v4649
        %v4682 = vadd.f32 %v4614, %v4650
        %v4683 = vadd.f32 %v4615, %v4651
        %v4684 = vadd.f32 %v4616, %v4652
        %v4685 = vadd.f32 %v4617, %v4653
        %v4686 = vadd.f32 %v4618, %v4654
        %v4687 = vadd.f32 %v4619, %v4655
        %v4688 = vadd.f32 %v4620, %v4656
        %v4689 = vlaneseq
        %v4690 = vshrl.u32 %v4689, 7
        %v4691 = vsub.s32 6, %v4690
        %v4692 = vrot.slane %v4535, %v4691
        %v4693 = vmul.f32 %v4545, %v4692
        %v4694 = vmul.f32 %v4546, %v4692
        %v4695 = vmul.f32 %v4547, %v4692
        %v4696 = vmul.f32 %v4548, %v4692
        %v4697 = vmul.f32 %v4549, %v4692
        %v4698 = vmul.f32 %v4550, %v4692
        %v4699 = vmul.f32 %v4551, %v4692
        %v4700 = vmul.f32 %v4552, %v4692
        %v4701 = vmul.f32 %v4553, %v4692
        %v4702 = vmul.f32 %v4554, %v4692
        %v4703 = vmul.f32 %v4555, %v4692
        %v4704 = vmul.f32 %v4556, %v4692
        %v4705 = vmul.f32 %v4557, %v4692
        %v4706 = vmul.f32 %v4558, %v4692
        %v4707 = vmul.f32 %v4559, %v4692
        %v4708 = vmul.f32 %v4560, %v4692
        %v4709 = vmul.f32 %v4561, %v4692
        %v4710 = vmul.f32 %v4562, %v4692
        %v4711 = vmul.f32 %v4563, %v4692
        %v4712 = vmul.f32 %v4564, %v4692
        %v4713 = vmul.f32 %v4565, %v4692
        %v4714 = vmul.f32 %v4566, %v4692
        %v4715 = vmul.f32 %v4567, %v4692
        %v4716 = vmul.f32 %v4568, %v4692
        %v4717 = vmul.f32 %v4569, %v4692
        %v4718 = vmul.f32 %v4570, %v4692
        %v4719 = vmul.f32 %v4571, %v4692
        %v4720 = vmul.f32 %v4572, %v4692
        %v4721 = vmul.f32 %v4573, %v4692
        %v4722 = vmul.f32 %v4574, %v4692
        %v4723 = vmul.f32 %v4575, %v4692
        %v4724 = vmul.f32 %v4576, %v4692
        %v4725 = vadd.f32 %v4657, %v4693
        %v4726 = vadd.f32 %v4658, %v4694
        %v4727 = vadd.f32 %v4659, %v4695
        %v4728 = vadd.f32 %v4660, %v4696
        %v4729 = vadd.f32 %v4661, %v4697
        %v4730 = vadd.f32 %v4662, %v4698
        %v4731 = vadd.f32 %v4663, %v4699
        %v4732 = vadd.f32 %v4664, %v4700
        %v4733 = vadd.f32 %v4665, %v4701
        %v4734 = vadd.f32 %v4666, %v4702
        %v4735 = vadd.f32 %v4667, %v4703
        %v4736 = vadd.f32 %v4668, %v4704
        %v4737 = vadd.f32 %v4669, %v4705
        %v4738 = vadd.f32 %v4670, %v4706
        %v4739 = vadd.f32 %v4671, %v4707
        %v4740 = vadd.f32 %v4672, %v4708
        %v4741 = vadd.f32 %v4673, %v4709
        %v4742 = vadd.f32 %v4674, %v4710
        %v4743 = vadd.f32 %v4675, %v4711
        %v4744 = vadd.f32 %v4676, %v4712
        %v4745 = vadd.f32 %v4677, %v4713
        %v4746 = vadd.f32 %v4678, %v4714
        %v4747 = vadd.f32 %v4679, %v4715
        %v4748 = vadd.f32 %v4680, %v4716
        %v4749 = vadd.f32 %v4681, %v4717
        %v4750 = vadd.f32 %v4682, %v4718
        %v4751 = vadd.f32 %v4683, %v4719
        %v4752 = vadd.f32 %v4684, %v4720
        %v4753 = vadd.f32 %v4685, %v4721
        %v4754 = vadd.f32 %v4686, %v4722
        %v4755 = vadd.f32 %v4687, %v4723
        %v4756 = vadd.f32 %v4688, %v4724
        %v4757 = vlaneseq
        %v4758 = vshrl.u32 %v4757, 7
        %v4759 = vsub.s32 5, %v4758
        %v4760 = vrot.slane %v4536, %v4759
        %v4761 = vmul.f32 %v4547, %v4760
        %v4762 = vmul.f32 %v4548, %v4760
        %v4763 = vmul.f32 %v4549, %v4760
        %v4764 = vmul.f32 %v4550, %v4760
        %v4765 = vmul.f32 %v4551, %v4760
        %v4766 = vmul.f32 %v4552, %v4760
        %v4767 = vmul.f32 %v4553, %v4760
        %v4768 = vmul.f32 %v4554, %v4760
        %v4769 = vmul.f32 %v4555, %v4760
        %v4770 = vmul.f32 %v4556, %v4760
        %v4771 = vmul.f32 %v4557, %v4760
        %v4772 = vmul.f32 %v4558, %v4760
        %v4773 = vmul.f32 %v4559, %v4760
        %v4774 = vmul.f32 %v4560, %v4760
        %v4775 = vmul.f32 %v4561, %v4760
        %v4776 = vmul.f32 %v4562, %v4760
        %v4777 = vmul.f32 %v4563, %v4760
        %v4778 = vmul.f32 %v4564, %v4760
        %v4779 = vmul.f32 %v4565, %v4760
        %v4780 = vmul.f32 %v4566, %v4760
        %v4781 = vmul.f32 %v4567, %v4760
        %v4782 = vmul.f32 %v4568, %v4760
        %v4783 = vmul.f32 %v4569, %v4760
        %v4784 = vmul.f32 %v4570, %v4760
        %v4785 = vmul.f32 %v4571, %v4760
        %v4786 = vmul.f32 %v4572, %v4760
        %v4787 = vmul.f32 %v4573, %v4760
        %v4788 = vmul.f32 %v4574, %v4760
        %v4789 = vmul.f32 %v4575, %v4760
        %v4790 = vmul.f32 %v4576, %v4760
        %v4791 = vmul.f32 %v4577, %v4760
        %v4792 = vmul.f32 %v4578, %v4760
        %v4793 = vadd.f32 %v4725, %v4761
        %v4794 = vadd.f32 %v4726, %v4762
        %v4795 = vadd.f32 %v4727, %v4763
        %v4796 = vadd.f32 %v4728, %v4764
        %v4797 = vadd.f32 %v4729, %v4765
        %v4798 = vadd.f32 %v4730, %v4766
        %v4799 = vadd.f32 %v4731, %v4767
        %v4800 = vadd.f32 %v4732, %v4768
        %v4801 = vadd.f32 %v4733, %v4769
        %v4802 = vadd.f32 %v4734, %v4770
        %v4803 = vadd.f32 %v4735, %v4771
        %v4804 = vadd.f32 %v4736, %v4772
        %v4805 = vadd.f32 %v4737, %v4773
        %v4806 = vadd.f32 %v4738, %v4774
        %v4807 = vadd.f32 %v4739, %v4775
        %v4808 = vadd.f32 %v4740, %v4776
        %v4809 = vadd.f32 %v4741, %v4777
        %v4810 = vadd.f32 %v4742, %v4778
        %v4811 = vadd.f32 %v4743, %v4779
        %v4812 = vadd.f32 %v4744, %v4780
        %v4813 = vadd.f32 %v4745, %v4781
        %v4814 = vadd.f32 %v4746, %v4782
        %v4815 = vadd.f32 %v4747, %v4783
        %v4816 = vadd.f32 %v4748, %v4784
        %v4817 = vadd.f32 %v4749, %v4785
        %v4818 = vadd.f32 %v4750, %v4786
        %v4819 = vadd.f32 %v4751, %v4787
        %v4820 = vadd.f32 %v4752, %v4788
        %v4821 = vadd.f32 %v4753, %v4789
        %v4822 = vadd.f32 %v4754, %v4790
        %v4823 = vadd.f32 %v4755, %v4791
        %v4824 = vadd.f32 %v4756, %v4792
        %v4825 = vlaneseq
        %v4826 = vshrl.u32 %v4825, 7
        %v4827 = vsub.s32 4, %v4826
        %v4828 = vrot.slane %v4537, %v4827
        %v4829 = vmul.f32 %v4549, %v4828
        %v4830 = vmul.f32 %v4550, %v4828
        %v4831 = vmul.f32 %v4551, %v4828
        %v4832 = vmul.f32 %v4552, %v4828
        %v4833 = vmul.f32 %v4553, %v4828
        %v4834 = vmul.f32 %v4554, %v4828
        %v4835 = vmul.f32 %v4555, %v4828
        %v4836 = vmul.f32 %v4556, %v4828
        %v4837 = vmul.f32 %v4557, %v4828
        %v4838 = vmul.f32 %v4558, %v4828
        %v4839 = vmul.f32 %v4559, %v4828
        %v4840 = vmul.f32 %v4560, %v4828
        %v4841 = vmul.f32 %v4561, %v4828
        %v4842 = vmul.f32 %v4562, %v4828
        %v4843 = vmul.f32 %v4563, %v4828
        %v4844 = vmul.f32 %v4564, %v4828
        %v4845 = vmul.f32 %v4565, %v4828
        %v4846 = vmul.f32 %v4566, %v4828
        %v4847 = vmul.f32 %v4567, %v4828
        %v4848 = vmul.f32 %v4568, %v4828
        %v4849 = vmul.f32 %v4569, %v4828
        %v4850 = vmul.f32 %v4570, %v4828
        %v4851 = vmul.f32 %v4571, %v4828
        %v4852 = vmul.f32 %v4572, %v4828
        %v4853 = vmul.f32 %v4573, %v4828
        %v4854 = vmul.f32 %v4574, %v4828
        %v4855 = vmul.f32 %v4575, %v4828
        %v4856 = vmul.f32 %v4576, %v4828
        %v4857 = vmul.f32 %v4577, %v4828
        %v4858 = vmul.f32 %v4578, %v4828
        %v4859 = vmul.f32 %v4579, %v4828
        %v4860 = vmul.f32 %v4580, %v4828
        %v4861 = vadd.f32 %v4793, %v4829
        %v4862 = vadd.f32 %v4794, %v4830
        %v4863 = vadd.f32 %v4795, %v4831
        %v4864 = vadd.f32 %v4796, %v4832
        %v4865 = vadd.f32 %v4797, %v4833
        %v4866 = vadd.f32 %v4798, %v4834
        %v4867 = vadd.f32 %v4799, %v4835
        %v4868 = vadd.f32 %v4800, %v4836
        %v4869 = vadd.f32 %v4801, %v4837
        %v4870 = vadd.f32 %v4802, %v4838
        %v4871 = vadd.f32 %v4803, %v4839
        %v4872 = vadd.f32 %v4804, %v4840
        %v4873 = vadd.f32 %v4805, %v4841
        %v4874 = vadd.f32 %v4806, %v4842
        %v4875 = vadd.f32 %v4807, %v4843
        %v4876 = vadd.f32 %v4808, %v4844
        %v4877 = vadd.f32 %v4809, %v4845
        %v4878 = vadd.f32 %v4810, %v4846
        %v4879 = vadd.f32 %v4811, %v4847
        %v4880 = vadd.f32 %v4812, %v4848
        %v4881 = vadd.f32 %v4813, %v4849
        %v4882 = vadd.f32 %v4814, %v4850
        %v4883 = vadd.f32 %v4815, %v4851
        %v4884 = vadd.f32 %v4816, %v4852
        %v4885 = vadd.f32 %v4817, %v4853
        %v4886 = vadd.f32 %v4818, %v4854
        %v4887 = vadd.f32 %v4819, %v4855
        %v4888 = vadd.f32 %v4820, %v4856
        %v4889 = vadd.f32 %v4821, %v4857
        %v4890 = vadd.f32 %v4822, %v4858
        %v4891 = vadd.f32 %v4823, %v4859
        %v4892 = vadd.f32 %v4824, %v4860
        %v4893 = vlaneseq
        %v4894 = vshrl.u32 %v4893, 7
        %v4895 = vsub.s32 3, %v4894
        %v4896 = vrot.slane %v4538, %v4895
        %v4897 = vmul.f32 %v4551, %v4896
        %v4898 = vmul.f32 %v4552, %v4896
        %v4899 = vmul.f32 %v4553, %v4896
        %v4900 = vmul.f32 %v4554, %v4896
        %v4901 = vmul.f32 %v4555, %v4896
        %v4902 = vmul.f32 %v4556, %v4896
        %v4903 = vmul.f32 %v4557, %v4896
        %v4904 = vmul.f32 %v4558, %v4896
        %v4905 = vmul.f32 %v4559, %v4896
        %v4906 = vmul.f32 %v4560, %v4896
        %v4907 = vmul.f32 %v4561, %v4896
        %v4908 = vmul.f32 %v4562, %v4896
        %v4909 = vmul.f32 %v4563, %v4896
        %v4910 = vmul.f32 %v4564, %v4896
        %v4911 = vmul.f32 %v4565, %v4896
        %v4912 = vmul.f32 %v4566, %v4896
        %v4913 = vmul.f32 %v4567, %v4896
        %v4914 = vmul.f32 %v4568, %v4896
        %v4915 = vmul.f32 %v4569, %v4896
        %v4916 = vmul.f32 %v4570, %v4896
        %v4917 = vmul.f32 %v4571, %v4896
        %v4918 = vmul.f32 %v4572, %v4896
        %v4919 = vmul.f32 %v4573, %v4896
        %v4920 = vmul.f32 %v4574, %v4896
        %v4921 = vmul.f32 %v4575, %v4896
        %v4922 = vmul.f32 %v4576, %v4896
        %v4923 = vmul.f32 %v4577, %v4896
        %v4924 = vmul.f32 %v4578, %v4896
        %v4925 = vmul.f32 %v4579, %v4896
        %v4926 = vmul.f32 %v4580, %v4896
        %v4927 = vmul.f32 %v4581, %v4896
        %v4928 = vmul.f32 %v4582, %v4896
        %v4929 = vadd.f32 %v4861, %v4897
        %v4930 = vadd.f32 %v4862, %v4898
        %v4931 = vadd.f32 %v4863, %v4899
        %v4932 = vadd.f32 %v4864, %v4900
        %v4933 = vadd.f32 %v4865, %v4901
        %v4934 = vadd.f32 %v4866, %v4902
        %v4935 = vadd.f32 %v4867, %v4903
        %v4936 = vadd.f32 %v4868, %v4904
        %v4937 = vadd.f32 %v4869, %v4905
        %v4938 = vadd.f32 %v4870, %v4906
        %v4939 = vadd.f32 %v4871, %v4907
        %v4940 = vadd.f32 %v4872, %v4908
        %v4941 = vadd.f32 %v4873, %v4909
        %v4942 = vadd.f32 %v4874, %v4910
        %v4943 = vadd.f32 %v4875, %v4911
        %v4944 = vadd.f32 %v4876, %v4912
        %v4945 = vadd.f32 %v4877, %v4913
        %v4946 = vadd.f32 %v4878, %v4914
        %v4947 = vadd.f32 %v4879, %v4915
        %v4948 = vadd.f32 %v4880, %v4916
        %v4949 = vadd.f32 %v4881, %v4917
        %v4950 = vadd.f32 %v4882, %v4918
        %v4951 = vadd.f32 %v4883, %v4919
        %v4952 = vadd.f32 %v4884, %v4920
        %v4953 = vadd.f32 %v4885, %v4921
        %v4954 = vadd.f32 %v4886, %v4922
        %v4955 = vadd.f32 %v4887, %v4923
        %v4956 = vadd.f32 %v4888, %v4924
        %v4957 = vadd.f32 %v4889, %v4925
        %v4958 = vadd.f32 %v4890, %v4926
        %v4959 = vadd.f32 %v4891, %v4927
        %v4960 = vadd.f32 %v4892, %v4928
        %v4961 = vlaneseq
        %v4962 = vshrl.u32 %v4961, 7
        %v4963 = vsub.s32 2, %v4962
        %v4964 = vrot.slane %v4539, %v4963
        %v4965 = vmul.f32 %v4553, %v4964
        %v4966 = vmul.f32 %v4554, %v4964
        %v4967 = vmul.f32 %v4555, %v4964
        %v4968 = vmul.f32 %v4556, %v4964
        %v4969 = vmul.f32 %v4557, %v4964
        %v4970 = vmul.f32 %v4558, %v4964
        %v4971 = vmul.f32 %v4559, %v4964
        %v4972 = vmul.f32 %v4560, %v4964
        %v4973 = vmul.f32 %v4561, %v4964
        %v4974 = vmul.f32 %v4562, %v4964
        %v4975 = vmul.f32 %v4563, %v4964
        %v4976 = vmul.f32 %v4564, %v4964
        %v4977 = vmul.f32 %v4565, %v4964
        %v4978 = vmul.f32 %v4566, %v4964
        %v4979 = vmul.f32 %v4567, %v4964
        %v4980 = vmul.f32 %v4568, %v4964
        %v4981 = vmul.f32 %v4569, %v4964
        %v4982 = vmul.f32 %v4570, %v4964
        %v4983 = vmul.f32 %v4571, %v4964
        %v4984 = vmul.f32 %v4572, %v4964
        %v4985 = vmul.f32 %v4573, %v4964
        %v4986 = vmul.f32 %v4574, %v4964
        %v4987 = vmul.f32 %v4575, %v4964
        %v4988 = vmul.f32 %v4576, %v4964
        %v4989 = vmul.f32 %v4577, %v4964
        %v4990 = vmul.f32 %v4578, %v4964
        %v4991 = vmul.f32 %v4579, %v4964
        %v4992 = vmul.f32 %v4580, %v4964
        %v4993 = vmul.f32 %v4581, %v4964
        %v4994 = vmul.f32 %v4582, %v4964
        %v4995 = vmul.f32 %v4583, %v4964
        %v4996 = vmul.f32 %v4584, %v4964
        %v4997 = vadd.f32 %v4929, %v4965
        %v4998 = vadd.f32 %v4930, %v4966
        %v4999 = vadd.f32 %v4931, %v4967
        %v5000 = vadd.f32 %v4932, %v4968
        %v5001 = vadd.f32 %v4933, %v4969
        %v5002 = vadd.f32 %v4934, %v4970
        %v5003 = vadd.f32 %v4935, %v4971
        %v5004 = vadd.f32 %v4936, %v4972
        %v5005 = vadd.f32 %v4937, %v4973
        %v5006 = vadd.f32 %v4938, %v4974
        %v5007 = vadd.f32 %v4939, %v4975
        %v5008 = vadd.f32 %v4940, %v4976
        %v5009 = vadd.f32 %v4941, %v4977
        %v5010 = vadd.f32 %v4942, %v4978
        %v5011 = vadd.f32 %v4943, %v4979
        %v5012 = vadd.f32 %v4944, %v4980
        %v5013 = vadd.f32 %v4945, %v4981
        %v5014 = vadd.f32 %v4946, %v4982
        %v5015 = vadd.f32 %v4947, %v4983
        %v5016 = vadd.f32 %v4948, %v4984
        %v5017 = vadd.f32 %v4949, %v4985
        %v5018 = vadd.f32 %v4950, %v4986
        %v5019 = vadd.f32 %v4951, %v4987
        %v5020 = vadd.f32 %v4952, %v4988
        %v5021 = vadd.f32 %v4953, %v4989
        %v5022 = vadd.f32 %v4954, %v4990
        %v5023 = vadd.f32 %v4955, %v4991
        %v5024 = vadd.f32 %v4956, %v4992
        %v5025 = vadd.f32 %v4957, %v4993
        %v5026 = vadd.f32 %v4958, %v4994
        %v5027 = vadd.f32 %v4959, %v4995
        %v5028 = vadd.f32 %v4960, %v4996
        %v5029 = vld [vmem:[#allocation2 + $0x6] sm:$0xff]
        %v5030 = vld [vmem:[#allocation2 + $0xe] sm:$0xff]
        %v5031 = vld [vmem:[#allocation2 + $0x26] sm:$0xff]
        %v5032 = vld [vmem:[#allocation2 + $0x2e] sm:$0xff]
        %v5033 = vld [vmem:[#allocation2 + $0x46] sm:$0xff]
        %v5034 = vld [vmem:[#allocation2 + $0x4e] sm:$0xff]
        %v5035 = vld [vmem:[#allocation2 + $0x66] sm:$0xff]
        %v5036 = vld [vmem:[#allocation2 + $0x6e] sm:$0xff]
        %v5037 = vld [vmem:[#allocation2 + $0x86] sm:$0xff]
        %v5038 = vld [vmem:[#allocation2 + $0x8e] sm:$0xff]
        %v5039 = vld [vmem:[#allocation2 + $0xa6] sm:$0xff]
        %v5040 = vld [vmem:[#allocation2 + $0xae] sm:$0xff]
        %v5041 = vld [vmem:[#allocation2 + $0xc6] sm:$0xff]
        %v5042 = vld [vmem:[#allocation2 + $0xce] sm:$0xff]
        %v5043 = vld [vmem:[#allocation2 + $0xe6] sm:$0xff]
        %v5044 = vld [vmem:[#allocation2 + $0xee] sm:$0xff]
        %v5045 = vld [vmem:[#allocation2 + $0x106] sm:$0xff]
        %v5046 = vld [vmem:[#allocation2 + $0x10e] sm:$0xff]
        %v5047 = vld [vmem:[#allocation2 + $0x126] sm:$0xff]
        %v5048 = vld [vmem:[#allocation2 + $0x12e] sm:$0xff]
        %v5049 = vld [vmem:[#allocation2 + $0x146] sm:$0xff]
        %v5050 = vld [vmem:[#allocation2 + $0x14e] sm:$0xff]
        %v5051 = vld [vmem:[#allocation2 + $0x166] sm:$0xff]
        %v5052 = vld [vmem:[#allocation2 + $0x16e] sm:$0xff]
        %v5053 = vld [vmem:[#allocation2 + $0x186] sm:$0xff]
        %v5054 = vld [vmem:[#allocation2 + $0x18e] sm:$0xff]
        %v5055 = vld [vmem:[#allocation2 + $0x1a6] sm:$0xff]
        %v5056 = vld [vmem:[#allocation2 + $0x1ae] sm:$0xff]
        %v5057 = vld [vmem:[#allocation2 + $0x1c6] sm:$0xff]
        %v5058 = vld [vmem:[#allocation2 + $0x1ce] sm:$0xff]
        %v5059 = vld [vmem:[#allocation2 + $0x1e6] sm:$0xff]
        %v5060 = vld [vmem:[#allocation2 + $0x1ee] sm:$0xff]
        %v5061 = vld [vmem:[#allocation2 + $0x206] sm:$0xff]
        %v5062 = vld [vmem:[#allocation2 + $0x20e] sm:$0xff]
        %v5063 = vld [vmem:[#allocation2 + $0x226] sm:$0xff]
        %v5064 = vld [vmem:[#allocation2 + $0x22e] sm:$0xff]
        %v5065 = vld [vmem:[#allocation2 + $0x246] sm:$0xff]
        %v5066 = vld [vmem:[#allocation2 + $0x24e] sm:$0xff]
        %v5067 = vld [vmem:[#allocation2 + $0x266] sm:$0xff]
        %v5068 = vld [vmem:[#allocation2 + $0x26e] sm:$0xff]
        %v5069 = vld [vmem:[#allocation2 + $0x286] sm:$0xff]
        %v5070 = vld [vmem:[#allocation2 + $0x28e] sm:$0xff]
        %v5071 = vld [vmem:[#allocation2 + $0x2a6] sm:$0xff]
        %v5072 = vld [vmem:[#allocation2 + $0x2ae] sm:$0xff]
        %v5073 = vlaneseq
        %v5074 = vshrl.u32 %v5073, 7
        %v5075 = vsub.s32 1, %v5074
        %v5076 = vrot.slane %v4534, %v5075
        %v5077 = vmul.f32 %v5029, %v5076
        %v5078 = vmul.f32 %v5030, %v5076
        %v5079 = vmul.f32 %v5031, %v5076
        %v5080 = vmul.f32 %v5032, %v5076
        %v5081 = vmul.f32 %v5033, %v5076
        %v5082 = vmul.f32 %v5034, %v5076
        %v5083 = vmul.f32 %v5035, %v5076
        %v5084 = vmul.f32 %v5036, %v5076
        %v5085 = vmul.f32 %v5037, %v5076
        %v5086 = vmul.f32 %v5038, %v5076
        %v5087 = vmul.f32 %v5039, %v5076
        %v5088 = vmul.f32 %v5040, %v5076
        %v5089 = vmul.f32 %v5041, %v5076
        %v5090 = vmul.f32 %v5042, %v5076
        %v5091 = vmul.f32 %v5043, %v5076
        %v5092 = vmul.f32 %v5044, %v5076
        %v5093 = vmul.f32 %v5045, %v5076
        %v5094 = vmul.f32 %v5046, %v5076
        %v5095 = vmul.f32 %v5047, %v5076
        %v5096 = vmul.f32 %v5048, %v5076
        %v5097 = vmul.f32 %v5049, %v5076
        %v5098 = vmul.f32 %v5050, %v5076
        %v5099 = vmul.f32 %v5051, %v5076
        %v5100 = vmul.f32 %v5052, %v5076
        %v5101 = vmul.f32 %v5053, %v5076
        %v5102 = vmul.f32 %v5054, %v5076
        %v5103 = vmul.f32 %v5055, %v5076
        %v5104 = vmul.f32 %v5056, %v5076
        %v5105 = vmul.f32 %v5057, %v5076
        %v5106 = vmul.f32 %v5058, %v5076
        %v5107 = vmul.f32 %v5059, %v5076
        %v5108 = vmul.f32 %v5060, %v5076
        %v5109 = vlaneseq
        %v5110 = vshrl.u32 %v5109, 7
        %v5111 = vsub.s32 0, %v5110
        %v5112 = vrot.slane %v4535, %v5111
        %v5113 = vmul.f32 %v5031, %v5112
        %v5114 = vmul.f32 %v5032, %v5112
        %v5115 = vmul.f32 %v5033, %v5112
        %v5116 = vmul.f32 %v5034, %v5112
        %v5117 = vmul.f32 %v5035, %v5112
        %v5118 = vmul.f32 %v5036, %v5112
        %v5119 = vmul.f32 %v5037, %v5112
        %v5120 = vmul.f32 %v5038, %v5112
        %v5121 = vmul.f32 %v5039, %v5112
        %v5122 = vmul.f32 %v5040, %v5112
        %v5123 = vmul.f32 %v5041, %v5112
        %v5124 = vmul.f32 %v5042, %v5112
        %v5125 = vmul.f32 %v5043, %v5112
        %v5126 = vmul.f32 %v5044, %v5112
        %v5127 = vmul.f32 %v5045, %v5112
        %v5128 = vmul.f32 %v5046, %v5112
        %v5129 = vmul.f32 %v5047, %v5112
        %v5130 = vmul.f32 %v5048, %v5112
        %v5131 = vmul.f32 %v5049, %v5112
        %v5132 = vmul.f32 %v5050, %v5112
        %v5133 = vmul.f32 %v5051, %v5112
        %v5134 = vmul.f32 %v5052, %v5112
        %v5135 = vmul.f32 %v5053, %v5112
        %v5136 = vmul.f32 %v5054, %v5112
        %v5137 = vmul.f32 %v5055, %v5112
        %v5138 = vmul.f32 %v5056, %v5112
        %v5139 = vmul.f32 %v5057, %v5112
        %v5140 = vmul.f32 %v5058, %v5112
        %v5141 = vmul.f32 %v5059, %v5112
        %v5142 = vmul.f32 %v5060, %v5112
        %v5143 = vmul.f32 %v5061, %v5112
        %v5144 = vmul.f32 %v5062, %v5112
        %v5145 = vadd.f32 %v5077, %v5113
        %v5146 = vadd.f32 %v5078, %v5114
        %v5147 = vadd.f32 %v5079, %v5115
        %v5148 = vadd.f32 %v5080, %v5116
        %v5149 = vadd.f32 %v5081, %v5117
        %v5150 = vadd.f32 %v5082, %v5118
        %v5151 = vadd.f32 %v5083, %v5119
        %v5152 = vadd.f32 %v5084, %v5120
        %v5153 = vadd.f32 %v5085, %v5121
        %v5154 = vadd.f32 %v5086, %v5122
        %v5155 = vadd.f32 %v5087, %v5123
        %v5156 = vadd.f32 %v5088, %v5124
        %v5157 = vadd.f32 %v5089, %v5125
        %v5158 = vadd.f32 %v5090, %v5126
        %v5159 = vadd.f32 %v5091, %v5127
        %v5160 = vadd.f32 %v5092, %v5128
        %v5161 = vadd.f32 %v5093, %v5129
        %v5162 = vadd.f32 %v5094, %v5130
        %v5163 = vadd.f32 %v5095, %v5131
        %v5164 = vadd.f32 %v5096, %v5132
        %v5165 = vadd.f32 %v5097, %v5133
        %v5166 = vadd.f32 %v5098, %v5134
        %v5167 = vadd.f32 %v5099, %v5135
        %v5168 = vadd.f32 %v5100, %v5136
        %v5169 = vadd.f32 %v5101, %v5137
        %v5170 = vadd.f32 %v5102, %v5138
        %v5171 = vadd.f32 %v5103, %v5139
        %v5172 = vadd.f32 %v5104, %v5140
        %v5173 = vadd.f32 %v5105, %v5141
        %v5174 = vadd.f32 %v5106, %v5142
        %v5175 = vadd.f32 %v5107, %v5143
        %v5176 = vadd.f32 %v5108, %v5144
        %v5177 = vlaneseq
        %v5178 = vshrl.u32 %v5177, 7
        %v5179 = vsub.s32 7, %v5178
        %v5180 = vrot.slane %v4535, %v5179
        %v5181 = vmul.f32 %v5033, %v5180
        %v5182 = vmul.f32 %v5034, %v5180
        %v5183 = vmul.f32 %v5035, %v5180
        %v5184 = vmul.f32 %v5036, %v5180
        %v5185 = vmul.f32 %v5037, %v5180
        %v5186 = vmul.f32 %v5038, %v5180
        %v5187 = vmul.f32 %v5039, %v5180
        %v5188 = vmul.f32 %v5040, %v5180
        %v5189 = vmul.f32 %v5041, %v5180
        %v5190 = vmul.f32 %v5042, %v5180
        %v5191 = vmul.f32 %v5043, %v5180
        %v5192 = vmul.f32 %v5044, %v5180
        %v5193 = vmul.f32 %v5045, %v5180
        %v5194 = vmul.f32 %v5046, %v5180
        %v5195 = vmul.f32 %v5047, %v5180
        %v5196 = vmul.f32 %v5048, %v5180
        %v5197 = vmul.f32 %v5049, %v5180
        %v5198 = vmul.f32 %v5050, %v5180
        %v5199 = vmul.f32 %v5051, %v5180
        %v5200 = vmul.f32 %v5052, %v5180
        %v5201 = vmul.f32 %v5053, %v5180
        %v5202 = vmul.f32 %v5054, %v5180
        %v5203 = vmul.f32 %v5055, %v5180
        %v5204 = vmul.f32 %v5056, %v5180
        %v5205 = vmul.f32 %v5057, %v5180
        %v5206 = vmul.f32 %v5058, %v5180
        %v5207 = vmul.f32 %v5059, %v5180
        %v5208 = vmul.f32 %v5060, %v5180
        %v5209 = vmul.f32 %v5061, %v5180
        %v5210 = vmul.f32 %v5062, %v5180
        %v5211 = vmul.f32 %v5063, %v5180
        %v5212 = vmul.f32 %v5064, %v5180
        %v5213 = vadd.f32 %v5145, %v5181
        %v5214 = vadd.f32 %v5146, %v5182
        %v5215 = vadd.f32 %v5147, %v5183
        %v5216 = vadd.f32 %v5148, %v5184
        %v5217 = vadd.f32 %v5149, %v5185
        %v5218 = vadd.f32 %v5150, %v5186
        %v5219 = vadd.f32 %v5151, %v5187
        %v5220 = vadd.f32 %v5152, %v5188
        %v5221 = vadd.f32 %v5153, %v5189
        %v5222 = vadd.f32 %v5154, %v5190
        %v5223 = vadd.f32 %v5155, %v5191
        %v5224 = vadd.f32 %v5156, %v5192
        %v5225 = vadd.f32 %v5157, %v5193
        %v5226 = vadd.f32 %v5158, %v5194
        %v5227 = vadd.f32 %v5159, %v5195
        %v5228 = vadd.f32 %v5160, %v5196
        %v5229 = vadd.f32 %v5161, %v5197
        %v5230 = vadd.f32 %v5162, %v5198
        %v5231 = vadd.f32 %v5163, %v5199
        %v5232 = vadd.f32 %v5164, %v5200
        %v5233 = vadd.f32 %v5165, %v5201
        %v5234 = vadd.f32 %v5166, %v5202
        %v5235 = vadd.f32 %v5167, %v5203
        %v5236 = vadd.f32 %v5168, %v5204
        %v5237 = vadd.f32 %v5169, %v5205
        %v5238 = vadd.f32 %v5170, %v5206
        %v5239 = vadd.f32 %v5171, %v5207
        %v5240 = vadd.f32 %v5172, %v5208
        %v5241 = vadd.f32 %v5173, %v5209
        %v5242 = vadd.f32 %v5174, %v5210
        %v5243 = vadd.f32 %v5175, %v5211
        %v5244 = vadd.f32 %v5176, %v5212
        %v5245 = vlaneseq
        %v5246 = vshrl.u32 %v5245, 7
        %v5247 = vsub.s32 6, %v5246
        %v5248 = vrot.slane %v4536, %v5247
        %v5249 = vmul.f32 %v5035, %v5248
        %v5250 = vmul.f32 %v5036, %v5248
        %v5251 = vmul.f32 %v5037, %v5248
        %v5252 = vmul.f32 %v5038, %v5248
        %v5253 = vmul.f32 %v5039, %v5248
        %v5254 = vmul.f32 %v5040, %v5248
        %v5255 = vmul.f32 %v5041, %v5248
        %v5256 = vmul.f32 %v5042, %v5248
        %v5257 = vmul.f32 %v5043, %v5248
        %v5258 = vmul.f32 %v5044, %v5248
        %v5259 = vmul.f32 %v5045, %v5248
        %v5260 = vmul.f32 %v5046, %v5248
        %v5261 = vmul.f32 %v5047, %v5248
        %v5262 = vmul.f32 %v5048, %v5248
        %v5263 = vmul.f32 %v5049, %v5248
        %v5264 = vmul.f32 %v5050, %v5248
        %v5265 = vmul.f32 %v5051, %v5248
        %v5266 = vmul.f32 %v5052, %v5248
        %v5267 = vmul.f32 %v5053, %v5248
        %v5268 = vmul.f32 %v5054, %v5248
        %v5269 = vmul.f32 %v5055, %v5248
        %v5270 = vmul.f32 %v5056, %v5248
        %v5271 = vmul.f32 %v5057, %v5248
        %v5272 = vmul.f32 %v5058, %v5248
        %v5273 = vmul.f32 %v5059, %v5248
        %v5274 = vmul.f32 %v5060, %v5248
        %v5275 = vmul.f32 %v5061, %v5248
        %v5276 = vmul.f32 %v5062, %v5248
        %v5277 = vmul.f32 %v5063, %v5248
        %v5278 = vmul.f32 %v5064, %v5248
        %v5279 = vmul.f32 %v5065, %v5248
        %v5280 = vmul.f32 %v5066, %v5248
        %v5281 = vadd.f32 %v5213, %v5249
        %v5282 = vadd.f32 %v5214, %v5250
        %v5283 = vadd.f32 %v5215, %v5251
        %v5284 = vadd.f32 %v5216, %v5252
        %v5285 = vadd.f32 %v5217, %v5253
        %v5286 = vadd.f32 %v5218, %v5254
        %v5287 = vadd.f32 %v5219, %v5255
        %v5288 = vadd.f32 %v5220, %v5256
        %v5289 = vadd.f32 %v5221, %v5257
        %v5290 = vadd.f32 %v5222, %v5258
        %v5291 = vadd.f32 %v5223, %v5259
        %v5292 = vadd.f32 %v5224, %v5260
        %v5293 = vadd.f32 %v5225, %v5261
        %v5294 = vadd.f32 %v5226, %v5262
        %v5295 = vadd.f32 %v5227, %v5263
        %v5296 = vadd.f32 %v5228, %v5264
        %v5297 = vadd.f32 %v5229, %v5265
        %v5298 = vadd.f32 %v5230, %v5266
        %v5299 = vadd.f32 %v5231, %v5267
        %v5300 = vadd.f32 %v5232, %v5268
        %v5301 = vadd.f32 %v5233, %v5269
        %v5302 = vadd.f32 %v5234, %v5270
        %v5303 = vadd.f32 %v5235, %v5271
        %v5304 = vadd.f32 %v5236, %v5272
        %v5305 = vadd.f32 %v5237, %v5273
        %v5306 = vadd.f32 %v5238, %v5274
        %v5307 = vadd.f32 %v5239, %v5275
        %v5308 = vadd.f32 %v5240, %v5276
        %v5309 = vadd.f32 %v5241, %v5277
        %v5310 = vadd.f32 %v5242, %v5278
        %v5311 = vadd.f32 %v5243, %v5279
        %v5312 = vadd.f32 %v5244, %v5280
        %v5313 = vlaneseq
        %v5314 = vshrl.u32 %v5313, 7
        %v5315 = vsub.s32 5, %v5314
        %v5316 = vrot.slane %v4537, %v5315
        %v5317 = vmul.f32 %v5037, %v5316
        %v5318 = vmul.f32 %v5038, %v5316
        %v5319 = vmul.f32 %v5039, %v5316
        %v5320 = vmul.f32 %v5040, %v5316
        %v5321 = vmul.f32 %v5041, %v5316
        %v5322 = vmul.f32 %v5042, %v5316
        %v5323 = vmul.f32 %v5043, %v5316
        %v5324 = vmul.f32 %v5044, %v5316
        %v5325 = vmul.f32 %v5045, %v5316
        %v5326 = vmul.f32 %v5046, %v5316
        %v5327 = vmul.f32 %v5047, %v5316
        %v5328 = vmul.f32 %v5048, %v5316
        %v5329 = vmul.f32 %v5049, %v5316
        %v5330 = vmul.f32 %v5050, %v5316
        %v5331 = vmul.f32 %v5051, %v5316
        %v5332 = vmul.f32 %v5052, %v5316
        %v5333 = vmul.f32 %v5053, %v5316
        %v5334 = vmul.f32 %v5054, %v5316
        %v5335 = vmul.f32 %v5055, %v5316
        %v5336 = vmul.f32 %v5056, %v5316
        %v5337 = vmul.f32 %v5057, %v5316
        %v5338 = vmul.f32 %v5058, %v5316
        %v5339 = vmul.f32 %v5059, %v5316
        %v5340 = vmul.f32 %v5060, %v5316
        %v5341 = vmul.f32 %v5061, %v5316
        %v5342 = vmul.f32 %v5062, %v5316
        %v5343 = vmul.f32 %v5063, %v5316
        %v5344 = vmul.f32 %v5064, %v5316
        %v5345 = vmul.f32 %v5065, %v5316
        %v5346 = vmul.f32 %v5066, %v5316
        %v5347 = vmul.f32 %v5067, %v5316
        %v5348 = vmul.f32 %v5068, %v5316
        %v5349 = vadd.f32 %v5281, %v5317
        %v5350 = vadd.f32 %v5282, %v5318
        %v5351 = vadd.f32 %v5283, %v5319
        %v5352 = vadd.f32 %v5284, %v5320
        %v5353 = vadd.f32 %v5285, %v5321
        %v5354 = vadd.f32 %v5286, %v5322
        %v5355 = vadd.f32 %v5287, %v5323
        %v5356 = vadd.f32 %v5288, %v5324
        %v5357 = vadd.f32 %v5289, %v5325
        %v5358 = vadd.f32 %v5290, %v5326
        %v5359 = vadd.f32 %v5291, %v5327
        %v5360 = vadd.f32 %v5292, %v5328
        %v5361 = vadd.f32 %v5293, %v5329
        %v5362 = vadd.f32 %v5294, %v5330
        %v5363 = vadd.f32 %v5295, %v5331
        %v5364 = vadd.f32 %v5296, %v5332
        %v5365 = vadd.f32 %v5297, %v5333
        %v5366 = vadd.f32 %v5298, %v5334
        %v5367 = vadd.f32 %v5299, %v5335
        %v5368 = vadd.f32 %v5300, %v5336
        %v5369 = vadd.f32 %v5301, %v5337
        %v5370 = vadd.f32 %v5302, %v5338
        %v5371 = vadd.f32 %v5303, %v5339
        %v5372 = vadd.f32 %v5304, %v5340
        %v5373 = vadd.f32 %v5305, %v5341
        %v5374 = vadd.f32 %v5306, %v5342
        %v5375 = vadd.f32 %v5307, %v5343
        %v5376 = vadd.f32 %v5308, %v5344
        %v5377 = vadd.f32 %v5309, %v5345
        %v5378 = vadd.f32 %v5310, %v5346
        %v5379 = vadd.f32 %v5311, %v5347
        %v5380 = vadd.f32 %v5312, %v5348
        %v5381 = vlaneseq
        %v5382 = vshrl.u32 %v5381, 7
        %v5383 = vsub.s32 4, %v5382
        %v5384 = vrot.slane %v4538, %v5383
        %v5385 = vmul.f32 %v5039, %v5384
        %v5386 = vmul.f32 %v5040, %v5384
        %v5387 = vmul.f32 %v5041, %v5384
        %v5388 = vmul.f32 %v5042, %v5384
        %v5389 = vmul.f32 %v5043, %v5384
        %v5390 = vmul.f32 %v5044, %v5384
        %v5391 = vmul.f32 %v5045, %v5384
        %v5392 = vmul.f32 %v5046, %v5384
        %v5393 = vmul.f32 %v5047, %v5384
        %v5394 = vmul.f32 %v5048, %v5384
        %v5395 = vmul.f32 %v5049, %v5384
        %v5396 = vmul.f32 %v5050, %v5384
        %v5397 = vmul.f32 %v5051, %v5384
        %v5398 = vmul.f32 %v5052, %v5384
        %v5399 = vmul.f32 %v5053, %v5384
        %v5400 = vmul.f32 %v5054, %v5384
        %v5401 = vmul.f32 %v5055, %v5384
        %v5402 = vmul.f32 %v5056, %v5384
        %v5403 = vmul.f32 %v5057, %v5384
        %v5404 = vmul.f32 %v5058, %v5384
        %v5405 = vmul.f32 %v5059, %v5384
        %v5406 = vmul.f32 %v5060, %v5384
        %v5407 = vmul.f32 %v5061, %v5384
        %v5408 = vmul.f32 %v5062, %v5384
        %v5409 = vmul.f32 %v5063, %v5384
        %v5410 = vmul.f32 %v5064, %v5384
        %v5411 = vmul.f32 %v5065, %v5384
        %v5412 = vmul.f32 %v5066, %v5384
        %v5413 = vmul.f32 %v5067, %v5384
        %v5414 = vmul.f32 %v5068, %v5384
        %v5415 = vmul.f32 %v5069, %v5384
        %v5416 = vmul.f32 %v5070, %v5384
        %v5417 = vadd.f32 %v5349, %v5385
        %v5418 = vadd.f32 %v5350, %v5386
        %v5419 = vadd.f32 %v5351, %v5387
        %v5420 = vadd.f32 %v5352, %v5388
        %v5421 = vadd.f32 %v5353, %v5389
        %v5422 = vadd.f32 %v5354, %v5390
        %v5423 = vadd.f32 %v5355, %v5391
        %v5424 = vadd.f32 %v5356, %v5392
        %v5425 = vadd.f32 %v5357, %v5393
        %v5426 = vadd.f32 %v5358, %v5394
        %v5427 = vadd.f32 %v5359, %v5395
        %v5428 = vadd.f32 %v5360, %v5396
        %v5429 = vadd.f32 %v5361, %v5397
        %v5430 = vadd.f32 %v5362, %v5398
        %v5431 = vadd.f32 %v5363, %v5399
        %v5432 = vadd.f32 %v5364, %v5400
        %v5433 = vadd.f32 %v5365, %v5401
        %v5434 = vadd.f32 %v5366, %v5402
        %v5435 = vadd.f32 %v5367, %v5403
        %v5436 = vadd.f32 %v5368, %v5404
        %v5437 = vadd.f32 %v5369, %v5405
        %v5438 = vadd.f32 %v5370, %v5406
        %v5439 = vadd.f32 %v5371, %v5407
        %v5440 = vadd.f32 %v5372, %v5408
        %v5441 = vadd.f32 %v5373, %v5409
        %v5442 = vadd.f32 %v5374, %v5410
        %v5443 = vadd.f32 %v5375, %v5411
        %v5444 = vadd.f32 %v5376, %v5412
        %v5445 = vadd.f32 %v5377, %v5413
        %v5446 = vadd.f32 %v5378, %v5414
        %v5447 = vadd.f32 %v5379, %v5415
        %v5448 = vadd.f32 %v5380, %v5416
        %v5449 = vlaneseq
        %v5450 = vshrl.u32 %v5449, 7
        %v5451 = vsub.s32 3, %v5450
        %v5452 = vrot.slane %v4539, %v5451
        %v5453 = vmul.f32 %v5041, %v5452
        %v5454 = vmul.f32 %v5042, %v5452
        %v5455 = vmul.f32 %v5043, %v5452
        %v5456 = vmul.f32 %v5044, %v5452
        %v5457 = vmul.f32 %v5045, %v5452
        %v5458 = vmul.f32 %v5046, %v5452
        %v5459 = vmul.f32 %v5047, %v5452
        %v5460 = vmul.f32 %v5048, %v5452
        %v5461 = vmul.f32 %v5049, %v5452
        %v5462 = vmul.f32 %v5050, %v5452
        %v5463 = vmul.f32 %v5051, %v5452
        %v5464 = vmul.f32 %v5052, %v5452
        %v5465 = vmul.f32 %v5053, %v5452
        %v5466 = vmul.f32 %v5054, %v5452
        %v5467 = vmul.f32 %v5055, %v5452
        %v5468 = vmul.f32 %v5056, %v5452
        %v5469 = vmul.f32 %v5057, %v5452
        %v5470 = vmul.f32 %v5058, %v5452
        %v5471 = vmul.f32 %v5059, %v5452
        %v5472 = vmul.f32 %v5060, %v5452
        %v5473 = vmul.f32 %v5061, %v5452
        %v5474 = vmul.f32 %v5062, %v5452
        %v5475 = vmul.f32 %v5063, %v5452
        %v5476 = vmul.f32 %v5064, %v5452
        %v5477 = vmul.f32 %v5065, %v5452
        %v5478 = vmul.f32 %v5066, %v5452
        %v5479 = vmul.f32 %v5067, %v5452
        %v5480 = vmul.f32 %v5068, %v5452
        %v5481 = vmul.f32 %v5069, %v5452
        %v5482 = vmul.f32 %v5070, %v5452
        %v5483 = vmul.f32 %v5071, %v5452
        %v5484 = vmul.f32 %v5072, %v5452
        %v5485 = vadd.f32 %v5417, %v5453
        %v5486 = vadd.f32 %v5418, %v5454
        %v5487 = vadd.f32 %v5419, %v5455
        %v5488 = vadd.f32 %v5420, %v5456
        %v5489 = vadd.f32 %v5421, %v5457
        %v5490 = vadd.f32 %v5422, %v5458
        %v5491 = vadd.f32 %v5423, %v5459
        %v5492 = vadd.f32 %v5424, %v5460
        %v5493 = vadd.f32 %v5425, %v5461
        %v5494 = vadd.f32 %v5426, %v5462
        %v5495 = vadd.f32 %v5427, %v5463
        %v5496 = vadd.f32 %v5428, %v5464
        %v5497 = vadd.f32 %v5429, %v5465
        %v5498 = vadd.f32 %v5430, %v5466
        %v5499 = vadd.f32 %v5431, %v5467
        %v5500 = vadd.f32 %v5432, %v5468
        %v5501 = vadd.f32 %v5433, %v5469
        %v5502 = vadd.f32 %v5434, %v5470
        %v5503 = vadd.f32 %v5435, %v5471
        %v5504 = vadd.f32 %v5436, %v5472
        %v5505 = vadd.f32 %v5437, %v5473
        %v5506 = vadd.f32 %v5438, %v5474
        %v5507 = vadd.f32 %v5439, %v5475
        %v5508 = vadd.f32 %v5440, %v5476
        %v5509 = vadd.f32 %v5441, %v5477
        %v5510 = vadd.f32 %v5442, %v5478
        %v5511 = vadd.f32 %v5443, %v5479
        %v5512 = vadd.f32 %v5444, %v5480
        %v5513 = vadd.f32 %v5445, %v5481
        %v5514 = vadd.f32 %v5446, %v5482
        %v5515 = vadd.f32 %v5447, %v5483
        %v5516 = vadd.f32 %v5448, %v5484
        %v5517 = vld [vmem:[#allocation2 + $0x7] sm:$0xff]
        %v5518 = vld [vmem:[#allocation2 + $0xf] sm:$0xff]
        %v5519 = vld [vmem:[#allocation2 + $0x27] sm:$0xff]
        %v5520 = vld [vmem:[#allocation2 + $0x2f] sm:$0xff]
        %v5521 = vld [vmem:[#allocation2 + $0x47] sm:$0xff]
        %v5522 = vld [vmem:[#allocation2 + $0x4f] sm:$0xff]
        %v5523 = vld [vmem:[#allocation2 + $0x67] sm:$0xff]
        %v5524 = vld [vmem:[#allocation2 + $0x6f] sm:$0xff]
        %v5525 = vld [vmem:[#allocation2 + $0x87] sm:$0xff]
        %v5526 = vld [vmem:[#allocation2 + $0x8f] sm:$0xff]
        %v5527 = vld [vmem:[#allocation2 + $0xa7] sm:$0xff]
        %v5528 = vld [vmem:[#allocation2 + $0xaf] sm:$0xff]
        %v5529 = vld [vmem:[#allocation2 + $0xc7] sm:$0xff]
        %v5530 = vld [vmem:[#allocation2 + $0xcf] sm:$0xff]
        %v5531 = vld [vmem:[#allocation2 + $0xe7] sm:$0xff]
        %v5532 = vld [vmem:[#allocation2 + $0xef] sm:$0xff]
        %v5533 = vld [vmem:[#allocation2 + $0x107] sm:$0xff]
        %v5534 = vld [vmem:[#allocation2 + $0x10f] sm:$0xff]
        %v5535 = vld [vmem:[#allocation2 + $0x127] sm:$0xff]
        %v5536 = vld [vmem:[#allocation2 + $0x12f] sm:$0xff]
        %v5537 = vld [vmem:[#allocation2 + $0x147] sm:$0xff]
        %v5538 = vld [vmem:[#allocation2 + $0x14f] sm:$0xff]
        %v5539 = vld [vmem:[#allocation2 + $0x167] sm:$0xff]
        %v5540 = vld [vmem:[#allocation2 + $0x16f] sm:$0xff]
        %v5541 = vld [vmem:[#allocation2 + $0x187] sm:$0xff]
        %v5542 = vld [vmem:[#allocation2 + $0x18f] sm:$0xff]
        %v5543 = vld [vmem:[#allocation2 + $0x1a7] sm:$0xff]
        %v5544 = vld [vmem:[#allocation2 + $0x1af] sm:$0xff]
        %v5545 = vld [vmem:[#allocation2 + $0x1c7] sm:$0xff]
        %v5546 = vld [vmem:[#allocation2 + $0x1cf] sm:$0xff]
        %v5547 = vld [vmem:[#allocation2 + $0x1e7] sm:$0xff]
        %v5548 = vld [vmem:[#allocation2 + $0x1ef] sm:$0xff]
        %v5549 = vld [vmem:[#allocation2 + $0x207] sm:$0xff]
        %v5550 = vld [vmem:[#allocation2 + $0x20f] sm:$0xff]
        %v5551 = vld [vmem:[#allocation2 + $0x227] sm:$0xff]
        %v5552 = vld [vmem:[#allocation2 + $0x22f] sm:$0xff]
        %v5553 = vld [vmem:[#allocation2 + $0x247] sm:$0xff]
        %v5554 = vld [vmem:[#allocation2 + $0x24f] sm:$0xff]
        %v5555 = vld [vmem:[#allocation2 + $0x267] sm:$0xff]
        %v5556 = vld [vmem:[#allocation2 + $0x26f] sm:$0xff]
        %v5557 = vld [vmem:[#allocation2 + $0x287] sm:$0xff]
        %v5558 = vld [vmem:[#allocation2 + $0x28f] sm:$0xff]
        %v5559 = vld [vmem:[#allocation2 + $0x2a7] sm:$0xff]
        %v5560 = vld [vmem:[#allocation2 + $0x2af] sm:$0xff]
        %v5561 = vlaneseq
        %v5562 = vshrl.u32 %v5561, 7
        %v5563 = vsub.s32 2, %v5562
        %v5564 = vrot.slane %v4534, %v5563
        %v5565 = vmul.f32 %v5517, %v5564
        %v5566 = vmul.f32 %v5518, %v5564
        %v5567 = vmul.f32 %v5519, %v5564
        %v5568 = vmul.f32 %v5520, %v5564
        %v5569 = vmul.f32 %v5521, %v5564
        %v5570 = vmul.f32 %v5522, %v5564
        %v5571 = vmul.f32 %v5523, %v5564
        %v5572 = vmul.f32 %v5524, %v5564
        %v5573 = vmul.f32 %v5525, %v5564
        %v5574 = vmul.f32 %v5526, %v5564
        %v5575 = vmul.f32 %v5527, %v5564
        %v5576 = vmul.f32 %v5528, %v5564
        %v5577 = vmul.f32 %v5529, %v5564
        %v5578 = vmul.f32 %v5530, %v5564
        %v5579 = vmul.f32 %v5531, %v5564
        %v5580 = vmul.f32 %v5532, %v5564
        %v5581 = vmul.f32 %v5533, %v5564
        %v5582 = vmul.f32 %v5534, %v5564
        %v5583 = vmul.f32 %v5535, %v5564
        %v5584 = vmul.f32 %v5536, %v5564
        %v5585 = vmul.f32 %v5537, %v5564
        %v5586 = vmul.f32 %v5538, %v5564
        %v5587 = vmul.f32 %v5539, %v5564
        %v5588 = vmul.f32 %v5540, %v5564
        %v5589 = vmul.f32 %v5541, %v5564
        %v5590 = vmul.f32 %v5542, %v5564
        %v5591 = vmul.f32 %v5543, %v5564
        %v5592 = vmul.f32 %v5544, %v5564
        %v5593 = vmul.f32 %v5545, %v5564
        %v5594 = vmul.f32 %v5546, %v5564
        %v5595 = vmul.f32 %v5547, %v5564
        %v5596 = vmul.f32 %v5548, %v5564
        %v5597 = vlaneseq
        %v5598 = vshrl.u32 %v5597, 7
        %v5599 = vsub.s32 1, %v5598
        %v5600 = vrot.slane %v4535, %v5599
        %v5601 = vmul.f32 %v5519, %v5600
        %v5602 = vmul.f32 %v5520, %v5600
        %v5603 = vmul.f32 %v5521, %v5600
        %v5604 = vmul.f32 %v5522, %v5600
        %v5605 = vmul.f32 %v5523, %v5600
        %v5606 = vmul.f32 %v5524, %v5600
        %v5607 = vmul.f32 %v5525, %v5600
        %v5608 = vmul.f32 %v5526, %v5600
        %v5609 = vmul.f32 %v5527, %v5600
        %v5610 = vmul.f32 %v5528, %v5600
        %v5611 = vmul.f32 %v5529, %v5600
        %v5612 = vmul.f32 %v5530, %v5600
        %v5613 = vmul.f32 %v5531, %v5600
        %v5614 = vmul.f32 %v5532, %v5600
        %v5615 = vmul.f32 %v5533, %v5600
        %v5616 = vmul.f32 %v5534, %v5600
        %v5617 = vmul.f32 %v5535, %v5600
        %v5618 = vmul.f32 %v5536, %v5600
        %v5619 = vmul.f32 %v5537, %v5600
        %v5620 = vmul.f32 %v5538, %v5600
        %v5621 = vmul.f32 %v5539, %v5600
        %v5622 = vmul.f32 %v5540, %v5600
        %v5623 = vmul.f32 %v5541, %v5600
        %v5624 = vmul.f32 %v5542, %v5600
        %v5625 = vmul.f32 %v5543, %v5600
        %v5626 = vmul.f32 %v5544, %v5600
        %v5627 = vmul.f32 %v5545, %v5600
        %v5628 = vmul.f32 %v5546, %v5600
        %v5629 = vmul.f32 %v5547, %v5600
        %v5630 = vmul.f32 %v5548, %v5600
        %v5631 = vmul.f32 %v5549, %v5600
        %v5632 = vmul.f32 %v5550, %v5600
        %v5633 = vadd.f32 %v5565, %v5601
        %v5634 = vadd.f32 %v5566, %v5602
        %v5635 = vadd.f32 %v5567, %v5603
        %v5636 = vadd.f32 %v5568, %v5604
        %v5637 = vadd.f32 %v5569, %v5605
        %v5638 = vadd.f32 %v5570, %v5606
        %v5639 = vadd.f32 %v5571, %v5607
        %v5640 = vadd.f32 %v5572, %v5608
        %v5641 = vadd.f32 %v5573, %v5609
        %v5642 = vadd.f32 %v5574, %v5610
        %v5643 = vadd.f32 %v5575, %v5611
        %v5644 = vadd.f32 %v5576, %v5612
        %v5645 = vadd.f32 %v5577, %v5613
        %v5646 = vadd.f32 %v5578, %v5614
        %v5647 = vadd.f32 %v5579, %v5615
        %v5648 = vadd.f32 %v5580, %v5616
        %v5649 = vadd.f32 %v5581, %v5617
        %v5650 = vadd.f32 %v5582, %v5618
        %v5651 = vadd.f32 %v5583, %v5619
        %v5652 = vadd.f32 %v5584, %v5620
        %v5653 = vadd.f32 %v5585, %v5621
        %v5654 = vadd.f32 %v5586, %v5622
        %v5655 = vadd.f32 %v5587, %v5623
        %v5656 = vadd.f32 %v5588, %v5624
        %v5657 = vadd.f32 %v5589, %v5625
        %v5658 = vadd.f32 %v5590, %v5626
        %v5659 = vadd.f32 %v5591, %v5627
        %v5660 = vadd.f32 %v5592, %v5628
        %v5661 = vadd.f32 %v5593, %v5629
        %v5662 = vadd.f32 %v5594, %v5630
        %v5663 = vadd.f32 %v5595, %v5631
        %v5664 = vadd.f32 %v5596, %v5632
        %v5665 = vlaneseq
        %v5666 = vshrl.u32 %v5665, 7
        %v5667 = vsub.s32 0, %v5666
        %v5668 = vrot.slane %v4536, %v5667
        %v5669 = vmul.f32 %v5521, %v5668
        %v5670 = vmul.f32 %v5522, %v5668
        %v5671 = vmul.f32 %v5523, %v5668
        %v5672 = vmul.f32 %v5524, %v5668
        %v5673 = vmul.f32 %v5525, %v5668
        %v5674 = vmul.f32 %v5526, %v5668
        %v5675 = vmul.f32 %v5527, %v5668
        %v5676 = vmul.f32 %v5528, %v5668
        %v5677 = vmul.f32 %v5529, %v5668
        %v5678 = vmul.f32 %v5530, %v5668
        %v5679 = vmul.f32 %v5531, %v5668
        %v5680 = vmul.f32 %v5532, %v5668
        %v5681 = vmul.f32 %v5533, %v5668
        %v5682 = vmul.f32 %v5534, %v5668
        %v5683 = vmul.f32 %v5535, %v5668
        %v5684 = vmul.f32 %v5536, %v5668
        %v5685 = vmul.f32 %v5537, %v5668
        %v5686 = vmul.f32 %v5538, %v5668
        %v5687 = vmul.f32 %v5539, %v5668
        %v5688 = vmul.f32 %v5540, %v5668
        %v5689 = vmul.f32 %v5541, %v5668
        %v5690 = vmul.f32 %v5542, %v5668
        %v5691 = vmul.f32 %v5543, %v5668
        %v5692 = vmul.f32 %v5544, %v5668
        %v5693 = vmul.f32 %v5545, %v5668
        %v5694 = vmul.f32 %v5546, %v5668
        %v5695 = vmul.f32 %v5547, %v5668
        %v5696 = vmul.f32 %v5548, %v5668
        %v5697 = vmul.f32 %v5549, %v5668
        %v5698 = vmul.f32 %v5550, %v5668
        %v5699 = vmul.f32 %v5551, %v5668
        %v5700 = vmul.f32 %v5552, %v5668
        %v5701 = vadd.f32 %v5633, %v5669
        %v5702 = vadd.f32 %v5634, %v5670
        %v5703 = vadd.f32 %v5635, %v5671
        %v5704 = vadd.f32 %v5636, %v5672
        %v5705 = vadd.f32 %v5637, %v5673
        %v5706 = vadd.f32 %v5638, %v5674
        %v5707 = vadd.f32 %v5639, %v5675
        %v5708 = vadd.f32 %v5640, %v5676
        %v5709 = vadd.f32 %v5641, %v5677
        %v5710 = vadd.f32 %v5642, %v5678
        %v5711 = vadd.f32 %v5643, %v5679
        %v5712 = vadd.f32 %v5644, %v5680
        %v5713 = vadd.f32 %v5645, %v5681
        %v5714 = vadd.f32 %v5646, %v5682
        %v5715 = vadd.f32 %v5647, %v5683
        %v5716 = vadd.f32 %v5648, %v5684
        %v5717 = vadd.f32 %v5649, %v5685
        %v5718 = vadd.f32 %v5650, %v5686
        %v5719 = vadd.f32 %v5651, %v5687
        %v5720 = vadd.f32 %v5652, %v5688
        %v5721 = vadd.f32 %v5653, %v5689
        %v5722 = vadd.f32 %v5654, %v5690
        %v5723 = vadd.f32 %v5655, %v5691
        %v5724 = vadd.f32 %v5656, %v5692
        %v5725 = vadd.f32 %v5657, %v5693
        %v5726 = vadd.f32 %v5658, %v5694
        %v5727 = vadd.f32 %v5659, %v5695
        %v5728 = vadd.f32 %v5660, %v5696
        %v5729 = vadd.f32 %v5661, %v5697
        %v5730 = vadd.f32 %v5662, %v5698
        %v5731 = vadd.f32 %v5663, %v5699
        %v5732 = vadd.f32 %v5664, %v5700
        %v5733 = vlaneseq
        %v5734 = vshrl.u32 %v5733, 7
        %v5735 = vsub.s32 7, %v5734
        %v5736 = vrot.slane %v4536, %v5735
        %v5737 = vmul.f32 %v5523, %v5736
        %v5738 = vmul.f32 %v5524, %v5736
        %v5739 = vmul.f32 %v5525, %v5736
        %v5740 = vmul.f32 %v5526, %v5736
        %v5741 = vmul.f32 %v5527, %v5736
        %v5742 = vmul.f32 %v5528, %v5736
        %v5743 = vmul.f32 %v5529, %v5736
        %v5744 = vmul.f32 %v5530, %v5736
        %v5745 = vmul.f32 %v5531, %v5736
        %v5746 = vmul.f32 %v5532, %v5736
        %v5747 = vmul.f32 %v5533, %v5736
        %v5748 = vmul.f32 %v5534, %v5736
        %v5749 = vmul.f32 %v5535, %v5736
        %v5750 = vmul.f32 %v5536, %v5736
        %v5751 = vmul.f32 %v5537, %v5736
        %v5752 = vmul.f32 %v5538, %v5736
        %v5753 = vmul.f32 %v5539, %v5736
        %v5754 = vmul.f32 %v5540, %v5736
        %v5755 = vmul.f32 %v5541, %v5736
        %v5756 = vmul.f32 %v5542, %v5736
        %v5757 = vmul.f32 %v5543, %v5736
        %v5758 = vmul.f32 %v5544, %v5736
        %v5759 = vmul.f32 %v5545, %v5736
        %v5760 = vmul.f32 %v5546, %v5736
        %v5761 = vmul.f32 %v5547, %v5736
        %v5762 = vmul.f32 %v5548, %v5736
        %v5763 = vmul.f32 %v5549, %v5736
        %v5764 = vmul.f32 %v5550, %v5736
        %v5765 = vmul.f32 %v5551, %v5736
        %v5766 = vmul.f32 %v5552, %v5736
        %v5767 = vmul.f32 %v5553, %v5736
        %v5768 = vmul.f32 %v5554, %v5736
        %v5769 = vadd.f32 %v5701, %v5737
        %v5770 = vadd.f32 %v5702, %v5738
        %v5771 = vadd.f32 %v5703, %v5739
        %v5772 = vadd.f32 %v5704, %v5740
        %v5773 = vadd.f32 %v5705, %v5741
        %v5774 = vadd.f32 %v5706, %v5742
        %v5775 = vadd.f32 %v5707, %v5743
        %v5776 = vadd.f32 %v5708, %v5744
        %v5777 = vadd.f32 %v5709, %v5745
        %v5778 = vadd.f32 %v5710, %v5746
        %v5779 = vadd.f32 %v5711, %v5747
        %v5780 = vadd.f32 %v5712, %v5748
        %v5781 = vadd.f32 %v5713, %v5749
        %v5782 = vadd.f32 %v5714, %v5750
        %v5783 = vadd.f32 %v5715, %v5751
        %v5784 = vadd.f32 %v5716, %v5752
        %v5785 = vadd.f32 %v5717, %v5753
        %v5786 = vadd.f32 %v5718, %v5754
        %v5787 = vadd.f32 %v5719, %v5755
        %v5788 = vadd.f32 %v5720, %v5756
        %v5789 = vadd.f32 %v5721, %v5757
        %v5790 = vadd.f32 %v5722, %v5758
        %v5791 = vadd.f32 %v5723, %v5759
        %v5792 = vadd.f32 %v5724, %v5760
        %v5793 = vadd.f32 %v5725, %v5761
        %v5794 = vadd.f32 %v5726, %v5762
        %v5795 = vadd.f32 %v5727, %v5763
        %v5796 = vadd.f32 %v5728, %v5764
        %v5797 = vadd.f32 %v5729, %v5765
        %v5798 = vadd.f32 %v5730, %v5766
        %v5799 = vadd.f32 %v5731, %v5767
        %v5800 = vadd.f32 %v5732, %v5768
        %v5801 = vlaneseq
        %v5802 = vshrl.u32 %v5801, 7
        %v5803 = vsub.s32 6, %v5802
        %v5804 = vrot.slane %v4537, %v5803
        %v5805 = vmul.f32 %v5525, %v5804
        %v5806 = vmul.f32 %v5526, %v5804
        %v5807 = vmul.f32 %v5527, %v5804
        %v5808 = vmul.f32 %v5528, %v5804
        %v5809 = vmul.f32 %v5529, %v5804
        %v5810 = vmul.f32 %v5530, %v5804
        %v5811 = vmul.f32 %v5531, %v5804
        %v5812 = vmul.f32 %v5532, %v5804
        %v5813 = vmul.f32 %v5533, %v5804
        %v5814 = vmul.f32 %v5534, %v5804
        %v5815 = vmul.f32 %v5535, %v5804
        %v5816 = vmul.f32 %v5536, %v5804
        %v5817 = vmul.f32 %v5537, %v5804
        %v5818 = vmul.f32 %v5538, %v5804
        %v5819 = vmul.f32 %v5539, %v5804
        %v5820 = vmul.f32 %v5540, %v5804
        %v5821 = vmul.f32 %v5541, %v5804
        %v5822 = vmul.f32 %v5542, %v5804
        %v5823 = vmul.f32 %v5543, %v5804
        %v5824 = vmul.f32 %v5544, %v5804
        %v5825 = vmul.f32 %v5545, %v5804
        %v5826 = vmul.f32 %v5546, %v5804
        %v5827 = vmul.f32 %v5547, %v5804
        %v5828 = vmul.f32 %v5548, %v5804
        %v5829 = vmul.f32 %v5549, %v5804
        %v5830 = vmul.f32 %v5550, %v5804
        %v5831 = vmul.f32 %v5551, %v5804
        %v5832 = vmul.f32 %v5552, %v5804
        %v5833 = vmul.f32 %v5553, %v5804
        %v5834 = vmul.f32 %v5554, %v5804
        %v5835 = vmul.f32 %v5555, %v5804
        %v5836 = vmul.f32 %v5556, %v5804
        %v5837 = vadd.f32 %v5769, %v5805
        %v5838 = vadd.f32 %v5770, %v5806
        %v5839 = vadd.f32 %v5771, %v5807
        %v5840 = vadd.f32 %v5772, %v5808
        %v5841 = vadd.f32 %v5773, %v5809
        %v5842 = vadd.f32 %v5774, %v5810
        %v5843 = vadd.f32 %v5775, %v5811
        %v5844 = vadd.f32 %v5776, %v5812
        %v5845 = vadd.f32 %v5777, %v5813
        %v5846 = vadd.f32 %v5778, %v5814
        %v5847 = vadd.f32 %v5779, %v5815
        %v5848 = vadd.f32 %v5780, %v5816
        %v5849 = vadd.f32 %v5781, %v5817
        %v5850 = vadd.f32 %v5782, %v5818
        %v5851 = vadd.f32 %v5783, %v5819
        %v5852 = vadd.f32 %v5784, %v5820
        %v5853 = vadd.f32 %v5785, %v5821
        %v5854 = vadd.f32 %v5786, %v5822
        %v5855 = vadd.f32 %v5787, %v5823
        %v5856 = vadd.f32 %v5788, %v5824
        %v5857 = vadd.f32 %v5789, %v5825
        %v5858 = vadd.f32 %v5790, %v5826
        %v5859 = vadd.f32 %v5791, %v5827
        %v5860 = vadd.f32 %v5792, %v5828
        %v5861 = vadd.f32 %v5793, %v5829
        %v5862 = vadd.f32 %v5794, %v5830
        %v5863 = vadd.f32 %v5795, %v5831
        %v5864 = vadd.f32 %v5796, %v5832
        %v5865 = vadd.f32 %v5797, %v5833
        %v5866 = vadd.f32 %v5798, %v5834
        %v5867 = vadd.f32 %v5799, %v5835
        %v5868 = vadd.f32 %v5800, %v5836
        %v5869 = vlaneseq
        %v5870 = vshrl.u32 %v5869, 7
        %v5871 = vsub.s32 5, %v5870
        %v5872 = vrot.slane %v4538, %v5871
        %v5873 = vmul.f32 %v5527, %v5872
        %v5874 = vmul.f32 %v5528, %v5872
        %v5875 = vmul.f32 %v5529, %v5872
        %v5876 = vmul.f32 %v5530, %v5872
        %v5877 = vmul.f32 %v5531, %v5872
        %v5878 = vmul.f32 %v5532, %v5872
        %v5879 = vmul.f32 %v5533, %v5872
        %v5880 = vmul.f32 %v5534, %v5872
        %v5881 = vmul.f32 %v5535, %v5872
        %v5882 = vmul.f32 %v5536, %v5872
        %v5883 = vmul.f32 %v5537, %v5872
        %v5884 = vmul.f32 %v5538, %v5872
        %v5885 = vmul.f32 %v5539, %v5872
        %v5886 = vmul.f32 %v5540, %v5872
        %v5887 = vmul.f32 %v5541, %v5872
        %v5888 = vmul.f32 %v5542, %v5872
        %v5889 = vmul.f32 %v5543, %v5872
        %v5890 = vmul.f32 %v5544, %v5872
        %v5891 = vmul.f32 %v5545, %v5872
        %v5892 = vmul.f32 %v5546, %v5872
        %v5893 = vmul.f32 %v5547, %v5872
        %v5894 = vmul.f32 %v5548, %v5872
        %v5895 = vmul.f32 %v5549, %v5872
        %v5896 = vmul.f32 %v5550, %v5872
        %v5897 = vmul.f32 %v5551, %v5872
        %v5898 = vmul.f32 %v5552, %v5872
        %v5899 = vmul.f32 %v5553, %v5872
        %v5900 = vmul.f32 %v5554, %v5872
        %v5901 = vmul.f32 %v5555, %v5872
        %v5902 = vmul.f32 %v5556, %v5872
        %v5903 = vmul.f32 %v5557, %v5872
        %v5904 = vmul.f32 %v5558, %v5872
        %v5905 = vadd.f32 %v5837, %v5873
        %v5906 = vadd.f32 %v5838, %v5874
        %v5907 = vadd.f32 %v5839, %v5875
        %v5908 = vadd.f32 %v5840, %v5876
        %v5909 = vadd.f32 %v5841, %v5877
        %v5910 = vadd.f32 %v5842, %v5878
        %v5911 = vadd.f32 %v5843, %v5879
        %v5912 = vadd.f32 %v5844, %v5880
        %v5913 = vadd.f32 %v5845, %v5881
        %v5914 = vadd.f32 %v5846, %v5882
        %v5915 = vadd.f32 %v5847, %v5883
        %v5916 = vadd.f32 %v5848, %v5884
        %v5917 = vadd.f32 %v5849, %v5885
        %v5918 = vadd.f32 %v5850, %v5886
        %v5919 = vadd.f32 %v5851, %v5887
        %v5920 = vadd.f32 %v5852, %v5888
        %v5921 = vadd.f32 %v5853, %v5889
        %v5922 = vadd.f32 %v5854, %v5890
        %v5923 = vadd.f32 %v5855, %v5891
        %v5924 = vadd.f32 %v5856, %v5892
        %v5925 = vadd.f32 %v5857, %v5893
        %v5926 = vadd.f32 %v5858, %v5894
        %v5927 = vadd.f32 %v5859, %v5895
        %v5928 = vadd.f32 %v5860, %v5896
        %v5929 = vadd.f32 %v5861, %v5897
        %v5930 = vadd.f32 %v5862, %v5898
        %v5931 = vadd.f32 %v5863, %v5899
        %v5932 = vadd.f32 %v5864, %v5900
        %v5933 = vadd.f32 %v5865, %v5901
        %v5934 = vadd.f32 %v5866, %v5902
        %v5935 = vadd.f32 %v5867, %v5903
        %v5936 = vadd.f32 %v5868, %v5904
        %v5937 = vlaneseq
        %v5938 = vshrl.u32 %v5937, 7
        %v5939 = vsub.s32 4, %v5938
        %v5940 = vrot.slane %v4539, %v5939
        %v5941 = vmul.f32 %v5529, %v5940
        %v5942 = vmul.f32 %v5530, %v5940
        %v5943 = vmul.f32 %v5531, %v5940
        %v5944 = vmul.f32 %v5532, %v5940
        %v5945 = vmul.f32 %v5533, %v5940
        %v5946 = vmul.f32 %v5534, %v5940
        %v5947 = vmul.f32 %v5535, %v5940
        %v5948 = vmul.f32 %v5536, %v5940
        %v5949 = vmul.f32 %v5537, %v5940
        %v5950 = vmul.f32 %v5538, %v5940
        %v5951 = vmul.f32 %v5539, %v5940
        %v5952 = vmul.f32 %v5540, %v5940
        %v5953 = vmul.f32 %v5541, %v5940
        %v5954 = vmul.f32 %v5542, %v5940
        %v5955 = vmul.f32 %v5543, %v5940
        %v5956 = vmul.f32 %v5544, %v5940
        %v5957 = vmul.f32 %v5545, %v5940
        %v5958 = vmul.f32 %v5546, %v5940
        %v5959 = vmul.f32 %v5547, %v5940
        %v5960 = vmul.f32 %v5548, %v5940
        %v5961 = vmul.f32 %v5549, %v5940
        %v5962 = vmul.f32 %v5550, %v5940
        %v5963 = vmul.f32 %v5551, %v5940
        %v5964 = vmul.f32 %v5552, %v5940
        %v5965 = vmul.f32 %v5553, %v5940
        %v5966 = vmul.f32 %v5554, %v5940
        %v5967 = vmul.f32 %v5555, %v5940
        %v5968 = vmul.f32 %v5556, %v5940
        %v5969 = vmul.f32 %v5557, %v5940
        %v5970 = vmul.f32 %v5558, %v5940
        %v5971 = vmul.f32 %v5559, %v5940
        %v5972 = vmul.f32 %v5560, %v5940
        %v5973 = vadd.f32 %v5905, %v5941
        %v5974 = vadd.f32 %v5906, %v5942
        %v5975 = vadd.f32 %v5907, %v5943
        %v5976 = vadd.f32 %v5908, %v5944
        %v5977 = vadd.f32 %v5909, %v5945
        %v5978 = vadd.f32 %v5910, %v5946
        %v5979 = vadd.f32 %v5911, %v5947
        %v5980 = vadd.f32 %v5912, %v5948
        %v5981 = vadd.f32 %v5913, %v5949
        %v5982 = vadd.f32 %v5914, %v5950
        %v5983 = vadd.f32 %v5915, %v5951
        %v5984 = vadd.f32 %v5916, %v5952
        %v5985 = vadd.f32 %v5917, %v5953
        %v5986 = vadd.f32 %v5918, %v5954
        %v5987 = vadd.f32 %v5919, %v5955
        %v5988 = vadd.f32 %v5920, %v5956
        %v5989 = vadd.f32 %v5921, %v5957
        %v5990 = vadd.f32 %v5922, %v5958
        %v5991 = vadd.f32 %v5923, %v5959
        %v5992 = vadd.f32 %v5924, %v5960
        %v5993 = vadd.f32 %v5925, %v5961
        %v5994 = vadd.f32 %v5926, %v5962
        %v5995 = vadd.f32 %v5927, %v5963
        %v5996 = vadd.f32 %v5928, %v5964
        %v5997 = vadd.f32 %v5929, %v5965
        %v5998 = vadd.f32 %v5930, %v5966
        %v5999 = vadd.f32 %v5931, %v5967
        %v6000 = vadd.f32 %v5932, %v5968
        %v6001 = vadd.f32 %v5933, %v5969
        %v6002 = vadd.f32 %v5934, %v5970
        %v6003 = vadd.f32 %v5935, %v5971
        %v6004 = vadd.f32 %v5936, %v5972
        %v6005 = vld [vmem:[#allocation2 + $0x8] sm:$0xff]
        %v6006 = vld [vmem:[#allocation2 + $0x10] sm:$0xff]
        %v6007 = vld [vmem:[#allocation2 + $0x28] sm:$0xff]
        %v6008 = vld [vmem:[#allocation2 + $0x30] sm:$0xff]
        %v6009 = vld [vmem:[#allocation2 + $0x48] sm:$0xff]
        %v6010 = vld [vmem:[#allocation2 + $0x50] sm:$0xff]
        %v6011 = vld [vmem:[#allocation2 + $0x68] sm:$0xff]
        %v6012 = vld [vmem:[#allocation2 + $0x70] sm:$0xff]
        %v6013 = vld [vmem:[#allocation2 + $0x88] sm:$0xff]
        %v6014 = vld [vmem:[#allocation2 + $0x90] sm:$0xff]
        %v6015 = vld [vmem:[#allocation2 + $0xa8] sm:$0xff]
        %v6016 = vld [vmem:[#allocation2 + $0xb0] sm:$0xff]
        %v6017 = vld [vmem:[#allocation2 + $0xc8] sm:$0xff]
        %v6018 = vld [vmem:[#allocation2 + $0xd0] sm:$0xff]
        %v6019 = vld [vmem:[#allocation2 + $0xe8] sm:$0xff]
        %v6020 = vld [vmem:[#allocation2 + $0xf0] sm:$0xff]
        %v6021 = vld [vmem:[#allocation2 + $0x108] sm:$0xff]
        %v6022 = vld [vmem:[#allocation2 + $0x110] sm:$0xff]
        %v6023 = vld [vmem:[#allocation2 + $0x128] sm:$0xff]
        %v6024 = vld [vmem:[#allocation2 + $0x130] sm:$0xff]
        %v6025 = vld [vmem:[#allocation2 + $0x148] sm:$0xff]
        %v6026 = vld [vmem:[#allocation2 + $0x150] sm:$0xff]
        %v6027 = vld [vmem:[#allocation2 + $0x168] sm:$0xff]
        %v6028 = vld [vmem:[#allocation2 + $0x170] sm:$0xff]
        %v6029 = vld [vmem:[#allocation2 + $0x188] sm:$0xff]
        %v6030 = vld [vmem:[#allocation2 + $0x190] sm:$0xff]
        %v6031 = vld [vmem:[#allocation2 + $0x1a8] sm:$0xff]
        %v6032 = vld [vmem:[#allocation2 + $0x1b0] sm:$0xff]
        %v6033 = vld [vmem:[#allocation2 + $0x1c8] sm:$0xff]
        %v6034 = vld [vmem:[#allocation2 + $0x1d0] sm:$0xff]
        %v6035 = vld [vmem:[#allocation2 + $0x1e8] sm:$0xff]
        %v6036 = vld [vmem:[#allocation2 + $0x1f0] sm:$0xff]
        %v6037 = vld [vmem:[#allocation2 + $0x208] sm:$0xff]
        %v6038 = vld [vmem:[#allocation2 + $0x210] sm:$0xff]
        %v6039 = vld [vmem:[#allocation2 + $0x228] sm:$0xff]
        %v6040 = vld [vmem:[#allocation2 + $0x230] sm:$0xff]
        %v6041 = vld [vmem:[#allocation2 + $0x248] sm:$0xff]
        %v6042 = vld [vmem:[#allocation2 + $0x250] sm:$0xff]
        %v6043 = vld [vmem:[#allocation2 + $0x268] sm:$0xff]
        %v6044 = vld [vmem:[#allocation2 + $0x270] sm:$0xff]
        %v6045 = vld [vmem:[#allocation2 + $0x288] sm:$0xff]
        %v6046 = vld [vmem:[#allocation2 + $0x290] sm:$0xff]
        %v6047 = vld [vmem:[#allocation2 + $0x2a8] sm:$0xff]
        %v6048 = vld [vmem:[#allocation2 + $0x2b0] sm:$0xff]
        %v6049 = vlaneseq
        %v6050 = vshrl.u32 %v6049, 7
        %v6051 = vsub.s32 3, %v6050
        %v6052 = vrot.slane %v4534, %v6051
        %v6053 = vmul.f32 %v6005, %v6052
        %v6054 = vmul.f32 %v6006, %v6052
        %v6055 = vmul.f32 %v6007, %v6052
        %v6056 = vmul.f32 %v6008, %v6052
        %v6057 = vmul.f32 %v6009, %v6052
        %v6058 = vmul.f32 %v6010, %v6052
        %v6059 = vmul.f32 %v6011, %v6052
        %v6060 = vmul.f32 %v6012, %v6052
        %v6061 = vmul.f32 %v6013, %v6052
        %v6062 = vmul.f32 %v6014, %v6052
        %v6063 = vmul.f32 %v6015, %v6052
        %v6064 = vmul.f32 %v6016, %v6052
        %v6065 = vmul.f32 %v6017, %v6052
        %v6066 = vmul.f32 %v6018, %v6052
        %v6067 = vmul.f32 %v6019, %v6052
        %v6068 = vmul.f32 %v6020, %v6052
        %v6069 = vmul.f32 %v6021, %v6052
        %v6070 = vmul.f32 %v6022, %v6052
        %v6071 = vmul.f32 %v6023, %v6052
        %v6072 = vmul.f32 %v6024, %v6052
        %v6073 = vmul.f32 %v6025, %v6052
        %v6074 = vmul.f32 %v6026, %v6052
        %v6075 = vmul.f32 %v6027, %v6052
        %v6076 = vmul.f32 %v6028, %v6052
        %v6077 = vmul.f32 %v6029, %v6052
        %v6078 = vmul.f32 %v6030, %v6052
        %v6079 = vmul.f32 %v6031, %v6052
        %v6080 = vmul.f32 %v6032, %v6052
        %v6081 = vmul.f32 %v6033, %v6052
        %v6082 = vmul.f32 %v6034, %v6052
        %v6083 = vmul.f32 %v6035, %v6052
        %v6084 = vmul.f32 %v6036, %v6052
        %v6085 = vlaneseq
        %v6086 = vshrl.u32 %v6085, 7
        %v6087 = vsub.s32 2, %v6086
        %v6088 = vrot.slane %v4535, %v6087
        %v6089 = vmul.f32 %v6007, %v6088
        %v6090 = vmul.f32 %v6008, %v6088
        %v6091 = vmul.f32 %v6009, %v6088
        %v6092 = vmul.f32 %v6010, %v6088
        %v6093 = vmul.f32 %v6011, %v6088
        %v6094 = vmul.f32 %v6012, %v6088
        %v6095 = vmul.f32 %v6013, %v6088
        %v6096 = vmul.f32 %v6014, %v6088
        %v6097 = vmul.f32 %v6015, %v6088
        %v6098 = vmul.f32 %v6016, %v6088
        %v6099 = vmul.f32 %v6017, %v6088
        %v6100 = vmul.f32 %v6018, %v6088
        %v6101 = vmul.f32 %v6019, %v6088
        %v6102 = vmul.f32 %v6020, %v6088
        %v6103 = vmul.f32 %v6021, %v6088
        %v6104 = vmul.f32 %v6022, %v6088
        %v6105 = vmul.f32 %v6023, %v6088
        %v6106 = vmul.f32 %v6024, %v6088
        %v6107 = vmul.f32 %v6025, %v6088
        %v6108 = vmul.f32 %v6026, %v6088
        %v6109 = vmul.f32 %v6027, %v6088
        %v6110 = vmul.f32 %v6028, %v6088
        %v6111 = vmul.f32 %v6029, %v6088
        %v6112 = vmul.f32 %v6030, %v6088
        %v6113 = vmul.f32 %v6031, %v6088
        %v6114 = vmul.f32 %v6032, %v6088
        %v6115 = vmul.f32 %v6033, %v6088
        %v6116 = vmul.f32 %v6034, %v6088
        %v6117 = vmul.f32 %v6035, %v6088
        %v6118 = vmul.f32 %v6036, %v6088
        %v6119 = vmul.f32 %v6037, %v6088
        %v6120 = vmul.f32 %v6038, %v6088
        %v6121 = vadd.f32 %v6053, %v6089
        %v6122 = vadd.f32 %v6054, %v6090
        %v6123 = vadd.f32 %v6055, %v6091
        %v6124 = vadd.f32 %v6056, %v6092
        %v6125 = vadd.f32 %v6057, %v6093
        %v6126 = vadd.f32 %v6058, %v6094
        %v6127 = vadd.f32 %v6059, %v6095
        %v6128 = vadd.f32 %v6060, %v6096
        %v6129 = vadd.f32 %v6061, %v6097
        %v6130 = vadd.f32 %v6062, %v6098
        %v6131 = vadd.f32 %v6063, %v6099
        %v6132 = vadd.f32 %v6064, %v6100
        %v6133 = vadd.f32 %v6065, %v6101
        %v6134 = vadd.f32 %v6066, %v6102
        %v6135 = vadd.f32 %v6067, %v6103
        %v6136 = vadd.f32 %v6068, %v6104
        %v6137 = vadd.f32 %v6069, %v6105
        %v6138 = vadd.f32 %v6070, %v6106
        %v6139 = vadd.f32 %v6071, %v6107
        %v6140 = vadd.f32 %v6072, %v6108
        %v6141 = vadd.f32 %v6073, %v6109
        %v6142 = vadd.f32 %v6074, %v6110
        %v6143 = vadd.f32 %v6075, %v6111
        %v6144 = vadd.f32 %v6076, %v6112
        %v6145 = vadd.f32 %v6077, %v6113
        %v6146 = vadd.f32 %v6078, %v6114
        %v6147 = vadd.f32 %v6079, %v6115
        %v6148 = vadd.f32 %v6080, %v6116
        %v6149 = vadd.f32 %v6081, %v6117
        %v6150 = vadd.f32 %v6082, %v6118
        %v6151 = vadd.f32 %v6083, %v6119
        %v6152 = vadd.f32 %v6084, %v6120
        %v6153 = vlaneseq
        %v6154 = vshrl.u32 %v6153, 7
        %v6155 = vsub.s32 1, %v6154
        %v6156 = vrot.slane %v4536, %v6155
        %v6157 = vmul.f32 %v6009, %v6156
        %v6158 = vmul.f32 %v6010, %v6156
        %v6159 = vmul.f32 %v6011, %v6156
        %v6160 = vmul.f32 %v6012, %v6156
        %v6161 = vmul.f32 %v6013, %v6156
        %v6162 = vmul.f32 %v6014, %v6156
        %v6163 = vmul.f32 %v6015, %v6156
        %v6164 = vmul.f32 %v6016, %v6156
        %v6165 = vmul.f32 %v6017, %v6156
        %v6166 = vmul.f32 %v6018, %v6156
        %v6167 = vmul.f32 %v6019, %v6156
        %v6168 = vmul.f32 %v6020, %v6156
        %v6169 = vmul.f32 %v6021, %v6156
        %v6170 = vmul.f32 %v6022, %v6156
        %v6171 = vmul.f32 %v6023, %v6156
        %v6172 = vmul.f32 %v6024, %v6156
        %v6173 = vmul.f32 %v6025, %v6156
        %v6174 = vmul.f32 %v6026, %v6156
        %v6175 = vmul.f32 %v6027, %v6156
        %v6176 = vmul.f32 %v6028, %v6156
        %v6177 = vmul.f32 %v6029, %v6156
        %v6178 = vmul.f32 %v6030, %v6156
        %v6179 = vmul.f32 %v6031, %v6156
        %v6180 = vmul.f32 %v6032, %v6156
        %v6181 = vmul.f32 %v6033, %v6156
        %v6182 = vmul.f32 %v6034, %v6156
        %v6183 = vmul.f32 %v6035, %v6156
        %v6184 = vmul.f32 %v6036, %v6156
        %v6185 = vmul.f32 %v6037, %v6156
        %v6186 = vmul.f32 %v6038, %v6156
        %v6187 = vmul.f32 %v6039, %v6156
        %v6188 = vmul.f32 %v6040, %v6156
        %v6189 = vadd.f32 %v6121, %v6157
        %v6190 = vadd.f32 %v6122, %v6158
        %v6191 = vadd.f32 %v6123, %v6159
        %v6192 = vadd.f32 %v6124, %v6160
        %v6193 = vadd.f32 %v6125, %v6161
        %v6194 = vadd.f32 %v6126, %v6162
        %v6195 = vadd.f32 %v6127, %v6163
        %v6196 = vadd.f32 %v6128, %v6164
        %v6197 = vadd.f32 %v6129, %v6165
        %v6198 = vadd.f32 %v6130, %v6166
        %v6199 = vadd.f32 %v6131, %v6167
        %v6200 = vadd.f32 %v6132, %v6168
        %v6201 = vadd.f32 %v6133, %v6169
        %v6202 = vadd.f32 %v6134, %v6170
        %v6203 = vadd.f32 %v6135, %v6171
        %v6204 = vadd.f32 %v6136, %v6172
        %v6205 = vadd.f32 %v6137, %v6173
        %v6206 = vadd.f32 %v6138, %v6174
        %v6207 = vadd.f32 %v6139, %v6175
        %v6208 = vadd.f32 %v6140, %v6176
        %v6209 = vadd.f32 %v6141, %v6177
        %v6210 = vadd.f32 %v6142, %v6178
        %v6211 = vadd.f32 %v6143, %v6179
        %v6212 = vadd.f32 %v6144, %v6180
        %v6213 = vadd.f32 %v6145, %v6181
        %v6214 = vadd.f32 %v6146, %v6182
        %v6215 = vadd.f32 %v6147, %v6183
        %v6216 = vadd.f32 %v6148, %v6184
        %v6217 = vadd.f32 %v6149, %v6185
        %v6218 = vadd.f32 %v6150, %v6186
        %v6219 = vadd.f32 %v6151, %v6187
        %v6220 = vadd.f32 %v6152, %v6188
        %v6221 = vlaneseq
        %v6222 = vshrl.u32 %v6221, 7
        %v6223 = vsub.s32 0, %v6222
        %v6224 = vrot.slane %v4537, %v6223
        %v6225 = vmul.f32 %v6011, %v6224
        %v6226 = vmul.f32 %v6012, %v6224
        %v6227 = vmul.f32 %v6013, %v6224
        %v6228 = vmul.f32 %v6014, %v6224
        %v6229 = vmul.f32 %v6015, %v6224
        %v6230 = vmul.f32 %v6016, %v6224
        %v6231 = vmul.f32 %v6017, %v6224
        %v6232 = vmul.f32 %v6018, %v6224
        %v6233 = vmul.f32 %v6019, %v6224
        %v6234 = vmul.f32 %v6020, %v6224
        %v6235 = vmul.f32 %v6021, %v6224
        %v6236 = vmul.f32 %v6022, %v6224
        %v6237 = vmul.f32 %v6023, %v6224
        %v6238 = vmul.f32 %v6024, %v6224
        %v6239 = vmul.f32 %v6025, %v6224
        %v6240 = vmul.f32 %v6026, %v6224
        %v6241 = vmul.f32 %v6027, %v6224
        %v6242 = vmul.f32 %v6028, %v6224
        %v6243 = vmul.f32 %v6029, %v6224
        %v6244 = vmul.f32 %v6030, %v6224
        %v6245 = vmul.f32 %v6031, %v6224
        %v6246 = vmul.f32 %v6032, %v6224
        %v6247 = vmul.f32 %v6033, %v6224
        %v6248 = vmul.f32 %v6034, %v6224
        %v6249 = vmul.f32 %v6035, %v6224
        %v6250 = vmul.f32 %v6036, %v6224
        %v6251 = vmul.f32 %v6037, %v6224
        %v6252 = vmul.f32 %v6038, %v6224
        %v6253 = vmul.f32 %v6039, %v6224
        %v6254 = vmul.f32 %v6040, %v6224
        %v6255 = vmul.f32 %v6041, %v6224
        %v6256 = vmul.f32 %v6042, %v6224
        %v6257 = vadd.f32 %v6189, %v6225
        %v6258 = vadd.f32 %v6190, %v6226
        %v6259 = vadd.f32 %v6191, %v6227
        %v6260 = vadd.f32 %v6192, %v6228
        %v6261 = vadd.f32 %v6193, %v6229
        %v6262 = vadd.f32 %v6194, %v6230
        %v6263 = vadd.f32 %v6195, %v6231
        %v6264 = vadd.f32 %v6196, %v6232
        %v6265 = vadd.f32 %v6197, %v6233
        %v6266 = vadd.f32 %v6198, %v6234
        %v6267 = vadd.f32 %v6199, %v6235
        %v6268 = vadd.f32 %v6200, %v6236
        %v6269 = vadd.f32 %v6201, %v6237
        %v6270 = vadd.f32 %v6202, %v6238
        %v6271 = vadd.f32 %v6203, %v6239
        %v6272 = vadd.f32 %v6204, %v6240
        %v6273 = vadd.f32 %v6205, %v6241
        %v6274 = vadd.f32 %v6206, %v6242
        %v6275 = vadd.f32 %v6207, %v6243
        %v6276 = vadd.f32 %v6208, %v6244
        %v6277 = vadd.f32 %v6209, %v6245
        %v6278 = vadd.f32 %v6210, %v6246
        %v6279 = vadd.f32 %v6211, %v6247
        %v6280 = vadd.f32 %v6212, %v6248
        %v6281 = vadd.f32 %v6213, %v6249
        %v6282 = vadd.f32 %v6214, %v6250
        %v6283 = vadd.f32 %v6215, %v6251
        %v6284 = vadd.f32 %v6216, %v6252
        %v6285 = vadd.f32 %v6217, %v6253
        %v6286 = vadd.f32 %v6218, %v6254
        %v6287 = vadd.f32 %v6219, %v6255
        %v6288 = vadd.f32 %v6220, %v6256
        %v6289 = vlaneseq
        %v6290 = vshrl.u32 %v6289, 7
        %v6291 = vsub.s32 7, %v6290
        %v6292 = vrot.slane %v4537, %v6291
        %v6293 = vmul.f32 %v6013, %v6292
        %v6294 = vmul.f32 %v6014, %v6292
        %v6295 = vmul.f32 %v6015, %v6292
        %v6296 = vmul.f32 %v6016, %v6292
        %v6297 = vmul.f32 %v6017, %v6292
        %v6298 = vmul.f32 %v6018, %v6292
        %v6299 = vmul.f32 %v6019, %v6292
        %v6300 = vmul.f32 %v6020, %v6292
        %v6301 = vmul.f32 %v6021, %v6292
        %v6302 = vmul.f32 %v6022, %v6292
        %v6303 = vmul.f32 %v6023, %v6292
        %v6304 = vmul.f32 %v6024, %v6292
        %v6305 = vmul.f32 %v6025, %v6292
        %v6306 = vmul.f32 %v6026, %v6292
        %v6307 = vmul.f32 %v6027, %v6292
        %v6308 = vmul.f32 %v6028, %v6292
        %v6309 = vmul.f32 %v6029, %v6292
        %v6310 = vmul.f32 %v6030, %v6292
        %v6311 = vmul.f32 %v6031, %v6292
        %v6312 = vmul.f32 %v6032, %v6292
        %v6313 = vmul.f32 %v6033, %v6292
        %v6314 = vmul.f32 %v6034, %v6292
        %v6315 = vmul.f32 %v6035, %v6292
        %v6316 = vmul.f32 %v6036, %v6292
        %v6317 = vmul.f32 %v6037, %v6292
        %v6318 = vmul.f32 %v6038, %v6292
        %v6319 = vmul.f32 %v6039, %v6292
        %v6320 = vmul.f32 %v6040, %v6292
        %v6321 = vmul.f32 %v6041, %v6292
        %v6322 = vmul.f32 %v6042, %v6292
        %v6323 = vmul.f32 %v6043, %v6292
        %v6324 = vmul.f32 %v6044, %v6292
        %v6325 = vadd.f32 %v6257, %v6293
        %v6326 = vadd.f32 %v6258, %v6294
        %v6327 = vadd.f32 %v6259, %v6295
        %v6328 = vadd.f32 %v6260, %v6296
        %v6329 = vadd.f32 %v6261, %v6297
        %v6330 = vadd.f32 %v6262, %v6298
        %v6331 = vadd.f32 %v6263, %v6299
        %v6332 = vadd.f32 %v6264, %v6300
        %v6333 = vadd.f32 %v6265, %v6301
        %v6334 = vadd.f32 %v6266, %v6302
        %v6335 = vadd.f32 %v6267, %v6303
        %v6336 = vadd.f32 %v6268, %v6304
        %v6337 = vadd.f32 %v6269, %v6305
        %v6338 = vadd.f32 %v6270, %v6306
        %v6339 = vadd.f32 %v6271, %v6307
        %v6340 = vadd.f32 %v6272, %v6308
        %v6341 = vadd.f32 %v6273, %v6309
        %v6342 = vadd.f32 %v6274, %v6310
        %v6343 = vadd.f32 %v6275, %v6311
        %v6344 = vadd.f32 %v6276, %v6312
        %v6345 = vadd.f32 %v6277, %v6313
        %v6346 = vadd.f32 %v6278, %v6314
        %v6347 = vadd.f32 %v6279, %v6315
        %v6348 = vadd.f32 %v6280, %v6316
        %v6349 = vadd.f32 %v6281, %v6317
        %v6350 = vadd.f32 %v6282, %v6318
        %v6351 = vadd.f32 %v6283, %v6319
        %v6352 = vadd.f32 %v6284, %v6320
        %v6353 = vadd.f32 %v6285, %v6321
        %v6354 = vadd.f32 %v6286, %v6322
        %v6355 = vadd.f32 %v6287, %v6323
        %v6356 = vadd.f32 %v6288, %v6324
        %v6357 = vlaneseq
        %v6358 = vshrl.u32 %v6357, 7
        %v6359 = vsub.s32 6, %v6358
        %v6360 = vrot.slane %v4538, %v6359
        %v6361 = vmul.f32 %v6015, %v6360
        %v6362 = vmul.f32 %v6016, %v6360
        %v6363 = vmul.f32 %v6017, %v6360
        %v6364 = vmul.f32 %v6018, %v6360
        %v6365 = vmul.f32 %v6019, %v6360
        %v6366 = vmul.f32 %v6020, %v6360
        %v6367 = vmul.f32 %v6021, %v6360
        %v6368 = vmul.f32 %v6022, %v6360
        %v6369 = vmul.f32 %v6023, %v6360
        %v6370 = vmul.f32 %v6024, %v6360
        %v6371 = vmul.f32 %v6025, %v6360
        %v6372 = vmul.f32 %v6026, %v6360
        %v6373 = vmul.f32 %v6027, %v6360
        %v6374 = vmul.f32 %v6028, %v6360
        %v6375 = vmul.f32 %v6029, %v6360
        %v6376 = vmul.f32 %v6030, %v6360
        %v6377 = vmul.f32 %v6031, %v6360
        %v6378 = vmul.f32 %v6032, %v6360
        %v6379 = vmul.f32 %v6033, %v6360
        %v6380 = vmul.f32 %v6034, %v6360
        %v6381 = vmul.f32 %v6035, %v6360
        %v6382 = vmul.f32 %v6036, %v6360
        %v6383 = vmul.f32 %v6037, %v6360
        %v6384 = vmul.f32 %v6038, %v6360
        %v6385 = vmul.f32 %v6039, %v6360
        %v6386 = vmul.f32 %v6040, %v6360
        %v6387 = vmul.f32 %v6041, %v6360
        %v6388 = vmul.f32 %v6042, %v6360
        %v6389 = vmul.f32 %v6043, %v6360
        %v6390 = vmul.f32 %v6044, %v6360
        %v6391 = vmul.f32 %v6045, %v6360
        %v6392 = vmul.f32 %v6046, %v6360
        %v6393 = vadd.f32 %v6325, %v6361
        %v6394 = vadd.f32 %v6326, %v6362
        %v6395 = vadd.f32 %v6327, %v6363
        %v6396 = vadd.f32 %v6328, %v6364
        %v6397 = vadd.f32 %v6329, %v6365
        %v6398 = vadd.f32 %v6330, %v6366
        %v6399 = vadd.f32 %v6331, %v6367
        %v6400 = vadd.f32 %v6332, %v6368
        %v6401 = vadd.f32 %v6333, %v6369
        %v6402 = vadd.f32 %v6334, %v6370
        %v6403 = vadd.f32 %v6335, %v6371
        %v6404 = vadd.f32 %v6336, %v6372
        %v6405 = vadd.f32 %v6337, %v6373
        %v6406 = vadd.f32 %v6338, %v6374
        %v6407 = vadd.f32 %v6339, %v6375
        %v6408 = vadd.f32 %v6340, %v6376
        %v6409 = vadd.f32 %v6341, %v6377
        %v6410 = vadd.f32 %v6342, %v6378
        %v6411 = vadd.f32 %v6343, %v6379
        %v6412 = vadd.f32 %v6344, %v6380
        %v6413 = vadd.f32 %v6345, %v6381
        %v6414 = vadd.f32 %v6346, %v6382
        %v6415 = vadd.f32 %v6347, %v6383
        %v6416 = vadd.f32 %v6348, %v6384
        %v6417 = vadd.f32 %v6349, %v6385
        %v6418 = vadd.f32 %v6350, %v6386
        %v6419 = vadd.f32 %v6351, %v6387
        %v6420 = vadd.f32 %v6352, %v6388
        %v6421 = vadd.f32 %v6353, %v6389
        %v6422 = vadd.f32 %v6354, %v6390
        %v6423 = vadd.f32 %v6355, %v6391
        %v6424 = vadd.f32 %v6356, %v6392
        %v6425 = vlaneseq
        %v6426 = vshrl.u32 %v6425, 7
        %v6427 = vsub.s32 5, %v6426
        %v6428 = vrot.slane %v4539, %v6427
        %v6429 = vmul.f32 %v6017, %v6428
        %v6430 = vmul.f32 %v6018, %v6428
        %v6431 = vmul.f32 %v6019, %v6428
        %v6432 = vmul.f32 %v6020, %v6428
        %v6433 = vmul.f32 %v6021, %v6428
        %v6434 = vmul.f32 %v6022, %v6428
        %v6435 = vmul.f32 %v6023, %v6428
        %v6436 = vmul.f32 %v6024, %v6428
        %v6437 = vmul.f32 %v6025, %v6428
        %v6438 = vmul.f32 %v6026, %v6428
        %v6439 = vmul.f32 %v6027, %v6428
        %v6440 = vmul.f32 %v6028, %v6428
        %v6441 = vmul.f32 %v6029, %v6428
        %v6442 = vmul.f32 %v6030, %v6428
        %v6443 = vmul.f32 %v6031, %v6428
        %v6444 = vmul.f32 %v6032, %v6428
        %v6445 = vmul.f32 %v6033, %v6428
        %v6446 = vmul.f32 %v6034, %v6428
        %v6447 = vmul.f32 %v6035, %v6428
        %v6448 = vmul.f32 %v6036, %v6428
        %v6449 = vmul.f32 %v6037, %v6428
        %v6450 = vmul.f32 %v6038, %v6428
        %v6451 = vmul.f32 %v6039, %v6428
        %v6452 = vmul.f32 %v6040, %v6428
        %v6453 = vmul.f32 %v6041, %v6428
        %v6454 = vmul.f32 %v6042, %v6428
        %v6455 = vmul.f32 %v6043, %v6428
        %v6456 = vmul.f32 %v6044, %v6428
        %v6457 = vmul.f32 %v6045, %v6428
        %v6458 = vmul.f32 %v6046, %v6428
        %v6459 = vmul.f32 %v6047, %v6428
        %v6460 = vmul.f32 %v6048, %v6428
        %v6461 = vadd.f32 %v6393, %v6429
        %v6462 = vadd.f32 %v6394, %v6430
        %v6463 = vadd.f32 %v6395, %v6431
        %v6464 = vadd.f32 %v6396, %v6432
        %v6465 = vadd.f32 %v6397, %v6433
        %v6466 = vadd.f32 %v6398, %v6434
        %v6467 = vadd.f32 %v6399, %v6435
        %v6468 = vadd.f32 %v6400, %v6436
        %v6469 = vadd.f32 %v6401, %v6437
        %v6470 = vadd.f32 %v6402, %v6438
        %v6471 = vadd.f32 %v6403, %v6439
        %v6472 = vadd.f32 %v6404, %v6440
        %v6473 = vadd.f32 %v6405, %v6441
        %v6474 = vadd.f32 %v6406, %v6442
        %v6475 = vadd.f32 %v6407, %v6443
        %v6476 = vadd.f32 %v6408, %v6444
        %v6477 = vadd.f32 %v6409, %v6445
        %v6478 = vadd.f32 %v6410, %v6446
        %v6479 = vadd.f32 %v6411, %v6447
        %v6480 = vadd.f32 %v6412, %v6448
        %v6481 = vadd.f32 %v6413, %v6449
        %v6482 = vadd.f32 %v6414, %v6450
        %v6483 = vadd.f32 %v6415, %v6451
        %v6484 = vadd.f32 %v6416, %v6452
        %v6485 = vadd.f32 %v6417, %v6453
        %v6486 = vadd.f32 %v6418, %v6454
        %v6487 = vadd.f32 %v6419, %v6455
        %v6488 = vadd.f32 %v6420, %v6456
        %v6489 = vadd.f32 %v6421, %v6457
        %v6490 = vadd.f32 %v6422, %v6458
        %v6491 = vadd.f32 %v6423, %v6459
        %v6492 = vadd.f32 %v6424, %v6460
        %v6493 = vld [vmem:[#allocation2 + $0x9] sm:$0xff]
        %v6494 = vld [vmem:[#allocation2 + $0x11] sm:$0xff]
        %v6495 = vld [vmem:[#allocation2 + $0x29] sm:$0xff]
        %v6496 = vld [vmem:[#allocation2 + $0x31] sm:$0xff]
        %v6497 = vld [vmem:[#allocation2 + $0x49] sm:$0xff]
        %v6498 = vld [vmem:[#allocation2 + $0x51] sm:$0xff]
        %v6499 = vld [vmem:[#allocation2 + $0x69] sm:$0xff]
        %v6500 = vld [vmem:[#allocation2 + $0x71] sm:$0xff]
        %v6501 = vld [vmem:[#allocation2 + $0x89] sm:$0xff]
        %v6502 = vld [vmem:[#allocation2 + $0x91] sm:$0xff]
        %v6503 = vld [vmem:[#allocation2 + $0xa9] sm:$0xff]
        %v6504 = vld [vmem:[#allocation2 + $0xb1] sm:$0xff]
        %v6505 = vld [vmem:[#allocation2 + $0xc9] sm:$0xff]
        %v6506 = vld [vmem:[#allocation2 + $0xd1] sm:$0xff]
        %v6507 = vld [vmem:[#allocation2 + $0xe9] sm:$0xff]
        %v6508 = vld [vmem:[#allocation2 + $0xf1] sm:$0xff]
        %v6509 = vld [vmem:[#allocation2 + $0x109] sm:$0xff]
        %v6510 = vld [vmem:[#allocation2 + $0x111] sm:$0xff]
        %v6511 = vld [vmem:[#allocation2 + $0x129] sm:$0xff]
        %v6512 = vld [vmem:[#allocation2 + $0x131] sm:$0xff]
        %v6513 = vld [vmem:[#allocation2 + $0x149] sm:$0xff]
        %v6514 = vld [vmem:[#allocation2 + $0x151] sm:$0xff]
        %v6515 = vld [vmem:[#allocation2 + $0x169] sm:$0xff]
        %v6516 = vld [vmem:[#allocation2 + $0x171] sm:$0xff]
        %v6517 = vld [vmem:[#allocation2 + $0x189] sm:$0xff]
        %v6518 = vld [vmem:[#allocation2 + $0x191] sm:$0xff]
        %v6519 = vld [vmem:[#allocation2 + $0x1a9] sm:$0xff]
        %v6520 = vld [vmem:[#allocation2 + $0x1b1] sm:$0xff]
        %v6521 = vld [vmem:[#allocation2 + $0x1c9] sm:$0xff]
        %v6522 = vld [vmem:[#allocation2 + $0x1d1] sm:$0xff]
        %v6523 = vld [vmem:[#allocation2 + $0x1e9] sm:$0xff]
        %v6524 = vld [vmem:[#allocation2 + $0x1f1] sm:$0xff]
        %v6525 = vld [vmem:[#allocation2 + $0x209] sm:$0xff]
        %v6526 = vld [vmem:[#allocation2 + $0x211] sm:$0xff]
        %v6527 = vld [vmem:[#allocation2 + $0x229] sm:$0xff]
        %v6528 = vld [vmem:[#allocation2 + $0x231] sm:$0xff]
        %v6529 = vld [vmem:[#allocation2 + $0x249] sm:$0xff]
        %v6530 = vld [vmem:[#allocation2 + $0x251] sm:$0xff]
        %v6531 = vld [vmem:[#allocation2 + $0x269] sm:$0xff]
        %v6532 = vld [vmem:[#allocation2 + $0x271] sm:$0xff]
        %v6533 = vld [vmem:[#allocation2 + $0x289] sm:$0xff]
        %v6534 = vld [vmem:[#allocation2 + $0x291] sm:$0xff]
        %v6535 = vld [vmem:[#allocation2 + $0x2a9] sm:$0xff]
        %v6536 = vld [vmem:[#allocation2 + $0x2b1] sm:$0xff]
        %v6537 = vlaneseq
        %v6538 = vshrl.u32 %v6537, 7
        %v6539 = vsub.s32 4, %v6538
        %v6540 = vrot.slane %v4534, %v6539
        %v6541 = vmul.f32 %v6493, %v6540
        %v6542 = vmul.f32 %v6494, %v6540
        %v6543 = vmul.f32 %v6495, %v6540
        %v6544 = vmul.f32 %v6496, %v6540
        %v6545 = vmul.f32 %v6497, %v6540
        %v6546 = vmul.f32 %v6498, %v6540
        %v6547 = vmul.f32 %v6499, %v6540
        %v6548 = vmul.f32 %v6500, %v6540
        %v6549 = vmul.f32 %v6501, %v6540
        %v6550 = vmul.f32 %v6502, %v6540
        %v6551 = vmul.f32 %v6503, %v6540
        %v6552 = vmul.f32 %v6504, %v6540
        %v6553 = vmul.f32 %v6505, %v6540
        %v6554 = vmul.f32 %v6506, %v6540
        %v6555 = vmul.f32 %v6507, %v6540
        %v6556 = vmul.f32 %v6508, %v6540
        %v6557 = vmul.f32 %v6509, %v6540
        %v6558 = vmul.f32 %v6510, %v6540
        %v6559 = vmul.f32 %v6511, %v6540
        %v6560 = vmul.f32 %v6512, %v6540
        %v6561 = vmul.f32 %v6513, %v6540
        %v6562 = vmul.f32 %v6514, %v6540
        %v6563 = vmul.f32 %v6515, %v6540
        %v6564 = vmul.f32 %v6516, %v6540
        %v6565 = vmul.f32 %v6517, %v6540
        %v6566 = vmul.f32 %v6518, %v6540
        %v6567 = vmul.f32 %v6519, %v6540
        %v6568 = vmul.f32 %v6520, %v6540
        %v6569 = vmul.f32 %v6521, %v6540
        %v6570 = vmul.f32 %v6522, %v6540
        %v6571 = vmul.f32 %v6523, %v6540
        %v6572 = vmul.f32 %v6524, %v6540
        %v6573 = vlaneseq
        %v6574 = vshrl.u32 %v6573, 7
        %v6575 = vsub.s32 3, %v6574
        %v6576 = vrot.slane %v4535, %v6575
        %v6577 = vmul.f32 %v6495, %v6576
        %v6578 = vmul.f32 %v6496, %v6576
        %v6579 = vmul.f32 %v6497, %v6576
        %v6580 = vmul.f32 %v6498, %v6576
        %v6581 = vmul.f32 %v6499, %v6576
        %v6582 = vmul.f32 %v6500, %v6576
        %v6583 = vmul.f32 %v6501, %v6576
        %v6584 = vmul.f32 %v6502, %v6576
        %v6585 = vmul.f32 %v6503, %v6576
        %v6586 = vmul.f32 %v6504, %v6576
        %v6587 = vmul.f32 %v6505, %v6576
        %v6588 = vmul.f32 %v6506, %v6576
        %v6589 = vmul.f32 %v6507, %v6576
        %v6590 = vmul.f32 %v6508, %v6576
        %v6591 = vmul.f32 %v6509, %v6576
        %v6592 = vmul.f32 %v6510, %v6576
        %v6593 = vmul.f32 %v6511, %v6576
        %v6594 = vmul.f32 %v6512, %v6576
        %v6595 = vmul.f32 %v6513, %v6576
        %v6596 = vmul.f32 %v6514, %v6576
        %v6597 = vmul.f32 %v6515, %v6576
        %v6598 = vmul.f32 %v6516, %v6576
        %v6599 = vmul.f32 %v6517, %v6576
        %v6600 = vmul.f32 %v6518, %v6576
        %v6601 = vmul.f32 %v6519, %v6576
        %v6602 = vmul.f32 %v6520, %v6576
        %v6603 = vmul.f32 %v6521, %v6576
        %v6604 = vmul.f32 %v6522, %v6576
        %v6605 = vmul.f32 %v6523, %v6576
        %v6606 = vmul.f32 %v6524, %v6576
        %v6607 = vmul.f32 %v6525, %v6576
        %v6608 = vmul.f32 %v6526, %v6576
        %v6609 = vadd.f32 %v6541, %v6577
        %v6610 = vadd.f32 %v6542, %v6578
        %v6611 = vadd.f32 %v6543, %v6579
        %v6612 = vadd.f32 %v6544, %v6580
        %v6613 = vadd.f32 %v6545, %v6581
        %v6614 = vadd.f32 %v6546, %v6582
        %v6615 = vadd.f32 %v6547, %v6583
        %v6616 = vadd.f32 %v6548, %v6584
        %v6617 = vadd.f32 %v6549, %v6585
        %v6618 = vadd.f32 %v6550, %v6586
        %v6619 = vadd.f32 %v6551, %v6587
        %v6620 = vadd.f32 %v6552, %v6588
        %v6621 = vadd.f32 %v6553, %v6589
        %v6622 = vadd.f32 %v6554, %v6590
        %v6623 = vadd.f32 %v6555, %v6591
        %v6624 = vadd.f32 %v6556, %v6592
        %v6625 = vadd.f32 %v6557, %v6593
        %v6626 = vadd.f32 %v6558, %v6594
        %v6627 = vadd.f32 %v6559, %v6595
        %v6628 = vadd.f32 %v6560, %v6596
        %v6629 = vadd.f32 %v6561, %v6597
        %v6630 = vadd.f32 %v6562, %v6598
        %v6631 = vadd.f32 %v6563, %v6599
        %v6632 = vadd.f32 %v6564, %v6600
        %v6633 = vadd.f32 %v6565, %v6601
        %v6634 = vadd.f32 %v6566, %v6602
        %v6635 = vadd.f32 %v6567, %v6603
        %v6636 = vadd.f32 %v6568, %v6604
        %v6637 = vadd.f32 %v6569, %v6605
        %v6638 = vadd.f32 %v6570, %v6606
        %v6639 = vadd.f32 %v6571, %v6607
        %v6640 = vadd.f32 %v6572, %v6608
        %v6641 = vlaneseq
        %v6642 = vshrl.u32 %v6641, 7
        %v6643 = vsub.s32 2, %v6642
        %v6644 = vrot.slane %v4536, %v6643
        %v6645 = vmul.f32 %v6497, %v6644
        %v6646 = vmul.f32 %v6498, %v6644
        %v6647 = vmul.f32 %v6499, %v6644
        %v6648 = vmul.f32 %v6500, %v6644
        %v6649 = vmul.f32 %v6501, %v6644
        %v6650 = vmul.f32 %v6502, %v6644
        %v6651 = vmul.f32 %v6503, %v6644
        %v6652 = vmul.f32 %v6504, %v6644
        %v6653 = vmul.f32 %v6505, %v6644
        %v6654 = vmul.f32 %v6506, %v6644
        %v6655 = vmul.f32 %v6507, %v6644
        %v6656 = vmul.f32 %v6508, %v6644
        %v6657 = vmul.f32 %v6509, %v6644
        %v6658 = vmul.f32 %v6510, %v6644
        %v6659 = vmul.f32 %v6511, %v6644
        %v6660 = vmul.f32 %v6512, %v6644
        %v6661 = vmul.f32 %v6513, %v6644
        %v6662 = vmul.f32 %v6514, %v6644
        %v6663 = vmul.f32 %v6515, %v6644
        %v6664 = vmul.f32 %v6516, %v6644
        %v6665 = vmul.f32 %v6517, %v6644
        %v6666 = vmul.f32 %v6518, %v6644
        %v6667 = vmul.f32 %v6519, %v6644
        %v6668 = vmul.f32 %v6520, %v6644
        %v6669 = vmul.f32 %v6521, %v6644
        %v6670 = vmul.f32 %v6522, %v6644
        %v6671 = vmul.f32 %v6523, %v6644
        %v6672 = vmul.f32 %v6524, %v6644
        %v6673 = vmul.f32 %v6525, %v6644
        %v6674 = vmul.f32 %v6526, %v6644
        %v6675 = vmul.f32 %v6527, %v6644
        %v6676 = vmul.f32 %v6528, %v6644
        %v6677 = vadd.f32 %v6609, %v6645
        %v6678 = vadd.f32 %v6610, %v6646
        %v6679 = vadd.f32 %v6611, %v6647
        %v6680 = vadd.f32 %v6612, %v6648
        %v6681 = vadd.f32 %v6613, %v6649
        %v6682 = vadd.f32 %v6614, %v6650
        %v6683 = vadd.f32 %v6615, %v6651
        %v6684 = vadd.f32 %v6616, %v6652
        %v6685 = vadd.f32 %v6617, %v6653
        %v6686 = vadd.f32 %v6618, %v6654
        %v6687 = vadd.f32 %v6619, %v6655
        %v6688 = vadd.f32 %v6620, %v6656
        %v6689 = vadd.f32 %v6621, %v6657
        %v6690 = vadd.f32 %v6622, %v6658
        %v6691 = vadd.f32 %v6623, %v6659
        %v6692 = vadd.f32 %v6624, %v6660
        %v6693 = vadd.f32 %v6625, %v6661
        %v6694 = vadd.f32 %v6626, %v6662
        %v6695 = vadd.f32 %v6627, %v6663
        %v6696 = vadd.f32 %v6628, %v6664
        %v6697 = vadd.f32 %v6629, %v6665
        %v6698 = vadd.f32 %v6630, %v6666
        %v6699 = vadd.f32 %v6631, %v6667
        %v6700 = vadd.f32 %v6632, %v6668
        %v6701 = vadd.f32 %v6633, %v6669
        %v6702 = vadd.f32 %v6634, %v6670
        %v6703 = vadd.f32 %v6635, %v6671
        %v6704 = vadd.f32 %v6636, %v6672
        %v6705 = vadd.f32 %v6637, %v6673
        %v6706 = vadd.f32 %v6638, %v6674
        %v6707 = vadd.f32 %v6639, %v6675
        %v6708 = vadd.f32 %v6640, %v6676
        %v6709 = vlaneseq
        %v6710 = vshrl.u32 %v6709, 7
        %v6711 = vsub.s32 1, %v6710
        %v6712 = vrot.slane %v4537, %v6711
        %v6713 = vmul.f32 %v6499, %v6712
        %v6714 = vmul.f32 %v6500, %v6712
        %v6715 = vmul.f32 %v6501, %v6712
        %v6716 = vmul.f32 %v6502, %v6712
        %v6717 = vmul.f32 %v6503, %v6712
        %v6718 = vmul.f32 %v6504, %v6712
        %v6719 = vmul.f32 %v6505, %v6712
        %v6720 = vmul.f32 %v6506, %v6712
        %v6721 = vmul.f32 %v6507, %v6712
        %v6722 = vmul.f32 %v6508, %v6712
        %v6723 = vmul.f32 %v6509, %v6712
        %v6724 = vmul.f32 %v6510, %v6712
        %v6725 = vmul.f32 %v6511, %v6712
        %v6726 = vmul.f32 %v6512, %v6712
        %v6727 = vmul.f32 %v6513, %v6712
        %v6728 = vmul.f32 %v6514, %v6712
        %v6729 = vmul.f32 %v6515, %v6712
        %v6730 = vmul.f32 %v6516, %v6712
        %v6731 = vmul.f32 %v6517, %v6712
        %v6732 = vmul.f32 %v6518, %v6712
        %v6733 = vmul.f32 %v6519, %v6712
        %v6734 = vmul.f32 %v6520, %v6712
        %v6735 = vmul.f32 %v6521, %v6712
        %v6736 = vmul.f32 %v6522, %v6712
        %v6737 = vmul.f32 %v6523, %v6712
        %v6738 = vmul.f32 %v6524, %v6712
        %v6739 = vmul.f32 %v6525, %v6712
        %v6740 = vmul.f32 %v6526, %v6712
        %v6741 = vmul.f32 %v6527, %v6712
        %v6742 = vmul.f32 %v6528, %v6712
        %v6743 = vmul.f32 %v6529, %v6712
        %v6744 = vmul.f32 %v6530, %v6712
        %v6745 = vadd.f32 %v6677, %v6713
        %v6746 = vadd.f32 %v6678, %v6714
        %v6747 = vadd.f32 %v6679, %v6715
        %v6748 = vadd.f32 %v6680, %v6716
        %v6749 = vadd.f32 %v6681, %v6717
        %v6750 = vadd.f32 %v6682, %v6718
        %v6751 = vadd.f32 %v6683, %v6719
        %v6752 = vadd.f32 %v6684, %v6720
        %v6753 = vadd.f32 %v6685, %v6721
        %v6754 = vadd.f32 %v6686, %v6722
        %v6755 = vadd.f32 %v6687, %v6723
        %v6756 = vadd.f32 %v6688, %v6724
        %v6757 = vadd.f32 %v6689, %v6725
        %v6758 = vadd.f32 %v6690, %v6726
        %v6759 = vadd.f32 %v6691, %v6727
        %v6760 = vadd.f32 %v6692, %v6728
        %v6761 = vadd.f32 %v6693, %v6729
        %v6762 = vadd.f32 %v6694, %v6730
        %v6763 = vadd.f32 %v6695, %v6731
        %v6764 = vadd.f32 %v6696, %v6732
        %v6765 = vadd.f32 %v6697, %v6733
        %v6766 = vadd.f32 %v6698, %v6734
        %v6767 = vadd.f32 %v6699, %v6735
        %v6768 = vadd.f32 %v6700, %v6736
        %v6769 = vadd.f32 %v6701, %v6737
        %v6770 = vadd.f32 %v6702, %v6738
        %v6771 = vadd.f32 %v6703, %v6739
        %v6772 = vadd.f32 %v6704, %v6740
        %v6773 = vadd.f32 %v6705, %v6741
        %v6774 = vadd.f32 %v6706, %v6742
        %v6775 = vadd.f32 %v6707, %v6743
        %v6776 = vadd.f32 %v6708, %v6744
        %v6777 = vlaneseq
        %v6778 = vshrl.u32 %v6777, 7
        %v6779 = vsub.s32 0, %v6778
        %v6780 = vrot.slane %v4538, %v6779
        %v6781 = vmul.f32 %v6501, %v6780
        %v6782 = vmul.f32 %v6502, %v6780
        %v6783 = vmul.f32 %v6503, %v6780
        %v6784 = vmul.f32 %v6504, %v6780
        %v6785 = vmul.f32 %v6505, %v6780
        %v6786 = vmul.f32 %v6506, %v6780
        %v6787 = vmul.f32 %v6507, %v6780
        %v6788 = vmul.f32 %v6508, %v6780
        %v6789 = vmul.f32 %v6509, %v6780
        %v6790 = vmul.f32 %v6510, %v6780
        %v6791 = vmul.f32 %v6511, %v6780
        %v6792 = vmul.f32 %v6512, %v6780
        %v6793 = vmul.f32 %v6513, %v6780
        %v6794 = vmul.f32 %v6514, %v6780
        %v6795 = vmul.f32 %v6515, %v6780
        %v6796 = vmul.f32 %v6516, %v6780
        %v6797 = vmul.f32 %v6517, %v6780
        %v6798 = vmul.f32 %v6518, %v6780
        %v6799 = vmul.f32 %v6519, %v6780
        %v6800 = vmul.f32 %v6520, %v6780
        %v6801 = vmul.f32 %v6521, %v6780
        %v6802 = vmul.f32 %v6522, %v6780
        %v6803 = vmul.f32 %v6523, %v6780
        %v6804 = vmul.f32 %v6524, %v6780
        %v6805 = vmul.f32 %v6525, %v6780
        %v6806 = vmul.f32 %v6526, %v6780
        %v6807 = vmul.f32 %v6527, %v6780
        %v6808 = vmul.f32 %v6528, %v6780
        %v6809 = vmul.f32 %v6529, %v6780
        %v6810 = vmul.f32 %v6530, %v6780
        %v6811 = vmul.f32 %v6531, %v6780
        %v6812 = vmul.f32 %v6532, %v6780
        %v6813 = vadd.f32 %v6745, %v6781
        %v6814 = vadd.f32 %v6746, %v6782
        %v6815 = vadd.f32 %v6747, %v6783
        %v6816 = vadd.f32 %v6748, %v6784
        %v6817 = vadd.f32 %v6749, %v6785
        %v6818 = vadd.f32 %v6750, %v6786
        %v6819 = vadd.f32 %v6751, %v6787
        %v6820 = vadd.f32 %v6752, %v6788
        %v6821 = vadd.f32 %v6753, %v6789
        %v6822 = vadd.f32 %v6754, %v6790
        %v6823 = vadd.f32 %v6755, %v6791
        %v6824 = vadd.f32 %v6756, %v6792
        %v6825 = vadd.f32 %v6757, %v6793
        %v6826 = vadd.f32 %v6758, %v6794
        %v6827 = vadd.f32 %v6759, %v6795
        %v6828 = vadd.f32 %v6760, %v6796
        %v6829 = vadd.f32 %v6761, %v6797
        %v6830 = vadd.f32 %v6762, %v6798
        %v6831 = vadd.f32 %v6763, %v6799
        %v6832 = vadd.f32 %v6764, %v6800
        %v6833 = vadd.f32 %v6765, %v6801
        %v6834 = vadd.f32 %v6766, %v6802
        %v6835 = vadd.f32 %v6767, %v6803
        %v6836 = vadd.f32 %v6768, %v6804
        %v6837 = vadd.f32 %v6769, %v6805
        %v6838 = vadd.f32 %v6770, %v6806
        %v6839 = vadd.f32 %v6771, %v6807
        %v6840 = vadd.f32 %v6772, %v6808
        %v6841 = vadd.f32 %v6773, %v6809
        %v6842 = vadd.f32 %v6774, %v6810
        %v6843 = vadd.f32 %v6775, %v6811
        %v6844 = vadd.f32 %v6776, %v6812
        %v6845 = vlaneseq
        %v6846 = vshrl.u32 %v6845, 7
        %v6847 = vsub.s32 7, %v6846
        %v6848 = vrot.slane %v4538, %v6847
        %v6849 = vmul.f32 %v6503, %v6848
        %v6850 = vmul.f32 %v6504, %v6848
        %v6851 = vmul.f32 %v6505, %v6848
        %v6852 = vmul.f32 %v6506, %v6848
        %v6853 = vmul.f32 %v6507, %v6848
        %v6854 = vmul.f32 %v6508, %v6848
        %v6855 = vmul.f32 %v6509, %v6848
        %v6856 = vmul.f32 %v6510, %v6848
        %v6857 = vmul.f32 %v6511, %v6848
        %v6858 = vmul.f32 %v6512, %v6848
        %v6859 = vmul.f32 %v6513, %v6848
        %v6860 = vmul.f32 %v6514, %v6848
        %v6861 = vmul.f32 %v6515, %v6848
        %v6862 = vmul.f32 %v6516, %v6848
        %v6863 = vmul.f32 %v6517, %v6848
        %v6864 = vmul.f32 %v6518, %v6848
        %v6865 = vmul.f32 %v6519, %v6848
        %v6866 = vmul.f32 %v6520, %v6848
        %v6867 = vmul.f32 %v6521, %v6848
        %v6868 = vmul.f32 %v6522, %v6848
        %v6869 = vmul.f32 %v6523, %v6848
        %v6870 = vmul.f32 %v6524, %v6848
        %v6871 = vmul.f32 %v6525, %v6848
        %v6872 = vmul.f32 %v6526, %v6848
        %v6873 = vmul.f32 %v6527, %v6848
        %v6874 = vmul.f32 %v6528, %v6848
        %v6875 = vmul.f32 %v6529, %v6848
        %v6876 = vmul.f32 %v6530, %v6848
        %v6877 = vmul.f32 %v6531, %v6848
        %v6878 = vmul.f32 %v6532, %v6848
        %v6879 = vmul.f32 %v6533, %v6848
        %v6880 = vmul.f32 %v6534, %v6848
        %v6881 = vadd.f32 %v6813, %v6849
        %v6882 = vadd.f32 %v6814, %v6850
        %v6883 = vadd.f32 %v6815, %v6851
        %v6884 = vadd.f32 %v6816, %v6852
        %v6885 = vadd.f32 %v6817, %v6853
        %v6886 = vadd.f32 %v6818, %v6854
        %v6887 = vadd.f32 %v6819, %v6855
        %v6888 = vadd.f32 %v6820, %v6856
        %v6889 = vadd.f32 %v6821, %v6857
        %v6890 = vadd.f32 %v6822, %v6858
        %v6891 = vadd.f32 %v6823, %v6859
        %v6892 = vadd.f32 %v6824, %v6860
        %v6893 = vadd.f32 %v6825, %v6861
        %v6894 = vadd.f32 %v6826, %v6862
        %v6895 = vadd.f32 %v6827, %v6863
        %v6896 = vadd.f32 %v6828, %v6864
        %v6897 = vadd.f32 %v6829, %v6865
        %v6898 = vadd.f32 %v6830, %v6866
        %v6899 = vadd.f32 %v6831, %v6867
        %v6900 = vadd.f32 %v6832, %v6868
        %v6901 = vadd.f32 %v6833, %v6869
        %v6902 = vadd.f32 %v6834, %v6870
        %v6903 = vadd.f32 %v6835, %v6871
        %v6904 = vadd.f32 %v6836, %v6872
        %v6905 = vadd.f32 %v6837, %v6873
        %v6906 = vadd.f32 %v6838, %v6874
        %v6907 = vadd.f32 %v6839, %v6875
        %v6908 = vadd.f32 %v6840, %v6876
        %v6909 = vadd.f32 %v6841, %v6877
        %v6910 = vadd.f32 %v6842, %v6878
        %v6911 = vadd.f32 %v6843, %v6879
        %v6912 = vadd.f32 %v6844, %v6880
        %v6913 = vlaneseq
        %v6914 = vshrl.u32 %v6913, 7
        %v6915 = vsub.s32 6, %v6914
        %v6916 = vrot.slane %v4539, %v6915
        %v6917 = vmul.f32 %v6505, %v6916
        %v6918 = vmul.f32 %v6506, %v6916
        %v6919 = vmul.f32 %v6507, %v6916
        %v6920 = vmul.f32 %v6508, %v6916
        %v6921 = vmul.f32 %v6509, %v6916
        %v6922 = vmul.f32 %v6510, %v6916
        %v6923 = vmul.f32 %v6511, %v6916
        %v6924 = vmul.f32 %v6512, %v6916
        %v6925 = vmul.f32 %v6513, %v6916
        %v6926 = vmul.f32 %v6514, %v6916
        %v6927 = vmul.f32 %v6515, %v6916
        %v6928 = vmul.f32 %v6516, %v6916
        %v6929 = vmul.f32 %v6517, %v6916
        %v6930 = vmul.f32 %v6518, %v6916
        %v6931 = vmul.f32 %v6519, %v6916
        %v6932 = vmul.f32 %v6520, %v6916
        %v6933 = vmul.f32 %v6521, %v6916
        %v6934 = vmul.f32 %v6522, %v6916
        %v6935 = vmul.f32 %v6523, %v6916
        %v6936 = vmul.f32 %v6524, %v6916
        %v6937 = vmul.f32 %v6525, %v6916
        %v6938 = vmul.f32 %v6526, %v6916
        %v6939 = vmul.f32 %v6527, %v6916
        %v6940 = vmul.f32 %v6528, %v6916
        %v6941 = vmul.f32 %v6529, %v6916
        %v6942 = vmul.f32 %v6530, %v6916
        %v6943 = vmul.f32 %v6531, %v6916
        %v6944 = vmul.f32 %v6532, %v6916
        %v6945 = vmul.f32 %v6533, %v6916
        %v6946 = vmul.f32 %v6534, %v6916
        %v6947 = vmul.f32 %v6535, %v6916
        %v6948 = vmul.f32 %v6536, %v6916
        %v6949 = vadd.f32 %v6881, %v6917
        %v6950 = vadd.f32 %v6882, %v6918
        %v6951 = vadd.f32 %v6883, %v6919
        %v6952 = vadd.f32 %v6884, %v6920
        %v6953 = vadd.f32 %v6885, %v6921
        %v6954 = vadd.f32 %v6886, %v6922
        %v6955 = vadd.f32 %v6887, %v6923
        %v6956 = vadd.f32 %v6888, %v6924
        %v6957 = vadd.f32 %v6889, %v6925
        %v6958 = vadd.f32 %v6890, %v6926
        %v6959 = vadd.f32 %v6891, %v6927
        %v6960 = vadd.f32 %v6892, %v6928
        %v6961 = vadd.f32 %v6893, %v6929
        %v6962 = vadd.f32 %v6894, %v6930
        %v6963 = vadd.f32 %v6895, %v6931
        %v6964 = vadd.f32 %v6896, %v6932
        %v6965 = vadd.f32 %v6897, %v6933
        %v6966 = vadd.f32 %v6898, %v6934
        %v6967 = vadd.f32 %v6899, %v6935
        %v6968 = vadd.f32 %v6900, %v6936
        %v6969 = vadd.f32 %v6901, %v6937
        %v6970 = vadd.f32 %v6902, %v6938
        %v6971 = vadd.f32 %v6903, %v6939
        %v6972 = vadd.f32 %v6904, %v6940
        %v6973 = vadd.f32 %v6905, %v6941
        %v6974 = vadd.f32 %v6906, %v6942
        %v6975 = vadd.f32 %v6907, %v6943
        %v6976 = vadd.f32 %v6908, %v6944
        %v6977 = vadd.f32 %v6909, %v6945
        %v6978 = vadd.f32 %v6910, %v6946
        %v6979 = vadd.f32 %v6911, %v6947
        %v6980 = vadd.f32 %v6912, %v6948
        %v6981 = vld [vmem:[#allocation2 + $0xa] sm:$0xff]
        %v6982 = vld [vmem:[#allocation2 + $0x12] sm:$0xff]
        %v6983 = vld [vmem:[#allocation2 + $0x2a] sm:$0xff]
        %v6984 = vld [vmem:[#allocation2 + $0x32] sm:$0xff]
        %v6985 = vld [vmem:[#allocation2 + $0x4a] sm:$0xff]
        %v6986 = vld [vmem:[#allocation2 + $0x52] sm:$0xff]
        %v6987 = vld [vmem:[#allocation2 + $0x6a] sm:$0xff]
        %v6988 = vld [vmem:[#allocation2 + $0x72] sm:$0xff]
        %v6989 = vld [vmem:[#allocation2 + $0x8a] sm:$0xff]
        %v6990 = vld [vmem:[#allocation2 + $0x92] sm:$0xff]
        %v6991 = vld [vmem:[#allocation2 + $0xaa] sm:$0xff]
        %v6992 = vld [vmem:[#allocation2 + $0xb2] sm:$0xff]
        %v6993 = vld [vmem:[#allocation2 + $0xca] sm:$0xff]
        %v6994 = vld [vmem:[#allocation2 + $0xd2] sm:$0xff]
        %v6995 = vld [vmem:[#allocation2 + $0xea] sm:$0xff]
        %v6996 = vld [vmem:[#allocation2 + $0xf2] sm:$0xff]
        %v6997 = vld [vmem:[#allocation2 + $0x10a] sm:$0xff]
        %v6998 = vld [vmem:[#allocation2 + $0x112] sm:$0xff]
        %v6999 = vld [vmem:[#allocation2 + $0x12a] sm:$0xff]
        %v7000 = vld [vmem:[#allocation2 + $0x132] sm:$0xff]
        %v7001 = vld [vmem:[#allocation2 + $0x14a] sm:$0xff]
        %v7002 = vld [vmem:[#allocation2 + $0x152] sm:$0xff]
        %v7003 = vld [vmem:[#allocation2 + $0x16a] sm:$0xff]
        %v7004 = vld [vmem:[#allocation2 + $0x172] sm:$0xff]
        %v7005 = vld [vmem:[#allocation2 + $0x18a] sm:$0xff]
        %v7006 = vld [vmem:[#allocation2 + $0x192] sm:$0xff]
        %v7007 = vld [vmem:[#allocation2 + $0x1aa] sm:$0xff]
        %v7008 = vld [vmem:[#allocation2 + $0x1b2] sm:$0xff]
        %v7009 = vld [vmem:[#allocation2 + $0x1ca] sm:$0xff]
        %v7010 = vld [vmem:[#allocation2 + $0x1d2] sm:$0xff]
        %v7011 = vld [vmem:[#allocation2 + $0x1ea] sm:$0xff]
        %v7012 = vld [vmem:[#allocation2 + $0x1f2] sm:$0xff]
        %v7013 = vld [vmem:[#allocation2 + $0x20a] sm:$0xff]
        %v7014 = vld [vmem:[#allocation2 + $0x212] sm:$0xff]
        %v7015 = vld [vmem:[#allocation2 + $0x22a] sm:$0xff]
        %v7016 = vld [vmem:[#allocation2 + $0x232] sm:$0xff]
        %v7017 = vld [vmem:[#allocation2 + $0x24a] sm:$0xff]
        %v7018 = vld [vmem:[#allocation2 + $0x252] sm:$0xff]
        %v7019 = vld [vmem:[#allocation2 + $0x26a] sm:$0xff]
        %v7020 = vld [vmem:[#allocation2 + $0x272] sm:$0xff]
        %v7021 = vld [vmem:[#allocation2 + $0x28a] sm:$0xff]
        %v7022 = vld [vmem:[#allocation2 + $0x292] sm:$0xff]
        %v7023 = vld [vmem:[#allocation2 + $0x2aa] sm:$0xff]
        %v7024 = vld [vmem:[#allocation2 + $0x2b2] sm:$0xff]
        %v7025 = vlaneseq
        %v7026 = vshrl.u32 %v7025, 7
        %v7027 = vsub.s32 5, %v7026
        %v7028 = vrot.slane %v4534, %v7027
        %v7029 = vmul.f32 %v6981, %v7028
        %v7030 = vmul.f32 %v6982, %v7028
        %v7031 = vmul.f32 %v6983, %v7028
        %v7032 = vmul.f32 %v6984, %v7028
        %v7033 = vmul.f32 %v6985, %v7028
        %v7034 = vmul.f32 %v6986, %v7028
        %v7035 = vmul.f32 %v6987, %v7028
        %v7036 = vmul.f32 %v6988, %v7028
        %v7037 = vmul.f32 %v6989, %v7028
        %v7038 = vmul.f32 %v6990, %v7028
        %v7039 = vmul.f32 %v6991, %v7028
        %v7040 = vmul.f32 %v6992, %v7028
        %v7041 = vmul.f32 %v6993, %v7028
        %v7042 = vmul.f32 %v6994, %v7028
        %v7043 = vmul.f32 %v6995, %v7028
        %v7044 = vmul.f32 %v6996, %v7028
        %v7045 = vmul.f32 %v6997, %v7028
        %v7046 = vmul.f32 %v6998, %v7028
        %v7047 = vmul.f32 %v6999, %v7028
        %v7048 = vmul.f32 %v7000, %v7028
        %v7049 = vmul.f32 %v7001, %v7028
        %v7050 = vmul.f32 %v7002, %v7028
        %v7051 = vmul.f32 %v7003, %v7028
        %v7052 = vmul.f32 %v7004, %v7028
        %v7053 = vmul.f32 %v7005, %v7028
        %v7054 = vmul.f32 %v7006, %v7028
        %v7055 = vmul.f32 %v7007, %v7028
        %v7056 = vmul.f32 %v7008, %v7028
        %v7057 = vmul.f32 %v7009, %v7028
        %v7058 = vmul.f32 %v7010, %v7028
        %v7059 = vmul.f32 %v7011, %v7028
        %v7060 = vmul.f32 %v7012, %v7028
        %v7061 = vlaneseq
        %v7062 = vshrl.u32 %v7061, 7
        %v7063 = vsub.s32 4, %v7062
        %v7064 = vrot.slane %v4535, %v7063
        %v7065 = vmul.f32 %v6983, %v7064
        %v7066 = vmul.f32 %v6984, %v7064
        %v7067 = vmul.f32 %v6985, %v7064
        %v7068 = vmul.f32 %v6986, %v7064
        %v7069 = vmul.f32 %v6987, %v7064
        %v7070 = vmul.f32 %v6988, %v7064
        %v7071 = vmul.f32 %v6989, %v7064
        %v7072 = vmul.f32 %v6990, %v7064
        %v7073 = vmul.f32 %v6991, %v7064
        %v7074 = vmul.f32 %v6992, %v7064
        %v7075 = vmul.f32 %v6993, %v7064
        %v7076 = vmul.f32 %v6994, %v7064
        %v7077 = vmul.f32 %v6995, %v7064
        %v7078 = vmul.f32 %v6996, %v7064
        %v7079 = vmul.f32 %v6997, %v7064
        %v7080 = vmul.f32 %v6998, %v7064
        %v7081 = vmul.f32 %v6999, %v7064
        %v7082 = vmul.f32 %v7000, %v7064
        %v7083 = vmul.f32 %v7001, %v7064
        %v7084 = vmul.f32 %v7002, %v7064
        %v7085 = vmul.f32 %v7003, %v7064
        %v7086 = vmul.f32 %v7004, %v7064
        %v7087 = vmul.f32 %v7005, %v7064
        %v7088 = vmul.f32 %v7006, %v7064
        %v7089 = vmul.f32 %v7007, %v7064
        %v7090 = vmul.f32 %v7008, %v7064
        %v7091 = vmul.f32 %v7009, %v7064
        %v7092 = vmul.f32 %v7010, %v7064
        %v7093 = vmul.f32 %v7011, %v7064
        %v7094 = vmul.f32 %v7012, %v7064
        %v7095 = vmul.f32 %v7013, %v7064
        %v7096 = vmul.f32 %v7014, %v7064
        %v7097 = vadd.f32 %v7029, %v7065
        %v7098 = vadd.f32 %v7030, %v7066
        %v7099 = vadd.f32 %v7031, %v7067
        %v7100 = vadd.f32 %v7032, %v7068
        %v7101 = vadd.f32 %v7033, %v7069
        %v7102 = vadd.f32 %v7034, %v7070
        %v7103 = vadd.f32 %v7035, %v7071
        %v7104 = vadd.f32 %v7036, %v7072
        %v7105 = vadd.f32 %v7037, %v7073
        %v7106 = vadd.f32 %v7038, %v7074
        %v7107 = vadd.f32 %v7039, %v7075
        %v7108 = vadd.f32 %v7040, %v7076
        %v7109 = vadd.f32 %v7041, %v7077
        %v7110 = vadd.f32 %v7042, %v7078
        %v7111 = vadd.f32 %v7043, %v7079
        %v7112 = vadd.f32 %v7044, %v7080
        %v7113 = vadd.f32 %v7045, %v7081
        %v7114 = vadd.f32 %v7046, %v7082
        %v7115 = vadd.f32 %v7047, %v7083
        %v7116 = vadd.f32 %v7048, %v7084
        %v7117 = vadd.f32 %v7049, %v7085
        %v7118 = vadd.f32 %v7050, %v7086
        %v7119 = vadd.f32 %v7051, %v7087
        %v7120 = vadd.f32 %v7052, %v7088
        %v7121 = vadd.f32 %v7053, %v7089
        %v7122 = vadd.f32 %v7054, %v7090
        %v7123 = vadd.f32 %v7055, %v7091
        %v7124 = vadd.f32 %v7056, %v7092
        %v7125 = vadd.f32 %v7057, %v7093
        %v7126 = vadd.f32 %v7058, %v7094
        %v7127 = vadd.f32 %v7059, %v7095
        %v7128 = vadd.f32 %v7060, %v7096
        %v7129 = vlaneseq
        %v7130 = vshrl.u32 %v7129, 7
        %v7131 = vsub.s32 3, %v7130
        %v7132 = vrot.slane %v4536, %v7131
        %v7133 = vmul.f32 %v6985, %v7132
        %v7134 = vmul.f32 %v6986, %v7132
        %v7135 = vmul.f32 %v6987, %v7132
        %v7136 = vmul.f32 %v6988, %v7132
        %v7137 = vmul.f32 %v6989, %v7132
        %v7138 = vmul.f32 %v6990, %v7132
        %v7139 = vmul.f32 %v6991, %v7132
        %v7140 = vmul.f32 %v6992, %v7132
        %v7141 = vmul.f32 %v6993, %v7132
        %v7142 = vmul.f32 %v6994, %v7132
        %v7143 = vmul.f32 %v6995, %v7132
        %v7144 = vmul.f32 %v6996, %v7132
        %v7145 = vmul.f32 %v6997, %v7132
        %v7146 = vmul.f32 %v6998, %v7132
        %v7147 = vmul.f32 %v6999, %v7132
        %v7148 = vmul.f32 %v7000, %v7132
        %v7149 = vmul.f32 %v7001, %v7132
        %v7150 = vmul.f32 %v7002, %v7132
        %v7151 = vmul.f32 %v7003, %v7132
        %v7152 = vmul.f32 %v7004, %v7132
        %v7153 = vmul.f32 %v7005, %v7132
        %v7154 = vmul.f32 %v7006, %v7132
        %v7155 = vmul.f32 %v7007, %v7132
        %v7156 = vmul.f32 %v7008, %v7132
        %v7157 = vmul.f32 %v7009, %v7132
        %v7158 = vmul.f32 %v7010, %v7132
        %v7159 = vmul.f32 %v7011, %v7132
        %v7160 = vmul.f32 %v7012, %v7132
        %v7161 = vmul.f32 %v7013, %v7132
        %v7162 = vmul.f32 %v7014, %v7132
        %v7163 = vmul.f32 %v7015, %v7132
        %v7164 = vmul.f32 %v7016, %v7132
        %v7165 = vadd.f32 %v7097, %v7133
        %v7166 = vadd.f32 %v7098, %v7134
        %v7167 = vadd.f32 %v7099, %v7135
        %v7168 = vadd.f32 %v7100, %v7136
        %v7169 = vadd.f32 %v7101, %v7137
        %v7170 = vadd.f32 %v7102, %v7138
        %v7171 = vadd.f32 %v7103, %v7139
        %v7172 = vadd.f32 %v7104, %v7140
        %v7173 = vadd.f32 %v7105, %v7141
        %v7174 = vadd.f32 %v7106, %v7142
        %v7175 = vadd.f32 %v7107, %v7143
        %v7176 = vadd.f32 %v7108, %v7144
        %v7177 = vadd.f32 %v7109, %v7145
        %v7178 = vadd.f32 %v7110, %v7146
        %v7179 = vadd.f32 %v7111, %v7147
        %v7180 = vadd.f32 %v7112, %v7148
        %v7181 = vadd.f32 %v7113, %v7149
        %v7182 = vadd.f32 %v7114, %v7150
        %v7183 = vadd.f32 %v7115, %v7151
        %v7184 = vadd.f32 %v7116, %v7152
        %v7185 = vadd.f32 %v7117, %v7153
        %v7186 = vadd.f32 %v7118, %v7154
        %v7187 = vadd.f32 %v7119, %v7155
        %v7188 = vadd.f32 %v7120, %v7156
        %v7189 = vadd.f32 %v7121, %v7157
        %v7190 = vadd.f32 %v7122, %v7158
        %v7191 = vadd.f32 %v7123, %v7159
        %v7192 = vadd.f32 %v7124, %v7160
        %v7193 = vadd.f32 %v7125, %v7161
        %v7194 = vadd.f32 %v7126, %v7162
        %v7195 = vadd.f32 %v7127, %v7163
        %v7196 = vadd.f32 %v7128, %v7164
        %v7197 = vlaneseq
        %v7198 = vshrl.u32 %v7197, 7
        %v7199 = vsub.s32 2, %v7198
        %v7200 = vrot.slane %v4537, %v7199
        %v7201 = vmul.f32 %v6987, %v7200
        %v7202 = vmul.f32 %v6988, %v7200
        %v7203 = vmul.f32 %v6989, %v7200
        %v7204 = vmul.f32 %v6990, %v7200
        %v7205 = vmul.f32 %v6991, %v7200
        %v7206 = vmul.f32 %v6992, %v7200
        %v7207 = vmul.f32 %v6993, %v7200
        %v7208 = vmul.f32 %v6994, %v7200
        %v7209 = vmul.f32 %v6995, %v7200
        %v7210 = vmul.f32 %v6996, %v7200
        %v7211 = vmul.f32 %v6997, %v7200
        %v7212 = vmul.f32 %v6998, %v7200
        %v7213 = vmul.f32 %v6999, %v7200
        %v7214 = vmul.f32 %v7000, %v7200
        %v7215 = vmul.f32 %v7001, %v7200
        %v7216 = vmul.f32 %v7002, %v7200
        %v7217 = vmul.f32 %v7003, %v7200
        %v7218 = vmul.f32 %v7004, %v7200
        %v7219 = vmul.f32 %v7005, %v7200
        %v7220 = vmul.f32 %v7006, %v7200
        %v7221 = vmul.f32 %v7007, %v7200
        %v7222 = vmul.f32 %v7008, %v7200
        %v7223 = vmul.f32 %v7009, %v7200
        %v7224 = vmul.f32 %v7010, %v7200
        %v7225 = vmul.f32 %v7011, %v7200
        %v7226 = vmul.f32 %v7012, %v7200
        %v7227 = vmul.f32 %v7013, %v7200
        %v7228 = vmul.f32 %v7014, %v7200
        %v7229 = vmul.f32 %v7015, %v7200
        %v7230 = vmul.f32 %v7016, %v7200
        %v7231 = vmul.f32 %v7017, %v7200
        %v7232 = vmul.f32 %v7018, %v7200
        %v7233 = vadd.f32 %v7165, %v7201
        %v7234 = vadd.f32 %v7166, %v7202
        %v7235 = vadd.f32 %v7167, %v7203
        %v7236 = vadd.f32 %v7168, %v7204
        %v7237 = vadd.f32 %v7169, %v7205
        %v7238 = vadd.f32 %v7170, %v7206
        %v7239 = vadd.f32 %v7171, %v7207
        %v7240 = vadd.f32 %v7172, %v7208
        %v7241 = vadd.f32 %v7173, %v7209
        %v7242 = vadd.f32 %v7174, %v7210
        %v7243 = vadd.f32 %v7175, %v7211
        %v7244 = vadd.f32 %v7176, %v7212
        %v7245 = vadd.f32 %v7177, %v7213
        %v7246 = vadd.f32 %v7178, %v7214
        %v7247 = vadd.f32 %v7179, %v7215
        %v7248 = vadd.f32 %v7180, %v7216
        %v7249 = vadd.f32 %v7181, %v7217
        %v7250 = vadd.f32 %v7182, %v7218
        %v7251 = vadd.f32 %v7183, %v7219
        %v7252 = vadd.f32 %v7184, %v7220
        %v7253 = vadd.f32 %v7185, %v7221
        %v7254 = vadd.f32 %v7186, %v7222
        %v7255 = vadd.f32 %v7187, %v7223
        %v7256 = vadd.f32 %v7188, %v7224
        %v7257 = vadd.f32 %v7189, %v7225
        %v7258 = vadd.f32 %v7190, %v7226
        %v7259 = vadd.f32 %v7191, %v7227
        %v7260 = vadd.f32 %v7192, %v7228
        %v7261 = vadd.f32 %v7193, %v7229
        %v7262 = vadd.f32 %v7194, %v7230
        %v7263 = vadd.f32 %v7195, %v7231
        %v7264 = vadd.f32 %v7196, %v7232
        %v7265 = vlaneseq
        %v7266 = vshrl.u32 %v7265, 7
        %v7267 = vsub.s32 1, %v7266
        %v7268 = vrot.slane %v4538, %v7267
        %v7269 = vmul.f32 %v6989, %v7268
        %v7270 = vmul.f32 %v6990, %v7268
        %v7271 = vmul.f32 %v6991, %v7268
        %v7272 = vmul.f32 %v6992, %v7268
        %v7273 = vmul.f32 %v6993, %v7268
        %v7274 = vmul.f32 %v6994, %v7268
        %v7275 = vmul.f32 %v6995, %v7268
        %v7276 = vmul.f32 %v6996, %v7268
        %v7277 = vmul.f32 %v6997, %v7268
        %v7278 = vmul.f32 %v6998, %v7268
        %v7279 = vmul.f32 %v6999, %v7268
        %v7280 = vmul.f32 %v7000, %v7268
        %v7281 = vmul.f32 %v7001, %v7268
        %v7282 = vmul.f32 %v7002, %v7268
        %v7283 = vmul.f32 %v7003, %v7268
        %v7284 = vmul.f32 %v7004, %v7268
        %v7285 = vmul.f32 %v7005, %v7268
        %v7286 = vmul.f32 %v7006, %v7268
        %v7287 = vmul.f32 %v7007, %v7268
        %v7288 = vmul.f32 %v7008, %v7268
        %v7289 = vmul.f32 %v7009, %v7268
        %v7290 = vmul.f32 %v7010, %v7268
        %v7291 = vmul.f32 %v7011, %v7268
        %v7292 = vmul.f32 %v7012, %v7268
        %v7293 = vmul.f32 %v7013, %v7268
        %v7294 = vmul.f32 %v7014, %v7268
        %v7295 = vmul.f32 %v7015, %v7268
        %v7296 = vmul.f32 %v7016, %v7268
        %v7297 = vmul.f32 %v7017, %v7268
        %v7298 = vmul.f32 %v7018, %v7268
        %v7299 = vmul.f32 %v7019, %v7268
        %v7300 = vmul.f32 %v7020, %v7268
        %v7301 = vadd.f32 %v7233, %v7269
        %v7302 = vadd.f32 %v7234, %v7270
        %v7303 = vadd.f32 %v7235, %v7271
        %v7304 = vadd.f32 %v7236, %v7272
        %v7305 = vadd.f32 %v7237, %v7273
        %v7306 = vadd.f32 %v7238, %v7274
        %v7307 = vadd.f32 %v7239, %v7275
        %v7308 = vadd.f32 %v7240, %v7276
        %v7309 = vadd.f32 %v7241, %v7277
        %v7310 = vadd.f32 %v7242, %v7278
        %v7311 = vadd.f32 %v7243, %v7279
        %v7312 = vadd.f32 %v7244, %v7280
        %v7313 = vadd.f32 %v7245, %v7281
        %v7314 = vadd.f32 %v7246, %v7282
        %v7315 = vadd.f32 %v7247, %v7283
        %v7316 = vadd.f32 %v7248, %v7284
        %v7317 = vadd.f32 %v7249, %v7285
        %v7318 = vadd.f32 %v7250, %v7286
        %v7319 = vadd.f32 %v7251, %v7287
        %v7320 = vadd.f32 %v7252, %v7288
        %v7321 = vadd.f32 %v7253, %v7289
        %v7322 = vadd.f32 %v7254, %v7290
        %v7323 = vadd.f32 %v7255, %v7291
        %v7324 = vadd.f32 %v7256, %v7292
        %v7325 = vadd.f32 %v7257, %v7293
        %v7326 = vadd.f32 %v7258, %v7294
        %v7327 = vadd.f32 %v7259, %v7295
        %v7328 = vadd.f32 %v7260, %v7296
        %v7329 = vadd.f32 %v7261, %v7297
        %v7330 = vadd.f32 %v7262, %v7298
        %v7331 = vadd.f32 %v7263, %v7299
        %v7332 = vadd.f32 %v7264, %v7300
        %v7333 = vlaneseq
        %v7334 = vshrl.u32 %v7333, 7
        %v7335 = vsub.s32 0, %v7334
        %v7336 = vrot.slane %v4539, %v7335
        %v7337 = vmul.f32 %v6991, %v7336
        %v7338 = vmul.f32 %v6992, %v7336
        %v7339 = vmul.f32 %v6993, %v7336
        %v7340 = vmul.f32 %v6994, %v7336
        %v7341 = vmul.f32 %v6995, %v7336
        %v7342 = vmul.f32 %v6996, %v7336
        %v7343 = vmul.f32 %v6997, %v7336
        %v7344 = vmul.f32 %v6998, %v7336
        %v7345 = vmul.f32 %v6999, %v7336
        %v7346 = vmul.f32 %v7000, %v7336
        %v7347 = vmul.f32 %v7001, %v7336
        %v7348 = vmul.f32 %v7002, %v7336
        %v7349 = vmul.f32 %v7003, %v7336
        %v7350 = vmul.f32 %v7004, %v7336
        %v7351 = vmul.f32 %v7005, %v7336
        %v7352 = vmul.f32 %v7006, %v7336
        %v7353 = vmul.f32 %v7007, %v7336
        %v7354 = vmul.f32 %v7008, %v7336
        %v7355 = vmul.f32 %v7009, %v7336
        %v7356 = vmul.f32 %v7010, %v7336
        %v7357 = vmul.f32 %v7011, %v7336
        %v7358 = vmul.f32 %v7012, %v7336
        %v7359 = vmul.f32 %v7013, %v7336
        %v7360 = vmul.f32 %v7014, %v7336
        %v7361 = vmul.f32 %v7015, %v7336
        %v7362 = vmul.f32 %v7016, %v7336
        %v7363 = vmul.f32 %v7017, %v7336
        %v7364 = vmul.f32 %v7018, %v7336
        %v7365 = vmul.f32 %v7019, %v7336
        %v7366 = vmul.f32 %v7020, %v7336
        %v7367 = vmul.f32 %v7021, %v7336
        %v7368 = vmul.f32 %v7022, %v7336
        %v7369 = vadd.f32 %v7301, %v7337
        %v7370 = vadd.f32 %v7302, %v7338
        %v7371 = vadd.f32 %v7303, %v7339
        %v7372 = vadd.f32 %v7304, %v7340
        %v7373 = vadd.f32 %v7305, %v7341
        %v7374 = vadd.f32 %v7306, %v7342
        %v7375 = vadd.f32 %v7307, %v7343
        %v7376 = vadd.f32 %v7308, %v7344
        %v7377 = vadd.f32 %v7309, %v7345
        %v7378 = vadd.f32 %v7310, %v7346
        %v7379 = vadd.f32 %v7311, %v7347
        %v7380 = vadd.f32 %v7312, %v7348
        %v7381 = vadd.f32 %v7313, %v7349
        %v7382 = vadd.f32 %v7314, %v7350
        %v7383 = vadd.f32 %v7315, %v7351
        %v7384 = vadd.f32 %v7316, %v7352
        %v7385 = vadd.f32 %v7317, %v7353
        %v7386 = vadd.f32 %v7318, %v7354
        %v7387 = vadd.f32 %v7319, %v7355
        %v7388 = vadd.f32 %v7320, %v7356
        %v7389 = vadd.f32 %v7321, %v7357
        %v7390 = vadd.f32 %v7322, %v7358
        %v7391 = vadd.f32 %v7323, %v7359
        %v7392 = vadd.f32 %v7324, %v7360
        %v7393 = vadd.f32 %v7325, %v7361
        %v7394 = vadd.f32 %v7326, %v7362
        %v7395 = vadd.f32 %v7327, %v7363
        %v7396 = vadd.f32 %v7328, %v7364
        %v7397 = vadd.f32 %v7329, %v7365
        %v7398 = vadd.f32 %v7330, %v7366
        %v7399 = vadd.f32 %v7331, %v7367
        %v7400 = vadd.f32 %v7332, %v7368
        %v7401 = vlaneseq
        %v7402 = vshrl.u32 %v7401, 7
        %v7403 = vsub.s32 7, %v7402
        %v7404 = vrot.slane %v4539, %v7403
        %v7405 = vmul.f32 %v6993, %v7404
        %v7406 = vmul.f32 %v6994, %v7404
        %v7407 = vmul.f32 %v6995, %v7404
        %v7408 = vmul.f32 %v6996, %v7404
        %v7409 = vmul.f32 %v6997, %v7404
        %v7410 = vmul.f32 %v6998, %v7404
        %v7411 = vmul.f32 %v6999, %v7404
        %v7412 = vmul.f32 %v7000, %v7404
        %v7413 = vmul.f32 %v7001, %v7404
        %v7414 = vmul.f32 %v7002, %v7404
        %v7415 = vmul.f32 %v7003, %v7404
        %v7416 = vmul.f32 %v7004, %v7404
        %v7417 = vmul.f32 %v7005, %v7404
        %v7418 = vmul.f32 %v7006, %v7404
        %v7419 = vmul.f32 %v7007, %v7404
        %v7420 = vmul.f32 %v7008, %v7404
        %v7421 = vmul.f32 %v7009, %v7404
        %v7422 = vmul.f32 %v7010, %v7404
        %v7423 = vmul.f32 %v7011, %v7404
        %v7424 = vmul.f32 %v7012, %v7404
        %v7425 = vmul.f32 %v7013, %v7404
        %v7426 = vmul.f32 %v7014, %v7404
        %v7427 = vmul.f32 %v7015, %v7404
        %v7428 = vmul.f32 %v7016, %v7404
        %v7429 = vmul.f32 %v7017, %v7404
        %v7430 = vmul.f32 %v7018, %v7404
        %v7431 = vmul.f32 %v7019, %v7404
        %v7432 = vmul.f32 %v7020, %v7404
        %v7433 = vmul.f32 %v7021, %v7404
        %v7434 = vmul.f32 %v7022, %v7404
        %v7435 = vmul.f32 %v7023, %v7404
        %v7436 = vmul.f32 %v7024, %v7404
        %v7437 = vadd.f32 %v7369, %v7405
        %v7438 = vadd.f32 %v7370, %v7406
        %v7439 = vadd.f32 %v7371, %v7407
        %v7440 = vadd.f32 %v7372, %v7408
        %v7441 = vadd.f32 %v7373, %v7409
        %v7442 = vadd.f32 %v7374, %v7410
        %v7443 = vadd.f32 %v7375, %v7411
        %v7444 = vadd.f32 %v7376, %v7412
        %v7445 = vadd.f32 %v7377, %v7413
        %v7446 = vadd.f32 %v7378, %v7414
        %v7447 = vadd.f32 %v7379, %v7415
        %v7448 = vadd.f32 %v7380, %v7416
        %v7449 = vadd.f32 %v7381, %v7417
        %v7450 = vadd.f32 %v7382, %v7418
        %v7451 = vadd.f32 %v7383, %v7419
        %v7452 = vadd.f32 %v7384, %v7420
        %v7453 = vadd.f32 %v7385, %v7421
        %v7454 = vadd.f32 %v7386, %v7422
        %v7455 = vadd.f32 %v7387, %v7423
        %v7456 = vadd.f32 %v7388, %v7424
        %v7457 = vadd.f32 %v7389, %v7425
        %v7458 = vadd.f32 %v7390, %v7426
        %v7459 = vadd.f32 %v7391, %v7427
        %v7460 = vadd.f32 %v7392, %v7428
        %v7461 = vadd.f32 %v7393, %v7429
        %v7462 = vadd.f32 %v7394, %v7430
        %v7463 = vadd.f32 %v7395, %v7431
        %v7464 = vadd.f32 %v7396, %v7432
        %v7465 = vadd.f32 %v7397, %v7433
        %v7466 = vadd.f32 %v7398, %v7434
        %v7467 = vadd.f32 %v7399, %v7435
        %v7468 = vadd.f32 %v7400, %v7436
        %v7469 = vld [vmem:[#allocation2 + $0xb] sm:$0xff]
        %v7470 = vld [vmem:[#allocation2 + $0x13] sm:$0xff]
        %v7471 = vld [vmem:[#allocation2 + $0x2b] sm:$0xff]
        %v7472 = vld [vmem:[#allocation2 + $0x33] sm:$0xff]
        %v7473 = vld [vmem:[#allocation2 + $0x4b] sm:$0xff]
        %v7474 = vld [vmem:[#allocation2 + $0x53] sm:$0xff]
        %v7475 = vld [vmem:[#allocation2 + $0x6b] sm:$0xff]
        %v7476 = vld [vmem:[#allocation2 + $0x73] sm:$0xff]
        %v7477 = vld [vmem:[#allocation2 + $0x8b] sm:$0xff]
        %v7478 = vld [vmem:[#allocation2 + $0x93] sm:$0xff]
        %v7479 = vld [vmem:[#allocation2 + $0xab] sm:$0xff]
        %v7480 = vld [vmem:[#allocation2 + $0xb3] sm:$0xff]
        %v7481 = vld [vmem:[#allocation2 + $0xcb] sm:$0xff]
        %v7482 = vld [vmem:[#allocation2 + $0xd3] sm:$0xff]
        %v7483 = vld [vmem:[#allocation2 + $0xeb] sm:$0xff]
        %v7484 = vld [vmem:[#allocation2 + $0xf3] sm:$0xff]
        %v7485 = vld [vmem:[#allocation2 + $0x10b] sm:$0xff]
        %v7486 = vld [vmem:[#allocation2 + $0x113] sm:$0xff]
        %v7487 = vld [vmem:[#allocation2 + $0x12b] sm:$0xff]
        %v7488 = vld [vmem:[#allocation2 + $0x133] sm:$0xff]
        %v7489 = vld [vmem:[#allocation2 + $0x14b] sm:$0xff]
        %v7490 = vld [vmem:[#allocation2 + $0x153] sm:$0xff]
        %v7491 = vld [vmem:[#allocation2 + $0x16b] sm:$0xff]
        %v7492 = vld [vmem:[#allocation2 + $0x173] sm:$0xff]
        %v7493 = vld [vmem:[#allocation2 + $0x18b] sm:$0xff]
        %v7494 = vld [vmem:[#allocation2 + $0x193] sm:$0xff]
        %v7495 = vld [vmem:[#allocation2 + $0x1ab] sm:$0xff]
        %v7496 = vld [vmem:[#allocation2 + $0x1b3] sm:$0xff]
        %v7497 = vld [vmem:[#allocation2 + $0x1cb] sm:$0xff]
        %v7498 = vld [vmem:[#allocation2 + $0x1d3] sm:$0xff]
        %v7499 = vld [vmem:[#allocation2 + $0x1eb] sm:$0xff]
        %v7500 = vld [vmem:[#allocation2 + $0x1f3] sm:$0xff]
        %v7501 = vld [vmem:[#allocation2 + $0x20b] sm:$0xff]
        %v7502 = vld [vmem:[#allocation2 + $0x213] sm:$0xff]
        %v7503 = vld [vmem:[#allocation2 + $0x22b] sm:$0xff]
        %v7504 = vld [vmem:[#allocation2 + $0x233] sm:$0xff]
        %v7505 = vld [vmem:[#allocation2 + $0x24b] sm:$0xff]
        %v7506 = vld [vmem:[#allocation2 + $0x253] sm:$0xff]
        %v7507 = vld [vmem:[#allocation2 + $0x26b] sm:$0xff]
        %v7508 = vld [vmem:[#allocation2 + $0x273] sm:$0xff]
        %v7509 = vld [vmem:[#allocation2 + $0x28b] sm:$0xff]
        %v7510 = vld [vmem:[#allocation2 + $0x293] sm:$0xff]
        %v7511 = vld [vmem:[#allocation2 + $0x2ab] sm:$0xff]
        %v7512 = vld [vmem:[#allocation2 + $0x2b3] sm:$0xff]
        %v7513 = vlaneseq
        %v7514 = vshrl.u32 %v7513, 7
        %v7515 = vsub.s32 6, %v7514
        %v7516 = vrot.slane %v4534, %v7515
        %v7517 = vmul.f32 %v7469, %v7516
        %v7518 = vmul.f32 %v7470, %v7516
        %v7519 = vmul.f32 %v7471, %v7516
        %v7520 = vmul.f32 %v7472, %v7516
        %v7521 = vmul.f32 %v7473, %v7516
        %v7522 = vmul.f32 %v7474, %v7516
        %v7523 = vmul.f32 %v7475, %v7516
        %v7524 = vmul.f32 %v7476, %v7516
        %v7525 = vmul.f32 %v7477, %v7516
        %v7526 = vmul.f32 %v7478, %v7516
        %v7527 = vmul.f32 %v7479, %v7516
        %v7528 = vmul.f32 %v7480, %v7516
        %v7529 = vmul.f32 %v7481, %v7516
        %v7530 = vmul.f32 %v7482, %v7516
        %v7531 = vmul.f32 %v7483, %v7516
        %v7532 = vmul.f32 %v7484, %v7516
        %v7533 = vmul.f32 %v7485, %v7516
        %v7534 = vmul.f32 %v7486, %v7516
        %v7535 = vmul.f32 %v7487, %v7516
        %v7536 = vmul.f32 %v7488, %v7516
        %v7537 = vmul.f32 %v7489, %v7516
        %v7538 = vmul.f32 %v7490, %v7516
        %v7539 = vmul.f32 %v7491, %v7516
        %v7540 = vmul.f32 %v7492, %v7516
        %v7541 = vmul.f32 %v7493, %v7516
        %v7542 = vmul.f32 %v7494, %v7516
        %v7543 = vmul.f32 %v7495, %v7516
        %v7544 = vmul.f32 %v7496, %v7516
        %v7545 = vmul.f32 %v7497, %v7516
        %v7546 = vmul.f32 %v7498, %v7516
        %v7547 = vmul.f32 %v7499, %v7516
        %v7548 = vmul.f32 %v7500, %v7516
        %v7549 = vlaneseq
        %v7550 = vshrl.u32 %v7549, 7
        %v7551 = vsub.s32 5, %v7550
        %v7552 = vrot.slane %v4535, %v7551
        %v7553 = vmul.f32 %v7471, %v7552
        %v7554 = vmul.f32 %v7472, %v7552
        %v7555 = vmul.f32 %v7473, %v7552
        %v7556 = vmul.f32 %v7474, %v7552
        %v7557 = vmul.f32 %v7475, %v7552
        %v7558 = vmul.f32 %v7476, %v7552
        %v7559 = vmul.f32 %v7477, %v7552
        %v7560 = vmul.f32 %v7478, %v7552
        %v7561 = vmul.f32 %v7479, %v7552
        %v7562 = vmul.f32 %v7480, %v7552
        %v7563 = vmul.f32 %v7481, %v7552
        %v7564 = vmul.f32 %v7482, %v7552
        %v7565 = vmul.f32 %v7483, %v7552
        %v7566 = vmul.f32 %v7484, %v7552
        %v7567 = vmul.f32 %v7485, %v7552
        %v7568 = vmul.f32 %v7486, %v7552
        %v7569 = vmul.f32 %v7487, %v7552
        %v7570 = vmul.f32 %v7488, %v7552
        %v7571 = vmul.f32 %v7489, %v7552
        %v7572 = vmul.f32 %v7490, %v7552
        %v7573 = vmul.f32 %v7491, %v7552
        %v7574 = vmul.f32 %v7492, %v7552
        %v7575 = vmul.f32 %v7493, %v7552
        %v7576 = vmul.f32 %v7494, %v7552
        %v7577 = vmul.f32 %v7495, %v7552
        %v7578 = vmul.f32 %v7496, %v7552
        %v7579 = vmul.f32 %v7497, %v7552
        %v7580 = vmul.f32 %v7498, %v7552
        %v7581 = vmul.f32 %v7499, %v7552
        %v7582 = vmul.f32 %v7500, %v7552
        %v7583 = vmul.f32 %v7501, %v7552
        %v7584 = vmul.f32 %v7502, %v7552
        %v7585 = vadd.f32 %v7517, %v7553
        %v7586 = vadd.f32 %v7518, %v7554
        %v7587 = vadd.f32 %v7519, %v7555
        %v7588 = vadd.f32 %v7520, %v7556
        %v7589 = vadd.f32 %v7521, %v7557
        %v7590 = vadd.f32 %v7522, %v7558
        %v7591 = vadd.f32 %v7523, %v7559
        %v7592 = vadd.f32 %v7524, %v7560
        %v7593 = vadd.f32 %v7525, %v7561
        %v7594 = vadd.f32 %v7526, %v7562
        %v7595 = vadd.f32 %v7527, %v7563
        %v7596 = vadd.f32 %v7528, %v7564
        %v7597 = vadd.f32 %v7529, %v7565
        %v7598 = vadd.f32 %v7530, %v7566
        %v7599 = vadd.f32 %v7531, %v7567
        %v7600 = vadd.f32 %v7532, %v7568
        %v7601 = vadd.f32 %v7533, %v7569
        %v7602 = vadd.f32 %v7534, %v7570
        %v7603 = vadd.f32 %v7535, %v7571
        %v7604 = vadd.f32 %v7536, %v7572
        %v7605 = vadd.f32 %v7537, %v7573
        %v7606 = vadd.f32 %v7538, %v7574
        %v7607 = vadd.f32 %v7539, %v7575
        %v7608 = vadd.f32 %v7540, %v7576
        %v7609 = vadd.f32 %v7541, %v7577
        %v7610 = vadd.f32 %v7542, %v7578
        %v7611 = vadd.f32 %v7543, %v7579
        %v7612 = vadd.f32 %v7544, %v7580
        %v7613 = vadd.f32 %v7545, %v7581
        %v7614 = vadd.f32 %v7546, %v7582
        %v7615 = vadd.f32 %v7547, %v7583
        %v7616 = vadd.f32 %v7548, %v7584
        %v7617 = vlaneseq
        %v7618 = vshrl.u32 %v7617, 7
        %v7619 = vsub.s32 4, %v7618
        %v7620 = vrot.slane %v4536, %v7619
        %v7621 = vmul.f32 %v7473, %v7620
        %v7622 = vmul.f32 %v7474, %v7620
        %v7623 = vmul.f32 %v7475, %v7620
        %v7624 = vmul.f32 %v7476, %v7620
        %v7625 = vmul.f32 %v7477, %v7620
        %v7626 = vmul.f32 %v7478, %v7620
        %v7627 = vmul.f32 %v7479, %v7620
        %v7628 = vmul.f32 %v7480, %v7620
        %v7629 = vmul.f32 %v7481, %v7620
        %v7630 = vmul.f32 %v7482, %v7620
        %v7631 = vmul.f32 %v7483, %v7620
        %v7632 = vmul.f32 %v7484, %v7620
        %v7633 = vmul.f32 %v7485, %v7620
        %v7634 = vmul.f32 %v7486, %v7620
        %v7635 = vmul.f32 %v7487, %v7620
        %v7636 = vmul.f32 %v7488, %v7620
        %v7637 = vmul.f32 %v7489, %v7620
        %v7638 = vmul.f32 %v7490, %v7620
        %v7639 = vmul.f32 %v7491, %v7620
        %v7640 = vmul.f32 %v7492, %v7620
        %v7641 = vmul.f32 %v7493, %v7620
        %v7642 = vmul.f32 %v7494, %v7620
        %v7643 = vmul.f32 %v7495, %v7620
        %v7644 = vmul.f32 %v7496, %v7620
        %v7645 = vmul.f32 %v7497, %v7620
        %v7646 = vmul.f32 %v7498, %v7620
        %v7647 = vmul.f32 %v7499, %v7620
        %v7648 = vmul.f32 %v7500, %v7620
        %v7649 = vmul.f32 %v7501, %v7620
        %v7650 = vmul.f32 %v7502, %v7620
        %v7651 = vmul.f32 %v7503, %v7620
        %v7652 = vmul.f32 %v7504, %v7620
        %v7653 = vadd.f32 %v7585, %v7621
        %v7654 = vadd.f32 %v7586, %v7622
        %v7655 = vadd.f32 %v7587, %v7623
        %v7656 = vadd.f32 %v7588, %v7624
        %v7657 = vadd.f32 %v7589, %v7625
        %v7658 = vadd.f32 %v7590, %v7626
        %v7659 = vadd.f32 %v7591, %v7627
        %v7660 = vadd.f32 %v7592, %v7628
        %v7661 = vadd.f32 %v7593, %v7629
        %v7662 = vadd.f32 %v7594, %v7630
        %v7663 = vadd.f32 %v7595, %v7631
        %v7664 = vadd.f32 %v7596, %v7632
        %v7665 = vadd.f32 %v7597, %v7633
        %v7666 = vadd.f32 %v7598, %v7634
        %v7667 = vadd.f32 %v7599, %v7635
        %v7668 = vadd.f32 %v7600, %v7636
        %v7669 = vadd.f32 %v7601, %v7637
        %v7670 = vadd.f32 %v7602, %v7638
        %v7671 = vadd.f32 %v7603, %v7639
        %v7672 = vadd.f32 %v7604, %v7640
        %v7673 = vadd.f32 %v7605, %v7641
        %v7674 = vadd.f32 %v7606, %v7642
        %v7675 = vadd.f32 %v7607, %v7643
        %v7676 = vadd.f32 %v7608, %v7644
        %v7677 = vadd.f32 %v7609, %v7645
        %v7678 = vadd.f32 %v7610, %v7646
        %v7679 = vadd.f32 %v7611, %v7647
        %v7680 = vadd.f32 %v7612, %v7648
        %v7681 = vadd.f32 %v7613, %v7649
        %v7682 = vadd.f32 %v7614, %v7650
        %v7683 = vadd.f32 %v7615, %v7651
        %v7684 = vadd.f32 %v7616, %v7652
        %v7685 = vlaneseq
        %v7686 = vshrl.u32 %v7685, 7
        %v7687 = vsub.s32 3, %v7686
        %v7688 = vrot.slane %v4537, %v7687
        %v7689 = vmul.f32 %v7475, %v7688
        %v7690 = vmul.f32 %v7476, %v7688
        %v7691 = vmul.f32 %v7477, %v7688
        %v7692 = vmul.f32 %v7478, %v7688
        %v7693 = vmul.f32 %v7479, %v7688
        %v7694 = vmul.f32 %v7480, %v7688
        %v7695 = vmul.f32 %v7481, %v7688
        %v7696 = vmul.f32 %v7482, %v7688
        %v7697 = vmul.f32 %v7483, %v7688
        %v7698 = vmul.f32 %v7484, %v7688
        %v7699 = vmul.f32 %v7485, %v7688
        %v7700 = vmul.f32 %v7486, %v7688
        %v7701 = vmul.f32 %v7487, %v7688
        %v7702 = vmul.f32 %v7488, %v7688
        %v7703 = vmul.f32 %v7489, %v7688
        %v7704 = vmul.f32 %v7490, %v7688
        %v7705 = vmul.f32 %v7491, %v7688
        %v7706 = vmul.f32 %v7492, %v7688
        %v7707 = vmul.f32 %v7493, %v7688
        %v7708 = vmul.f32 %v7494, %v7688
        %v7709 = vmul.f32 %v7495, %v7688
        %v7710 = vmul.f32 %v7496, %v7688
        %v7711 = vmul.f32 %v7497, %v7688
        %v7712 = vmul.f32 %v7498, %v7688
        %v7713 = vmul.f32 %v7499, %v7688
        %v7714 = vmul.f32 %v7500, %v7688
        %v7715 = vmul.f32 %v7501, %v7688
        %v7716 = vmul.f32 %v7502, %v7688
        %v7717 = vmul.f32 %v7503, %v7688
        %v7718 = vmul.f32 %v7504, %v7688
        %v7719 = vmul.f32 %v7505, %v7688
        %v7720 = vmul.f32 %v7506, %v7688
        %v7721 = vadd.f32 %v7653, %v7689
        %v7722 = vadd.f32 %v7654, %v7690
        %v7723 = vadd.f32 %v7655, %v7691
        %v7724 = vadd.f32 %v7656, %v7692
        %v7725 = vadd.f32 %v7657, %v7693
        %v7726 = vadd.f32 %v7658, %v7694
        %v7727 = vadd.f32 %v7659, %v7695
        %v7728 = vadd.f32 %v7660, %v7696
        %v7729 = vadd.f32 %v7661, %v7697
        %v7730 = vadd.f32 %v7662, %v7698
        %v7731 = vadd.f32 %v7663, %v7699
        %v7732 = vadd.f32 %v7664, %v7700
        %v7733 = vadd.f32 %v7665, %v7701
        %v7734 = vadd.f32 %v7666, %v7702
        %v7735 = vadd.f32 %v7667, %v7703
        %v7736 = vadd.f32 %v7668, %v7704
        %v7737 = vadd.f32 %v7669, %v7705
        %v7738 = vadd.f32 %v7670, %v7706
        %v7739 = vadd.f32 %v7671, %v7707
        %v7740 = vadd.f32 %v7672, %v7708
        %v7741 = vadd.f32 %v7673, %v7709
        %v7742 = vadd.f32 %v7674, %v7710
        %v7743 = vadd.f32 %v7675, %v7711
        %v7744 = vadd.f32 %v7676, %v7712
        %v7745 = vadd.f32 %v7677, %v7713
        %v7746 = vadd.f32 %v7678, %v7714
        %v7747 = vadd.f32 %v7679, %v7715
        %v7748 = vadd.f32 %v7680, %v7716
        %v7749 = vadd.f32 %v7681, %v7717
        %v7750 = vadd.f32 %v7682, %v7718
        %v7751 = vadd.f32 %v7683, %v7719
        %v7752 = vadd.f32 %v7684, %v7720
        %v7753 = vlaneseq
        %v7754 = vshrl.u32 %v7753, 7
        %v7755 = vsub.s32 2, %v7754
        %v7756 = vrot.slane %v4538, %v7755
        %v7757 = vmul.f32 %v7477, %v7756
        %v7758 = vmul.f32 %v7478, %v7756
        %v7759 = vmul.f32 %v7479, %v7756
        %v7760 = vmul.f32 %v7480, %v7756
        %v7761 = vmul.f32 %v7481, %v7756
        %v7762 = vmul.f32 %v7482, %v7756
        %v7763 = vmul.f32 %v7483, %v7756
        %v7764 = vmul.f32 %v7484, %v7756
        %v7765 = vmul.f32 %v7485, %v7756
        %v7766 = vmul.f32 %v7486, %v7756
        %v7767 = vmul.f32 %v7487, %v7756
        %v7768 = vmul.f32 %v7488, %v7756
        %v7769 = vmul.f32 %v7489, %v7756
        %v7770 = vmul.f32 %v7490, %v7756
        %v7771 = vmul.f32 %v7491, %v7756
        %v7772 = vmul.f32 %v7492, %v7756
        %v7773 = vmul.f32 %v7493, %v7756
        %v7774 = vmul.f32 %v7494, %v7756
        %v7775 = vmul.f32 %v7495, %v7756
        %v7776 = vmul.f32 %v7496, %v7756
        %v7777 = vmul.f32 %v7497, %v7756
        %v7778 = vmul.f32 %v7498, %v7756
        %v7779 = vmul.f32 %v7499, %v7756
        %v7780 = vmul.f32 %v7500, %v7756
        %v7781 = vmul.f32 %v7501, %v7756
        %v7782 = vmul.f32 %v7502, %v7756
        %v7783 = vmul.f32 %v7503, %v7756
        %v7784 = vmul.f32 %v7504, %v7756
        %v7785 = vmul.f32 %v7505, %v7756
        %v7786 = vmul.f32 %v7506, %v7756
        %v7787 = vmul.f32 %v7507, %v7756
        %v7788 = vmul.f32 %v7508, %v7756
        %v7789 = vadd.f32 %v7721, %v7757
        %v7790 = vadd.f32 %v7722, %v7758
        %v7791 = vadd.f32 %v7723, %v7759
        %v7792 = vadd.f32 %v7724, %v7760
        %v7793 = vadd.f32 %v7725, %v7761
        %v7794 = vadd.f32 %v7726, %v7762
        %v7795 = vadd.f32 %v7727, %v7763
        %v7796 = vadd.f32 %v7728, %v7764
        %v7797 = vadd.f32 %v7729, %v7765
        %v7798 = vadd.f32 %v7730, %v7766
        %v7799 = vadd.f32 %v7731, %v7767
        %v7800 = vadd.f32 %v7732, %v7768
        %v7801 = vadd.f32 %v7733, %v7769
        %v7802 = vadd.f32 %v7734, %v7770
        %v7803 = vadd.f32 %v7735, %v7771
        %v7804 = vadd.f32 %v7736, %v7772
        %v7805 = vadd.f32 %v7737, %v7773
        %v7806 = vadd.f32 %v7738, %v7774
        %v7807 = vadd.f32 %v7739, %v7775
        %v7808 = vadd.f32 %v7740, %v7776
        %v7809 = vadd.f32 %v7741, %v7777
        %v7810 = vadd.f32 %v7742, %v7778
        %v7811 = vadd.f32 %v7743, %v7779
        %v7812 = vadd.f32 %v7744, %v7780
        %v7813 = vadd.f32 %v7745, %v7781
        %v7814 = vadd.f32 %v7746, %v7782
        %v7815 = vadd.f32 %v7747, %v7783
        %v7816 = vadd.f32 %v7748, %v7784
        %v7817 = vadd.f32 %v7749, %v7785
        %v7818 = vadd.f32 %v7750, %v7786
        %v7819 = vadd.f32 %v7751, %v7787
        %v7820 = vadd.f32 %v7752, %v7788
        %v7821 = vlaneseq
        %v7822 = vshrl.u32 %v7821, 7
        %v7823 = vsub.s32 1, %v7822
        %v7824 = vrot.slane %v4539, %v7823
        %v7825 = vmul.f32 %v7479, %v7824
        %v7826 = vmul.f32 %v7480, %v7824
        %v7827 = vmul.f32 %v7481, %v7824
        %v7828 = vmul.f32 %v7482, %v7824
        %v7829 = vmul.f32 %v7483, %v7824
        %v7830 = vmul.f32 %v7484, %v7824
        %v7831 = vmul.f32 %v7485, %v7824
        %v7832 = vmul.f32 %v7486, %v7824
        %v7833 = vmul.f32 %v7487, %v7824
        %v7834 = vmul.f32 %v7488, %v7824
        %v7835 = vmul.f32 %v7489, %v7824
        %v7836 = vmul.f32 %v7490, %v7824
        %v7837 = vmul.f32 %v7491, %v7824
        %v7838 = vmul.f32 %v7492, %v7824
        %v7839 = vmul.f32 %v7493, %v7824
        %v7840 = vmul.f32 %v7494, %v7824
        %v7841 = vmul.f32 %v7495, %v7824
        %v7842 = vmul.f32 %v7496, %v7824
        %v7843 = vmul.f32 %v7497, %v7824
        %v7844 = vmul.f32 %v7498, %v7824
        %v7845 = vmul.f32 %v7499, %v7824
        %v7846 = vmul.f32 %v7500, %v7824
        %v7847 = vmul.f32 %v7501, %v7824
        %v7848 = vmul.f32 %v7502, %v7824
        %v7849 = vmul.f32 %v7503, %v7824
        %v7850 = vmul.f32 %v7504, %v7824
        %v7851 = vmul.f32 %v7505, %v7824
        %v7852 = vmul.f32 %v7506, %v7824
        %v7853 = vmul.f32 %v7507, %v7824
        %v7854 = vmul.f32 %v7508, %v7824
        %v7855 = vmul.f32 %v7509, %v7824
        %v7856 = vmul.f32 %v7510, %v7824
        %v7857 = vadd.f32 %v7789, %v7825
        %v7858 = vadd.f32 %v7790, %v7826
        %v7859 = vadd.f32 %v7791, %v7827
        %v7860 = vadd.f32 %v7792, %v7828
        %v7861 = vadd.f32 %v7793, %v7829
        %v7862 = vadd.f32 %v7794, %v7830
        %v7863 = vadd.f32 %v7795, %v7831
        %v7864 = vadd.f32 %v7796, %v7832
        %v7865 = vadd.f32 %v7797, %v7833
        %v7866 = vadd.f32 %v7798, %v7834
        %v7867 = vadd.f32 %v7799, %v7835
        %v7868 = vadd.f32 %v7800, %v7836
        %v7869 = vadd.f32 %v7801, %v7837
        %v7870 = vadd.f32 %v7802, %v7838
        %v7871 = vadd.f32 %v7803, %v7839
        %v7872 = vadd.f32 %v7804, %v7840
        %v7873 = vadd.f32 %v7805, %v7841
        %v7874 = vadd.f32 %v7806, %v7842
        %v7875 = vadd.f32 %v7807, %v7843
        %v7876 = vadd.f32 %v7808, %v7844
        %v7877 = vadd.f32 %v7809, %v7845
        %v7878 = vadd.f32 %v7810, %v7846
        %v7879 = vadd.f32 %v7811, %v7847
        %v7880 = vadd.f32 %v7812, %v7848
        %v7881 = vadd.f32 %v7813, %v7849
        %v7882 = vadd.f32 %v7814, %v7850
        %v7883 = vadd.f32 %v7815, %v7851
        %v7884 = vadd.f32 %v7816, %v7852
        %v7885 = vadd.f32 %v7817, %v7853
        %v7886 = vadd.f32 %v7818, %v7854
        %v7887 = vadd.f32 %v7819, %v7855
        %v7888 = vadd.f32 %v7820, %v7856
        %v7889 = vlaneseq
        %v7890 = vshrl.u32 %v7889, 7
        %v7891 = vsub.s32 0, %v7890
        %v7892 = vrot.slane %v4540, %v7891
        %v7893 = vmul.f32 %v7481, %v7892
        %v7894 = vmul.f32 %v7482, %v7892
        %v7895 = vmul.f32 %v7483, %v7892
        %v7896 = vmul.f32 %v7484, %v7892
        %v7897 = vmul.f32 %v7485, %v7892
        %v7898 = vmul.f32 %v7486, %v7892
        %v7899 = vmul.f32 %v7487, %v7892
        %v7900 = vmul.f32 %v7488, %v7892
        %v7901 = vmul.f32 %v7489, %v7892
        %v7902 = vmul.f32 %v7490, %v7892
        %v7903 = vmul.f32 %v7491, %v7892
        %v7904 = vmul.f32 %v7492, %v7892
        %v7905 = vmul.f32 %v7493, %v7892
        %v7906 = vmul.f32 %v7494, %v7892
        %v7907 = vmul.f32 %v7495, %v7892
        %v7908 = vmul.f32 %v7496, %v7892
        %v7909 = vmul.f32 %v7497, %v7892
        %v7910 = vmul.f32 %v7498, %v7892
        %v7911 = vmul.f32 %v7499, %v7892
        %v7912 = vmul.f32 %v7500, %v7892
        %v7913 = vmul.f32 %v7501, %v7892
        %v7914 = vmul.f32 %v7502, %v7892
        %v7915 = vmul.f32 %v7503, %v7892
        %v7916 = vmul.f32 %v7504, %v7892
        %v7917 = vmul.f32 %v7505, %v7892
        %v7918 = vmul.f32 %v7506, %v7892
        %v7919 = vmul.f32 %v7507, %v7892
        %v7920 = vmul.f32 %v7508, %v7892
        %v7921 = vmul.f32 %v7509, %v7892
        %v7922 = vmul.f32 %v7510, %v7892
        %v7923 = vmul.f32 %v7511, %v7892
        %v7924 = vmul.f32 %v7512, %v7892
        %v7925 = vadd.f32 %v7857, %v7893
        %v7926 = vadd.f32 %v7858, %v7894
        %v7927 = vadd.f32 %v7859, %v7895
        %v7928 = vadd.f32 %v7860, %v7896
        %v7929 = vadd.f32 %v7861, %v7897
        %v7930 = vadd.f32 %v7862, %v7898
        %v7931 = vadd.f32 %v7863, %v7899
        %v7932 = vadd.f32 %v7864, %v7900
        %v7933 = vadd.f32 %v7865, %v7901
        %v7934 = vadd.f32 %v7866, %v7902
        %v7935 = vadd.f32 %v7867, %v7903
        %v7936 = vadd.f32 %v7868, %v7904
        %v7937 = vadd.f32 %v7869, %v7905
        %v7938 = vadd.f32 %v7870, %v7906
        %v7939 = vadd.f32 %v7871, %v7907
        %v7940 = vadd.f32 %v7872, %v7908
        %v7941 = vadd.f32 %v7873, %v7909
        %v7942 = vadd.f32 %v7874, %v7910
        %v7943 = vadd.f32 %v7875, %v7911
        %v7944 = vadd.f32 %v7876, %v7912
        %v7945 = vadd.f32 %v7877, %v7913
        %v7946 = vadd.f32 %v7878, %v7914
        %v7947 = vadd.f32 %v7879, %v7915
        %v7948 = vadd.f32 %v7880, %v7916
        %v7949 = vadd.f32 %v7881, %v7917
        %v7950 = vadd.f32 %v7882, %v7918
        %v7951 = vadd.f32 %v7883, %v7919
        %v7952 = vadd.f32 %v7884, %v7920
        %v7953 = vadd.f32 %v7885, %v7921
        %v7954 = vadd.f32 %v7886, %v7922
        %v7955 = vadd.f32 %v7887, %v7923
        %v7956 = vadd.f32 %v7888, %v7924
        %v7957 = vadd.f32 %v4997, %v5485
        %v7958 = vadd.f32 %v4998, %v5486
        %v7959 = vadd.f32 %v4999, %v5487
        %v7960 = vadd.f32 %v5000, %v5488
        %v7961 = vadd.f32 %v5001, %v5489
        %v7962 = vadd.f32 %v5002, %v5490
        %v7963 = vadd.f32 %v5003, %v5491
        %v7964 = vadd.f32 %v5004, %v5492
        %v7965 = vadd.f32 %v5005, %v5493
        %v7966 = vadd.f32 %v5006, %v5494
        %v7967 = vadd.f32 %v5007, %v5495
        %v7968 = vadd.f32 %v5008, %v5496
        %v7969 = vadd.f32 %v5009, %v5497
        %v7970 = vadd.f32 %v5010, %v5498
        %v7971 = vadd.f32 %v5011, %v5499
        %v7972 = vadd.f32 %v5012, %v5500
        %v7973 = vadd.f32 %v5013, %v5501
        %v7974 = vadd.f32 %v5014, %v5502
        %v7975 = vadd.f32 %v5015, %v5503
        %v7976 = vadd.f32 %v5016, %v5504
        %v7977 = vadd.f32 %v5017, %v5505
        %v7978 = vadd.f32 %v5018, %v5506
        %v7979 = vadd.f32 %v5019, %v5507
        %v7980 = vadd.f32 %v5020, %v5508
        %v7981 = vadd.f32 %v5021, %v5509
        %v7982 = vadd.f32 %v5022, %v5510
        %v7983 = vadd.f32 %v5023, %v5511
        %v7984 = vadd.f32 %v5024, %v5512
        %v7985 = vadd.f32 %v5025, %v5513
        %v7986 = vadd.f32 %v5026, %v5514
        %v7987 = vadd.f32 %v5027, %v5515
        %v7988 = vadd.f32 %v5028, %v5516
        %v7989 = vadd.f32 %v5973, %v6461
        %v7990 = vadd.f32 %v5974, %v6462
        %v7991 = vadd.f32 %v5975, %v6463
        %v7992 = vadd.f32 %v5976, %v6464
        %v7993 = vadd.f32 %v5977, %v6465
        %v7994 = vadd.f32 %v5978, %v6466
        %v7995 = vadd.f32 %v5979, %v6467
        %v7996 = vadd.f32 %v5980, %v6468
        %v7997 = vadd.f32 %v5981, %v6469
        %v7998 = vadd.f32 %v5982, %v6470
        %v7999 = vadd.f32 %v5983, %v6471
        %v8000 = vadd.f32 %v5984, %v6472
        %v8001 = vadd.f32 %v5985, %v6473
        %v8002 = vadd.f32 %v5986, %v6474
        %v8003 = vadd.f32 %v5987, %v6475
        %v8004 = vadd.f32 %v5988, %v6476
        %v8005 = vadd.f32 %v5989, %v6477
        %v8006 = vadd.f32 %v5990, %v6478
        %v8007 = vadd.f32 %v5991, %v6479
        %v8008 = vadd.f32 %v5992, %v6480
        %v8009 = vadd.f32 %v5993, %v6481
        %v8010 = vadd.f32 %v5994, %v6482
        %v8011 = vadd.f32 %v5995, %v6483
        %v8012 = vadd.f32 %v5996, %v6484
        %v8013 = vadd.f32 %v5997, %v6485
        %v8014 = vadd.f32 %v5998, %v6486
        %v8015 = vadd.f32 %v5999, %v6487
        %v8016 = vadd.f32 %v6000, %v6488
        %v8017 = vadd.f32 %v6001, %v6489
        %v8018 = vadd.f32 %v6002, %v6490
        %v8019 = vadd.f32 %v6003, %v6491
        %v8020 = vadd.f32 %v6004, %v6492
        %v8021 = vadd.f32 %v6949, %v7437
        %v8022 = vadd.f32 %v6950, %v7438
        %v8023 = vadd.f32 %v6951, %v7439
        %v8024 = vadd.f32 %v6952, %v7440
        %v8025 = vadd.f32 %v6953, %v7441
        %v8026 = vadd.f32 %v6954, %v7442
        %v8027 = vadd.f32 %v6955, %v7443
        %v8028 = vadd.f32 %v6956, %v7444
        %v8029 = vadd.f32 %v6957, %v7445
        %v8030 = vadd.f32 %v6958, %v7446
        %v8031 = vadd.f32 %v6959, %v7447
        %v8032 = vadd.f32 %v6960, %v7448
        %v8033 = vadd.f32 %v6961, %v7449
        %v8034 = vadd.f32 %v6962, %v7450
        %v8035 = vadd.f32 %v6963, %v7451
        %v8036 = vadd.f32 %v6964, %v7452
        %v8037 = vadd.f32 %v6965, %v7453
        %v8038 = vadd.f32 %v6966, %v7454
        %v8039 = vadd.f32 %v6967, %v7455
        %v8040 = vadd.f32 %v6968, %v7456
        %v8041 = vadd.f32 %v6969, %v7457
        %v8042 = vadd.f32 %v6970, %v7458
        %v8043 = vadd.f32 %v6971, %v7459
        %v8044 = vadd.f32 %v6972, %v7460
        %v8045 = vadd.f32 %v6973, %v7461
        %v8046 = vadd.f32 %v6974, %v7462
        %v8047 = vadd.f32 %v6975, %v7463
        %v8048 = vadd.f32 %v6976, %v7464
        %v8049 = vadd.f32 %v6977, %v7465
        %v8050 = vadd.f32 %v6978, %v7466
        %v8051 = vadd.f32 %v6979, %v7467
        %v8052 = vadd.f32 %v6980, %v7468
        %v8053 = vadd.f32 %v7957, %v7989
        %v8054 = vadd.f32 %v7958, %v7990
        %v8055 = vadd.f32 %v7959, %v7991
        %v8056 = vadd.f32 %v7960, %v7992
        %v8057 = vadd.f32 %v7961, %v7993
        %v8058 = vadd.f32 %v7962, %v7994
        %v8059 = vadd.f32 %v7963, %v7995
        %v8060 = vadd.f32 %v7964, %v7996
        %v8061 = vadd.f32 %v7965, %v7997
        %v8062 = vadd.f32 %v7966, %v7998
        %v8063 = vadd.f32 %v7967, %v7999
        %v8064 = vadd.f32 %v7968, %v8000
        %v8065 = vadd.f32 %v7969, %v8001
        %v8066 = vadd.f32 %v7970, %v8002
        %v8067 = vadd.f32 %v7971, %v8003
        %v8068 = vadd.f32 %v7972, %v8004
        %v8069 = vadd.f32 %v7973, %v8005
        %v8070 = vadd.f32 %v7974, %v8006
        %v8071 = vadd.f32 %v7975, %v8007
        %v8072 = vadd.f32 %v7976, %v8008
        %v8073 = vadd.f32 %v7977, %v8009
        %v8074 = vadd.f32 %v7978, %v8010
        %v8075 = vadd.f32 %v7979, %v8011
        %v8076 = vadd.f32 %v7980, %v8012
        %v8077 = vadd.f32 %v7981, %v8013
        %v8078 = vadd.f32 %v7982, %v8014
        %v8079 = vadd.f32 %v7983, %v8015
        %v8080 = vadd.f32 %v7984, %v8016
        %v8081 = vadd.f32 %v7985, %v8017
        %v8082 = vadd.f32 %v7986, %v8018
        %v8083 = vadd.f32 %v7987, %v8019
        %v8084 = vadd.f32 %v7988, %v8020
        %v8085 = vadd.f32 %v8021, %v7925
        %v8086 = vadd.f32 %v8022, %v7926
        %v8087 = vadd.f32 %v8023, %v7927
        %v8088 = vadd.f32 %v8024, %v7928
        %v8089 = vadd.f32 %v8025, %v7929
        %v8090 = vadd.f32 %v8026, %v7930
        %v8091 = vadd.f32 %v8027, %v7931
        %v8092 = vadd.f32 %v8028, %v7932
        %v8093 = vadd.f32 %v8029, %v7933
        %v8094 = vadd.f32 %v8030, %v7934
        %v8095 = vadd.f32 %v8031, %v7935
        %v8096 = vadd.f32 %v8032, %v7936
        %v8097 = vadd.f32 %v8033, %v7937
        %v8098 = vadd.f32 %v8034, %v7938
        %v8099 = vadd.f32 %v8035, %v7939
        %v8100 = vadd.f32 %v8036, %v7940
        %v8101 = vadd.f32 %v8037, %v7941
        %v8102 = vadd.f32 %v8038, %v7942
        %v8103 = vadd.f32 %v8039, %v7943
        %v8104 = vadd.f32 %v8040, %v7944
        %v8105 = vadd.f32 %v8041, %v7945
        %v8106 = vadd.f32 %v8042, %v7946
        %v8107 = vadd.f32 %v8043, %v7947
        %v8108 = vadd.f32 %v8044, %v7948
        %v8109 = vadd.f32 %v8045, %v7949
        %v8110 = vadd.f32 %v8046, %v7950
        %v8111 = vadd.f32 %v8047, %v7951
        %v8112 = vadd.f32 %v8048, %v7952
        %v8113 = vadd.f32 %v8049, %v7953
        %v8114 = vadd.f32 %v8050, %v7954
        %v8115 = vadd.f32 %v8051, %v7955
        %v8116 = vadd.f32 %v8052, %v7956
        %v8117 = vadd.f32 %v8053, %v8085
        %v8118 = vadd.f32 %v8054, %v8086
        %v8119 = vadd.f32 %v8055, %v8087
        %v8120 = vadd.f32 %v8056, %v8088
        %v8121 = vadd.f32 %v8057, %v8089
        %v8122 = vadd.f32 %v8058, %v8090
        %v8123 = vadd.f32 %v8059, %v8091
        %v8124 = vadd.f32 %v8060, %v8092
        %v8125 = vadd.f32 %v8061, %v8093
        %v8126 = vadd.f32 %v8062, %v8094
        %v8127 = vadd.f32 %v8063, %v8095
        %v8128 = vadd.f32 %v8064, %v8096
        %v8129 = vadd.f32 %v8065, %v8097
        %v8130 = vadd.f32 %v8066, %v8098
        %v8131 = vadd.f32 %v8067, %v8099
        %v8132 = vadd.f32 %v8068, %v8100
        %v8133 = vadd.f32 %v8069, %v8101
        %v8134 = vadd.f32 %v8070, %v8102
        %v8135 = vadd.f32 %v8071, %v8103
        %v8136 = vadd.f32 %v8072, %v8104
        %v8137 = vadd.f32 %v8073, %v8105
        %v8138 = vadd.f32 %v8074, %v8106
        %v8139 = vadd.f32 %v8075, %v8107
        %v8140 = vadd.f32 %v8076, %v8108
        %v8141 = vadd.f32 %v8077, %v8109
        %v8142 = vadd.f32 %v8078, %v8110
        %v8143 = vadd.f32 %v8079, %v8111
        %v8144 = vadd.f32 %v8080, %v8112
        %v8145 = vadd.f32 %v8081, %v8113
        %v8146 = vadd.f32 %v8082, %v8114
        %v8147 = vadd.f32 %v8083, %v8115
        %v8148 = vadd.f32 %v8084, %v8116
        %v8149 = vld [vmem:[#allocation23] sm:$0x1]
        %v8151 = vlaneseq
        %v8152 = vshrl.u32 %v8151, 7
        %v8153 = vsub.s32 0, %v8152
        %v8154 = vrot.slane %v8149, %v8153
        %v8156 = vadd.f32 %v8117, %v8154
        %v8157 = vadd.f32 %v8118, %v8154
        %v8158 = vadd.f32 %v8119, %v8154
        %v8159 = vadd.f32 %v8120, %v8154
        %v8160 = vadd.f32 %v8121, %v8154
        %v8161 = vadd.f32 %v8122, %v8154
        %v8162 = vadd.f32 %v8123, %v8154
        %v8163 = vadd.f32 %v8124, %v8154
        %v8164 = vadd.f32 %v8125, %v8154
        %v8165 = vadd.f32 %v8126, %v8154
        %v8166 = vadd.f32 %v8127, %v8154
        %v8167 = vadd.f32 %v8128, %v8154
        %v8168 = vadd.f32 %v8129, %v8154
        %v8169 = vadd.f32 %v8130, %v8154
        %v8170 = vadd.f32 %v8131, %v8154
        %v8171 = vadd.f32 %v8132, %v8154
        %v8172 = vadd.f32 %v8133, %v8154
        %v8173 = vadd.f32 %v8134, %v8154
        %v8174 = vadd.f32 %v8135, %v8154
        %v8175 = vadd.f32 %v8136, %v8154
        %v8176 = vadd.f32 %v8137, %v8154
        %v8177 = vadd.f32 %v8138, %v8154
        %v8178 = vadd.f32 %v8139, %v8154
        %v8179 = vadd.f32 %v8140, %v8154
        %v8180 = vadd.f32 %v8141, %v8154
        %v8181 = vadd.f32 %v8142, %v8154
        %v8182 = vadd.f32 %v8143, %v8154
        %v8183 = vadd.f32 %v8144, %v8154
        %v8184 = vadd.f32 %v8145, %v8154
        %v8185 = vadd.f32 %v8146, %v8154
        %v8186 = vadd.f32 %v8147, %v8154
        %v8187 = vadd.f32 %v8148, %v8154
        %v8188 = vld [vmem:[%s528] sm:$0xff]
        %v8189 = vld [vmem:[%s528 + $0x8] sm:$0xff]
        %v8190 = vld [vmem:[%s528 + $0x10] sm:$0xff]
        %v8191 = vld [vmem:[%s528 + $0x18] sm:$0xff]
        %v8192 = vld [vmem:[%s528 + $0x20] sm:$0xff]
        %v8193 = vld [vmem:[%s528 + $0x28] sm:$0xff]
        %v8194 = vld [vmem:[%s528 + $0x30] sm:$0xff]
        %v8195 = vld [vmem:[%s528 + $0x38] sm:$0xff]
        %v8196 = vld [vmem:[%s528 + $0x40] sm:$0xff]
        %v8197 = vld [vmem:[%s528 + $0x48] sm:$0xff]
        %v8198 = vld [vmem:[%s528 + $0x50] sm:$0xff]
        %v8199 = vld [vmem:[%s528 + $0x58] sm:$0xff]
        %v8200 = vld [vmem:[%s528 + $0x60] sm:$0xff]
        %v8201 = vld [vmem:[%s528 + $0x68] sm:$0xff]
        %v8202 = vld [vmem:[%s528 + $0x70] sm:$0xff]
        %v8203 = vld [vmem:[%s528 + $0x78] sm:$0xff]
        %v8204 = vld [vmem:[%s528 + $0x80] sm:$0xff]
        %v8205 = vld [vmem:[%s528 + $0x88] sm:$0xff]
        %v8206 = vld [vmem:[%s528 + $0x90] sm:$0xff]
        %v8207 = vld [vmem:[%s528 + $0x98] sm:$0xff]
        %v8208 = vld [vmem:[%s528 + $0xa0] sm:$0xff]
        %v8209 = vld [vmem:[%s528 + $0xa8] sm:$0xff]
        %v8210 = vld [vmem:[%s528 + $0xb0] sm:$0xff]
        %v8211 = vld [vmem:[%s528 + $0xb8] sm:$0xff]
        %v8212 = vld [vmem:[%s528 + $0xc0] sm:$0xff]
        %v8213 = vld [vmem:[%s528 + $0xc8] sm:$0xff]
        %v8214 = vld [vmem:[%s528 + $0xd0] sm:$0xff]
        %v8215 = vld [vmem:[%s528 + $0xd8] sm:$0xff]
        %v8216 = vld [vmem:[%s528 + $0xe0] sm:$0xff]
        %v8217 = vld [vmem:[%s528 + $0xe8] sm:$0xff]
        %v8218 = vld [vmem:[%s528 + $0xf0] sm:$0xff]
        %v8219 = vld [vmem:[%s528 + $0xf8] sm:$0xff]
        %v8220 = vadd.f32 %v8156, %v8188
        %v8221 = vadd.f32 %v8157, %v8189
        %v8222 = vadd.f32 %v8158, %v8190
        %v8223 = vadd.f32 %v8159, %v8191
        %v8224 = vadd.f32 %v8160, %v8192
        %v8225 = vadd.f32 %v8161, %v8193
        %v8226 = vadd.f32 %v8162, %v8194
        %v8227 = vadd.f32 %v8163, %v8195
        %v8228 = vadd.f32 %v8164, %v8196
        %v8229 = vadd.f32 %v8165, %v8197
        %v8230 = vadd.f32 %v8166, %v8198
        %v8231 = vadd.f32 %v8167, %v8199
        %v8232 = vadd.f32 %v8168, %v8200
        %v8233 = vadd.f32 %v8169, %v8201
        %v8234 = vadd.f32 %v8170, %v8202
        %v8235 = vadd.f32 %v8171, %v8203
        %v8236 = vadd.f32 %v8172, %v8204
        %v8237 = vadd.f32 %v8173, %v8205
        %v8238 = vadd.f32 %v8174, %v8206
        %v8239 = vadd.f32 %v8175, %v8207
        %v8240 = vadd.f32 %v8176, %v8208
        %v8241 = vadd.f32 %v8177, %v8209
        %v8242 = vadd.f32 %v8178, %v8210
        %v8243 = vadd.f32 %v8179, %v8211
        %v8244 = vadd.f32 %v8180, %v8212
        %v8245 = vadd.f32 %v8181, %v8213
        %v8246 = vadd.f32 %v8182, %v8214
        %v8247 = vadd.f32 %v8183, %v8215
        %v8248 = vadd.f32 %v8184, %v8216
        %v8249 = vadd.f32 %v8185, %v8217
        %v8250 = vadd.f32 %v8186, %v8218
        %v8251 = vadd.f32 %v8187, %v8219
        %8252 = vst [vmem:[%s618] sm:$0xff] %v8220
        %8253 = vst [vmem:[%s618 + $0x8] sm:$0xff] %v8221
        %8254 = vst [vmem:[%s618 + $0x10] sm:$0xff] %v8222
        %8255 = vst [vmem:[%s618 + $0x18] sm:$0xff] %v8223
        %8256 = vst [vmem:[%s618 + $0x20] sm:$0xff] %v8224
        %8257 = vst [vmem:[%s618 + $0x28] sm:$0xff] %v8225
        %8258 = vst [vmem:[%s618 + $0x30] sm:$0xff] %v8226
        %8259 = vst [vmem:[%s618 + $0x38] sm:$0xff] %v8227
        %8260 = vst [vmem:[%s618 + $0x40] sm:$0xff] %v8228
        %8261 = vst [vmem:[%s618 + $0x48] sm:$0xff] %v8229
        %8262 = vst [vmem:[%s618 + $0x50] sm:$0xff] %v8230
        %8263 = vst [vmem:[%s618 + $0x58] sm:$0xff] %v8231
        %8264 = vst [vmem:[%s618 + $0x60] sm:$0xff] %v8232
        %8265 = vst [vmem:[%s618 + $0x68] sm:$0xff] %v8233
        %8266 = vst [vmem:[%s618 + $0x70] sm:$0xff] %v8234
        %8267 = vst [vmem:[%s618 + $0x78] sm:$0xff] %v8235
        %8268 = vst [vmem:[%s618 + $0x80] sm:$0xff] %v8236
        %8269 = vst [vmem:[%s618 + $0x88] sm:$0xff] %v8237
        %8270 = vst [vmem:[%s618 + $0x90] sm:$0xff] %v8238
        %8271 = vst [vmem:[%s618 + $0x98] sm:$0xff] %v8239
        %8272 = vst [vmem:[%s618 + $0xa0] sm:$0xff] %v8240
        %8273 = vst [vmem:[%s618 + $0xa8] sm:$0xff] %v8241
        %8274 = vst [vmem:[%s618 + $0xb0] sm:$0xff] %v8242
        %8275 = vst [vmem:[%s618 + $0xb8] sm:$0xff] %v8243
        %8276 = vst [vmem:[%s618 + $0xc0] sm:$0xff] %v8244
        %8277 = vst [vmem:[%s618 + $0xc8] sm:$0xff] %v8245
        %8278 = vst [vmem:[%s618 + $0xd0] sm:$0xff] %v8246
        %8279 = vst [vmem:[%s618 + $0xd8] sm:$0xff] %v8247
        %8280 = vst [vmem:[%s618 + $0xe0] sm:$0xff] %v8248
        %8281 = vst [vmem:[%s618 + $0xe8] sm:$0xff] %v8249
        %8282 = vst [vmem:[%s618 + $0xf0] sm:$0xff] %v8250
        %8283 = vst [vmem:[%s618 + $0xf8] sm:$0xff] %v8251
        %s8284 = sand.u32 %s322, 1
        %s8285 = scalar_lea.sflag [#allocation5], %s8284
        %s8286 = sand.u32 %s322, 1
        %s8287 = smul.addr %s8286, 256
        %s8288 = scalar_lea.vmem [#allocation24], %s8287
        // Predicated region
        $region125: #{tpu_custom_call.1} parent=71 // pred_check
          %p8289 = pneg %p332
        $region126: #{tpu_custom_call.1} parent=71 // pred_check_branch
          %8291 = sbr.rel (%p8289) target = $region128
        $region127: #{tpu_custom_call.1} parent=71 // pred_region
          %s8293 = ssub.s32 4096, 4096
          %8294 = vsyncadd %s8285, %s8293
          %s8295 = smul.addr %s36, 32
          %s8296 = smul.addr %s8295, 128
          %s8297 = scalar_lea.hbm %s13, %s8296
          %s8298 = sshll.u32 %s8288, 4
          %s8299 = int_to_ptr.vmem [resolvable:$true] %s8298
          %8304 = dma.vmem_to_hbm [thread:$0]  %s8299, 4096, %s8297, %s8285, 128, 128, 8
        $region128: #{tpu_custom_call.1} parent=71 // pred_fallthru
          _
      $region72: #{tpu_custom_call.1} parent=5 // pred_fallthru
        _
      %p8305 = scmp.le.s32.totalorder 2, %s31
      // Predicated region
      $region129: #{tpu_custom_call.1} parent=5 // pred_check
        %p8306 = pneg %p8305
      $region130: #{tpu_custom_call.1} parent=5 // pred_check_branch
        %8308 = sbr.rel (%p8306) target = $region132
      $region131: #{tpu_custom_call.1} parent=5 // pred_region
        %s8309 = ssub.s32 %s31, 2
        // Predicated region
        $region133: #{tpu_custom_call.1} parent=131 // pred_check
          %p8310 = pneg %p338
        $region134: #{tpu_custom_call.1} parent=131 // pred_check_branch
          %8312 = sbr.rel (%p8310) target = $region136
        $region135: #{tpu_custom_call.1} parent=131 // pred_region
          %s8313 = sand.u32 %s323, 1
          %s8314 = scalar_lea.sflag [#allocation5], %s8313
          %s8315 = sand.u32 %s323, 1
          %s8316 = smul.addr %s8315, 256
          %s8317 = scalar_lea.vmem [#allocation24], %s8316
          %8318 = dma.done %s8314, 4096
        $region136: #{tpu_custom_call.1} parent=131 // pred_fallthru
          _
      $region132: #{tpu_custom_call.1} parent=5 // pred_fallthru
        _
    $region6: #{tpu_custom_call.1} parent=1 // loop_footer
      %s35 = sadd.s32 1, %s31
    $region7: #{tpu_custom_call.1} parent=1 // loop_footer_branch
      %30 = sbr.rel target = $region3
    $region8: #{tpu_custom_call.1} parent=1 // loop_exit
      _
    %8319 = vsyncpa [#allocation4], 1
    %s8320 = scalar_lea.sflag [#allocation4], 1
    %8321 = vsyncpa %s8320, 1
    %8322 = vsyncpa [#allocation7], 1
    %8323 = vsyncpa [#allocation10], 1
    %8324 = vsyncpa [#allocation13], 1
    %8325 = vsyncpa [#allocation16], 1
    %8326 = vsyncpa [#allocation19], 1
    %8327 = vsyncpa [#allocation22], 1
    %8328 = vsyncpa [#allocation5], 1
    %s8329 = scalar_lea.sflag [#allocation5], 1
    %8330 = vsyncpa %s8329, 1

</llo_original>
